<compile_context>
chip_gen: v5e
topology: v5e:2x2
jax: 0.10.0
libtpu: 0.0.40
codegen_flags: <defaults>
</compile_context>

<pallas_src>
import jax
import jax.numpy as jnp
from jax.experimental import pallas as pl
from jax.experimental.pallas import tpu as pltpu

# ------------------------- small synthetic config -------------------------
B = 2
N_KPS = 16            # num_kps2d == num_kps3d (kept equal so shapes are consistent)
HID = 32              # GraFormer hid_size
N_HEAD = 4
N_LAYERS = 5          # GraFormer num_layers
NUM_FEATURES = 64     # TwoMLPHead representation size
MESH_HID = NUM_FEATURES // 4
MESH_LAYERS = 2
NUM_VERTS = 64
FEAT_C, FEAT_H, FEAT_W = 8, 5, 5
IMG_H, IMG_W = 32, 32
LN_EPS = 1e-6
CHEB_K = 3


# ---------------------------- in-kernel helpers -----------------------------
def _layernorm(x, gamma, beta):
    # GraFormer-style LayerNorm: unbiased std, eps added to std (matches torch.std).
    d = x.shape[-1]
    mu = jnp.mean(x, axis=-1, keepdims=True)
    xc = x - mu
    var = jnp.sum(xc * xc, axis=-1, keepdims=True) * (1.0 / (d - 1))
    inv = pl.reciprocal(jnp.sqrt(var) + LN_EPS, approx=True)
    return gamma * xc * inv + beta


def _softmax_lastdim(s):
    m = jnp.max(s, axis=-1, keepdims=True)
    p = jnp.exp(s - m)
    return p * pl.reciprocal(jnp.sum(p, axis=-1, keepdims=True), approx=True)


def _cheb_gconv(cheb, x, w_flat, b):
    # sum_k T_k(L) @ x @ W_k  ==  [T_0 x | T_1 x | T_2 x] @ [W_0; W_1; W_2]
    lx = jnp.concatenate(
        [jnp.dot(cheb[k], x, preferred_element_type=jnp.float32)
         for k in range(CHEB_K)], axis=-1)
    return jnp.dot(lx, w_flat, preferred_element_type=jnp.float32) + b


def _gra_atten_layer(x, lam, ln_g, ln_b, w_qkv, b_qkv, w_o, b_o,
                     w_g1, b_g1, w_g2, b_g2, n_head):
    # One GraAttenLayer: x + MHA(LN(x)); then  . + GraphNet(LN(.))
    # TODO(synk): exact attention-mask convention of the OHRSA GraFormer variant
    # is not in the provided source; full (unmasked) attention is used.
    n, d = x.shape
    d_k = d // n_head
    scale = 1.0 / float(d_k) ** 0.5

    # --- multi-head self-attention sublayer (fused QKV / output projections) ---
    y = _layernorm(x, ln_g[0:1], ln_b[0:1])
    qkv = jnp.dot(y, w_qkv, preferred_element_type=jnp.float32) + b_qkv   # (N, 3D)
    q, k, v = qkv[:, :d], qkv[:, d:2 * d], qkv[:, 2 * d:]
    # Fold the 1/sqrt(d_k) scale into Q (one fewer (H,N,N) multiply).
    qh = jnp.stack([q[:, h * d_k:(h + 1) * d_k] * scale for h in range(n_head)], axis=0)
    kh = jnp.stack([k[:, h * d_k:(h + 1) * d_k] for h in range(n_head)], axis=0)
    vh = jnp.stack([v[:, h * d_k:(h + 1) * d_k] for h in range(n_head)], axis=0)
    s = jnp.einsum('hnd,hmd->hnm', qh, kh,
                   preferred_element_type=jnp.float32)                    # (H, N, N)
    p = _softmax_lastdim(s)
    ctx = jnp.einsum('hnm,hmd->hnd', p, vh,
                     preferred_element_type=jnp.float32)                  # (H, N, dk)
    ctx = jnp.concatenate([ctx[h] for h in range(n_head)], axis=-1)       # (N, D)
    x1 = x + jnp.dot(ctx, w_o, preferred_element_type=jnp.float32) + b_o

    # --- GraphNet sublayer: two LAM graph convs (relu on the first) ---
    y2 = _layernorm(x1, ln_g[1:2], ln_b[1:2])
    g1 = jnp.dot(lam, y2, preferred_element_type=jnp.float32)
    g1 = jnp.maximum(jnp.dot(g1, w_g1, preferred_element_type=jnp.float32) + b_g1, 0.0)
    g2 = jnp.dot(lam, g1, preferred_element_type=jnp.float32)
    g2 = jnp.dot(g2, w_g2, preferred_element_type=jnp.float32) + b_g2
    return x1 + g2


# ------------------------------ fused kernel --------------------------------
def ohrsa_fused_kernel(
        kp_ref, feat_ref,
        cheb_ref, lam_ref,
        kg_gin_w_ref, kg_gin_b_ref,
        kg_ln_g_ref, kg_ln_b_ref, kg_wqkv_ref, kg_bqkv_ref,
        kg_wo_ref, kg_bo_ref, kg_wg1_ref, kg_bg1_ref, kg_wg2_ref, kg_bg2_ref,
        kg_gout_w_ref, kg_gout_b_ref,
        fe_w1_ref, fe_b1_ref, fe_w2_ref, fe_b2_ref,
        mg_gin_w_ref, mg_gin_b_ref,
        mg_ln_g_ref, mg_ln_b_ref, mg_wqkv_ref, mg_bqkv_ref,
        mg_wo_ref, mg_bo_ref, mg_wg1_ref, mg_bg1_ref, mg_wg2_ref, mg_bg2_ref,
        mg_up_ref, mg_out_w_ref, mg_out_b_ref,
        kp3d_ref, mesh3d_ref):
    cheb = cheb_ref[...]                    # (K, N, N)
    lam = lam_ref[...]                      # (N, N)
    kp_in = kp_ref[0]                       # (N, 2) normalized keypoints

    # ---- keypoint GraFormer ----
    x = _cheb_gconv(cheb, kp_in, kg_gin_w_ref[...], kg_gin_b_ref[...])
    for l in range(N_LAYERS):
        x = _gra_atten_layer(
            x, lam,
            kg_ln_g_ref[l], kg_ln_b_ref[l],
            kg_wqkv_ref[l], kg_bqkv_ref[l],
            kg_wo_ref[l], kg_bo_ref[l],
            kg_wg1_ref[l], kg_bg1_ref[l],
            kg_wg2_ref[l], kg_bg2_ref[l],
            N_HEAD)
    kp3d_ref[0] = _cheb_gconv(cheb, x, kg_gout_w_ref[...], kg_gout_b_ref[...])

    # ---- TwoMLPHead feature extractor: relu(fc6(x)) -> relu(fc7(.)) ----
    f = feat_ref[0]                         # (1, C*H*W)
    h = jnp.maximum(jnp.dot(f, fe_w1_ref[...], preferred_element_type=jnp.float32)
                    + fe_b1_ref[...], 0.0)
    h = jnp.maximum(jnp.dot(h, fe_w2_ref[...], preferred_element_type=jnp.float32)
                    + fe_b2_ref[...], 0.0)  # (1, NUM_FEATURES)
    feats = jnp.broadcast_to(h, (N_KPS, NUM_FEATURES))

    # ---- mesh GraFormer ----
    mesh_in = jnp.concatenate([kp_in, feats], axis=-1)    # (N, 2 + NUM_FEATURES)
    m = _cheb_gconv(cheb, mesh_in, mg_gin_w_ref[...], mg_gin_b_ref[...])
    for l in range(MESH_LAYERS):
        m = _gra_atten_layer(
            m, lam,
            mg_ln_g_ref[l], mg_ln_b_ref[l],
            mg_wqkv_ref[l], mg_bqkv_ref[l],
            mg_wo_ref[l], mg_bo_ref[l],
            mg_wg1_ref[l], mg_bg1_ref[l],
            mg_wg2_ref[l], mg_bg2_ref[l],
            N_HEAD)
    # TODO(synk): the real MeshGraFormer loads coarse-to-fine adjacency/upsampling
    # matrices from files under ADJ_MATRIX_ROOT; replaced by a deterministic
    # learned upsampling matrix + linear 3D output head.
    up = jnp.dot(mg_up_ref[...], m, preferred_element_type=jnp.float32)   # (V, Dh)
    mesh3d_ref[0] = jnp.dot(up, mg_out_w_ref[...],
                            preferred_element_type=jnp.float32) + mg_out_b_ref[...]


# ------------------------- graph / parameter setup --------------------------
def build_cheb_polys(n):
    # chain-graph edges as a deterministic stand-in for create_edges(...)
    a = jnp.zeros((n, n), jnp.float32)
    idx = jnp.arange(n - 1)
    a = a.at[idx, idx + 1].set(1.0)
    a = a.at[idx + 1, idx].set(1.0)
    adj = a + jnp.eye(n, dtype=jnp.float32)
    # TODO(synk): torch_geometric ChebConv uses the scaled Laplacian 2L/lmax - I;
    # the raw normalized Laplacian polynomials are used here for the synthetic graph.
    d = jnp.sum(adj, axis=-1) ** -0.5
    lap = jnp.eye(n) - (d[:, None] * adj * d[None, :])
    t0 = jnp.eye(n, dtype=jnp.float32)
    t1 = lap
    t2 = 2.0 * lap @ lap - jnp.eye(n)
    return jnp.stack([t0, t1, t2], axis=0)          # (K=3, N, N)


def lam_laplacian(n):
    # GraphNet A_hat initialized to identity; LAM_Gconv degree normalization.
    a_hat = jnp.eye(n, dtype=jnp.float32)
    d_hat = (jnp.sum(a_hat, axis=0) + 1e-5) ** -0.5
    return d_hat[None, :] * a_hat * d_hat[None, :]


def _normal(key, shape, scale=0.02):
    return scale * jax.random.normal(key, shape, dtype=jnp.float32)


def init_atten_stack(key, n_layers, dim):
    # Per-layer weights stacked with a leading layer axis; QKV fused along lanes.
    ks = jax.random.split(key, 4)
    return dict(
        ln_g=jnp.ones((n_layers, 2, dim), jnp.float32),
        ln_b=jnp.zeros((n_layers, 2, dim), jnp.float32),
        w_qkv=_normal(ks[0], (n_layers, dim, 3 * dim)),
        b_qkv=jnp.zeros((n_layers, 1, 3 * dim), jnp.float32),
        w_o=_normal(ks[1], (n_layers, dim, dim)),
        b_o=jnp.zeros((n_layers, 1, dim), jnp.float32),
        w_g1=_normal(ks[2], (n_layers, dim, 2 * dim)),
        b_g1=jnp.zeros((n_layers, 1, 2 * dim), jnp.float32),
        w_g2=_normal(ks[3], (n_layers, 2 * dim, dim)),
        b_g2=jnp.zeros((n_layers, 1, dim), jnp.float32),
    )


def init_params(key):
    keys = jax.random.split(key, 12)
    cheb = build_cheb_polys(N_KPS)
    lam = lam_laplacian(N_KPS)

    keypoint_graformer = dict(
        gin_w=_normal(keys[1], (CHEB_K * 2, HID)),          # (K*Din, HID), K-major rows
        gin_b=jnp.zeros((1, HID), jnp.float32),
        layers=init_atten_stack(keys[0], N_LAYERS, HID),
        gout_w=_normal(keys[2], (CHEB_K * HID, 3)),
        gout_b=jnp.zeros((1, 3), jnp.float32),
    )

    feat_in = FEAT_C * FEAT_H * FEAT_W
    feature_extractor = dict(
        w1=_normal(keys[3], (feat_in, NUM_FEATURES)),
        b1=jnp.zeros((1, NUM_FEATURES), jnp.float32),
        w2=_normal(keys[4], (NUM_FEATURES, NUM_FEATURES)),
        b2=jnp.zeros((1, NUM_FEATURES), jnp.float32),
    )

    mesh_graformer = dict(
        gin_w=_normal(keys[6], (CHEB_K * (2 + NUM_FEATURES), MESH_HID)),
        gin_b=jnp.zeros((1, MESH_HID), jnp.float32),
        layers=init_atten_stack(keys[5], MESH_LAYERS, MESH_HID),
        upsample=_normal(keys[7], (NUM_VERTS, N_KPS), scale=0.1),
        out_w=_normal(keys[8], (MESH_HID, 3)),
        out_b=jnp.zeros((1, 3), jnp.float32),
    )

    synth_kp = jax.random.uniform(keys[9], (B, N_KPS, 2), minval=0.0,
                                  maxval=float(IMG_W))
    synth_fm = _normal(keys[10], (B, FEAT_C, FEAT_H, FEAT_W), scale=1.0)

    return dict(cheb_polys=cheb, lam=lam,
                keypoint_graformer=keypoint_graformer,
                feature_extractor=feature_extractor,
                mesh_graformer=mesh_graformer,
                synthetic_keypoints_px=synth_kp,
                synthetic_feature_maps=synth_fm)


# --------------------------------- forward ----------------------------------
def _const_spec(a):
    # Constant block index across the grid => weights stay resident in VMEM.
    nd = a.ndim
    return pl.BlockSpec(tuple(a.shape), lambda b, _nd=nd: (0,) * _nd)


def _batched_spec(a):
    nd = a.ndim
    return pl.BlockSpec((1,) + tuple(a.shape[1:]),
                        lambda b, _nd=nd: (b,) + (0,) * (_nd - 1))


def ohrsa_forward(images, params):
    bsz = images.shape[0]
    # TODO(synk): YOLO keypoint predictor (ultralytics) is an external pretrained
    # detector with no Pallas equivalent; its outputs are synthesized in params.
    kp_px = params["synthetic_keypoints_px"]            # (B, N_KPS, 2) pixel coords
    feature_maps = params["synthetic_feature_maps"]     # (B, C, Hf, Wf)

    # keypoints2d /= [img_w, img_h]
    keypoints2d = kp_px / jnp.array([images.shape[-1], images.shape[-2]], jnp.float32)
    graformer_inputs = keypoints2d[:, :N_KPS, :2]       # (B, N, 2)
    flat_feats = feature_maps.reshape(bsz, 1, -1)       # NCHW flatten, like torch

    kg = params["keypoint_graformer"]; kgl = kg["layers"]
    fe = params["feature_extractor"]
    mg = params["mesh_graformer"]; mgl = mg["layers"]

    weights = [
        params["cheb_polys"], params["lam"],
        kg["gin_w"], kg["gin_b"],
        kgl["ln_g"], kgl["ln_b"], kgl["w_qkv"], kgl["b_qkv"],
        kgl["w_o"], kgl["b_o"], kgl["w_g1"], kgl["b_g1"], kgl["w_g2"], kgl["b_g2"],
        kg["gout_w"], kg["gout_b"],
        fe["w1"], fe["b1"], fe["w2"], fe["b2"],
        mg["gin_w"], mg["gin_b"],
        mgl["ln_g"], mgl["ln_b"], mgl["w_qkv"], mgl["b_qkv"],
        mgl["w_o"], mgl["b_o"], mgl["w_g1"], mgl["b_g1"], mgl["w_g2"], mgl["b_g2"],
        mg["upsample"], mg["out_w"], mg["out_b"],
    ]

    kp3d, mesh3d = pl.pallas_call(
        ohrsa_fused_kernel,
        grid=(bsz,),
        in_specs=[_batched_spec(graformer_inputs), _batched_spec(flat_feats)]
                 + [_const_spec(w) for w in weights],
        out_specs=[
            pl.BlockSpec((1, N_KPS, 3), lambda b: (b, 0, 0)),
            pl.BlockSpec((1, NUM_VERTS, 3), lambda b: (b, 0, 0)),
        ],
        out_shape=(
            jax.ShapeDtypeStruct((bsz, N_KPS, 3), jnp.float32),
            jax.ShapeDtypeStruct((bsz, NUM_VERTS, 3), jnp.float32),
        ),
        compiler_params=pltpu.CompilerParams(
            dimension_semantics=("parallel",),
            vmem_limit_bytes=64 << 20,
        ),
    )(graformer_inputs, flat_feats, *weights)

    return {"keypoint2d": keypoints2d, "keypoint3d": kp3d, "mesh3d": mesh3d}


if __name__ == "__main__":
    key = jax.random.PRNGKey(0)
    pkey, ikey = jax.random.split(key)
    params = init_params(pkey)
    images = jax.random.uniform(ikey, (B, 3, IMG_H, IMG_W), dtype=jnp.float32)

    out = ohrsa_forward(images, params)
    out = jax.tree_util.tree_map(jax.block_until_ready, out)

    assert out["keypoint2d"].shape == (B, N_KPS, 2)
    assert out["keypoint3d"].shape == (B, N_KPS, 3)
    assert out["mesh3d"].shape == (B, NUM_VERTS, 3)
    assert all(bool(jnp.all(jnp.isfinite(v))) for v in out.values())
    print("KERNEL_OK")
</pallas_src>

<mosaic_0001>
module attributes {stable_mosaic.version = 11 : i64} {
  func.func @ohrsa_fused_kernel(%arg0: i32, %arg1: memref<1x16x2xf32, #tpu.memory_space<vmem>>, %arg2: memref<1x1x200xf32, #tpu.memory_space<vmem>>, %arg3: memref<3x16x16xf32, #tpu.memory_space<vmem>>, %arg4: memref<16x16xf32, #tpu.memory_space<vmem>>, %arg5: memref<6x32xf32, #tpu.memory_space<vmem>>, %arg6: memref<1x32xf32, #tpu.memory_space<vmem>>, %arg7: memref<5x2x32xf32, #tpu.memory_space<vmem>>, %arg8: memref<5x2x32xf32, #tpu.memory_space<vmem>>, %arg9: memref<5x32x96xf32, #tpu.memory_space<vmem>>, %arg10: memref<5x1x96xf32, #tpu.memory_space<vmem>>, %arg11: memref<5x32x32xf32, #tpu.memory_space<vmem>>, %arg12: memref<5x1x32xf32, #tpu.memory_space<vmem>>, %arg13: memref<5x32x64xf32, #tpu.memory_space<vmem>>, %arg14: memref<5x1x64xf32, #tpu.memory_space<vmem>>, %arg15: memref<5x64x32xf32, #tpu.memory_space<vmem>>, %arg16: memref<5x1x32xf32, #tpu.memory_space<vmem>>, %arg17: memref<96x3xf32, #tpu.memory_space<vmem>>, %arg18: memref<1x3xf32, #tpu.memory_space<vmem>>, %arg19: memref<200x64xf32, #tpu.memory_space<vmem>>, %arg20: memref<1x64xf32, #tpu.memory_space<vmem>>, %arg21: memref<64x64xf32, #tpu.memory_space<vmem>>, %arg22: memref<1x64xf32, #tpu.memory_space<vmem>>, %arg23: memref<198x16xf32, #tpu.memory_space<vmem>>, %arg24: memref<1x16xf32, #tpu.memory_space<vmem>>, %arg25: memref<2x2x16xf32, #tpu.memory_space<vmem>>, %arg26: memref<2x2x16xf32, #tpu.memory_space<vmem>>, %arg27: memref<2x16x48xf32, #tpu.memory_space<vmem>>, %arg28: memref<2x1x48xf32, #tpu.memory_space<vmem>>, %arg29: memref<2x16x16xf32, #tpu.memory_space<vmem>>, %arg30: memref<2x1x16xf32, #tpu.memory_space<vmem>>, %arg31: memref<2x16x32xf32, #tpu.memory_space<vmem>>, %arg32: memref<2x1x32xf32, #tpu.memory_space<vmem>>, %arg33: memref<2x32x16xf32, #tpu.memory_space<vmem>>, %arg34: memref<2x1x16xf32, #tpu.memory_space<vmem>>, %arg35: memref<64x16xf32, #tpu.memory_space<vmem>>, %arg36: memref<16x3xf32, #tpu.memory_space<vmem>>, %arg37: memref<1x3xf32, #tpu.memory_space<vmem>>, %arg38: memref<1x16x3xf32, #tpu.memory_space<vmem>>, %arg39: memref<1x64x3xf32, #tpu.memory_space<vmem>>) attributes {dimension_semantics = [#tpu.dimension_semantics<parallel>], iteration_bounds = array<i64: 2>, scalar_prefetch = 0 : i64, scratch_operands = 0 : i64, tpu.core_type = #tpu.core_type<tc>, window_params = [{transform_indices = @transform_0, window_bounds = array<i64: 1, 16, 2>}, {transform_indices = @transform_1, window_bounds = array<i64: 1, 1, 200>}, {pipeline_mode = #tpu.pipeline_mode<synchronous>, transform_indices = @transform_2, window_bounds = array<i64: 3, 16, 16>}, {pipeline_mode = #tpu.pipeline_mode<synchronous>, transform_indices = @transform_3, window_bounds = array<i64: 16, 16>}, {pipeline_mode = #tpu.pipeline_mode<synchronous>, transform_indices = @transform_4, window_bounds = array<i64: 6, 32>}, {pipeline_mode = #tpu.pipeline_mode<synchronous>, transform_indices = @transform_5, window_bounds = array<i64: 1, 32>}, {pipeline_mode = #tpu.pipeline_mode<synchronous>, transform_indices = @transform_6, window_bounds = array<i64: 5, 2, 32>}, {pipeline_mode = #tpu.pipeline_mode<synchronous>, transform_indices = @transform_7, window_bounds = array<i64: 5, 2, 32>}, {pipeline_mode = #tpu.pipeline_mode<synchronous>, transform_indices = @transform_8, window_bounds = array<i64: 5, 32, 96>}, {pipeline_mode = #tpu.pipeline_mode<synchronous>, transform_indices = @transform_9, window_bounds = array<i64: 5, 1, 96>}, {pipeline_mode = #tpu.pipeline_mode<synchronous>, transform_indices = @transform_10, window_bounds = array<i64: 5, 32, 32>}, {pipeline_mode = #tpu.pipeline_mode<synchronous>, transform_indices = @transform_11, window_bounds = array<i64: 5, 1, 32>}, {pipeline_mode = #tpu.pipeline_mode<synchronous>, transform_indices = @transform_12, window_bounds = array<i64: 5, 32, 64>}, {pipeline_mode = #tpu.pipeline_mode<synchronous>, transform_indices = @transform_13, window_bounds = array<i64: 5, 1, 64>}, {pipeline_mode = #tpu.pipeline_mode<synchronous>, transform_indices = @transform_14, window_bounds = array<i64: 5, 64, 32>}, {pipeline_mode = #tpu.pipeline_mode<synchronous>, transform_indices = @transform_15, window_bounds = array<i64: 5, 1, 32>}, {pipeline_mode = #tpu.pipeline_mode<synchronous>, transform_indices = @transform_16, window_bounds = array<i64: 96, 3>}, {pipeline_mode = #tpu.pipeline_mode<synchronous>, transform_indices = @transform_17, window_bounds = array<i64: 1, 3>}, {pipeline_mode = #tpu.pipeline_mode<synchronous>, transform_indices = @transform_18, window_bounds = array<i64: 200, 64>}, {pipeline_mode = #tpu.pipeline_mode<synchronous>, transform_indices = @transform_19, window_bounds = array<i64: 1, 64>}, {pipeline_mode = #tpu.pipeline_mode<synchronous>, transform_indices = @transform_20, window_bounds = array<i64: 64, 64>}, {pipeline_mode = #tpu.pipeline_mode<synchronous>, transform_indices = @transform_21, window_bounds = array<i64: 1, 64>}, {pipeline_mode = #tpu.pipeline_mode<synchronous>, transform_indices = @transform_22, window_bounds = array<i64: 198, 16>}, {pipeline_mode = #tpu.pipeline_mode<synchronous>, transform_indices = @transform_23, window_bounds = array<i64: 1, 16>}, {pipeline_mode = #tpu.pipeline_mode<synchronous>, transform_indices = @transform_24, window_bounds = array<i64: 2, 2, 16>}, {pipeline_mode = #tpu.pipeline_mode<synchronous>, transform_indices = @transform_25, window_bounds = array<i64: 2, 2, 16>}, {pipeline_mode = #tpu.pipeline_mode<synchronous>, transform_indices = @transform_26, window_bounds = array<i64: 2, 16, 48>}, {pipeline_mode = #tpu.pipeline_mode<synchronous>, transform_indices = @transform_27, window_bounds = array<i64: 2, 1, 48>}, {pipeline_mode = #tpu.pipeline_mode<synchronous>, transform_indices = @transform_28, window_bounds = array<i64: 2, 16, 16>}, {pipeline_mode = #tpu.pipeline_mode<synchronous>, transform_indices = @transform_29, window_bounds = array<i64: 2, 1, 16>}, {pipeline_mode = #tpu.pipeline_mode<synchronous>, transform_indices = @transform_30, window_bounds = array<i64: 2, 16, 32>}, {pipeline_mode = #tpu.pipeline_mode<synchronous>, transform_indices = @transform_31, window_bounds = array<i64: 2, 1, 32>}, {pipeline_mode = #tpu.pipeline_mode<synchronous>, transform_indices = @transform_32, window_bounds = array<i64: 2, 32, 16>}, {pipeline_mode = #tpu.pipeline_mode<synchronous>, transform_indices = @transform_33, window_bounds = array<i64: 2, 1, 16>}, {pipeline_mode = #tpu.pipeline_mode<synchronous>, transform_indices = @transform_34, window_bounds = array<i64: 64, 16>}, {pipeline_mode = #tpu.pipeline_mode<synchronous>, transform_indices = @transform_35, window_bounds = array<i64: 16, 3>}, {pipeline_mode = #tpu.pipeline_mode<synchronous>, transform_indices = @transform_36, window_bounds = array<i64: 1, 3>}, {transform_indices = @transform_37, window_bounds = array<i64: 1, 16, 3>}, {transform_indices = @transform_38, window_bounds = array<i64: 1, 64, 3>}]} {
    %c0 = arith.constant 0 : index
    %c0_0 = arith.constant 0 : index
    %c0_1 = arith.constant 0 : index
    %0 = vector.load %arg3[%c0, %c0_0, %c0_1] : memref<3x16x16xf32, #tpu.memory_space<vmem>>, vector<3x16x16xf32>
    %c0_2 = arith.constant 0 : index
    %c0_3 = arith.constant 0 : index
    %1 = vector.load %arg4[%c0_2, %c0_3] : memref<16x16xf32, #tpu.memory_space<vmem>>, vector<16x16xf32>
    %c0_4 = arith.constant 0 : index
    %c0_5 = arith.constant 0 : index
    %c0_6 = arith.constant 0 : index
    %2 = vector.load %arg1[%c0_4, %c0_5, %c0_6] : memref<1x16x2xf32, #tpu.memory_space<vmem>>, vector<1x16x2xf32>
    %3 = vector.shape_cast %2 : vector<1x16x2xf32> to vector<16x2xf32>
    %c0_7 = arith.constant 0 : index
    %c0_8 = arith.constant 0 : index
    %4 = vector.load %arg5[%c0_7, %c0_8] : memref<6x32xf32, #tpu.memory_space<vmem>>, vector<6x32xf32>
    %c0_9 = arith.constant 0 : index
    %c0_10 = arith.constant 0 : index
    %5 = vector.load %arg6[%c0_9, %c0_10] : memref<1x32xf32, #tpu.memory_space<vmem>>, vector<1x32xf32>
    %6 = vector.extract_strided_slice %0 {offsets = [0, 0, 0], sizes = [1, 16, 16], strides = [1, 1, 1]} : vector<3x16x16xf32> to vector<1x16x16xf32>
    %7 = vector.shape_cast %6 : vector<1x16x16xf32> to vector<16x16xf32>
    %cst = arith.constant dense<0.000000e+00> : vector<16x2xf32>
    %8 = tpu.matmul %7, %3, %cst {dimension_numbers = #tpu.dot_dimension_numbers<[1], [0], [0], [1], [0, 0, 1, 1], [], []>} : vector<16x16xf32>, vector<16x2xf32>, vector<16x2xf32> -> vector<16x2xf32>
    %9 = vector.extract_strided_slice %0 {offsets = [1, 0, 0], sizes = [1, 16, 16], strides = [1, 1, 1]} : vector<3x16x16xf32> to vector<1x16x16xf32>
    %10 = vector.shape_cast %9 : vector<1x16x16xf32> to vector<16x16xf32>
    %cst_11 = arith.constant dense<0.000000e+00> : vector<16x2xf32>
    %11 = tpu.matmul %10, %3, %cst_11 {dimension_numbers = #tpu.dot_dimension_numbers<[1], [0], [0], [1], [0, 0, 1, 1], [], []>} : vector<16x16xf32>, vector<16x2xf32>, vector<16x2xf32> -> vector<16x2xf32>
    %12 = vector.extract_strided_slice %0 {offsets = [2, 0, 0], sizes = [1, 16, 16], strides = [1, 1, 1]} : vector<3x16x16xf32> to vector<1x16x16xf32>
    %13 = vector.shape_cast %12 : vector<1x16x16xf32> to vector<16x16xf32>
    %cst_12 = arith.constant dense<0.000000e+00> : vector<16x2xf32>
    %14 = tpu.matmul %13, %3, %cst_12 {dimension_numbers = #tpu.dot_dimension_numbers<[1], [0], [0], [1], [0, 0, 1, 1], [], []>} : vector<16x16xf32>, vector<16x2xf32>, vector<16x2xf32> -> vector<16x2xf32>
    %15 = tpu.concatenate %8, %11, %14 in 1 : vector<16x2xf32>, vector<16x2xf32>, vector<16x2xf32> -> vector<16x6xf32>
    %cst_13 = arith.constant dense<0.000000e+00> : vector<16x32xf32>
    %16 = tpu.matmul %15, %4, %cst_13 {dimension_numbers = #tpu.dot_dimension_numbers<[1], [0], [0], [1], [0, 0, 1, 1], [], []>} : vector<16x6xf32>, vector<6x32xf32>, vector<16x32xf32> -> vector<16x32xf32>
    %17 = vector.broadcast %5 : vector<1x32xf32> to vector<16x32xf32>
    %18 = arith.addf %16, %17 : vector<16x32xf32>
    %c0_14 = arith.constant 0 : index
    %c0_15 = arith.constant 0 : index
    %c0_16 = arith.constant 0 : index
    %19 = vector.load %arg7[%c0_14, %c0_15, %c0_16] : memref<5x2x32xf32, #tpu.memory_space<vmem>>, vector<1x2x32xf32>
    %20 = vector.shape_cast %19 : vector<1x2x32xf32> to vector<2x32xf32>
    %c0_17 = arith.constant 0 : index
    %c0_18 = arith.constant 0 : index
    %c0_19 = arith.constant 0 : index
    %21 = vector.load %arg8[%c0_17, %c0_18, %c0_19] : memref<5x2x32xf32, #tpu.memory_space<vmem>>, vector<1x2x32xf32>
    %22 = vector.shape_cast %21 : vector<1x2x32xf32> to vector<2x32xf32>
    %c0_20 = arith.constant 0 : index
    %c0_21 = arith.constant 0 : index
    %c0_22 = arith.constant 0 : index
    %23 = vector.load %arg9[%c0_20, %c0_21, %c0_22] : memref<5x32x96xf32, #tpu.memory_space<vmem>>, vector<1x32x96xf32>
    %24 = vector.shape_cast %23 : vector<1x32x96xf32> to vector<32x96xf32>
    %c0_23 = arith.constant 0 : index
    %c0_24 = arith.constant 0 : index
    %c0_25 = arith.constant 0 : index
    %25 = vector.load %arg10[%c0_23, %c0_24, %c0_25] : memref<5x1x96xf32, #tpu.memory_space<vmem>>, vector<1x1x96xf32>
    %26 = vector.shape_cast %25 : vector<1x1x96xf32> to vector<1x96xf32>
    %c0_26 = arith.constant 0 : index
    %c0_27 = arith.constant 0 : index
    %c0_28 = arith.constant 0 : index
    %27 = vector.load %arg11[%c0_26, %c0_27, %c0_28] : memref<5x32x32xf32, #tpu.memory_space<vmem>>, vector<1x32x32xf32>
    %28 = vector.shape_cast %27 : vector<1x32x32xf32> to vector<32x32xf32>
    %c0_29 = arith.constant 0 : index
    %c0_30 = arith.constant 0 : index
    %c0_31 = arith.constant 0 : index
    %29 = vector.load %arg12[%c0_29, %c0_30, %c0_31] : memref<5x1x32xf32, #tpu.memory_space<vmem>>, vector<1x1x32xf32>
    %30 = vector.shape_cast %29 : vector<1x1x32xf32> to vector<1x32xf32>
    %c0_32 = arith.constant 0 : index
    %c0_33 = arith.constant 0 : index
    %c0_34 = arith.constant 0 : index
    %31 = vector.load %arg13[%c0_32, %c0_33, %c0_34] : memref<5x32x64xf32, #tpu.memory_space<vmem>>, vector<1x32x64xf32>
    %32 = vector.shape_cast %31 : vector<1x32x64xf32> to vector<32x64xf32>
    %c0_35 = arith.constant 0 : index
    %c0_36 = arith.constant 0 : index
    %c0_37 = arith.constant 0 : index
    %33 = vector.load %arg14[%c0_35, %c0_36, %c0_37] : memref<5x1x64xf32, #tpu.memory_space<vmem>>, vector<1x1x64xf32>
    %34 = vector.shape_cast %33 : vector<1x1x64xf32> to vector<1x64xf32>
    %c0_38 = arith.constant 0 : index
    %c0_39 = arith.constant 0 : index
    %c0_40 = arith.constant 0 : index
    %35 = vector.load %arg15[%c0_38, %c0_39, %c0_40] : memref<5x64x32xf32, #tpu.memory_space<vmem>>, vector<1x64x32xf32>
    %36 = vector.shape_cast %35 : vector<1x64x32xf32> to vector<64x32xf32>
    %c0_41 = arith.constant 0 : index
    %c0_42 = arith.constant 0 : index
    %c0_43 = arith.constant 0 : index
    %37 = vector.load %arg16[%c0_41, %c0_42, %c0_43] : memref<5x1x32xf32, #tpu.memory_space<vmem>>, vector<1x1x32xf32>
    %38 = vector.shape_cast %37 : vector<1x1x32xf32> to vector<1x32xf32>
    %39 = vector.extract_strided_slice %20 {offsets = [0, 0], sizes = [1, 32], strides = [1, 1]} : vector<2x32xf32> to vector<1x32xf32>
    %40 = vector.extract_strided_slice %22 {offsets = [0, 0], sizes = [1, 32], strides = [1, 1]} : vector<2x32xf32> to vector<1x32xf32>
    %cst_44 = arith.constant dense<0.000000e+00> : vector<16xf32>
    %41 = vector.multi_reduction <add>, %18, %cst_44 [1] : vector<16x32xf32> to vector<16xf32>
    %42 = vector.shape_cast %41 : vector<16xf32> to vector<16x1xf32>
    %cst_45 = arith.constant 3.200000e+01 : f32
    %43 = vector.broadcast %cst_45 : f32 to vector<16x1xf32>
    %44 = arith.divf %42, %43 : vector<16x1xf32>
    %45 = vector.broadcast %44 : vector<16x1xf32> to vector<16x32xf32>
    %46 = arith.subf %18, %45 : vector<16x32xf32>
    %47 = arith.mulf %46, %46 : vector<16x32xf32>
    %cst_46 = arith.constant dense<0.000000e+00> : vector<16xf32>
    %48 = vector.multi_reduction <add>, %47, %cst_46 [1] : vector<16x32xf32> to vector<16xf32>
    %49 = vector.shape_cast %48 : vector<16xf32> to vector<16x1xf32>
    %cst_47 = arith.constant 0.0322580636 : f32
    %50 = vector.broadcast %cst_47 : f32 to vector<16x1xf32>
    %51 = arith.mulf %49, %50 : vector<16x1xf32>
    %52 = math.sqrt %51 : vector<16x1xf32>
    %cst_48 = arith.constant 9.99999997E-7 : f32
    %53 = vector.broadcast %cst_48 : f32 to vector<16x1xf32>
    %54 = arith.addf %52, %53 : vector<16x1xf32>
    %55 = tpu.reciprocal %54 {approx = true} : vector<16x1xf32> -> vector<16x1xf32>
    %56 = vector.broadcast %39 : vector<1x32xf32> to vector<16x32xf32>
    %57 = arith.mulf %56, %46 : vector<16x32xf32>
    %58 = vector.broadcast %55 : vector<16x1xf32> to vector<16x32xf32>
    %59 = arith.mulf %57, %58 : vector<16x32xf32>
    %60 = vector.broadcast %40 : vector<1x32xf32> to vector<16x32xf32>
    %61 = arith.addf %59, %60 : vector<16x32xf32>
    %cst_49 = arith.constant dense<0.000000e+00> : vector<16x96xf32>
    %62 = tpu.matmul %61, %24, %cst_49 {dimension_numbers = #tpu.dot_dimension_numbers<[1], [0], [0], [1], [0, 0, 1, 1], [], []>} : vector<16x32xf32>, vector<32x96xf32>, vector<16x96xf32> -> vector<16x96xf32>
    %63 = vector.broadcast %26 : vector<1x96xf32> to vector<16x96xf32>
    %64 = arith.addf %62, %63 : vector<16x96xf32>
    %65 = vector.extract_strided_slice %64 {offsets = [0, 0], sizes = [16, 32], strides = [1, 1]} : vector<16x96xf32> to vector<16x32xf32>
    %66 = vector.extract_strided_slice %64 {offsets = [0, 32], sizes = [16, 32], strides = [1, 1]} : vector<16x96xf32> to vector<16x32xf32>
    %67 = vector.extract_strided_slice %64 {offsets = [0, 64], sizes = [16, 32], strides = [1, 1]} : vector<16x96xf32> to vector<16x32xf32>
    %68 = vector.extract_strided_slice %65 {offsets = [0, 0], sizes = [16, 8], strides = [1, 1]} : vector<16x32xf32> to vector<16x8xf32>
    %cst_50 = arith.constant 0.353553385 : f32
    %69 = vector.broadcast %cst_50 : f32 to vector<16x8xf32>
    %70 = arith.mulf %68, %69 : vector<16x8xf32>
    %71 = vector.extract_strided_slice %65 {offsets = [0, 8], sizes = [16, 8], strides = [1, 1]} : vector<16x32xf32> to vector<16x8xf32>
    %cst_51 = arith.constant 0.353553385 : f32
    %72 = vector.broadcast %cst_51 : f32 to vector<16x8xf32>
    %73 = arith.mulf %71, %72 : vector<16x8xf32>
    %74 = vector.extract_strided_slice %65 {offsets = [0, 16], sizes = [16, 8], strides = [1, 1]} : vector<16x32xf32> to vector<16x8xf32>
    %cst_52 = arith.constant 0.353553385 : f32
    %75 = vector.broadcast %cst_52 : f32 to vector<16x8xf32>
    %76 = arith.mulf %74, %75 : vector<16x8xf32>
    %77 = vector.extract_strided_slice %65 {offsets = [0, 24], sizes = [16, 8], strides = [1, 1]} : vector<16x32xf32> to vector<16x8xf32>
    %cst_53 = arith.constant 0.353553385 : f32
    %78 = vector.broadcast %cst_53 : f32 to vector<16x8xf32>
    %79 = arith.mulf %77, %78 : vector<16x8xf32>
    %80 = vector.shape_cast %70 : vector<16x8xf32> to vector<1x16x8xf32>
    %81 = vector.shape_cast %73 : vector<16x8xf32> to vector<1x16x8xf32>
    %82 = vector.shape_cast %76 : vector<16x8xf32> to vector<1x16x8xf32>
    %83 = vector.shape_cast %79 : vector<16x8xf32> to vector<1x16x8xf32>
    %84 = tpu.concatenate %80, %81, %82, %83 in 0 : vector<1x16x8xf32>, vector<1x16x8xf32>, vector<1x16x8xf32>, vector<1x16x8xf32> -> vector<4x16x8xf32>
    %85 = vector.extract_strided_slice %66 {offsets = [0, 0], sizes = [16, 8], strides = [1, 1]} : vector<16x32xf32> to vector<16x8xf32>
    %86 = vector.extract_strided_slice %66 {offsets = [0, 8], sizes = [16, 8], strides = [1, 1]} : vector<16x32xf32> to vector<16x8xf32>
    %87 = vector.extract_strided_slice %66 {offsets = [0, 16], sizes = [16, 8], strides = [1, 1]} : vector<16x32xf32> to vector<16x8xf32>
    %88 = vector.extract_strided_slice %66 {offsets = [0, 24], sizes = [16, 8], strides = [1, 1]} : vector<16x32xf32> to vector<16x8xf32>
    %89 = vector.shape_cast %85 : vector<16x8xf32> to vector<1x16x8xf32>
    %90 = vector.shape_cast %86 : vector<16x8xf32> to vector<1x16x8xf32>
    %91 = vector.shape_cast %87 : vector<16x8xf32> to vector<1x16x8xf32>
    %92 = vector.shape_cast %88 : vector<16x8xf32> to vector<1x16x8xf32>
    %93 = tpu.concatenate %89, %90, %91, %92 in 0 : vector<1x16x8xf32>, vector<1x16x8xf32>, vector<1x16x8xf32>, vector<1x16x8xf32> -> vector<4x16x8xf32>
    %94 = vector.extract_strided_slice %67 {offsets = [0, 0], sizes = [16, 8], strides = [1, 1]} : vector<16x32xf32> to vector<16x8xf32>
    %95 = vector.extract_strided_slice %67 {offsets = [0, 8], sizes = [16, 8], strides = [1, 1]} : vector<16x32xf32> to vector<16x8xf32>
    %96 = vector.extract_strided_slice %67 {offsets = [0, 16], sizes = [16, 8], strides = [1, 1]} : vector<16x32xf32> to vector<16x8xf32>
    %97 = vector.extract_strided_slice %67 {offsets = [0, 24], sizes = [16, 8], strides = [1, 1]} : vector<16x32xf32> to vector<16x8xf32>
    %98 = vector.shape_cast %94 : vector<16x8xf32> to vector<1x16x8xf32>
    %99 = vector.shape_cast %95 : vector<16x8xf32> to vector<1x16x8xf32>
    %100 = vector.shape_cast %96 : vector<16x8xf32> to vector<1x16x8xf32>
    %101 = vector.shape_cast %97 : vector<16x8xf32> to vector<1x16x8xf32>
    %102 = tpu.concatenate %98, %99, %100, %101 in 0 : vector<1x16x8xf32>, vector<1x16x8xf32>, vector<1x16x8xf32>, vector<1x16x8xf32> -> vector<4x16x8xf32>
    "tpu.trace_start"() <{level = 10 : i32, message = "hnd,hmd->hnm"}> : () -> ()
    %cst_54 = arith.constant dense<0.000000e+00> : vector<4x16x16xf32>
    %103 = tpu.matmul %84, %93, %cst_54 {dimension_numbers = #tpu.dot_dimension_numbers<[2], [2], [1], [1], [0, 0, 0, 1, 1, 1], [0], [0]>} : vector<4x16x8xf32>, vector<4x16x8xf32>, vector<4x16x16xf32> -> vector<4x16x16xf32>
    "tpu.trace_stop"() : () -> ()
    %cst_55 = arith.constant dense<0xFF800000> : vector<4x16xf32>
    %104 = vector.multi_reduction <maximumf>, %103, %cst_55 [2] : vector<4x16x16xf32> to vector<4x16xf32>
    %105 = vector.shape_cast %104 : vector<4x16xf32> to vector<4x16x1xf32>
    %106 = vector.broadcast %105 : vector<4x16x1xf32> to vector<4x16x16xf32>
    %107 = arith.subf %103, %106 : vector<4x16x16xf32>
    %108 = math.exp %107 : vector<4x16x16xf32>
    %cst_56 = arith.constant dense<0.000000e+00> : vector<4x16xf32>
    %109 = vector.multi_reduction <add>, %108, %cst_56 [2] : vector<4x16x16xf32> to vector<4x16xf32>
    %110 = vector.shape_cast %109 : vector<4x16xf32> to vector<4x16x1xf32>
    %111 = tpu.reciprocal %110 {approx = true} : vector<4x16x1xf32> -> vector<4x16x1xf32>
    %112 = vector.broadcast %111 : vector<4x16x1xf32> to vector<4x16x16xf32>
    %113 = arith.mulf %108, %112 : vector<4x16x16xf32>
    "tpu.trace_start"() <{level = 10 : i32, message = "hnm,hmd->hnd"}> : () -> ()
    %cst_57 = arith.constant dense<0.000000e+00> : vector<4x16x8xf32>
    %114 = tpu.matmul %113, %102, %cst_57 {dimension_numbers = #tpu.dot_dimension_numbers<[2], [1], [1], [2], [0, 0, 0, 1, 1, 2], [0], [0]>} : vector<4x16x16xf32>, vector<4x16x8xf32>, vector<4x16x8xf32> -> vector<4x16x8xf32>
    "tpu.trace_stop"() : () -> ()
    %115 = vector.extract_strided_slice %114 {offsets = [0, 0, 0], sizes = [1, 16, 8], strides = [1, 1, 1]} : vector<4x16x8xf32> to vector<1x16x8xf32>
    %116 = vector.shape_cast %115 : vector<1x16x8xf32> to vector<16x8xf32>
    %117 = vector.extract_strided_slice %114 {offsets = [1, 0, 0], sizes = [1, 16, 8], strides = [1, 1, 1]} : vector<4x16x8xf32> to vector<1x16x8xf32>
    %118 = vector.shape_cast %117 : vector<1x16x8xf32> to vector<16x8xf32>
    %119 = vector.extract_strided_slice %114 {offsets = [2, 0, 0], sizes = [1, 16, 8], strides = [1, 1, 1]} : vector<4x16x8xf32> to vector<1x16x8xf32>
    %120 = vector.shape_cast %119 : vector<1x16x8xf32> to vector<16x8xf32>
    %121 = vector.extract_strided_slice %114 {offsets = [3, 0, 0], sizes = [1, 16, 8], strides = [1, 1, 1]} : vector<4x16x8xf32> to vector<1x16x8xf32>
    %122 = vector.shape_cast %121 : vector<1x16x8xf32> to vector<16x8xf32>
    %123 = tpu.concatenate %116, %118, %120, %122 in 1 : vector<16x8xf32>, vector<16x8xf32>, vector<16x8xf32>, vector<16x8xf32> -> vector<16x32xf32>
    %cst_58 = arith.constant dense<0.000000e+00> : vector<16x32xf32>
    %124 = tpu.matmul %123, %28, %cst_58 {dimension_numbers = #tpu.dot_dimension_numbers<[1], [0], [0], [1], [0, 0, 1, 1], [], []>} : vector<16x32xf32>, vector<32x32xf32>, vector<16x32xf32> -> vector<16x32xf32>
    %125 = arith.addf %18, %124 : vector<16x32xf32>
    %126 = vector.broadcast %30 : vector<1x32xf32> to vector<16x32xf32>
    %127 = arith.addf %125, %126 : vector<16x32xf32>
    %128 = vector.extract_strided_slice %20 {offsets = [1, 0], sizes = [1, 32], strides = [1, 1]} : vector<2x32xf32> to vector<1x32xf32>
    %129 = vector.extract_strided_slice %22 {offsets = [1, 0], sizes = [1, 32], strides = [1, 1]} : vector<2x32xf32> to vector<1x32xf32>
    %cst_59 = arith.constant dense<0.000000e+00> : vector<16xf32>
    %130 = vector.multi_reduction <add>, %127, %cst_59 [1] : vector<16x32xf32> to vector<16xf32>
    %131 = vector.shape_cast %130 : vector<16xf32> to vector<16x1xf32>
    %cst_60 = arith.constant 3.200000e+01 : f32
    %132 = vector.broadcast %cst_60 : f32 to vector<16x1xf32>
    %133 = arith.divf %131, %132 : vector<16x1xf32>
    %134 = vector.broadcast %133 : vector<16x1xf32> to vector<16x32xf32>
    %135 = arith.subf %127, %134 : vector<16x32xf32>
    %136 = arith.mulf %135, %135 : vector<16x32xf32>
    %cst_61 = arith.constant dense<0.000000e+00> : vector<16xf32>
    %137 = vector.multi_reduction <add>, %136, %cst_61 [1] : vector<16x32xf32> to vector<16xf32>
    %138 = vector.shape_cast %137 : vector<16xf32> to vector<16x1xf32>
    %cst_62 = arith.constant 0.0322580636 : f32
    %139 = vector.broadcast %cst_62 : f32 to vector<16x1xf32>
    %140 = arith.mulf %138, %139 : vector<16x1xf32>
    %141 = math.sqrt %140 : vector<16x1xf32>
    %cst_63 = arith.constant 9.99999997E-7 : f32
    %142 = vector.broadcast %cst_63 : f32 to vector<16x1xf32>
    %143 = arith.addf %141, %142 : vector<16x1xf32>
    %144 = tpu.reciprocal %143 {approx = true} : vector<16x1xf32> -> vector<16x1xf32>
    %145 = vector.broadcast %128 : vector<1x32xf32> to vector<16x32xf32>
    %146 = arith.mulf %145, %135 : vector<16x32xf32>
    %147 = vector.broadcast %144 : vector<16x1xf32> to vector<16x32xf32>
    %148 = arith.mulf %146, %147 : vector<16x32xf32>
    %149 = vector.broadcast %129 : vector<1x32xf32> to vector<16x32xf32>
    %150 = arith.addf %148, %149 : vector<16x32xf32>
    %cst_64 = arith.constant dense<0.000000e+00> : vector<16x32xf32>
    %151 = tpu.matmul %1, %150, %cst_64 {dimension_numbers = #tpu.dot_dimension_numbers<[1], [0], [0], [1], [0, 0, 1, 1], [], []>} : vector<16x16xf32>, vector<16x32xf32>, vector<16x32xf32> -> vector<16x32xf32>
    %cst_65 = arith.constant dense<0.000000e+00> : vector<16x64xf32>
    %152 = tpu.matmul %151, %32, %cst_65 {dimension_numbers = #tpu.dot_dimension_numbers<[1], [0], [0], [1], [0, 0, 1, 1], [], []>} : vector<16x32xf32>, vector<32x64xf32>, vector<16x64xf32> -> vector<16x64xf32>
    %153 = vector.broadcast %34 : vector<1x64xf32> to vector<16x64xf32>
    %154 = arith.addf %152, %153 : vector<16x64xf32>
    %cst_66 = arith.constant 0.000000e+00 : f32
    %155 = vector.broadcast %cst_66 : f32 to vector<16x64xf32>
    %156 = arith.maximumf %154, %155 : vector<16x64xf32>
    %cst_67 = arith.constant dense<0.000000e+00> : vector<16x64xf32>
    %157 = tpu.matmul %1, %156, %cst_67 {dimension_numbers = #tpu.dot_dimension_numbers<[1], [0], [0], [1], [0, 0, 1, 1], [], []>} : vector<16x16xf32>, vector<16x64xf32>, vector<16x64xf32> -> vector<16x64xf32>
    %cst_68 = arith.constant dense<0.000000e+00> : vector<16x32xf32>
    %158 = tpu.matmul %157, %36, %cst_68 {dimension_numbers = #tpu.dot_dimension_numbers<[1], [0], [0], [1], [0, 0, 1, 1], [], []>} : vector<16x64xf32>, vector<64x32xf32>, vector<16x32xf32> -> vector<16x32xf32>
    %159 = vector.broadcast %38 : vector<1x32xf32> to vector<16x32xf32>
    %160 = arith.addf %158, %159 : vector<16x32xf32>
    %161 = arith.addf %127, %160 : vector<16x32xf32>
    %c1 = arith.constant 1 : index
    %c0_69 = arith.constant 0 : index
    %c0_70 = arith.constant 0 : index
    %162 = vector.load %arg7[%c1, %c0_69, %c0_70] : memref<5x2x32xf32, #tpu.memory_space<vmem>>, vector<1x2x32xf32>
    %163 = vector.shape_cast %162 : vector<1x2x32xf32> to vector<2x32xf32>
    %c1_71 = arith.constant 1 : index
    %c0_72 = arith.constant 0 : index
    %c0_73 = arith.constant 0 : index
    %164 = vector.load %arg8[%c1_71, %c0_72, %c0_73] : memref<5x2x32xf32, #tpu.memory_space<vmem>>, vector<1x2x32xf32>
    %165 = vector.shape_cast %164 : vector<1x2x32xf32> to vector<2x32xf32>
    %c1_74 = arith.constant 1 : index
    %c0_75 = arith.constant 0 : index
    %c0_76 = arith.constant 0 : index
    %166 = vector.load %arg9[%c1_74, %c0_75, %c0_76] : memref<5x32x96xf32, #tpu.memory_space<vmem>>, vector<1x32x96xf32>
    %167 = vector.shape_cast %166 : vector<1x32x96xf32> to vector<32x96xf32>
    %c1_77 = arith.constant 1 : index
    %c0_78 = arith.constant 0 : index
    %c0_79 = arith.constant 0 : index
    %168 = vector.load %arg10[%c1_77, %c0_78, %c0_79] : memref<5x1x96xf32, #tpu.memory_space<vmem>>, vector<1x1x96xf32>
    %169 = vector.shape_cast %168 : vector<1x1x96xf32> to vector<1x96xf32>
    %c1_80 = arith.constant 1 : index
    %c0_81 = arith.constant 0 : index
    %c0_82 = arith.constant 0 : index
    %170 = vector.load %arg11[%c1_80, %c0_81, %c0_82] : memref<5x32x32xf32, #tpu.memory_space<vmem>>, vector<1x32x32xf32>
    %171 = vector.shape_cast %170 : vector<1x32x32xf32> to vector<32x32xf32>
    %c1_83 = arith.constant 1 : index
    %c0_84 = arith.constant 0 : index
    %c0_85 = arith.constant 0 : index
    %172 = vector.load %arg12[%c1_83, %c0_84, %c0_85] : memref<5x1x32xf32, #tpu.memory_space<vmem>>, vector<1x1x32xf32>
    %173 = vector.shape_cast %172 : vector<1x1x32xf32> to vector<1x32xf32>
    %c1_86 = arith.constant 1 : index
    %c0_87 = arith.constant 0 : index
    %c0_88 = arith.constant 0 : index
    %174 = vector.load %arg13[%c1_86, %c0_87, %c0_88] : memref<5x32x64xf32, #tpu.memory_space<vmem>>, vector<1x32x64xf32>
    %175 = vector.shape_cast %174 : vector<1x32x64xf32> to vector<32x64xf32>
    %c1_89 = arith.constant 1 : index
    %c0_90 = arith.constant 0 : index
    %c0_91 = arith.constant 0 : index
    %176 = vector.load %arg14[%c1_89, %c0_90, %c0_91] : memref<5x1x64xf32, #tpu.memory_space<vmem>>, vector<1x1x64xf32>
    %177 = vector.shape_cast %176 : vector<1x1x64xf32> to vector<1x64xf32>
    %c1_92 = arith.constant 1 : index
    %c0_93 = arith.constant 0 : index
    %c0_94 = arith.constant 0 : index
    %178 = vector.load %arg15[%c1_92, %c0_93, %c0_94] : memref<5x64x32xf32, #tpu.memory_space<vmem>>, vector<1x64x32xf32>
    %179 = vector.shape_cast %178 : vector<1x64x32xf32> to vector<64x32xf32>
    %c1_95 = arith.constant 1 : index
    %c0_96 = arith.constant 0 : index
    %c0_97 = arith.constant 0 : index
    %180 = vector.load %arg16[%c1_95, %c0_96, %c0_97] : memref<5x1x32xf32, #tpu.memory_space<vmem>>, vector<1x1x32xf32>
    %181 = vector.shape_cast %180 : vector<1x1x32xf32> to vector<1x32xf32>
    %182 = vector.extract_strided_slice %163 {offsets = [0, 0], sizes = [1, 32], strides = [1, 1]} : vector<2x32xf32> to vector<1x32xf32>
    %183 = vector.extract_strided_slice %165 {offsets = [0, 0], sizes = [1, 32], strides = [1, 1]} : vector<2x32xf32> to vector<1x32xf32>
    %cst_98 = arith.constant dense<0.000000e+00> : vector<16xf32>
    %184 = vector.multi_reduction <add>, %161, %cst_98 [1] : vector<16x32xf32> to vector<16xf32>
    %185 = vector.shape_cast %184 : vector<16xf32> to vector<16x1xf32>
    %cst_99 = arith.constant 3.200000e+01 : f32
    %186 = vector.broadcast %cst_99 : f32 to vector<16x1xf32>
    %187 = arith.divf %185, %186 : vector<16x1xf32>
    %188 = vector.broadcast %187 : vector<16x1xf32> to vector<16x32xf32>
    %189 = arith.subf %161, %188 : vector<16x32xf32>
    %190 = arith.mulf %189, %189 : vector<16x32xf32>
    %cst_100 = arith.constant dense<0.000000e+00> : vector<16xf32>
    %191 = vector.multi_reduction <add>, %190, %cst_100 [1] : vector<16x32xf32> to vector<16xf32>
    %192 = vector.shape_cast %191 : vector<16xf32> to vector<16x1xf32>
    %cst_101 = arith.constant 0.0322580636 : f32
    %193 = vector.broadcast %cst_101 : f32 to vector<16x1xf32>
    %194 = arith.mulf %192, %193 : vector<16x1xf32>
    %195 = math.sqrt %194 : vector<16x1xf32>
    %cst_102 = arith.constant 9.99999997E-7 : f32
    %196 = vector.broadcast %cst_102 : f32 to vector<16x1xf32>
    %197 = arith.addf %195, %196 : vector<16x1xf32>
    %198 = tpu.reciprocal %197 {approx = true} : vector<16x1xf32> -> vector<16x1xf32>
    %199 = vector.broadcast %182 : vector<1x32xf32> to vector<16x32xf32>
    %200 = arith.mulf %199, %189 : vector<16x32xf32>
    %201 = vector.broadcast %198 : vector<16x1xf32> to vector<16x32xf32>
    %202 = arith.mulf %200, %201 : vector<16x32xf32>
    %203 = vector.broadcast %183 : vector<1x32xf32> to vector<16x32xf32>
    %204 = arith.addf %202, %203 : vector<16x32xf32>
    %cst_103 = arith.constant dense<0.000000e+00> : vector<16x96xf32>
    %205 = tpu.matmul %204, %167, %cst_103 {dimension_numbers = #tpu.dot_dimension_numbers<[1], [0], [0], [1], [0, 0, 1, 1], [], []>} : vector<16x32xf32>, vector<32x96xf32>, vector<16x96xf32> -> vector<16x96xf32>
    %206 = vector.broadcast %169 : vector<1x96xf32> to vector<16x96xf32>
    %207 = arith.addf %205, %206 : vector<16x96xf32>
    %208 = vector.extract_strided_slice %207 {offsets = [0, 0], sizes = [16, 32], strides = [1, 1]} : vector<16x96xf32> to vector<16x32xf32>
    %209 = vector.extract_strided_slice %207 {offsets = [0, 32], sizes = [16, 32], strides = [1, 1]} : vector<16x96xf32> to vector<16x32xf32>
    %210 = vector.extract_strided_slice %207 {offsets = [0, 64], sizes = [16, 32], strides = [1, 1]} : vector<16x96xf32> to vector<16x32xf32>
    %211 = vector.extract_strided_slice %208 {offsets = [0, 0], sizes = [16, 8], strides = [1, 1]} : vector<16x32xf32> to vector<16x8xf32>
    %cst_104 = arith.constant 0.353553385 : f32
    %212 = vector.broadcast %cst_104 : f32 to vector<16x8xf32>
    %213 = arith.mulf %211, %212 : vector<16x8xf32>
    %214 = vector.extract_strided_slice %208 {offsets = [0, 8], sizes = [16, 8], strides = [1, 1]} : vector<16x32xf32> to vector<16x8xf32>
    %cst_105 = arith.constant 0.353553385 : f32
    %215 = vector.broadcast %cst_105 : f32 to vector<16x8xf32>
    %216 = arith.mulf %214, %215 : vector<16x8xf32>
    %217 = vector.extract_strided_slice %208 {offsets = [0, 16], sizes = [16, 8], strides = [1, 1]} : vector<16x32xf32> to vector<16x8xf32>
    %cst_106 = arith.constant 0.353553385 : f32
    %218 = vector.broadcast %cst_106 : f32 to vector<16x8xf32>
    %219 = arith.mulf %217, %218 : vector<16x8xf32>
    %220 = vector.extract_strided_slice %208 {offsets = [0, 24], sizes = [16, 8], strides = [1, 1]} : vector<16x32xf32> to vector<16x8xf32>
    %cst_107 = arith.constant 0.353553385 : f32
    %221 = vector.broadcast %cst_107 : f32 to vector<16x8xf32>
    %222 = arith.mulf %220, %221 : vector<16x8xf32>
    %223 = vector.shape_cast %213 : vector<16x8xf32> to vector<1x16x8xf32>
    %224 = vector.shape_cast %216 : vector<16x8xf32> to vector<1x16x8xf32>
    %225 = vector.shape_cast %219 : vector<16x8xf32> to vector<1x16x8xf32>
    %226 = vector.shape_cast %222 : vector<16x8xf32> to vector<1x16x8xf32>
    %227 = tpu.concatenate %223, %224, %225, %226 in 0 : vector<1x16x8xf32>, vector<1x16x8xf32>, vector<1x16x8xf32>, vector<1x16x8xf32> -> vector<4x16x8xf32>
    %228 = vector.extract_strided_slice %209 {offsets = [0, 0], sizes = [16, 8], strides = [1, 1]} : vector<16x32xf32> to vector<16x8xf32>
    %229 = vector.extract_strided_slice %209 {offsets = [0, 8], sizes = [16, 8], strides = [1, 1]} : vector<16x32xf32> to vector<16x8xf32>
    %230 = vector.extract_strided_slice %209 {offsets = [0, 16], sizes = [16, 8], strides = [1, 1]} : vector<16x32xf32> to vector<16x8xf32>
    %231 = vector.extract_strided_slice %209 {offsets = [0, 24], sizes = [16, 8], strides = [1, 1]} : vector<16x32xf32> to vector<16x8xf32>
    %232 = vector.shape_cast %228 : vector<16x8xf32> to vector<1x16x8xf32>
    %233 = vector.shape_cast %229 : vector<16x8xf32> to vector<1x16x8xf32>
    %234 = vector.shape_cast %230 : vector<16x8xf32> to vector<1x16x8xf32>
    %235 = vector.shape_cast %231 : vector<16x8xf32> to vector<1x16x8xf32>
    %236 = tpu.concatenate %232, %233, %234, %235 in 0 : vector<1x16x8xf32>, vector<1x16x8xf32>, vector<1x16x8xf32>, vector<1x16x8xf32> -> vector<4x16x8xf32>
    %237 = vector.extract_strided_slice %210 {offsets = [0, 0], sizes = [16, 8], strides = [1, 1]} : vector<16x32xf32> to vector<16x8xf32>
    %238 = vector.extract_strided_slice %210 {offsets = [0, 8], sizes = [16, 8], strides = [1, 1]} : vector<16x32xf32> to vector<16x8xf32>
    %239 = vector.extract_strided_slice %210 {offsets = [0, 16], sizes = [16, 8], strides = [1, 1]} : vector<16x32xf32> to vector<16x8xf32>
    %240 = vector.extract_strided_slice %210 {offsets = [0, 24], sizes = [16, 8], strides = [1, 1]} : vector<16x32xf32> to vector<16x8xf32>
    %241 = vector.shape_cast %237 : vector<16x8xf32> to vector<1x16x8xf32>
    %242 = vector.shape_cast %238 : vector<16x8xf32> to vector<1x16x8xf32>
    %243 = vector.shape_cast %239 : vector<16x8xf32> to vector<1x16x8xf32>
    %244 = vector.shape_cast %240 : vector<16x8xf32> to vector<1x16x8xf32>
    %245 = tpu.concatenate %241, %242, %243, %244 in 0 : vector<1x16x8xf32>, vector<1x16x8xf32>, vector<1x16x8xf32>, vector<1x16x8xf32> -> vector<4x16x8xf32>
    "tpu.trace_start"() <{level = 10 : i32, message = "hnd,hmd->hnm"}> : () -> ()
    %cst_108 = arith.constant dense<0.000000e+00> : vector<4x16x16xf32>
    %246 = tpu.matmul %227, %236, %cst_108 {dimension_numbers = #tpu.dot_dimension_numbers<[2], [2], [1], [1], [0, 0, 0, 1, 1, 1], [0], [0]>} : vector<4x16x8xf32>, vector<4x16x8xf32>, vector<4x16x16xf32> -> vector<4x16x16xf32>
    "tpu.trace_stop"() : () -> ()
    %cst_109 = arith.constant dense<0xFF800000> : vector<4x16xf32>
    %247 = vector.multi_reduction <maximumf>, %246, %cst_109 [2] : vector<4x16x16xf32> to vector<4x16xf32>
    %248 = vector.shape_cast %247 : vector<4x16xf32> to vector<4x16x1xf32>
    %249 = vector.broadcast %248 : vector<4x16x1xf32> to vector<4x16x16xf32>
    %250 = arith.subf %246, %249 : vector<4x16x16xf32>
    %251 = math.exp %250 : vector<4x16x16xf32>
    %cst_110 = arith.constant dense<0.000000e+00> : vector<4x16xf32>
    %252 = vector.multi_reduction <add>, %251, %cst_110 [2] : vector<4x16x16xf32> to vector<4x16xf32>
    %253 = vector.shape_cast %252 : vector<4x16xf32> to vector<4x16x1xf32>
    %254 = tpu.reciprocal %253 {approx = true} : vector<4x16x1xf32> -> vector<4x16x1xf32>
    %255 = vector.broadcast %254 : vector<4x16x1xf32> to vector<4x16x16xf32>
    %256 = arith.mulf %251, %255 : vector<4x16x16xf32>
    "tpu.trace_start"() <{level = 10 : i32, message = "hnm,hmd->hnd"}> : () -> ()
    %cst_111 = arith.constant dense<0.000000e+00> : vector<4x16x8xf32>
    %257 = tpu.matmul %256, %245, %cst_111 {dimension_numbers = #tpu.dot_dimension_numbers<[2], [1], [1], [2], [0, 0, 0, 1, 1, 2], [0], [0]>} : vector<4x16x16xf32>, vector<4x16x8xf32>, vector<4x16x8xf32> -> vector<4x16x8xf32>
    "tpu.trace_stop"() : () -> ()
    %258 = vector.extract_strided_slice %257 {offsets = [0, 0, 0], sizes = [1, 16, 8], strides = [1, 1, 1]} : vector<4x16x8xf32> to vector<1x16x8xf32>
    %259 = vector.shape_cast %258 : vector<1x16x8xf32> to vector<16x8xf32>
    %260 = vector.extract_strided_slice %257 {offsets = [1, 0, 0], sizes = [1, 16, 8], strides = [1, 1, 1]} : vector<4x16x8xf32> to vector<1x16x8xf32>
    %261 = vector.shape_cast %260 : vector<1x16x8xf32> to vector<16x8xf32>
    %262 = vector.extract_strided_slice %257 {offsets = [2, 0, 0], sizes = [1, 16, 8], strides = [1, 1, 1]} : vector<4x16x8xf32> to vector<1x16x8xf32>
    %263 = vector.shape_cast %262 : vector<1x16x8xf32> to vector<16x8xf32>
    %264 = vector.extract_strided_slice %257 {offsets = [3, 0, 0], sizes = [1, 16, 8], strides = [1, 1, 1]} : vector<4x16x8xf32> to vector<1x16x8xf32>
    %265 = vector.shape_cast %264 : vector<1x16x8xf32> to vector<16x8xf32>
    %266 = tpu.concatenate %259, %261, %263, %265 in 1 : vector<16x8xf32>, vector<16x8xf32>, vector<16x8xf32>, vector<16x8xf32> -> vector<16x32xf32>
    %cst_112 = arith.constant dense<0.000000e+00> : vector<16x32xf32>
    %267 = tpu.matmul %266, %171, %cst_112 {dimension_numbers = #tpu.dot_dimension_numbers<[1], [0], [0], [1], [0, 0, 1, 1], [], []>} : vector<16x32xf32>, vector<32x32xf32>, vector<16x32xf32> -> vector<16x32xf32>
    %268 = arith.addf %161, %267 : vector<16x32xf32>
    %269 = vector.broadcast %173 : vector<1x32xf32> to vector<16x32xf32>
    %270 = arith.addf %268, %269 : vector<16x32xf32>
    %271 = vector.extract_strided_slice %163 {offsets = [1, 0], sizes = [1, 32], strides = [1, 1]} : vector<2x32xf32> to vector<1x32xf32>
    %272 = vector.extract_strided_slice %165 {offsets = [1, 0], sizes = [1, 32], strides = [1, 1]} : vector<2x32xf32> to vector<1x32xf32>
    %cst_113 = arith.constant dense<0.000000e+00> : vector<16xf32>
    %273 = vector.multi_reduction <add>, %270, %cst_113 [1] : vector<16x32xf32> to vector<16xf32>
    %274 = vector.shape_cast %273 : vector<16xf32> to vector<16x1xf32>
    %cst_114 = arith.constant 3.200000e+01 : f32
    %275 = vector.broadcast %cst_114 : f32 to vector<16x1xf32>
    %276 = arith.divf %274, %275 : vector<16x1xf32>
    %277 = vector.broadcast %276 : vector<16x1xf32> to vector<16x32xf32>
    %278 = arith.subf %270, %277 : vector<16x32xf32>
    %279 = arith.mulf %278, %278 : vector<16x32xf32>
    %cst_115 = arith.constant dense<0.000000e+00> : vector<16xf32>
    %280 = vector.multi_reduction <add>, %279, %cst_115 [1] : vector<16x32xf32> to vector<16xf32>
    %281 = vector.shape_cast %280 : vector<16xf32> to vector<16x1xf32>
    %cst_116 = arith.constant 0.0322580636 : f32
    %282 = vector.broadcast %cst_116 : f32 to vector<16x1xf32>
    %283 = arith.mulf %281, %282 : vector<16x1xf32>
    %284 = math.sqrt %283 : vector<16x1xf32>
    %cst_117 = arith.constant 9.99999997E-7 : f32
    %285 = vector.broadcast %cst_117 : f32 to vector<16x1xf32>
    %286 = arith.addf %284, %285 : vector<16x1xf32>
    %287 = tpu.reciprocal %286 {approx = true} : vector<16x1xf32> -> vector<16x1xf32>
    %288 = vector.broadcast %271 : vector<1x32xf32> to vector<16x32xf32>
    %289 = arith.mulf %288, %278 : vector<16x32xf32>
    %290 = vector.broadcast %287 : vector<16x1xf32> to vector<16x32xf32>
    %291 = arith.mulf %289, %290 : vector<16x32xf32>
    %292 = vector.broadcast %272 : vector<1x32xf32> to vector<16x32xf32>
    %293 = arith.addf %291, %292 : vector<16x32xf32>
    %cst_118 = arith.constant dense<0.000000e+00> : vector<16x32xf32>
    %294 = tpu.matmul %1, %293, %cst_118 {dimension_numbers = #tpu.dot_dimension_numbers<[1], [0], [0], [1], [0, 0, 1, 1], [], []>} : vector<16x16xf32>, vector<16x32xf32>, vector<16x32xf32> -> vector<16x32xf32>
    %cst_119 = arith.constant dense<0.000000e+00> : vector<16x64xf32>
    %295 = tpu.matmul %294, %175, %cst_119 {dimension_numbers = #tpu.dot_dimension_numbers<[1], [0], [0], [1], [0, 0, 1, 1], [], []>} : vector<16x32xf32>, vector<32x64xf32>, vector<16x64xf32> -> vector<16x64xf32>
    %296 = vector.broadcast %177 : vector<1x64xf32> to vector<16x64xf32>
    %297 = arith.addf %295, %296 : vector<16x64xf32>
    %cst_120 = arith.constant 0.000000e+00 : f32
    %298 = vector.broadcast %cst_120 : f32 to vector<16x64xf32>
    %299 = arith.maximumf %297, %298 : vector<16x64xf32>
    %cst_121 = arith.constant dense<0.000000e+00> : vector<16x64xf32>
    %300 = tpu.matmul %1, %299, %cst_121 {dimension_numbers = #tpu.dot_dimension_numbers<[1], [0], [0], [1], [0, 0, 1, 1], [], []>} : vector<16x16xf32>, vector<16x64xf32>, vector<16x64xf32> -> vector<16x64xf32>
    %cst_122 = arith.constant dense<0.000000e+00> : vector<16x32xf32>
    %301 = tpu.matmul %300, %179, %cst_122 {dimension_numbers = #tpu.dot_dimension_numbers<[1], [0], [0], [1], [0, 0, 1, 1], [], []>} : vector<16x64xf32>, vector<64x32xf32>, vector<16x32xf32> -> vector<16x32xf32>
    %302 = vector.broadcast %181 : vector<1x32xf32> to vector<16x32xf32>
    %303 = arith.addf %301, %302 : vector<16x32xf32>
    %304 = arith.addf %270, %303 : vector<16x32xf32>
    %c2 = arith.constant 2 : index
    %c0_123 = arith.constant 0 : index
    %c0_124 = arith.constant 0 : index
    %305 = vector.load %arg7[%c2, %c0_123, %c0_124] : memref<5x2x32xf32, #tpu.memory_space<vmem>>, vector<1x2x32xf32>
    %306 = vector.shape_cast %305 : vector<1x2x32xf32> to vector<2x32xf32>
    %c2_125 = arith.constant 2 : index
    %c0_126 = arith.constant 0 : index
    %c0_127 = arith.constant 0 : index
    %307 = vector.load %arg8[%c2_125, %c0_126, %c0_127] : memref<5x2x32xf32, #tpu.memory_space<vmem>>, vector<1x2x32xf32>
    %308 = vector.shape_cast %307 : vector<1x2x32xf32> to vector<2x32xf32>
    %c2_128 = arith.constant 2 : index
    %c0_129 = arith.constant 0 : index
    %c0_130 = arith.constant 0 : index
    %309 = vector.load %arg9[%c2_128, %c0_129, %c0_130] : memref<5x32x96xf32, #tpu.memory_space<vmem>>, vector<1x32x96xf32>
    %310 = vector.shape_cast %309 : vector<1x32x96xf32> to vector<32x96xf32>
    %c2_131 = arith.constant 2 : index
    %c0_132 = arith.constant 0 : index
    %c0_133 = arith.constant 0 : index
    %311 = vector.load %arg10[%c2_131, %c0_132, %c0_133] : memref<5x1x96xf32, #tpu.memory_space<vmem>>, vector<1x1x96xf32>
    %312 = vector.shape_cast %311 : vector<1x1x96xf32> to vector<1x96xf32>
    %c2_134 = arith.constant 2 : index
    %c0_135 = arith.constant 0 : index
    %c0_136 = arith.constant 0 : index
    %313 = vector.load %arg11[%c2_134, %c0_135, %c0_136] : memref<5x32x32xf32, #tpu.memory_space<vmem>>, vector<1x32x32xf32>
    %314 = vector.shape_cast %313 : vector<1x32x32xf32> to vector<32x32xf32>
    %c2_137 = arith.constant 2 : index
    %c0_138 = arith.constant 0 : index
    %c0_139 = arith.constant 0 : index
    %315 = vector.load %arg12[%c2_137, %c0_138, %c0_139] : memref<5x1x32xf32, #tpu.memory_space<vmem>>, vector<1x1x32xf32>
    %316 = vector.shape_cast %315 : vector<1x1x32xf32> to vector<1x32xf32>
    %c2_140 = arith.constant 2 : index
    %c0_141 = arith.constant 0 : index
    %c0_142 = arith.constant 0 : index
    %317 = vector.load %arg13[%c2_140, %c0_141, %c0_142] : memref<5x32x64xf32, #tpu.memory_space<vmem>>, vector<1x32x64xf32>
    %318 = vector.shape_cast %317 : vector<1x32x64xf32> to vector<32x64xf32>
    %c2_143 = arith.constant 2 : index
    %c0_144 = arith.constant 0 : index
    %c0_145 = arith.constant 0 : index
    %319 = vector.load %arg14[%c2_143, %c0_144, %c0_145] : memref<5x1x64xf32, #tpu.memory_space<vmem>>, vector<1x1x64xf32>
    %320 = vector.shape_cast %319 : vector<1x1x64xf32> to vector<1x64xf32>
    %c2_146 = arith.constant 2 : index
    %c0_147 = arith.constant 0 : index
    %c0_148 = arith.constant 0 : index
    %321 = vector.load %arg15[%c2_146, %c0_147, %c0_148] : memref<5x64x32xf32, #tpu.memory_space<vmem>>, vector<1x64x32xf32>
    %322 = vector.shape_cast %321 : vector<1x64x32xf32> to vector<64x32xf32>
    %c2_149 = arith.constant 2 : index
    %c0_150 = arith.constant 0 : index
    %c0_151 = arith.constant 0 : index
    %323 = vector.load %arg16[%c2_149, %c0_150, %c0_151] : memref<5x1x32xf32, #tpu.memory_space<vmem>>, vector<1x1x32xf32>
    %324 = vector.shape_cast %323 : vector<1x1x32xf32> to vector<1x32xf32>
    %325 = vector.extract_strided_slice %306 {offsets = [0, 0], sizes = [1, 32], strides = [1, 1]} : vector<2x32xf32> to vector<1x32xf32>
    %326 = vector.extract_strided_slice %308 {offsets = [0, 0], sizes = [1, 32], strides = [1, 1]} : vector<2x32xf32> to vector<1x32xf32>
    %cst_152 = arith.constant dense<0.000000e+00> : vector<16xf32>
    %327 = vector.multi_reduction <add>, %304, %cst_152 [1] : vector<16x32xf32> to vector<16xf32>
    %328 = vector.shape_cast %327 : vector<16xf32> to vector<16x1xf32>
    %cst_153 = arith.constant 3.200000e+01 : f32
    %329 = vector.broadcast %cst_153 : f32 to vector<16x1xf32>
    %330 = arith.divf %328, %329 : vector<16x1xf32>
    %331 = vector.broadcast %330 : vector<16x1xf32> to vector<16x32xf32>
    %332 = arith.subf %304, %331 : vector<16x32xf32>
    %333 = arith.mulf %332, %332 : vector<16x32xf32>
    %cst_154 = arith.constant dense<0.000000e+00> : vector<16xf32>
    %334 = vector.multi_reduction <add>, %333, %cst_154 [1] : vector<16x32xf32> to vector<16xf32>
    %335 = vector.shape_cast %334 : vector<16xf32> to vector<16x1xf32>
    %cst_155 = arith.constant 0.0322580636 : f32
    %336 = vector.broadcast %cst_155 : f32 to vector<16x1xf32>
    %337 = arith.mulf %335, %336 : vector<16x1xf32>
    %338 = math.sqrt %337 : vector<16x1xf32>
    %cst_156 = arith.constant 9.99999997E-7 : f32
    %339 = vector.broadcast %cst_156 : f32 to vector<16x1xf32>
    %340 = arith.addf %338, %339 : vector<16x1xf32>
    %341 = tpu.reciprocal %340 {approx = true} : vector<16x1xf32> -> vector<16x1xf32>
    %342 = vector.broadcast %325 : vector<1x32xf32> to vector<16x32xf32>
    %343 = arith.mulf %342, %332 : vector<16x32xf32>
    %344 = vector.broadcast %341 : vector<16x1xf32> to vector<16x32xf32>
    %345 = arith.mulf %343, %344 : vector<16x32xf32>
    %346 = vector.broadcast %326 : vector<1x32xf32> to vector<16x32xf32>
    %347 = arith.addf %345, %346 : vector<16x32xf32>
    %cst_157 = arith.constant dense<0.000000e+00> : vector<16x96xf32>
    %348 = tpu.matmul %347, %310, %cst_157 {dimension_numbers = #tpu.dot_dimension_numbers<[1], [0], [0], [1], [0, 0, 1, 1], [], []>} : vector<16x32xf32>, vector<32x96xf32>, vector<16x96xf32> -> vector<16x96xf32>
    %349 = vector.broadcast %312 : vector<1x96xf32> to vector<16x96xf32>
    %350 = arith.addf %348, %349 : vector<16x96xf32>
    %351 = vector.extract_strided_slice %350 {offsets = [0, 0], sizes = [16, 32], strides = [1, 1]} : vector<16x96xf32> to vector<16x32xf32>
    %352 = vector.extract_strided_slice %350 {offsets = [0, 32], sizes = [16, 32], strides = [1, 1]} : vector<16x96xf32> to vector<16x32xf32>
    %353 = vector.extract_strided_slice %350 {offsets = [0, 64], sizes = [16, 32], strides = [1, 1]} : vector<16x96xf32> to vector<16x32xf32>
    %354 = vector.extract_strided_slice %351 {offsets = [0, 0], sizes = [16, 8], strides = [1, 1]} : vector<16x32xf32> to vector<16x8xf32>
    %cst_158 = arith.constant 0.353553385 : f32
    %355 = vector.broadcast %cst_158 : f32 to vector<16x8xf32>
    %356 = arith.mulf %354, %355 : vector<16x8xf32>
    %357 = vector.extract_strided_slice %351 {offsets = [0, 8], sizes = [16, 8], strides = [1, 1]} : vector<16x32xf32> to vector<16x8xf32>
    %cst_159 = arith.constant 0.353553385 : f32
    %358 = vector.broadcast %cst_159 : f32 to vector<16x8xf32>
    %359 = arith.mulf %357, %358 : vector<16x8xf32>
    %360 = vector.extract_strided_slice %351 {offsets = [0, 16], sizes = [16, 8], strides = [1, 1]} : vector<16x32xf32> to vector<16x8xf32>
    %cst_160 = arith.constant 0.353553385 : f32
    %361 = vector.broadcast %cst_160 : f32 to vector<16x8xf32>
    %362 = arith.mulf %360, %361 : vector<16x8xf32>
    %363 = vector.extract_strided_slice %351 {offsets = [0, 24], sizes = [16, 8], strides = [1, 1]} : vector<16x32xf32> to vector<16x8xf32>
    %cst_161 = arith.constant 0.353553385 : f32
    %364 = vector.broadcast %cst_161 : f32 to vector<16x8xf32>
    %365 = arith.mulf %363, %364 : vector<16x8xf32>
    %366 = vector.shape_cast %356 : vector<16x8xf32> to vector<1x16x8xf32>
    %367 = vector.shape_cast %359 : vector<16x8xf32> to vector<1x16x8xf32>
    %368 = vector.shape_cast %362 : vector<16x8xf32> to vector<1x16x8xf32>
    %369 = vector.shape_cast %365 : vector<16x8xf32> to vector<1x16x8xf32>
    %370 = tpu.concatenate %366, %367, %368, %369 in 0 : vector<1x16x8xf32>, vector<1x16x8xf32>, vector<1x16x8xf32>, vector<1x16x8xf32> -> vector<4x16x8xf32>
    %371 = vector.extract_strided_slice %352 {offsets = [0, 0], sizes = [16, 8], strides = [1, 1]} : vector<16x32xf32> to vector<16x8xf32>
    %372 = vector.extract_strided_slice %352 {offsets = [0, 8], sizes = [16, 8], strides = [1, 1]} : vector<16x32xf32> to vector<16x8xf32>
    %373 = vector.extract_strided_slice %352 {offsets = [0, 16], sizes = [16, 8], strides = [1, 1]} : vector<16x32xf32> to vector<16x8xf32>
    %374 = vector.extract_strided_slice %352 {offsets = [0, 24], sizes = [16, 8], strides = [1, 1]} : vector<16x32xf32> to vector<16x8xf32>
    %375 = vector.shape_cast %371 : vector<16x8xf32> to vector<1x16x8xf32>
    %376 = vector.shape_cast %372 : vector<16x8xf32> to vector<1x16x8xf32>
    %377 = vector.shape_cast %373 : vector<16x8xf32> to vector<1x16x8xf32>
    %378 = vector.shape_cast %374 : vector<16x8xf32> to vector<1x16x8xf32>
    %379 = tpu.concatenate %375, %376, %377, %378 in 0 : vector<1x16x8xf32>, vector<1x16x8xf32>, vector<1x16x8xf32>, vector<1x16x8xf32> -> vector<4x16x8xf32>
    %380 = vector.extract_strided_slice %353 {offsets = [0, 0], sizes = [16, 8], strides = [1, 1]} : vector<16x32xf32> to vector<16x8xf32>
    %381 = vector.extract_strided_slice %353 {offsets = [0, 8], sizes = [16, 8], strides = [1, 1]} : vector<16x32xf32> to vector<16x8xf32>
    %382 = vector.extract_strided_slice %353 {offsets = [0, 16], sizes = [16, 8], strides = [1, 1]} : vector<16x32xf32> to vector<16x8xf32>
    %383 = vector.extract_strided_slice %353 {offsets = [0, 24], sizes = [16, 8], strides = [1, 1]} : vector<16x32xf32> to vector<16x8xf32>
    %384 = vector.shape_cast %380 : vector<16x8xf32> to vector<1x16x8xf32>
    %385 = vector.shape_cast %381 : vector<16x8xf32> to vector<1x16x8xf32>
    %386 = vector.shape_cast %382 : vector<16x8xf32> to vector<1x16x8xf32>
    %387 = vector.shape_cast %383 : vector<16x8xf32> to vector<1x16x8xf32>
    %388 = tpu.concatenate %384, %385, %386, %387 in 0 : vector<1x16x8xf32>, vector<1x16x8xf32>, vector<1x16x8xf32>, vector<1x16x8xf32> -> vector<4x16x8xf32>
    "tpu.trace_start"() <{level = 10 : i32, message = "hnd,hmd->hnm"}> : () -> ()
    %cst_162 = arith.constant dense<0.000000e+00> : vector<4x16x16xf32>
    %389 = tpu.matmul %370, %379, %cst_162 {dimension_numbers = #tpu.dot_dimension_numbers<[2], [2], [1], [1], [0, 0, 0, 1, 1, 1], [0], [0]>} : vector<4x16x8xf32>, vector<4x16x8xf32>, vector<4x16x16xf32> -> vector<4x16x16xf32>
    "tpu.trace_stop"() : () -> ()
    %cst_163 = arith.constant dense<0xFF800000> : vector<4x16xf32>
    %390 = vector.multi_reduction <maximumf>, %389, %cst_163 [2] : vector<4x16x16xf32> to vector<4x16xf32>
    %391 = vector.shape_cast %390 : vector<4x16xf32> to vector<4x16x1xf32>
    %392 = vector.broadcast %391 : vector<4x16x1xf32> to vector<4x16x16xf32>
    %393 = arith.subf %389, %392 : vector<4x16x16xf32>
    %394 = math.exp %393 : vector<4x16x16xf32>
    %cst_164 = arith.constant dense<0.000000e+00> : vector<4x16xf32>
    %395 = vector.multi_reduction <add>, %394, %cst_164 [2] : vector<4x16x16xf32> to vector<4x16xf32>
    %396 = vector.shape_cast %395 : vector<4x16xf32> to vector<4x16x1xf32>
    %397 = tpu.reciprocal %396 {approx = true} : vector<4x16x1xf32> -> vector<4x16x1xf32>
    %398 = vector.broadcast %397 : vector<4x16x1xf32> to vector<4x16x16xf32>
    %399 = arith.mulf %394, %398 : vector<4x16x16xf32>
    "tpu.trace_start"() <{level = 10 : i32, message = "hnm,hmd->hnd"}> : () -> ()
    %cst_165 = arith.constant dense<0.000000e+00> : vector<4x16x8xf32>
    %400 = tpu.matmul %399, %388, %cst_165 {dimension_numbers = #tpu.dot_dimension_numbers<[2], [1], [1], [2], [0, 0, 0, 1, 1, 2], [0], [0]>} : vector<4x16x16xf32>, vector<4x16x8xf32>, vector<4x16x8xf32> -> vector<4x16x8xf32>
    "tpu.trace_stop"() : () -> ()
    %401 = vector.extract_strided_slice %400 {offsets = [0, 0, 0], sizes = [1, 16, 8], strides = [1, 1, 1]} : vector<4x16x8xf32> to vector<1x16x8xf32>
    %402 = vector.shape_cast %401 : vector<1x16x8xf32> to vector<16x8xf32>
    %403 = vector.extract_strided_slice %400 {offsets = [1, 0, 0], sizes = [1, 16, 8], strides = [1, 1, 1]} : vector<4x16x8xf32> to vector<1x16x8xf32>
    %404 = vector.shape_cast %403 : vector<1x16x8xf32> to vector<16x8xf32>
    %405 = vector.extract_strided_slice %400 {offsets = [2, 0, 0], sizes = [1, 16, 8], strides = [1, 1, 1]} : vector<4x16x8xf32> to vector<1x16x8xf32>
    %406 = vector.shape_cast %405 : vector<1x16x8xf32> to vector<16x8xf32>
    %407 = vector.extract_strided_slice %400 {offsets = [3, 0, 0], sizes = [1, 16, 8], strides = [1, 1, 1]} : vector<4x16x8xf32> to vector<1x16x8xf32>
    %408 = vector.shape_cast %407 : vector<1x16x8xf32> to vector<16x8xf32>
    %409 = tpu.concatenate %402, %404, %406, %408 in 1 : vector<16x8xf32>, vector<16x8xf32>, vector<16x8xf32>, vector<16x8xf32> -> vector<16x32xf32>
    %cst_166 = arith.constant dense<0.000000e+00> : vector<16x32xf32>
    %410 = tpu.matmul %409, %314, %cst_166 {dimension_numbers = #tpu.dot_dimension_numbers<[1], [0], [0], [1], [0, 0, 1, 1], [], []>} : vector<16x32xf32>, vector<32x32xf32>, vector<16x32xf32> -> vector<16x32xf32>
    %411 = arith.addf %304, %410 : vector<16x32xf32>
    %412 = vector.broadcast %316 : vector<1x32xf32> to vector<16x32xf32>
    %413 = arith.addf %411, %412 : vector<16x32xf32>
    %414 = vector.extract_strided_slice %306 {offsets = [1, 0], sizes = [1, 32], strides = [1, 1]} : vector<2x32xf32> to vector<1x32xf32>
    %415 = vector.extract_strided_slice %308 {offsets = [1, 0], sizes = [1, 32], strides = [1, 1]} : vector<2x32xf32> to vector<1x32xf32>
    %cst_167 = arith.constant dense<0.000000e+00> : vector<16xf32>
    %416 = vector.multi_reduction <add>, %413, %cst_167 [1] : vector<16x32xf32> to vector<16xf32>
    %417 = vector.shape_cast %416 : vector<16xf32> to vector<16x1xf32>
    %cst_168 = arith.constant 3.200000e+01 : f32
    %418 = vector.broadcast %cst_168 : f32 to vector<16x1xf32>
    %419 = arith.divf %417, %418 : vector<16x1xf32>
    %420 = vector.broadcast %419 : vector<16x1xf32> to vector<16x32xf32>
    %421 = arith.subf %413, %420 : vector<16x32xf32>
    %422 = arith.mulf %421, %421 : vector<16x32xf32>
    %cst_169 = arith.constant dense<0.000000e+00> : vector<16xf32>
    %423 = vector.multi_reduction <add>, %422, %cst_169 [1] : vector<16x32xf32> to vector<16xf32>
    %424 = vector.shape_cast %423 : vector<16xf32> to vector<16x1xf32>
    %cst_170 = arith.constant 0.0322580636 : f32
    %425 = vector.broadcast %cst_170 : f32 to vector<16x1xf32>
    %426 = arith.mulf %424, %425 : vector<16x1xf32>
    %427 = math.sqrt %426 : vector<16x1xf32>
    %cst_171 = arith.constant 9.99999997E-7 : f32
    %428 = vector.broadcast %cst_171 : f32 to vector<16x1xf32>
    %429 = arith.addf %427, %428 : vector<16x1xf32>
    %430 = tpu.reciprocal %429 {approx = true} : vector<16x1xf32> -> vector<16x1xf32>
    %431 = vector.broadcast %414 : vector<1x32xf32> to vector<16x32xf32>
    %432 = arith.mulf %431, %421 : vector<16x32xf32>
    %433 = vector.broadcast %430 : vector<16x1xf32> to vector<16x32xf32>
    %434 = arith.mulf %432, %433 : vector<16x32xf32>
    %435 = vector.broadcast %415 : vector<1x32xf32> to vector<16x32xf32>
    %436 = arith.addf %434, %435 : vector<16x32xf32>
    %cst_172 = arith.constant dense<0.000000e+00> : vector<16x32xf32>
    %437 = tpu.matmul %1, %436, %cst_172 {dimension_numbers = #tpu.dot_dimension_numbers<[1], [0], [0], [1], [0, 0, 1, 1], [], []>} : vector<16x16xf32>, vector<16x32xf32>, vector<16x32xf32> -> vector<16x32xf32>
    %cst_173 = arith.constant dense<0.000000e+00> : vector<16x64xf32>
    %438 = tpu.matmul %437, %318, %cst_173 {dimension_numbers = #tpu.dot_dimension_numbers<[1], [0], [0], [1], [0, 0, 1, 1], [], []>} : vector<16x32xf32>, vector<32x64xf32>, vector<16x64xf32> -> vector<16x64xf32>
    %439 = vector.broadcast %320 : vector<1x64xf32> to vector<16x64xf32>
    %440 = arith.addf %438, %439 : vector<16x64xf32>
    %cst_174 = arith.constant 0.000000e+00 : f32
    %441 = vector.broadcast %cst_174 : f32 to vector<16x64xf32>
    %442 = arith.maximumf %440, %441 : vector<16x64xf32>
    %cst_175 = arith.constant dense<0.000000e+00> : vector<16x64xf32>
    %443 = tpu.matmul %1, %442, %cst_175 {dimension_numbers = #tpu.dot_dimension_numbers<[1], [0], [0], [1], [0, 0, 1, 1], [], []>} : vector<16x16xf32>, vector<16x64xf32>, vector<16x64xf32> -> vector<16x64xf32>
    %cst_176 = arith.constant dense<0.000000e+00> : vector<16x32xf32>
    %444 = tpu.matmul %443, %322, %cst_176 {dimension_numbers = #tpu.dot_dimension_numbers<[1], [0], [0], [1], [0, 0, 1, 1], [], []>} : vector<16x64xf32>, vector<64x32xf32>, vector<16x32xf32> -> vector<16x32xf32>
    %445 = vector.broadcast %324 : vector<1x32xf32> to vector<16x32xf32>
    %446 = arith.addf %444, %445 : vector<16x32xf32>
    %447 = arith.addf %413, %446 : vector<16x32xf32>
    %c3 = arith.constant 3 : index
    %c0_177 = arith.constant 0 : index
    %c0_178 = arith.constant 0 : index
    %448 = vector.load %arg7[%c3, %c0_177, %c0_178] : memref<5x2x32xf32, #tpu.memory_space<vmem>>, vector<1x2x32xf32>
    %449 = vector.shape_cast %448 : vector<1x2x32xf32> to vector<2x32xf32>
    %c3_179 = arith.constant 3 : index
    %c0_180 = arith.constant 0 : index
    %c0_181 = arith.constant 0 : index
    %450 = vector.load %arg8[%c3_179, %c0_180, %c0_181] : memref<5x2x32xf32, #tpu.memory_space<vmem>>, vector<1x2x32xf32>
    %451 = vector.shape_cast %450 : vector<1x2x32xf32> to vector<2x32xf32>
    %c3_182 = arith.constant 3 : index
    %c0_183 = arith.constant 0 : index
    %c0_184 = arith.constant 0 : index
    %452 = vector.load %arg9[%c3_182, %c0_183, %c0_184] : memref<5x32x96xf32, #tpu.memory_space<vmem>>, vector<1x32x96xf32>
    %453 = vector.shape_cast %452 : vector<1x32x96xf32> to vector<32x96xf32>
    %c3_185 = arith.constant 3 : index
    %c0_186 = arith.constant 0 : index
    %c0_187 = arith.constant 0 : index
    %454 = vector.load %arg10[%c3_185, %c0_186, %c0_187] : memref<5x1x96xf32, #tpu.memory_space<vmem>>, vector<1x1x96xf32>
    %455 = vector.shape_cast %454 : vector<1x1x96xf32> to vector<1x96xf32>
    %c3_188 = arith.constant 3 : index
    %c0_189 = arith.constant 0 : index
    %c0_190 = arith.constant 0 : index
    %456 = vector.load %arg11[%c3_188, %c0_189, %c0_190] : memref<5x32x32xf32, #tpu.memory_space<vmem>>, vector<1x32x32xf32>
    %457 = vector.shape_cast %456 : vector<1x32x32xf32> to vector<32x32xf32>
    %c3_191 = arith.constant 3 : index
    %c0_192 = arith.constant 0 : index
    %c0_193 = arith.constant 0 : index
    %458 = vector.load %arg12[%c3_191, %c0_192, %c0_193] : memref<5x1x32xf32, #tpu.memory_space<vmem>>, vector<1x1x32xf32>
    %459 = vector.shape_cast %458 : vector<1x1x32xf32> to vector<1x32xf32>
    %c3_194 = arith.constant 3 : index
    %c0_195 = arith.constant 0 : index
    %c0_196 = arith.constant 0 : index
    %460 = vector.load %arg13[%c3_194, %c0_195, %c0_196] : memref<5x32x64xf32, #tpu.memory_space<vmem>>, vector<1x32x64xf32>
    %461 = vector.shape_cast %460 : vector<1x32x64xf32> to vector<32x64xf32>
    %c3_197 = arith.constant 3 : index
    %c0_198 = arith.constant 0 : index
    %c0_199 = arith.constant 0 : index
    %462 = vector.load %arg14[%c3_197, %c0_198, %c0_199] : memref<5x1x64xf32, #tpu.memory_space<vmem>>, vector<1x1x64xf32>
    %463 = vector.shape_cast %462 : vector<1x1x64xf32> to vector<1x64xf32>
    %c3_200 = arith.constant 3 : index
    %c0_201 = arith.constant 0 : index
    %c0_202 = arith.constant 0 : index
    %464 = vector.load %arg15[%c3_200, %c0_201, %c0_202] : memref<5x64x32xf32, #tpu.memory_space<vmem>>, vector<1x64x32xf32>
    %465 = vector.shape_cast %464 : vector<1x64x32xf32> to vector<64x32xf32>
    %c3_203 = arith.constant 3 : index
    %c0_204 = arith.constant 0 : index
    %c0_205 = arith.constant 0 : index
    %466 = vector.load %arg16[%c3_203, %c0_204, %c0_205] : memref<5x1x32xf32, #tpu.memory_space<vmem>>, vector<1x1x32xf32>
    %467 = vector.shape_cast %466 : vector<1x1x32xf32> to vector<1x32xf32>
    %468 = vector.extract_strided_slice %449 {offsets = [0, 0], sizes = [1, 32], strides = [1, 1]} : vector<2x32xf32> to vector<1x32xf32>
    %469 = vector.extract_strided_slice %451 {offsets = [0, 0], sizes = [1, 32], strides = [1, 1]} : vector<2x32xf32> to vector<1x32xf32>
    %cst_206 = arith.constant dense<0.000000e+00> : vector<16xf32>
    %470 = vector.multi_reduction <add>, %447, %cst_206 [1] : vector<16x32xf32> to vector<16xf32>
    %471 = vector.shape_cast %470 : vector<16xf32> to vector<16x1xf32>
    %cst_207 = arith.constant 3.200000e+01 : f32
    %472 = vector.broadcast %cst_207 : f32 to vector<16x1xf32>
    %473 = arith.divf %471, %472 : vector<16x1xf32>
    %474 = vector.broadcast %473 : vector<16x1xf32> to vector<16x32xf32>
    %475 = arith.subf %447, %474 : vector<16x32xf32>
    %476 = arith.mulf %475, %475 : vector<16x32xf32>
    %cst_208 = arith.constant dense<0.000000e+00> : vector<16xf32>
    %477 = vector.multi_reduction <add>, %476, %cst_208 [1] : vector<16x32xf32> to vector<16xf32>
    %478 = vector.shape_cast %477 : vector<16xf32> to vector<16x1xf32>
    %cst_209 = arith.constant 0.0322580636 : f32
    %479 = vector.broadcast %cst_209 : f32 to vector<16x1xf32>
    %480 = arith.mulf %478, %479 : vector<16x1xf32>
    %481 = math.sqrt %480 : vector<16x1xf32>
    %cst_210 = arith.constant 9.99999997E-7 : f32
    %482 = vector.broadcast %cst_210 : f32 to vector<16x1xf32>
    %483 = arith.addf %481, %482 : vector<16x1xf32>
    %484 = tpu.reciprocal %483 {approx = true} : vector<16x1xf32> -> vector<16x1xf32>
    %485 = vector.broadcast %468 : vector<1x32xf32> to vector<16x32xf32>
    %486 = arith.mulf %485, %475 : vector<16x32xf32>
    %487 = vector.broadcast %484 : vector<16x1xf32> to vector<16x32xf32>
    %488 = arith.mulf %486, %487 : vector<16x32xf32>
    %489 = vector.broadcast %469 : vector<1x32xf32> to vector<16x32xf32>
    %490 = arith.addf %488, %489 : vector<16x32xf32>
    %cst_211 = arith.constant dense<0.000000e+00> : vector<16x96xf32>
    %491 = tpu.matmul %490, %453, %cst_211 {dimension_numbers = #tpu.dot_dimension_numbers<[1], [0], [0], [1], [0, 0, 1, 1], [], []>} : vector<16x32xf32>, vector<32x96xf32>, vector<16x96xf32> -> vector<16x96xf32>
    %492 = vector.broadcast %455 : vector<1x96xf32> to vector<16x96xf32>
    %493 = arith.addf %491, %492 : vector<16x96xf32>
    %494 = vector.extract_strided_slice %493 {offsets = [0, 0], sizes = [16, 32], strides = [1, 1]} : vector<16x96xf32> to vector<16x32xf32>
    %495 = vector.extract_strided_slice %493 {offsets = [0, 32], sizes = [16, 32], strides = [1, 1]} : vector<16x96xf32> to vector<16x32xf32>
    %496 = vector.extract_strided_slice %493 {offsets = [0, 64], sizes = [16, 32], strides = [1, 1]} : vector<16x96xf32> to vector<16x32xf32>
    %497 = vector.extract_strided_slice %494 {offsets = [0, 0], sizes = [16, 8], strides = [1, 1]} : vector<16x32xf32> to vector<16x8xf32>
    %cst_212 = arith.constant 0.353553385 : f32
    %498 = vector.broadcast %cst_212 : f32 to vector<16x8xf32>
    %499 = arith.mulf %497, %498 : vector<16x8xf32>
    %500 = vector.extract_strided_slice %494 {offsets = [0, 8], sizes = [16, 8], strides = [1, 1]} : vector<16x32xf32> to vector<16x8xf32>
    %cst_213 = arith.constant 0.353553385 : f32
    %501 = vector.broadcast %cst_213 : f32 to vector<16x8xf32>
    %502 = arith.mulf %500, %501 : vector<16x8xf32>
    %503 = vector.extract_strided_slice %494 {offsets = [0, 16], sizes = [16, 8], strides = [1, 1]} : vector<16x32xf32> to vector<16x8xf32>
    %cst_214 = arith.constant 0.353553385 : f32
    %504 = vector.broadcast %cst_214 : f32 to vector<16x8xf32>
    %505 = arith.mulf %503, %504 : vector<16x8xf32>
    %506 = vector.extract_strided_slice %494 {offsets = [0, 24], sizes = [16, 8], strides = [1, 1]} : vector<16x32xf32> to vector<16x8xf32>
    %cst_215 = arith.constant 0.353553385 : f32
    %507 = vector.broadcast %cst_215 : f32 to vector<16x8xf32>
    %508 = arith.mulf %506, %507 : vector<16x8xf32>
    %509 = vector.shape_cast %499 : vector<16x8xf32> to vector<1x16x8xf32>
    %510 = vector.shape_cast %502 : vector<16x8xf32> to vector<1x16x8xf32>
    %511 = vector.shape_cast %505 : vector<16x8xf32> to vector<1x16x8xf32>
    %512 = vector.shape_cast %508 : vector<16x8xf32> to vector<1x16x8xf32>
    %513 = tpu.concatenate %509, %510, %511, %512 in 0 : vector<1x16x8xf32>, vector<1x16x8xf32>, vector<1x16x8xf32>, vector<1x16x8xf32> -> vector<4x16x8xf32>
    %514 = vector.extract_strided_slice %495 {offsets = [0, 0], sizes = [16, 8], strides = [1, 1]} : vector<16x32xf32> to vector<16x8xf32>
    %515 = vector.extract_strided_slice %495 {offsets = [0, 8], sizes = [16, 8], strides = [1, 1]} : vector<16x32xf32> to vector<16x8xf32>
    %516 = vector.extract_strided_slice %495 {offsets = [0, 16], sizes = [16, 8], strides = [1, 1]} : vector<16x32xf32> to vector<16x8xf32>
    %517 = vector.extract_strided_slice %495 {offsets = [0, 24], sizes = [16, 8], strides = [1, 1]} : vector<16x32xf32> to vector<16x8xf32>
    %518 = vector.shape_cast %514 : vector<16x8xf32> to vector<1x16x8xf32>
    %519 = vector.shape_cast %515 : vector<16x8xf32> to vector<1x16x8xf32>
    %520 = vector.shape_cast %516 : vector<16x8xf32> to vector<1x16x8xf32>
    %521 = vector.shape_cast %517 : vector<16x8xf32> to vector<1x16x8xf32>
    %522 = tpu.concatenate %518, %519, %520, %521 in 0 : vector<1x16x8xf32>, vector<1x16x8xf32>, vector<1x16x8xf32>, vector<1x16x8xf32> -> vector<4x16x8xf32>
    %523 = vector.extract_strided_slice %496 {offsets = [0, 0], sizes = [16, 8], strides = [1, 1]} : vector<16x32xf32> to vector<16x8xf32>
    %524 = vector.extract_strided_slice %496 {offsets = [0, 8], sizes = [16, 8], strides = [1, 1]} : vector<16x32xf32> to vector<16x8xf32>
    %525 = vector.extract_strided_slice %496 {offsets = [0, 16], sizes = [16, 8], strides = [1, 1]} : vector<16x32xf32> to vector<16x8xf32>
    %526 = vector.extract_strided_slice %496 {offsets = [0, 24], sizes = [16, 8], strides = [1, 1]} : vector<16x32xf32> to vector<16x8xf32>
    %527 = vector.shape_cast %523 : vector<16x8xf32> to vector<1x16x8xf32>
    %528 = vector.shape_cast %524 : vector<16x8xf32> to vector<1x16x8xf32>
    %529 = vector.shape_cast %525 : vector<16x8xf32> to vector<1x16x8xf32>
    %530 = vector.shape_cast %526 : vector<16x8xf32> to vector<1x16x8xf32>
    %531 = tpu.concatenate %527, %528, %529, %530 in 0 : vector<1x16x8xf32>, vector<1x16x8xf32>, vector<1x16x8xf32>, vector<1x16x8xf32> -> vector<4x16x8xf32>
    "tpu.trace_start"() <{level = 10 : i32, message = "hnd,hmd->hnm"}> : () -> ()
    %cst_216 = arith.constant dense<0.000000e+00> : vector<4x16x16xf32>
    %532 = tpu.matmul %513, %522, %cst_216 {dimension_numbers = #tpu.dot_dimension_numbers<[2], [2], [1], [1], [0, 0, 0, 1, 1, 1], [0], [0]>} : vector<4x16x8xf32>, vector<4x16x8xf32>, vector<4x16x16xf32> -> vector<4x16x16xf32>
    "tpu.trace_stop"() : () -> ()
    %cst_217 = arith.constant dense<0xFF800000> : vector<4x16xf32>
    %533 = vector.multi_reduction <maximumf>, %532, %cst_217 [2] : vector<4x16x16xf32> to vector<4x16xf32>
    %534 = vector.shape_cast %533 : vector<4x16xf32> to vector<4x16x1xf32>
    %535 = vector.broadcast %534 : vector<4x16x1xf32> to vector<4x16x16xf32>
    %536 = arith.subf %532, %535 : vector<4x16x16xf32>
    %537 = math.exp %536 : vector<4x16x16xf32>
    %cst_218 = arith.constant dense<0.000000e+00> : vector<4x16xf32>
    %538 = vector.multi_reduction <add>, %537, %cst_218 [2] : vector<4x16x16xf32> to vector<4x16xf32>
    %539 = vector.shape_cast %538 : vector<4x16xf32> to vector<4x16x1xf32>
    %540 = tpu.reciprocal %539 {approx = true} : vector<4x16x1xf32> -> vector<4x16x1xf32>
    %541 = vector.broadcast %540 : vector<4x16x1xf32> to vector<4x16x16xf32>
    %542 = arith.mulf %537, %541 : vector<4x16x16xf32>
    "tpu.trace_start"() <{level = 10 : i32, message = "hnm,hmd->hnd"}> : () -> ()
    %cst_219 = arith.constant dense<0.000000e+00> : vector<4x16x8xf32>
    %543 = tpu.matmul %542, %531, %cst_219 {dimension_numbers = #tpu.dot_dimension_numbers<[2], [1], [1], [2], [0, 0, 0, 1, 1, 2], [0], [0]>} : vector<4x16x16xf32>, vector<4x16x8xf32>, vector<4x16x8xf32> -> vector<4x16x8xf32>
    "tpu.trace_stop"() : () -> ()
    %544 = vector.extract_strided_slice %543 {offsets = [0, 0, 0], sizes = [1, 16, 8], strides = [1, 1, 1]} : vector<4x16x8xf32> to vector<1x16x8xf32>
    %545 = vector.shape_cast %544 : vector<1x16x8xf32> to vector<16x8xf32>
    %546 = vector.extract_strided_slice %543 {offsets = [1, 0, 0], sizes = [1, 16, 8], strides = [1, 1, 1]} : vector<4x16x8xf32> to vector<1x16x8xf32>
    %547 = vector.shape_cast %546 : vector<1x16x8xf32> to vector<16x8xf32>
    %548 = vector.extract_strided_slice %543 {offsets = [2, 0, 0], sizes = [1, 16, 8], strides = [1, 1, 1]} : vector<4x16x8xf32> to vector<1x16x8xf32>
    %549 = vector.shape_cast %548 : vector<1x16x8xf32> to vector<16x8xf32>
    %550 = vector.extract_strided_slice %543 {offsets = [3, 0, 0], sizes = [1, 16, 8], strides = [1, 1, 1]} : vector<4x16x8xf32> to vector<1x16x8xf32>
    %551 = vector.shape_cast %550 : vector<1x16x8xf32> to vector<16x8xf32>
    %552 = tpu.concatenate %545, %547, %549, %551 in 1 : vector<16x8xf32>, vector<16x8xf32>, vector<16x8xf32>, vector<16x8xf32> -> vector<16x32xf32>
    %cst_220 = arith.constant dense<0.000000e+00> : vector<16x32xf32>
    %553 = tpu.matmul %552, %457, %cst_220 {dimension_numbers = #tpu.dot_dimension_numbers<[1], [0], [0], [1], [0, 0, 1, 1], [], []>} : vector<16x32xf32>, vector<32x32xf32>, vector<16x32xf32> -> vector<16x32xf32>
    %554 = arith.addf %447, %553 : vector<16x32xf32>
    %555 = vector.broadcast %459 : vector<1x32xf32> to vector<16x32xf32>
    %556 = arith.addf %554, %555 : vector<16x32xf32>
    %557 = vector.extract_strided_slice %449 {offsets = [1, 0], sizes = [1, 32], strides = [1, 1]} : vector<2x32xf32> to vector<1x32xf32>
    %558 = vector.extract_strided_slice %451 {offsets = [1, 0], sizes = [1, 32], strides = [1, 1]} : vector<2x32xf32> to vector<1x32xf32>
    %cst_221 = arith.constant dense<0.000000e+00> : vector<16xf32>
    %559 = vector.multi_reduction <add>, %556, %cst_221 [1] : vector<16x32xf32> to vector<16xf32>
    %560 = vector.shape_cast %559 : vector<16xf32> to vector<16x1xf32>
    %cst_222 = arith.constant 3.200000e+01 : f32
    %561 = vector.broadcast %cst_222 : f32 to vector<16x1xf32>
    %562 = arith.divf %560, %561 : vector<16x1xf32>
    %563 = vector.broadcast %562 : vector<16x1xf32> to vector<16x32xf32>
    %564 = arith.subf %556, %563 : vector<16x32xf32>
    %565 = arith.mulf %564, %564 : vector<16x32xf32>
    %cst_223 = arith.constant dense<0.000000e+00> : vector<16xf32>
    %566 = vector.multi_reduction <add>, %565, %cst_223 [1] : vector<16x32xf32> to vector<16xf32>
    %567 = vector.shape_cast %566 : vector<16xf32> to vector<16x1xf32>
    %cst_224 = arith.constant 0.0322580636 : f32
    %568 = vector.broadcast %cst_224 : f32 to vector<16x1xf32>
    %569 = arith.mulf %567, %568 : vector<16x1xf32>
    %570 = math.sqrt %569 : vector<16x1xf32>
    %cst_225 = arith.constant 9.99999997E-7 : f32
    %571 = vector.broadcast %cst_225 : f32 to vector<16x1xf32>
    %572 = arith.addf %570, %571 : vector<16x1xf32>
    %573 = tpu.reciprocal %572 {approx = true} : vector<16x1xf32> -> vector<16x1xf32>
    %574 = vector.broadcast %557 : vector<1x32xf32> to vector<16x32xf32>
    %575 = arith.mulf %574, %564 : vector<16x32xf32>
    %576 = vector.broadcast %573 : vector<16x1xf32> to vector<16x32xf32>
    %577 = arith.mulf %575, %576 : vector<16x32xf32>
    %578 = vector.broadcast %558 : vector<1x32xf32> to vector<16x32xf32>
    %579 = arith.addf %577, %578 : vector<16x32xf32>
    %cst_226 = arith.constant dense<0.000000e+00> : vector<16x32xf32>
    %580 = tpu.matmul %1, %579, %cst_226 {dimension_numbers = #tpu.dot_dimension_numbers<[1], [0], [0], [1], [0, 0, 1, 1], [], []>} : vector<16x16xf32>, vector<16x32xf32>, vector<16x32xf32> -> vector<16x32xf32>
    %cst_227 = arith.constant dense<0.000000e+00> : vector<16x64xf32>
    %581 = tpu.matmul %580, %461, %cst_227 {dimension_numbers = #tpu.dot_dimension_numbers<[1], [0], [0], [1], [0, 0, 1, 1], [], []>} : vector<16x32xf32>, vector<32x64xf32>, vector<16x64xf32> -> vector<16x64xf32>
    %582 = vector.broadcast %463 : vector<1x64xf32> to vector<16x64xf32>
    %583 = arith.addf %581, %582 : vector<16x64xf32>
    %cst_228 = arith.constant 0.000000e+00 : f32
    %584 = vector.broadcast %cst_228 : f32 to vector<16x64xf32>
    %585 = arith.maximumf %583, %584 : vector<16x64xf32>
    %cst_229 = arith.constant dense<0.000000e+00> : vector<16x64xf32>
    %586 = tpu.matmul %1, %585, %cst_229 {dimension_numbers = #tpu.dot_dimension_numbers<[1], [0], [0], [1], [0, 0, 1, 1], [], []>} : vector<16x16xf32>, vector<16x64xf32>, vector<16x64xf32> -> vector<16x64xf32>
    %cst_230 = arith.constant dense<0.000000e+00> : vector<16x32xf32>
    %587 = tpu.matmul %586, %465, %cst_230 {dimension_numbers = #tpu.dot_dimension_numbers<[1], [0], [0], [1], [0, 0, 1, 1], [], []>} : vector<16x64xf32>, vector<64x32xf32>, vector<16x32xf32> -> vector<16x32xf32>
    %588 = vector.broadcast %467 : vector<1x32xf32> to vector<16x32xf32>
    %589 = arith.addf %587, %588 : vector<16x32xf32>
    %590 = arith.addf %556, %589 : vector<16x32xf32>
    %c4 = arith.constant 4 : index
    %c0_231 = arith.constant 0 : index
    %c0_232 = arith.constant 0 : index
    %591 = vector.load %arg7[%c4, %c0_231, %c0_232] : memref<5x2x32xf32, #tpu.memory_space<vmem>>, vector<1x2x32xf32>
    %592 = vector.shape_cast %591 : vector<1x2x32xf32> to vector<2x32xf32>
    %c4_233 = arith.constant 4 : index
    %c0_234 = arith.constant 0 : index
    %c0_235 = arith.constant 0 : index
    %593 = vector.load %arg8[%c4_233, %c0_234, %c0_235] : memref<5x2x32xf32, #tpu.memory_space<vmem>>, vector<1x2x32xf32>
    %594 = vector.shape_cast %593 : vector<1x2x32xf32> to vector<2x32xf32>
    %c4_236 = arith.constant 4 : index
    %c0_237 = arith.constant 0 : index
    %c0_238 = arith.constant 0 : index
    %595 = vector.load %arg9[%c4_236, %c0_237, %c0_238] : memref<5x32x96xf32, #tpu.memory_space<vmem>>, vector<1x32x96xf32>
    %596 = vector.shape_cast %595 : vector<1x32x96xf32> to vector<32x96xf32>
    %c4_239 = arith.constant 4 : index
    %c0_240 = arith.constant 0 : index
    %c0_241 = arith.constant 0 : index
    %597 = vector.load %arg10[%c4_239, %c0_240, %c0_241] : memref<5x1x96xf32, #tpu.memory_space<vmem>>, vector<1x1x96xf32>
    %598 = vector.shape_cast %597 : vector<1x1x96xf32> to vector<1x96xf32>
    %c4_242 = arith.constant 4 : index
    %c0_243 = arith.constant 0 : index
    %c0_244 = arith.constant 0 : index
    %599 = vector.load %arg11[%c4_242, %c0_243, %c0_244] : memref<5x32x32xf32, #tpu.memory_space<vmem>>, vector<1x32x32xf32>
    %600 = vector.shape_cast %599 : vector<1x32x32xf32> to vector<32x32xf32>
    %c4_245 = arith.constant 4 : index
    %c0_246 = arith.constant 0 : index
    %c0_247 = arith.constant 0 : index
    %601 = vector.load %arg12[%c4_245, %c0_246, %c0_247] : memref<5x1x32xf32, #tpu.memory_space<vmem>>, vector<1x1x32xf32>
    %602 = vector.shape_cast %601 : vector<1x1x32xf32> to vector<1x32xf32>
    %c4_248 = arith.constant 4 : index
    %c0_249 = arith.constant 0 : index
    %c0_250 = arith.constant 0 : index
    %603 = vector.load %arg13[%c4_248, %c0_249, %c0_250] : memref<5x32x64xf32, #tpu.memory_space<vmem>>, vector<1x32x64xf32>
    %604 = vector.shape_cast %603 : vector<1x32x64xf32> to vector<32x64xf32>
    %c4_251 = arith.constant 4 : index
    %c0_252 = arith.constant 0 : index
    %c0_253 = arith.constant 0 : index
    %605 = vector.load %arg14[%c4_251, %c0_252, %c0_253] : memref<5x1x64xf32, #tpu.memory_space<vmem>>, vector<1x1x64xf32>
    %606 = vector.shape_cast %605 : vector<1x1x64xf32> to vector<1x64xf32>
    %c4_254 = arith.constant 4 : index
    %c0_255 = arith.constant 0 : index
    %c0_256 = arith.constant 0 : index
    %607 = vector.load %arg15[%c4_254, %c0_255, %c0_256] : memref<5x64x32xf32, #tpu.memory_space<vmem>>, vector<1x64x32xf32>
    %608 = vector.shape_cast %607 : vector<1x64x32xf32> to vector<64x32xf32>
    %c4_257 = arith.constant 4 : index
    %c0_258 = arith.constant 0 : index
    %c0_259 = arith.constant 0 : index
    %609 = vector.load %arg16[%c4_257, %c0_258, %c0_259] : memref<5x1x32xf32, #tpu.memory_space<vmem>>, vector<1x1x32xf32>
    %610 = vector.shape_cast %609 : vector<1x1x32xf32> to vector<1x32xf32>
    %611 = vector.extract_strided_slice %592 {offsets = [0, 0], sizes = [1, 32], strides = [1, 1]} : vector<2x32xf32> to vector<1x32xf32>
    %612 = vector.extract_strided_slice %594 {offsets = [0, 0], sizes = [1, 32], strides = [1, 1]} : vector<2x32xf32> to vector<1x32xf32>
    %cst_260 = arith.constant dense<0.000000e+00> : vector<16xf32>
    %613 = vector.multi_reduction <add>, %590, %cst_260 [1] : vector<16x32xf32> to vector<16xf32>
    %614 = vector.shape_cast %613 : vector<16xf32> to vector<16x1xf32>
    %cst_261 = arith.constant 3.200000e+01 : f32
    %615 = vector.broadcast %cst_261 : f32 to vector<16x1xf32>
    %616 = arith.divf %614, %615 : vector<16x1xf32>
    %617 = vector.broadcast %616 : vector<16x1xf32> to vector<16x32xf32>
    %618 = arith.subf %590, %617 : vector<16x32xf32>
    %619 = arith.mulf %618, %618 : vector<16x32xf32>
    %cst_262 = arith.constant dense<0.000000e+00> : vector<16xf32>
    %620 = vector.multi_reduction <add>, %619, %cst_262 [1] : vector<16x32xf32> to vector<16xf32>
    %621 = vector.shape_cast %620 : vector<16xf32> to vector<16x1xf32>
    %cst_263 = arith.constant 0.0322580636 : f32
    %622 = vector.broadcast %cst_263 : f32 to vector<16x1xf32>
    %623 = arith.mulf %621, %622 : vector<16x1xf32>
    %624 = math.sqrt %623 : vector<16x1xf32>
    %cst_264 = arith.constant 9.99999997E-7 : f32
    %625 = vector.broadcast %cst_264 : f32 to vector<16x1xf32>
    %626 = arith.addf %624, %625 : vector<16x1xf32>
    %627 = tpu.reciprocal %626 {approx = true} : vector<16x1xf32> -> vector<16x1xf32>
    %628 = vector.broadcast %611 : vector<1x32xf32> to vector<16x32xf32>
    %629 = arith.mulf %628, %618 : vector<16x32xf32>
    %630 = vector.broadcast %627 : vector<16x1xf32> to vector<16x32xf32>
    %631 = arith.mulf %629, %630 : vector<16x32xf32>
    %632 = vector.broadcast %612 : vector<1x32xf32> to vector<16x32xf32>
    %633 = arith.addf %631, %632 : vector<16x32xf32>
    %cst_265 = arith.constant dense<0.000000e+00> : vector<16x96xf32>
    %634 = tpu.matmul %633, %596, %cst_265 {dimension_numbers = #tpu.dot_dimension_numbers<[1], [0], [0], [1], [0, 0, 1, 1], [], []>} : vector<16x32xf32>, vector<32x96xf32>, vector<16x96xf32> -> vector<16x96xf32>
    %635 = vector.broadcast %598 : vector<1x96xf32> to vector<16x96xf32>
    %636 = arith.addf %634, %635 : vector<16x96xf32>
    %637 = vector.extract_strided_slice %636 {offsets = [0, 0], sizes = [16, 32], strides = [1, 1]} : vector<16x96xf32> to vector<16x32xf32>
    %638 = vector.extract_strided_slice %636 {offsets = [0, 32], sizes = [16, 32], strides = [1, 1]} : vector<16x96xf32> to vector<16x32xf32>
    %639 = vector.extract_strided_slice %636 {offsets = [0, 64], sizes = [16, 32], strides = [1, 1]} : vector<16x96xf32> to vector<16x32xf32>
    %640 = vector.extract_strided_slice %637 {offsets = [0, 0], sizes = [16, 8], strides = [1, 1]} : vector<16x32xf32> to vector<16x8xf32>
    %cst_266 = arith.constant 0.353553385 : f32
    %641 = vector.broadcast %cst_266 : f32 to vector<16x8xf32>
    %642 = arith.mulf %640, %641 : vector<16x8xf32>
    %643 = vector.extract_strided_slice %637 {offsets = [0, 8], sizes = [16, 8], strides = [1, 1]} : vector<16x32xf32> to vector<16x8xf32>
    %cst_267 = arith.constant 0.353553385 : f32
    %644 = vector.broadcast %cst_267 : f32 to vector<16x8xf32>
    %645 = arith.mulf %643, %644 : vector<16x8xf32>
    %646 = vector.extract_strided_slice %637 {offsets = [0, 16], sizes = [16, 8], strides = [1, 1]} : vector<16x32xf32> to vector<16x8xf32>
    %cst_268 = arith.constant 0.353553385 : f32
    %647 = vector.broadcast %cst_268 : f32 to vector<16x8xf32>
    %648 = arith.mulf %646, %647 : vector<16x8xf32>
    %649 = vector.extract_strided_slice %637 {offsets = [0, 24], sizes = [16, 8], strides = [1, 1]} : vector<16x32xf32> to vector<16x8xf32>
    %cst_269 = arith.constant 0.353553385 : f32
    %650 = vector.broadcast %cst_269 : f32 to vector<16x8xf32>
    %651 = arith.mulf %649, %650 : vector<16x8xf32>
    %652 = vector.shape_cast %642 : vector<16x8xf32> to vector<1x16x8xf32>
    %653 = vector.shape_cast %645 : vector<16x8xf32> to vector<1x16x8xf32>
    %654 = vector.shape_cast %648 : vector<16x8xf32> to vector<1x16x8xf32>
    %655 = vector.shape_cast %651 : vector<16x8xf32> to vector<1x16x8xf32>
    %656 = tpu.concatenate %652, %653, %654, %655 in 0 : vector<1x16x8xf32>, vector<1x16x8xf32>, vector<1x16x8xf32>, vector<1x16x8xf32> -> vector<4x16x8xf32>
    %657 = vector.extract_strided_slice %638 {offsets = [0, 0], sizes = [16, 8], strides = [1, 1]} : vector<16x32xf32> to vector<16x8xf32>
    %658 = vector.extract_strided_slice %638 {offsets = [0, 8], sizes = [16, 8], strides = [1, 1]} : vector<16x32xf32> to vector<16x8xf32>
    %659 = vector.extract_strided_slice %638 {offsets = [0, 16], sizes = [16, 8], strides = [1, 1]} : vector<16x32xf32> to vector<16x8xf32>
    %660 = vector.extract_strided_slice %638 {offsets = [0, 24], sizes = [16, 8], strides = [1, 1]} : vector<16x32xf32> to vector<16x8xf32>
    %661 = vector.shape_cast %657 : vector<16x8xf32> to vector<1x16x8xf32>
    %662 = vector.shape_cast %658 : vector<16x8xf32> to vector<1x16x8xf32>
    %663 = vector.shape_cast %659 : vector<16x8xf32> to vector<1x16x8xf32>
    %664 = vector.shape_cast %660 : vector<16x8xf32> to vector<1x16x8xf32>
    %665 = tpu.concatenate %661, %662, %663, %664 in 0 : vector<1x16x8xf32>, vector<1x16x8xf32>, vector<1x16x8xf32>, vector<1x16x8xf32> -> vector<4x16x8xf32>
    %666 = vector.extract_strided_slice %639 {offsets = [0, 0], sizes = [16, 8], strides = [1, 1]} : vector<16x32xf32> to vector<16x8xf32>
    %667 = vector.extract_strided_slice %639 {offsets = [0, 8], sizes = [16, 8], strides = [1, 1]} : vector<16x32xf32> to vector<16x8xf32>
    %668 = vector.extract_strided_slice %639 {offsets = [0, 16], sizes = [16, 8], strides = [1, 1]} : vector<16x32xf32> to vector<16x8xf32>
    %669 = vector.extract_strided_slice %639 {offsets = [0, 24], sizes = [16, 8], strides = [1, 1]} : vector<16x32xf32> to vector<16x8xf32>
    %670 = vector.shape_cast %666 : vector<16x8xf32> to vector<1x16x8xf32>
    %671 = vector.shape_cast %667 : vector<16x8xf32> to vector<1x16x8xf32>
    %672 = vector.shape_cast %668 : vector<16x8xf32> to vector<1x16x8xf32>
    %673 = vector.shape_cast %669 : vector<16x8xf32> to vector<1x16x8xf32>
    %674 = tpu.concatenate %670, %671, %672, %673 in 0 : vector<1x16x8xf32>, vector<1x16x8xf32>, vector<1x16x8xf32>, vector<1x16x8xf32> -> vector<4x16x8xf32>
    "tpu.trace_start"() <{level = 10 : i32, message = "hnd,hmd->hnm"}> : () -> ()
    %cst_270 = arith.constant dense<0.000000e+00> : vector<4x16x16xf32>
    %675 = tpu.matmul %656, %665, %cst_270 {dimension_numbers = #tpu.dot_dimension_numbers<[2], [2], [1], [1], [0, 0, 0, 1, 1, 1], [0], [0]>} : vector<4x16x8xf32>, vector<4x16x8xf32>, vector<4x16x16xf32> -> vector<4x16x16xf32>
    "tpu.trace_stop"() : () -> ()
    %cst_271 = arith.constant dense<0xFF800000> : vector<4x16xf32>
    %676 = vector.multi_reduction <maximumf>, %675, %cst_271 [2] : vector<4x16x16xf32> to vector<4x16xf32>
    %677 = vector.shape_cast %676 : vector<4x16xf32> to vector<4x16x1xf32>
    %678 = vector.broadcast %677 : vector<4x16x1xf32> to vector<4x16x16xf32>
    %679 = arith.subf %675, %678 : vector<4x16x16xf32>
    %680 = math.exp %679 : vector<4x16x16xf32>
    %cst_272 = arith.constant dense<0.000000e+00> : vector<4x16xf32>
    %681 = vector.multi_reduction <add>, %680, %cst_272 [2] : vector<4x16x16xf32> to vector<4x16xf32>
    %682 = vector.shape_cast %681 : vector<4x16xf32> to vector<4x16x1xf32>
    %683 = tpu.reciprocal %682 {approx = true} : vector<4x16x1xf32> -> vector<4x16x1xf32>
    %684 = vector.broadcast %683 : vector<4x16x1xf32> to vector<4x16x16xf32>
    %685 = arith.mulf %680, %684 : vector<4x16x16xf32>
    "tpu.trace_start"() <{level = 10 : i32, message = "hnm,hmd->hnd"}> : () -> ()
    %cst_273 = arith.constant dense<0.000000e+00> : vector<4x16x8xf32>
    %686 = tpu.matmul %685, %674, %cst_273 {dimension_numbers = #tpu.dot_dimension_numbers<[2], [1], [1], [2], [0, 0, 0, 1, 1, 2], [0], [0]>} : vector<4x16x16xf32>, vector<4x16x8xf32>, vector<4x16x8xf32> -> vector<4x16x8xf32>
    "tpu.trace_stop"() : () -> ()
    %687 = vector.extract_strided_slice %686 {offsets = [0, 0, 0], sizes = [1, 16, 8], strides = [1, 1, 1]} : vector<4x16x8xf32> to vector<1x16x8xf32>
    %688 = vector.shape_cast %687 : vector<1x16x8xf32> to vector<16x8xf32>
    %689 = vector.extract_strided_slice %686 {offsets = [1, 0, 0], sizes = [1, 16, 8], strides = [1, 1, 1]} : vector<4x16x8xf32> to vector<1x16x8xf32>
    %690 = vector.shape_cast %689 : vector<1x16x8xf32> to vector<16x8xf32>
    %691 = vector.extract_strided_slice %686 {offsets = [2, 0, 0], sizes = [1, 16, 8], strides = [1, 1, 1]} : vector<4x16x8xf32> to vector<1x16x8xf32>
    %692 = vector.shape_cast %691 : vector<1x16x8xf32> to vector<16x8xf32>
    %693 = vector.extract_strided_slice %686 {offsets = [3, 0, 0], sizes = [1, 16, 8], strides = [1, 1, 1]} : vector<4x16x8xf32> to vector<1x16x8xf32>
    %694 = vector.shape_cast %693 : vector<1x16x8xf32> to vector<16x8xf32>
    %695 = tpu.concatenate %688, %690, %692, %694 in 1 : vector<16x8xf32>, vector<16x8xf32>, vector<16x8xf32>, vector<16x8xf32> -> vector<16x32xf32>
    %cst_274 = arith.constant dense<0.000000e+00> : vector<16x32xf32>
    %696 = tpu.matmul %695, %600, %cst_274 {dimension_numbers = #tpu.dot_dimension_numbers<[1], [0], [0], [1], [0, 0, 1, 1], [], []>} : vector<16x32xf32>, vector<32x32xf32>, vector<16x32xf32> -> vector<16x32xf32>
    %697 = arith.addf %590, %696 : vector<16x32xf32>
    %698 = vector.broadcast %602 : vector<1x32xf32> to vector<16x32xf32>
    %699 = arith.addf %697, %698 : vector<16x32xf32>
    %700 = vector.extract_strided_slice %592 {offsets = [1, 0], sizes = [1, 32], strides = [1, 1]} : vector<2x32xf32> to vector<1x32xf32>
    %701 = vector.extract_strided_slice %594 {offsets = [1, 0], sizes = [1, 32], strides = [1, 1]} : vector<2x32xf32> to vector<1x32xf32>
    %cst_275 = arith.constant dense<0.000000e+00> : vector<16xf32>
    %702 = vector.multi_reduction <add>, %699, %cst_275 [1] : vector<16x32xf32> to vector<16xf32>
    %703 = vector.shape_cast %702 : vector<16xf32> to vector<16x1xf32>
    %cst_276 = arith.constant 3.200000e+01 : f32
    %704 = vector.broadcast %cst_276 : f32 to vector<16x1xf32>
    %705 = arith.divf %703, %704 : vector<16x1xf32>
    %706 = vector.broadcast %705 : vector<16x1xf32> to vector<16x32xf32>
    %707 = arith.subf %699, %706 : vector<16x32xf32>
    %708 = arith.mulf %707, %707 : vector<16x32xf32>
    %cst_277 = arith.constant dense<0.000000e+00> : vector<16xf32>
    %709 = vector.multi_reduction <add>, %708, %cst_277 [1] : vector<16x32xf32> to vector<16xf32>
    %710 = vector.shape_cast %709 : vector<16xf32> to vector<16x1xf32>
    %cst_278 = arith.constant 0.0322580636 : f32
    %711 = vector.broadcast %cst_278 : f32 to vector<16x1xf32>
    %712 = arith.mulf %710, %711 : vector<16x1xf32>
    %713 = math.sqrt %712 : vector<16x1xf32>
    %cst_279 = arith.constant 9.99999997E-7 : f32
    %714 = vector.broadcast %cst_279 : f32 to vector<16x1xf32>
    %715 = arith.addf %713, %714 : vector<16x1xf32>
    %716 = tpu.reciprocal %715 {approx = true} : vector<16x1xf32> -> vector<16x1xf32>
    %717 = vector.broadcast %700 : vector<1x32xf32> to vector<16x32xf32>
    %718 = arith.mulf %717, %707 : vector<16x32xf32>
    %719 = vector.broadcast %716 : vector<16x1xf32> to vector<16x32xf32>
    %720 = arith.mulf %718, %719 : vector<16x32xf32>
    %721 = vector.broadcast %701 : vector<1x32xf32> to vector<16x32xf32>
    %722 = arith.addf %720, %721 : vector<16x32xf32>
    %cst_280 = arith.constant dense<0.000000e+00> : vector<16x32xf32>
    %723 = tpu.matmul %1, %722, %cst_280 {dimension_numbers = #tpu.dot_dimension_numbers<[1], [0], [0], [1], [0, 0, 1, 1], [], []>} : vector<16x16xf32>, vector<16x32xf32>, vector<16x32xf32> -> vector<16x32xf32>
    %cst_281 = arith.constant dense<0.000000e+00> : vector<16x64xf32>
    %724 = tpu.matmul %723, %604, %cst_281 {dimension_numbers = #tpu.dot_dimension_numbers<[1], [0], [0], [1], [0, 0, 1, 1], [], []>} : vector<16x32xf32>, vector<32x64xf32>, vector<16x64xf32> -> vector<16x64xf32>
    %725 = vector.broadcast %606 : vector<1x64xf32> to vector<16x64xf32>
    %726 = arith.addf %724, %725 : vector<16x64xf32>
    %cst_282 = arith.constant 0.000000e+00 : f32
    %727 = vector.broadcast %cst_282 : f32 to vector<16x64xf32>
    %728 = arith.maximumf %726, %727 : vector<16x64xf32>
    %cst_283 = arith.constant dense<0.000000e+00> : vector<16x64xf32>
    %729 = tpu.matmul %1, %728, %cst_283 {dimension_numbers = #tpu.dot_dimension_numbers<[1], [0], [0], [1], [0, 0, 1, 1], [], []>} : vector<16x16xf32>, vector<16x64xf32>, vector<16x64xf32> -> vector<16x64xf32>
    %cst_284 = arith.constant dense<0.000000e+00> : vector<16x32xf32>
    %730 = tpu.matmul %729, %608, %cst_284 {dimension_numbers = #tpu.dot_dimension_numbers<[1], [0], [0], [1], [0, 0, 1, 1], [], []>} : vector<16x64xf32>, vector<64x32xf32>, vector<16x32xf32> -> vector<16x32xf32>
    %731 = vector.broadcast %610 : vector<1x32xf32> to vector<16x32xf32>
    %732 = arith.addf %730, %731 : vector<16x32xf32>
    %733 = arith.addf %699, %732 : vector<16x32xf32>
    %c0_285 = arith.constant 0 : index
    %c0_286 = arith.constant 0 : index
    %734 = vector.load %arg17[%c0_285, %c0_286] : memref<96x3xf32, #tpu.memory_space<vmem>>, vector<96x3xf32>
    %c0_287 = arith.constant 0 : index
    %c0_288 = arith.constant 0 : index
    %735 = vector.load %arg18[%c0_287, %c0_288] : memref<1x3xf32, #tpu.memory_space<vmem>>, vector<1x3xf32>
    %736 = vector.extract_strided_slice %0 {offsets = [0, 0, 0], sizes = [1, 16, 16], strides = [1, 1, 1]} : vector<3x16x16xf32> to vector<1x16x16xf32>
    %737 = vector.shape_cast %736 : vector<1x16x16xf32> to vector<16x16xf32>
    %cst_289 = arith.constant dense<0.000000e+00> : vector<16x32xf32>
    %738 = tpu.matmul %737, %733, %cst_289 {dimension_numbers = #tpu.dot_dimension_numbers<[1], [0], [0], [1], [0, 0, 1, 1], [], []>} : vector<16x16xf32>, vector<16x32xf32>, vector<16x32xf32> -> vector<16x32xf32>
    %739 = vector.extract_strided_slice %0 {offsets = [1, 0, 0], sizes = [1, 16, 16], strides = [1, 1, 1]} : vector<3x16x16xf32> to vector<1x16x16xf32>
    %740 = vector.shape_cast %739 : vector<1x16x16xf32> to vector<16x16xf32>
    %cst_290 = arith.constant dense<0.000000e+00> : vector<16x32xf32>
    %741 = tpu.matmul %740, %733, %cst_290 {dimension_numbers = #tpu.dot_dimension_numbers<[1], [0], [0], [1], [0, 0, 1, 1], [], []>} : vector<16x16xf32>, vector<16x32xf32>, vector<16x32xf32> -> vector<16x32xf32>
    %742 = vector.extract_strided_slice %0 {offsets = [2, 0, 0], sizes = [1, 16, 16], strides = [1, 1, 1]} : vector<3x16x16xf32> to vector<1x16x16xf32>
    %743 = vector.shape_cast %742 : vector<1x16x16xf32> to vector<16x16xf32>
    %cst_291 = arith.constant dense<0.000000e+00> : vector<16x32xf32>
    %744 = tpu.matmul %743, %733, %cst_291 {dimension_numbers = #tpu.dot_dimension_numbers<[1], [0], [0], [1], [0, 0, 1, 1], [], []>} : vector<16x16xf32>, vector<16x32xf32>, vector<16x32xf32> -> vector<16x32xf32>
    %745 = tpu.concatenate %738, %741, %744 in 1 : vector<16x32xf32>, vector<16x32xf32>, vector<16x32xf32> -> vector<16x96xf32>
    %cst_292 = arith.constant dense<0.000000e+00> : vector<16x3xf32>
    %746 = tpu.matmul %745, %734, %cst_292 {dimension_numbers = #tpu.dot_dimension_numbers<[1], [0], [0], [1], [0, 0, 1, 1], [], []>} : vector<16x96xf32>, vector<96x3xf32>, vector<16x3xf32> -> vector<16x3xf32>
    %747 = vector.broadcast %735 : vector<1x3xf32> to vector<16x3xf32>
    %748 = arith.addf %746, %747 : vector<16x3xf32>
    %c0_293 = arith.constant 0 : index
    %c0_294 = arith.constant 0 : index
    %c0_295 = arith.constant 0 : index
    %749 = vector.load %arg38[%c0_293, %c0_294, %c0_295] : memref<1x16x3xf32, #tpu.memory_space<vmem>>, vector<1x16x3xf32>
    %750 = vector.shape_cast %749 : vector<1x16x3xf32> to vector<16x3xf32>
    %751 = vector.shape_cast %748 : vector<16x3xf32> to vector<1x16x3xf32>
    tpu.vector_store %arg38[%c0_293, %c0_294, %c0_295], %751 {strides = array<i32>} : memref<1x16x3xf32, #tpu.memory_space<vmem>>, vector<1x16x3xf32>,
    %c0_296 = arith.constant 0 : index
    %c0_297 = arith.constant 0 : index
    %c0_298 = arith.constant 0 : index
    %752 = vector.load %arg2[%c0_296, %c0_297, %c0_298] : memref<1x1x200xf32, #tpu.memory_space<vmem>>, vector<1x1x200xf32>
    %753 = vector.shape_cast %752 : vector<1x1x200xf32> to vector<1x200xf32>
    %c0_299 = arith.constant 0 : index
    %c0_300 = arith.constant 0 : index
    %754 = vector.load %arg19[%c0_299, %c0_300] : memref<200x64xf32, #tpu.memory_space<vmem>>, vector<200x64xf32>
    %cst_301 = arith.constant dense<0.000000e+00> : vector<1x64xf32>
    %755 = tpu.matmul %753, %754, %cst_301 {dimension_numbers = #tpu.dot_dimension_numbers<[1], [0], [0], [1], [0, 0, 1, 1], [], []>} : vector<1x200xf32>, vector<200x64xf32>, vector<1x64xf32> -> vector<1x64xf32>
    %c0_302 = arith.constant 0 : index
    %c0_303 = arith.constant 0 : index
    %756 = vector.load %arg20[%c0_302, %c0_303] : memref<1x64xf32, #tpu.memory_space<vmem>>, vector<1x64xf32>
    %757 = arith.addf %755, %756 : vector<1x64xf32>
    %cst_304 = arith.constant 0.000000e+00 : f32
    %758 = vector.broadcast %cst_304 : f32 to vector<1x64xf32>
    %759 = arith.maximumf %757, %758 : vector<1x64xf32>
    %c0_305 = arith.constant 0 : index
    %c0_306 = arith.constant 0 : index
    %760 = vector.load %arg21[%c0_305, %c0_306] : memref<64x64xf32, #tpu.memory_space<vmem>>, vector<64x64xf32>
    %cst_307 = arith.constant dense<0.000000e+00> : vector<1x64xf32>
    %761 = tpu.matmul %759, %760, %cst_307 {dimension_numbers = #tpu.dot_dimension_numbers<[1], [0], [0], [1], [0, 0, 1, 1], [], []>} : vector<1x64xf32>, vector<64x64xf32>, vector<1x64xf32> -> vector<1x64xf32>
    %c0_308 = arith.constant 0 : index
    %c0_309 = arith.constant 0 : index
    %762 = vector.load %arg22[%c0_308, %c0_309] : memref<1x64xf32, #tpu.memory_space<vmem>>, vector<1x64xf32>
    %763 = arith.addf %761, %762 : vector<1x64xf32>
    %cst_310 = arith.constant 0.000000e+00 : f32
    %764 = vector.broadcast %cst_310 : f32 to vector<1x64xf32>
    %765 = arith.maximumf %763, %764 : vector<1x64xf32>
    %766 = vector.shape_cast %765 : vector<1x64xf32> to vector<1x64xf32>
    %767 = vector.broadcast %766 : vector<1x64xf32> to vector<16x64xf32>
    %768 = tpu.concatenate %3, %767 in 1 : vector<16x2xf32>, vector<16x64xf32> -> vector<16x66xf32>
    %c0_311 = arith.constant 0 : index
    %c0_312 = arith.constant 0 : index
    %769 = vector.load %arg23[%c0_311, %c0_312] : memref<198x16xf32, #tpu.memory_space<vmem>>, vector<198x16xf32>
    %c0_313 = arith.constant 0 : index
    %c0_314 = arith.constant 0 : index
    %770 = vector.load %arg24[%c0_313, %c0_314] : memref<1x16xf32, #tpu.memory_space<vmem>>, vector<1x16xf32>
    %771 = vector.extract_strided_slice %0 {offsets = [0, 0, 0], sizes = [1, 16, 16], strides = [1, 1, 1]} : vector<3x16x16xf32> to vector<1x16x16xf32>
    %772 = vector.shape_cast %771 : vector<1x16x16xf32> to vector<16x16xf32>
    %cst_315 = arith.constant dense<0.000000e+00> : vector<16x66xf32>
    %773 = tpu.matmul %772, %768, %cst_315 {dimension_numbers = #tpu.dot_dimension_numbers<[1], [0], [0], [1], [0, 0, 1, 1], [], []>} : vector<16x16xf32>, vector<16x66xf32>, vector<16x66xf32> -> vector<16x66xf32>
    %774 = vector.extract_strided_slice %0 {offsets = [1, 0, 0], sizes = [1, 16, 16], strides = [1, 1, 1]} : vector<3x16x16xf32> to vector<1x16x16xf32>
    %775 = vector.shape_cast %774 : vector<1x16x16xf32> to vector<16x16xf32>
    %cst_316 = arith.constant dense<0.000000e+00> : vector<16x66xf32>
    %776 = tpu.matmul %775, %768, %cst_316 {dimension_numbers = #tpu.dot_dimension_numbers<[1], [0], [0], [1], [0, 0, 1, 1], [], []>} : vector<16x16xf32>, vector<16x66xf32>, vector<16x66xf32> -> vector<16x66xf32>
    %777 = vector.extract_strided_slice %0 {offsets = [2, 0, 0], sizes = [1, 16, 16], strides = [1, 1, 1]} : vector<3x16x16xf32> to vector<1x16x16xf32>
    %778 = vector.shape_cast %777 : vector<1x16x16xf32> to vector<16x16xf32>
    %cst_317 = arith.constant dense<0.000000e+00> : vector<16x66xf32>
    %779 = tpu.matmul %778, %768, %cst_317 {dimension_numbers = #tpu.dot_dimension_numbers<[1], [0], [0], [1], [0, 0, 1, 1], [], []>} : vector<16x16xf32>, vector<16x66xf32>, vector<16x66xf32> -> vector<16x66xf32>
    %780 = tpu.concatenate %773, %776, %779 in 1 : vector<16x66xf32>, vector<16x66xf32>, vector<16x66xf32> -> vector<16x198xf32>
    %cst_318 = arith.constant dense<0.000000e+00> : vector<16x16xf32>
    %781 = tpu.matmul %780, %769, %cst_318 {dimension_numbers = #tpu.dot_dimension_numbers<[1], [0], [0], [1], [0, 0, 1, 1], [], []>} : vector<16x198xf32>, vector<198x16xf32>, vector<16x16xf32> -> vector<16x16xf32>
    %782 = vector.broadcast %770 : vector<1x16xf32> to vector<16x16xf32>
    %783 = arith.addf %781, %782 : vector<16x16xf32>
    %c0_319 = arith.constant 0 : index
    %c0_320 = arith.constant 0 : index
    %c0_321 = arith.constant 0 : index
    %784 = vector.load %arg25[%c0_319, %c0_320, %c0_321] : memref<2x2x16xf32, #tpu.memory_space<vmem>>, vector<1x2x16xf32>
    %785 = vector.shape_cast %784 : vector<1x2x16xf32> to vector<2x16xf32>
    %c0_322 = arith.constant 0 : index
    %c0_323 = arith.constant 0 : index
    %c0_324 = arith.constant 0 : index
    %786 = vector.load %arg26[%c0_322, %c0_323, %c0_324] : memref<2x2x16xf32, #tpu.memory_space<vmem>>, vector<1x2x16xf32>
    %787 = vector.shape_cast %786 : vector<1x2x16xf32> to vector<2x16xf32>
    %c0_325 = arith.constant 0 : index
    %c0_326 = arith.constant 0 : index
    %c0_327 = arith.constant 0 : index
    %788 = vector.load %arg27[%c0_325, %c0_326, %c0_327] : memref<2x16x48xf32, #tpu.memory_space<vmem>>, vector<1x16x48xf32>
    %789 = vector.shape_cast %788 : vector<1x16x48xf32> to vector<16x48xf32>
    %c0_328 = arith.constant 0 : index
    %c0_329 = arith.constant 0 : index
    %c0_330 = arith.constant 0 : index
    %790 = vector.load %arg28[%c0_328, %c0_329, %c0_330] : memref<2x1x48xf32, #tpu.memory_space<vmem>>, vector<1x1x48xf32>
    %791 = vector.shape_cast %790 : vector<1x1x48xf32> to vector<1x48xf32>
    %c0_331 = arith.constant 0 : index
    %c0_332 = arith.constant 0 : index
    %c0_333 = arith.constant 0 : index
    %792 = vector.load %arg29[%c0_331, %c0_332, %c0_333] : memref<2x16x16xf32, #tpu.memory_space<vmem>>, vector<1x16x16xf32>
    %793 = vector.shape_cast %792 : vector<1x16x16xf32> to vector<16x16xf32>
    %c0_334 = arith.constant 0 : index
    %c0_335 = arith.constant 0 : index
    %c0_336 = arith.constant 0 : index
    %794 = vector.load %arg30[%c0_334, %c0_335, %c0_336] : memref<2x1x16xf32, #tpu.memory_space<vmem>>, vector<1x1x16xf32>
    %795 = vector.shape_cast %794 : vector<1x1x16xf32> to vector<1x16xf32>
    %c0_337 = arith.constant 0 : index
    %c0_338 = arith.constant 0 : index
    %c0_339 = arith.constant 0 : index
    %796 = vector.load %arg31[%c0_337, %c0_338, %c0_339] : memref<2x16x32xf32, #tpu.memory_space<vmem>>, vector<1x16x32xf32>
    %797 = vector.shape_cast %796 : vector<1x16x32xf32> to vector<16x32xf32>
    %c0_340 = arith.constant 0 : index
    %c0_341 = arith.constant 0 : index
    %c0_342 = arith.constant 0 : index
    %798 = vector.load %arg32[%c0_340, %c0_341, %c0_342] : memref<2x1x32xf32, #tpu.memory_space<vmem>>, vector<1x1x32xf32>
    %799 = vector.shape_cast %798 : vector<1x1x32xf32> to vector<1x32xf32>
    %c0_343 = arith.constant 0 : index
    %c0_344 = arith.constant 0 : index
    %c0_345 = arith.constant 0 : index
    %800 = vector.load %arg33[%c0_343, %c0_344, %c0_345] : memref<2x32x16xf32, #tpu.memory_space<vmem>>, vector<1x32x16xf32>
    %801 = vector.shape_cast %800 : vector<1x32x16xf32> to vector<32x16xf32>
    %c0_346 = arith.constant 0 : index
    %c0_347 = arith.constant 0 : index
    %c0_348 = arith.constant 0 : index
    %802 = vector.load %arg34[%c0_346, %c0_347, %c0_348] : memref<2x1x16xf32, #tpu.memory_space<vmem>>, vector<1x1x16xf32>
    %803 = vector.shape_cast %802 : vector<1x1x16xf32> to vector<1x16xf32>
    %804 = vector.extract_strided_slice %785 {offsets = [0, 0], sizes = [1, 16], strides = [1, 1]} : vector<2x16xf32> to vector<1x16xf32>
    %805 = vector.extract_strided_slice %787 {offsets = [0, 0], sizes = [1, 16], strides = [1, 1]} : vector<2x16xf32> to vector<1x16xf32>
    %cst_349 = arith.constant dense<0.000000e+00> : vector<16xf32>
    %806 = vector.multi_reduction <add>, %783, %cst_349 [1] : vector<16x16xf32> to vector<16xf32>
    %807 = vector.shape_cast %806 : vector<16xf32> to vector<16x1xf32>
    %cst_350 = arith.constant 1.600000e+01 : f32
    %808 = vector.broadcast %cst_350 : f32 to vector<16x1xf32>
    %809 = arith.divf %807, %808 : vector<16x1xf32>
    %810 = vector.broadcast %809 : vector<16x1xf32> to vector<16x16xf32>
    %811 = arith.subf %783, %810 : vector<16x16xf32>
    %812 = arith.mulf %811, %811 : vector<16x16xf32>
    %cst_351 = arith.constant dense<0.000000e+00> : vector<16xf32>
    %813 = vector.multi_reduction <add>, %812, %cst_351 [1] : vector<16x16xf32> to vector<16xf32>
    %814 = vector.shape_cast %813 : vector<16xf32> to vector<16x1xf32>
    %cst_352 = arith.constant 0.0666666701 : f32
    %815 = vector.broadcast %cst_352 : f32 to vector<16x1xf32>
    %816 = arith.mulf %814, %815 : vector<16x1xf32>
    %817 = math.sqrt %816 : vector<16x1xf32>
    %cst_353 = arith.constant 9.99999997E-7 : f32
    %818 = vector.broadcast %cst_353 : f32 to vector<16x1xf32>
    %819 = arith.addf %817, %818 : vector<16x1xf32>
    %820 = tpu.reciprocal %819 {approx = true} : vector<16x1xf32> -> vector<16x1xf32>
    %821 = vector.broadcast %804 : vector<1x16xf32> to vector<16x16xf32>
    %822 = arith.mulf %821, %811 : vector<16x16xf32>
    %823 = vector.broadcast %820 : vector<16x1xf32> to vector<16x16xf32>
    %824 = arith.mulf %822, %823 : vector<16x16xf32>
    %825 = vector.broadcast %805 : vector<1x16xf32> to vector<16x16xf32>
    %826 = arith.addf %824, %825 : vector<16x16xf32>
    %cst_354 = arith.constant dense<0.000000e+00> : vector<16x48xf32>
    %827 = tpu.matmul %826, %789, %cst_354 {dimension_numbers = #tpu.dot_dimension_numbers<[1], [0], [0], [1], [0, 0, 1, 1], [], []>} : vector<16x16xf32>, vector<16x48xf32>, vector<16x48xf32> -> vector<16x48xf32>
    %828 = vector.broadcast %791 : vector<1x48xf32> to vector<16x48xf32>
    %829 = arith.addf %827, %828 : vector<16x48xf32>
    %830 = vector.extract_strided_slice %829 {offsets = [0, 0], sizes = [16, 16], strides = [1, 1]} : vector<16x48xf32> to vector<16x16xf32>
    %831 = vector.extract_strided_slice %829 {offsets = [0, 16], sizes = [16, 16], strides = [1, 1]} : vector<16x48xf32> to vector<16x16xf32>
    %832 = vector.extract_strided_slice %829 {offsets = [0, 32], sizes = [16, 16], strides = [1, 1]} : vector<16x48xf32> to vector<16x16xf32>
    %833 = vector.extract_strided_slice %830 {offsets = [0, 0], sizes = [16, 4], strides = [1, 1]} : vector<16x16xf32> to vector<16x4xf32>
    %cst_355 = arith.constant 5.000000e-01 : f32
    %834 = vector.broadcast %cst_355 : f32 to vector<16x4xf32>
    %835 = arith.mulf %833, %834 : vector<16x4xf32>
    %836 = vector.extract_strided_slice %830 {offsets = [0, 4], sizes = [16, 4], strides = [1, 1]} : vector<16x16xf32> to vector<16x4xf32>
    %cst_356 = arith.constant 5.000000e-01 : f32
    %837 = vector.broadcast %cst_356 : f32 to vector<16x4xf32>
    %838 = arith.mulf %836, %837 : vector<16x4xf32>
    %839 = vector.extract_strided_slice %830 {offsets = [0, 8], sizes = [16, 4], strides = [1, 1]} : vector<16x16xf32> to vector<16x4xf32>
    %cst_357 = arith.constant 5.000000e-01 : f32
    %840 = vector.broadcast %cst_357 : f32 to vector<16x4xf32>
    %841 = arith.mulf %839, %840 : vector<16x4xf32>
    %842 = vector.extract_strided_slice %830 {offsets = [0, 12], sizes = [16, 4], strides = [1, 1]} : vector<16x16xf32> to vector<16x4xf32>
    %cst_358 = arith.constant 5.000000e-01 : f32
    %843 = vector.broadcast %cst_358 : f32 to vector<16x4xf32>
    %844 = arith.mulf %842, %843 : vector<16x4xf32>
    %845 = vector.shape_cast %835 : vector<16x4xf32> to vector<1x16x4xf32>
    %846 = vector.shape_cast %838 : vector<16x4xf32> to vector<1x16x4xf32>
    %847 = vector.shape_cast %841 : vector<16x4xf32> to vector<1x16x4xf32>
    %848 = vector.shape_cast %844 : vector<16x4xf32> to vector<1x16x4xf32>
    %849 = tpu.concatenate %845, %846, %847, %848 in 0 : vector<1x16x4xf32>, vector<1x16x4xf32>, vector<1x16x4xf32>, vector<1x16x4xf32> -> vector<4x16x4xf32>
    %850 = vector.extract_strided_slice %831 {offsets = [0, 0], sizes = [16, 4], strides = [1, 1]} : vector<16x16xf32> to vector<16x4xf32>
    %851 = vector.extract_strided_slice %831 {offsets = [0, 4], sizes = [16, 4], strides = [1, 1]} : vector<16x16xf32> to vector<16x4xf32>
    %852 = vector.extract_strided_slice %831 {offsets = [0, 8], sizes = [16, 4], strides = [1, 1]} : vector<16x16xf32> to vector<16x4xf32>
    %853 = vector.extract_strided_slice %831 {offsets = [0, 12], sizes = [16, 4], strides = [1, 1]} : vector<16x16xf32> to vector<16x4xf32>
    %854 = vector.shape_cast %850 : vector<16x4xf32> to vector<1x16x4xf32>
    %855 = vector.shape_cast %851 : vector<16x4xf32> to vector<1x16x4xf32>
    %856 = vector.shape_cast %852 : vector<16x4xf32> to vector<1x16x4xf32>
    %857 = vector.shape_cast %853 : vector<16x4xf32> to vector<1x16x4xf32>
    %858 = tpu.concatenate %854, %855, %856, %857 in 0 : vector<1x16x4xf32>, vector<1x16x4xf32>, vector<1x16x4xf32>, vector<1x16x4xf32> -> vector<4x16x4xf32>
    %859 = vector.extract_strided_slice %832 {offsets = [0, 0], sizes = [16, 4], strides = [1, 1]} : vector<16x16xf32> to vector<16x4xf32>
    %860 = vector.extract_strided_slice %832 {offsets = [0, 4], sizes = [16, 4], strides = [1, 1]} : vector<16x16xf32> to vector<16x4xf32>
    %861 = vector.extract_strided_slice %832 {offsets = [0, 8], sizes = [16, 4], strides = [1, 1]} : vector<16x16xf32> to vector<16x4xf32>
    %862 = vector.extract_strided_slice %832 {offsets = [0, 12], sizes = [16, 4], strides = [1, 1]} : vector<16x16xf32> to vector<16x4xf32>
    %863 = vector.shape_cast %859 : vector<16x4xf32> to vector<1x16x4xf32>
    %864 = vector.shape_cast %860 : vector<16x4xf32> to vector<1x16x4xf32>
    %865 = vector.shape_cast %861 : vector<16x4xf32> to vector<1x16x4xf32>
    %866 = vector.shape_cast %862 : vector<16x4xf32> to vector<1x16x4xf32>
    %867 = tpu.concatenate %863, %864, %865, %866 in 0 : vector<1x16x4xf32>, vector<1x16x4xf32>, vector<1x16x4xf32>, vector<1x16x4xf32> -> vector<4x16x4xf32>
    "tpu.trace_start"() <{level = 10 : i32, message = "hnd,hmd->hnm"}> : () -> ()
    %cst_359 = arith.constant dense<0.000000e+00> : vector<4x16x16xf32>
    %868 = tpu.matmul %849, %858, %cst_359 {dimension_numbers = #tpu.dot_dimension_numbers<[2], [2], [1], [1], [0, 0, 0, 1, 1, 1], [0], [0]>} : vector<4x16x4xf32>, vector<4x16x4xf32>, vector<4x16x16xf32> -> vector<4x16x16xf32>
    "tpu.trace_stop"() : () -> ()
    %cst_360 = arith.constant dense<0xFF800000> : vector<4x16xf32>
    %869 = vector.multi_reduction <maximumf>, %868, %cst_360 [2] : vector<4x16x16xf32> to vector<4x16xf32>
    %870 = vector.shape_cast %869 : vector<4x16xf32> to vector<4x16x1xf32>
    %871 = vector.broadcast %870 : vector<4x16x1xf32> to vector<4x16x16xf32>
    %872 = arith.subf %868, %871 : vector<4x16x16xf32>
    %873 = math.exp %872 : vector<4x16x16xf32>
    %cst_361 = arith.constant dense<0.000000e+00> : vector<4x16xf32>
    %874 = vector.multi_reduction <add>, %873, %cst_361 [2] : vector<4x16x16xf32> to vector<4x16xf32>
    %875 = vector.shape_cast %874 : vector<4x16xf32> to vector<4x16x1xf32>
    %876 = tpu.reciprocal %875 {approx = true} : vector<4x16x1xf32> -> vector<4x16x1xf32>
    %877 = vector.broadcast %876 : vector<4x16x1xf32> to vector<4x16x16xf32>
    %878 = arith.mulf %873, %877 : vector<4x16x16xf32>
    "tpu.trace_start"() <{level = 10 : i32, message = "hnm,hmd->hnd"}> : () -> ()
    %cst_362 = arith.constant dense<0.000000e+00> : vector<4x16x4xf32>
    %879 = tpu.matmul %878, %867, %cst_362 {dimension_numbers = #tpu.dot_dimension_numbers<[2], [1], [1], [2], [0, 0, 0, 1, 1, 2], [0], [0]>} : vector<4x16x16xf32>, vector<4x16x4xf32>, vector<4x16x4xf32> -> vector<4x16x4xf32>
    "tpu.trace_stop"() : () -> ()
    %880 = vector.extract_strided_slice %879 {offsets = [0, 0, 0], sizes = [1, 16, 4], strides = [1, 1, 1]} : vector<4x16x4xf32> to vector<1x16x4xf32>
    %881 = vector.shape_cast %880 : vector<1x16x4xf32> to vector<16x4xf32>
    %882 = vector.extract_strided_slice %879 {offsets = [1, 0, 0], sizes = [1, 16, 4], strides = [1, 1, 1]} : vector<4x16x4xf32> to vector<1x16x4xf32>
    %883 = vector.shape_cast %882 : vector<1x16x4xf32> to vector<16x4xf32>
    %884 = vector.extract_strided_slice %879 {offsets = [2, 0, 0], sizes = [1, 16, 4], strides = [1, 1, 1]} : vector<4x16x4xf32> to vector<1x16x4xf32>
    %885 = vector.shape_cast %884 : vector<1x16x4xf32> to vector<16x4xf32>
    %886 = vector.extract_strided_slice %879 {offsets = [3, 0, 0], sizes = [1, 16, 4], strides = [1, 1, 1]} : vector<4x16x4xf32> to vector<1x16x4xf32>
    %887 = vector.shape_cast %886 : vector<1x16x4xf32> to vector<16x4xf32>
    %888 = tpu.concatenate %881, %883, %885, %887 in 1 : vector<16x4xf32>, vector<16x4xf32>, vector<16x4xf32>, vector<16x4xf32> -> vector<16x16xf32>
    %cst_363 = arith.constant dense<0.000000e+00> : vector<16x16xf32>
    %889 = tpu.matmul %888, %793, %cst_363 {dimension_numbers = #tpu.dot_dimension_numbers<[1], [0], [0], [1], [0, 0, 1, 1], [], []>} : vector<16x16xf32>, vector<16x16xf32>, vector<16x16xf32> -> vector<16x16xf32>
    %890 = arith.addf %783, %889 : vector<16x16xf32>
    %891 = vector.broadcast %795 : vector<1x16xf32> to vector<16x16xf32>
    %892 = arith.addf %890, %891 : vector<16x16xf32>
    %893 = vector.extract_strided_slice %785 {offsets = [1, 0], sizes = [1, 16], strides = [1, 1]} : vector<2x16xf32> to vector<1x16xf32>
    %894 = vector.extract_strided_slice %787 {offsets = [1, 0], sizes = [1, 16], strides = [1, 1]} : vector<2x16xf32> to vector<1x16xf32>
    %cst_364 = arith.constant dense<0.000000e+00> : vector<16xf32>
    %895 = vector.multi_reduction <add>, %892, %cst_364 [1] : vector<16x16xf32> to vector<16xf32>
    %896 = vector.shape_cast %895 : vector<16xf32> to vector<16x1xf32>
    %cst_365 = arith.constant 1.600000e+01 : f32
    %897 = vector.broadcast %cst_365 : f32 to vector<16x1xf32>
    %898 = arith.divf %896, %897 : vector<16x1xf32>
    %899 = vector.broadcast %898 : vector<16x1xf32> to vector<16x16xf32>
    %900 = arith.subf %892, %899 : vector<16x16xf32>
    %901 = arith.mulf %900, %900 : vector<16x16xf32>
    %cst_366 = arith.constant dense<0.000000e+00> : vector<16xf32>
    %902 = vector.multi_reduction <add>, %901, %cst_366 [1] : vector<16x16xf32> to vector<16xf32>
    %903 = vector.shape_cast %902 : vector<16xf32> to vector<16x1xf32>
    %cst_367 = arith.constant 0.0666666701 : f32
    %904 = vector.broadcast %cst_367 : f32 to vector<16x1xf32>
    %905 = arith.mulf %903, %904 : vector<16x1xf32>
    %906 = math.sqrt %905 : vector<16x1xf32>
    %cst_368 = arith.constant 9.99999997E-7 : f32
    %907 = vector.broadcast %cst_368 : f32 to vector<16x1xf32>
    %908 = arith.addf %906, %907 : vector<16x1xf32>
    %909 = tpu.reciprocal %908 {approx = true} : vector<16x1xf32> -> vector<16x1xf32>
    %910 = vector.broadcast %893 : vector<1x16xf32> to vector<16x16xf32>
    %911 = arith.mulf %910, %900 : vector<16x16xf32>
    %912 = vector.broadcast %909 : vector<16x1xf32> to vector<16x16xf32>
    %913 = arith.mulf %911, %912 : vector<16x16xf32>
    %914 = vector.broadcast %894 : vector<1x16xf32> to vector<16x16xf32>
    %915 = arith.addf %913, %914 : vector<16x16xf32>
    %cst_369 = arith.constant dense<0.000000e+00> : vector<16x16xf32>
    %916 = tpu.matmul %1, %915, %cst_369 {dimension_numbers = #tpu.dot_dimension_numbers<[1], [0], [0], [1], [0, 0, 1, 1], [], []>} : vector<16x16xf32>, vector<16x16xf32>, vector<16x16xf32> -> vector<16x16xf32>
    %cst_370 = arith.constant dense<0.000000e+00> : vector<16x32xf32>
    %917 = tpu.matmul %916, %797, %cst_370 {dimension_numbers = #tpu.dot_dimension_numbers<[1], [0], [0], [1], [0, 0, 1, 1], [], []>} : vector<16x16xf32>, vector<16x32xf32>, vector<16x32xf32> -> vector<16x32xf32>
    %918 = vector.broadcast %799 : vector<1x32xf32> to vector<16x32xf32>
    %919 = arith.addf %917, %918 : vector<16x32xf32>
    %cst_371 = arith.constant 0.000000e+00 : f32
    %920 = vector.broadcast %cst_371 : f32 to vector<16x32xf32>
    %921 = arith.maximumf %919, %920 : vector<16x32xf32>
    %cst_372 = arith.constant dense<0.000000e+00> : vector<16x32xf32>
    %922 = tpu.matmul %1, %921, %cst_372 {dimension_numbers = #tpu.dot_dimension_numbers<[1], [0], [0], [1], [0, 0, 1, 1], [], []>} : vector<16x16xf32>, vector<16x32xf32>, vector<16x32xf32> -> vector<16x32xf32>
    %cst_373 = arith.constant dense<0.000000e+00> : vector<16x16xf32>
    %923 = tpu.matmul %922, %801, %cst_373 {dimension_numbers = #tpu.dot_dimension_numbers<[1], [0], [0], [1], [0, 0, 1, 1], [], []>} : vector<16x32xf32>, vector<32x16xf32>, vector<16x16xf32> -> vector<16x16xf32>
    %924 = vector.broadcast %803 : vector<1x16xf32> to vector<16x16xf32>
    %925 = arith.addf %923, %924 : vector<16x16xf32>
    %926 = arith.addf %892, %925 : vector<16x16xf32>
    %c1_374 = arith.constant 1 : index
    %c0_375 = arith.constant 0 : index
    %c0_376 = arith.constant 0 : index
    %927 = vector.load %arg25[%c1_374, %c0_375, %c0_376] : memref<2x2x16xf32, #tpu.memory_space<vmem>>, vector<1x2x16xf32>
    %928 = vector.shape_cast %927 : vector<1x2x16xf32> to vector<2x16xf32>
    %c1_377 = arith.constant 1 : index
    %c0_378 = arith.constant 0 : index
    %c0_379 = arith.constant 0 : index
    %929 = vector.load %arg26[%c1_377, %c0_378, %c0_379] : memref<2x2x16xf32, #tpu.memory_space<vmem>>, vector<1x2x16xf32>
    %930 = vector.shape_cast %929 : vector<1x2x16xf32> to vector<2x16xf32>
    %c1_380 = arith.constant 1 : index
    %c0_381 = arith.constant 0 : index
    %c0_382 = arith.constant 0 : index
    %931 = vector.load %arg27[%c1_380, %c0_381, %c0_382] : memref<2x16x48xf32, #tpu.memory_space<vmem>>, vector<1x16x48xf32>
    %932 = vector.shape_cast %931 : vector<1x16x48xf32> to vector<16x48xf32>
    %c1_383 = arith.constant 1 : index
    %c0_384 = arith.constant 0 : index
    %c0_385 = arith.constant 0 : index
    %933 = vector.load %arg28[%c1_383, %c0_384, %c0_385] : memref<2x1x48xf32, #tpu.memory_space<vmem>>, vector<1x1x48xf32>
    %934 = vector.shape_cast %933 : vector<1x1x48xf32> to vector<1x48xf32>
    %c1_386 = arith.constant 1 : index
    %c0_387 = arith.constant 0 : index
    %c0_388 = arith.constant 0 : index
    %935 = vector.load %arg29[%c1_386, %c0_387, %c0_388] : memref<2x16x16xf32, #tpu.memory_space<vmem>>, vector<1x16x16xf32>
    %936 = vector.shape_cast %935 : vector<1x16x16xf32> to vector<16x16xf32>
    %c1_389 = arith.constant 1 : index
    %c0_390 = arith.constant 0 : index
    %c0_391 = arith.constant 0 : index
    %937 = vector.load %arg30[%c1_389, %c0_390, %c0_391] : memref<2x1x16xf32, #tpu.memory_space<vmem>>, vector<1x1x16xf32>
    %938 = vector.shape_cast %937 : vector<1x1x16xf32> to vector<1x16xf32>
    %c1_392 = arith.constant 1 : index
    %c0_393 = arith.constant 0 : index
    %c0_394 = arith.constant 0 : index
    %939 = vector.load %arg31[%c1_392, %c0_393, %c0_394] : memref<2x16x32xf32, #tpu.memory_space<vmem>>, vector<1x16x32xf32>
    %940 = vector.shape_cast %939 : vector<1x16x32xf32> to vector<16x32xf32>
    %c1_395 = arith.constant 1 : index
    %c0_396 = arith.constant 0 : index
    %c0_397 = arith.constant 0 : index
    %941 = vector.load %arg32[%c1_395, %c0_396, %c0_397] : memref<2x1x32xf32, #tpu.memory_space<vmem>>, vector<1x1x32xf32>
    %942 = vector.shape_cast %941 : vector<1x1x32xf32> to vector<1x32xf32>
    %c1_398 = arith.constant 1 : index
    %c0_399 = arith.constant 0 : index
    %c0_400 = arith.constant 0 : index
    %943 = vector.load %arg33[%c1_398, %c0_399, %c0_400] : memref<2x32x16xf32, #tpu.memory_space<vmem>>, vector<1x32x16xf32>
    %944 = vector.shape_cast %943 : vector<1x32x16xf32> to vector<32x16xf32>
    %c1_401 = arith.constant 1 : index
    %c0_402 = arith.constant 0 : index
    %c0_403 = arith.constant 0 : index
    %945 = vector.load %arg34[%c1_401, %c0_402, %c0_403] : memref<2x1x16xf32, #tpu.memory_space<vmem>>, vector<1x1x16xf32>
    %946 = vector.shape_cast %945 : vector<1x1x16xf32> to vector<1x16xf32>
    %947 = vector.extract_strided_slice %928 {offsets = [0, 0], sizes = [1, 16], strides = [1, 1]} : vector<2x16xf32> to vector<1x16xf32>
    %948 = vector.extract_strided_slice %930 {offsets = [0, 0], sizes = [1, 16], strides = [1, 1]} : vector<2x16xf32> to vector<1x16xf32>
    %cst_404 = arith.constant dense<0.000000e+00> : vector<16xf32>
    %949 = vector.multi_reduction <add>, %926, %cst_404 [1] : vector<16x16xf32> to vector<16xf32>
    %950 = vector.shape_cast %949 : vector<16xf32> to vector<16x1xf32>
    %cst_405 = arith.constant 1.600000e+01 : f32
    %951 = vector.broadcast %cst_405 : f32 to vector<16x1xf32>
    %952 = arith.divf %950, %951 : vector<16x1xf32>
    %953 = vector.broadcast %952 : vector<16x1xf32> to vector<16x16xf32>
    %954 = arith.subf %926, %953 : vector<16x16xf32>
    %955 = arith.mulf %954, %954 : vector<16x16xf32>
    %cst_406 = arith.constant dense<0.000000e+00> : vector<16xf32>
    %956 = vector.multi_reduction <add>, %955, %cst_406 [1] : vector<16x16xf32> to vector<16xf32>
    %957 = vector.shape_cast %956 : vector<16xf32> to vector<16x1xf32>
    %cst_407 = arith.constant 0.0666666701 : f32
    %958 = vector.broadcast %cst_407 : f32 to vector<16x1xf32>
    %959 = arith.mulf %957, %958 : vector<16x1xf32>
    %960 = math.sqrt %959 : vector<16x1xf32>
    %cst_408 = arith.constant 9.99999997E-7 : f32
    %961 = vector.broadcast %cst_408 : f32 to vector<16x1xf32>
    %962 = arith.addf %960, %961 : vector<16x1xf32>
    %963 = tpu.reciprocal %962 {approx = true} : vector<16x1xf32> -> vector<16x1xf32>
    %964 = vector.broadcast %947 : vector<1x16xf32> to vector<16x16xf32>
    %965 = arith.mulf %964, %954 : vector<16x16xf32>
    %966 = vector.broadcast %963 : vector<16x1xf32> to vector<16x16xf32>
    %967 = arith.mulf %965, %966 : vector<16x16xf32>
    %968 = vector.broadcast %948 : vector<1x16xf32> to vector<16x16xf32>
    %969 = arith.addf %967, %968 : vector<16x16xf32>
    %cst_409 = arith.constant dense<0.000000e+00> : vector<16x48xf32>
    %970 = tpu.matmul %969, %932, %cst_409 {dimension_numbers = #tpu.dot_dimension_numbers<[1], [0], [0], [1], [0, 0, 1, 1], [], []>} : vector<16x16xf32>, vector<16x48xf32>, vector<16x48xf32> -> vector<16x48xf32>
    %971 = vector.broadcast %934 : vector<1x48xf32> to vector<16x48xf32>
    %972 = arith.addf %970, %971 : vector<16x48xf32>
    %973 = vector.extract_strided_slice %972 {offsets = [0, 0], sizes = [16, 16], strides = [1, 1]} : vector<16x48xf32> to vector<16x16xf32>
    %974 = vector.extract_strided_slice %972 {offsets = [0, 16], sizes = [16, 16], strides = [1, 1]} : vector<16x48xf32> to vector<16x16xf32>
    %975 = vector.extract_strided_slice %972 {offsets = [0, 32], sizes = [16, 16], strides = [1, 1]} : vector<16x48xf32> to vector<16x16xf32>
    %976 = vector.extract_strided_slice %973 {offsets = [0, 0], sizes = [16, 4], strides = [1, 1]} : vector<16x16xf32> to vector<16x4xf32>
    %cst_410 = arith.constant 5.000000e-01 : f32
    %977 = vector.broadcast %cst_410 : f32 to vector<16x4xf32>
    %978 = arith.mulf %976, %977 : vector<16x4xf32>
    %979 = vector.extract_strided_slice %973 {offsets = [0, 4], sizes = [16, 4], strides = [1, 1]} : vector<16x16xf32> to vector<16x4xf32>
    %cst_411 = arith.constant 5.000000e-01 : f32
    %980 = vector.broadcast %cst_411 : f32 to vector<16x4xf32>
    %981 = arith.mulf %979, %980 : vector<16x4xf32>
    %982 = vector.extract_strided_slice %973 {offsets = [0, 8], sizes = [16, 4], strides = [1, 1]} : vector<16x16xf32> to vector<16x4xf32>
    %cst_412 = arith.constant 5.000000e-01 : f32
    %983 = vector.broadcast %cst_412 : f32 to vector<16x4xf32>
    %984 = arith.mulf %982, %983 : vector<16x4xf32>
    %985 = vector.extract_strided_slice %973 {offsets = [0, 12], sizes = [16, 4], strides = [1, 1]} : vector<16x16xf32> to vector<16x4xf32>
    %cst_413 = arith.constant 5.000000e-01 : f32
    %986 = vector.broadcast %cst_413 : f32 to vector<16x4xf32>
    %987 = arith.mulf %985, %986 : vector<16x4xf32>
    %988 = vector.shape_cast %978 : vector<16x4xf32> to vector<1x16x4xf32>
    %989 = vector.shape_cast %981 : vector<16x4xf32> to vector<1x16x4xf32>
    %990 = vector.shape_cast %984 : vector<16x4xf32> to vector<1x16x4xf32>
    %991 = vector.shape_cast %987 : vector<16x4xf32> to vector<1x16x4xf32>
    %992 = tpu.concatenate %988, %989, %990, %991 in 0 : vector<1x16x4xf32>, vector<1x16x4xf32>, vector<1x16x4xf32>, vector<1x16x4xf32> -> vector<4x16x4xf32>
    %993 = vector.extract_strided_slice %974 {offsets = [0, 0], sizes = [16, 4], strides = [1, 1]} : vector<16x16xf32> to vector<16x4xf32>
    %994 = vector.extract_strided_slice %974 {offsets = [0, 4], sizes = [16, 4], strides = [1, 1]} : vector<16x16xf32> to vector<16x4xf32>
    %995 = vector.extract_strided_slice %974 {offsets = [0, 8], sizes = [16, 4], strides = [1, 1]} : vector<16x16xf32> to vector<16x4xf32>
    %996 = vector.extract_strided_slice %974 {offsets = [0, 12], sizes = [16, 4], strides = [1, 1]} : vector<16x16xf32> to vector<16x4xf32>
    %997 = vector.shape_cast %993 : vector<16x4xf32> to vector<1x16x4xf32>
    %998 = vector.shape_cast %994 : vector<16x4xf32> to vector<1x16x4xf32>
    %999 = vector.shape_cast %995 : vector<16x4xf32> to vector<1x16x4xf32>
    %1000 = vector.shape_cast %996 : vector<16x4xf32> to vector<1x16x4xf32>
    %1001 = tpu.concatenate %997, %998, %999, %1000 in 0 : vector<1x16x4xf32>, vector<1x16x4xf32>, vector<1x16x4xf32>, vector<1x16x4xf32> -> vector<4x16x4xf32>
    %1002 = vector.extract_strided_slice %975 {offsets = [0, 0], sizes = [16, 4], strides = [1, 1]} : vector<16x16xf32> to vector<16x4xf32>
    %1003 = vector.extract_strided_slice %975 {offsets = [0, 4], sizes = [16, 4], strides = [1, 1]} : vector<16x16xf32> to vector<16x4xf32>
    %1004 = vector.extract_strided_slice %975 {offsets = [0, 8], sizes = [16, 4], strides = [1, 1]} : vector<16x16xf32> to vector<16x4xf32>
    %1005 = vector.extract_strided_slice %975 {offsets = [0, 12], sizes = [16, 4], strides = [1, 1]} : vector<16x16xf32> to vector<16x4xf32>
    %1006 = vector.shape_cast %1002 : vector<16x4xf32> to vector<1x16x4xf32>
    %1007 = vector.shape_cast %1003 : vector<16x4xf32> to vector<1x16x4xf32>
    %1008 = vector.shape_cast %1004 : vector<16x4xf32> to vector<1x16x4xf32>
    %1009 = vector.shape_cast %1005 : vector<16x4xf32> to vector<1x16x4xf32>
    %1010 = tpu.concatenate %1006, %1007, %1008, %1009 in 0 : vector<1x16x4xf32>, vector<1x16x4xf32>, vector<1x16x4xf32>, vector<1x16x4xf32> -> vector<4x16x4xf32>
    "tpu.trace_start"() <{level = 10 : i32, message = "hnd,hmd->hnm"}> : () -> ()
    %cst_414 = arith.constant dense<0.000000e+00> : vector<4x16x16xf32>
    %1011 = tpu.matmul %992, %1001, %cst_414 {dimension_numbers = #tpu.dot_dimension_numbers<[2], [2], [1], [1], [0, 0, 0, 1, 1, 1], [0], [0]>} : vector<4x16x4xf32>, vector<4x16x4xf32>, vector<4x16x16xf32> -> vector<4x16x16xf32>
    "tpu.trace_stop"() : () -> ()
    %cst_415 = arith.constant dense<0xFF800000> : vector<4x16xf32>
    %1012 = vector.multi_reduction <maximumf>, %1011, %cst_415 [2] : vector<4x16x16xf32> to vector<4x16xf32>
    %1013 = vector.shape_cast %1012 : vector<4x16xf32> to vector<4x16x1xf32>
    %1014 = vector.broadcast %1013 : vector<4x16x1xf32> to vector<4x16x16xf32>
    %1015 = arith.subf %1011, %1014 : vector<4x16x16xf32>
    %1016 = math.exp %1015 : vector<4x16x16xf32>
    %cst_416 = arith.constant dense<0.000000e+00> : vector<4x16xf32>
    %1017 = vector.multi_reduction <add>, %1016, %cst_416 [2] : vector<4x16x16xf32> to vector<4x16xf32>
    %1018 = vector.shape_cast %1017 : vector<4x16xf32> to vector<4x16x1xf32>
    %1019 = tpu.reciprocal %1018 {approx = true} : vector<4x16x1xf32> -> vector<4x16x1xf32>
    %1020 = vector.broadcast %1019 : vector<4x16x1xf32> to vector<4x16x16xf32>
    %1021 = arith.mulf %1016, %1020 : vector<4x16x16xf32>
    "tpu.trace_start"() <{level = 10 : i32, message = "hnm,hmd->hnd"}> : () -> ()
    %cst_417 = arith.constant dense<0.000000e+00> : vector<4x16x4xf32>
    %1022 = tpu.matmul %1021, %1010, %cst_417 {dimension_numbers = #tpu.dot_dimension_numbers<[2], [1], [1], [2], [0, 0, 0, 1, 1, 2], [0], [0]>} : vector<4x16x16xf32>, vector<4x16x4xf32>, vector<4x16x4xf32> -> vector<4x16x4xf32>
    "tpu.trace_stop"() : () -> ()
    %1023 = vector.extract_strided_slice %1022 {offsets = [0, 0, 0], sizes = [1, 16, 4], strides = [1, 1, 1]} : vector<4x16x4xf32> to vector<1x16x4xf32>
    %1024 = vector.shape_cast %1023 : vector<1x16x4xf32> to vector<16x4xf32>
    %1025 = vector.extract_strided_slice %1022 {offsets = [1, 0, 0], sizes = [1, 16, 4], strides = [1, 1, 1]} : vector<4x16x4xf32> to vector<1x16x4xf32>
    %1026 = vector.shape_cast %1025 : vector<1x16x4xf32> to vector<16x4xf32>
    %1027 = vector.extract_strided_slice %1022 {offsets = [2, 0, 0], sizes = [1, 16, 4], strides = [1, 1, 1]} : vector<4x16x4xf32> to vector<1x16x4xf32>
    %1028 = vector.shape_cast %1027 : vector<1x16x4xf32> to vector<16x4xf32>
    %1029 = vector.extract_strided_slice %1022 {offsets = [3, 0, 0], sizes = [1, 16, 4], strides = [1, 1, 1]} : vector<4x16x4xf32> to vector<1x16x4xf32>
    %1030 = vector.shape_cast %1029 : vector<1x16x4xf32> to vector<16x4xf32>
    %1031 = tpu.concatenate %1024, %1026, %1028, %1030 in 1 : vector<16x4xf32>, vector<16x4xf32>, vector<16x4xf32>, vector<16x4xf32> -> vector<16x16xf32>
    %cst_418 = arith.constant dense<0.000000e+00> : vector<16x16xf32>
    %1032 = tpu.matmul %1031, %936, %cst_418 {dimension_numbers = #tpu.dot_dimension_numbers<[1], [0], [0], [1], [0, 0, 1, 1], [], []>} : vector<16x16xf32>, vector<16x16xf32>, vector<16x16xf32> -> vector<16x16xf32>
    %1033 = arith.addf %926, %1032 : vector<16x16xf32>
    %1034 = vector.broadcast %938 : vector<1x16xf32> to vector<16x16xf32>
    %1035 = arith.addf %1033, %1034 : vector<16x16xf32>
    %1036 = vector.extract_strided_slice %928 {offsets = [1, 0], sizes = [1, 16], strides = [1, 1]} : vector<2x16xf32> to vector<1x16xf32>
    %1037 = vector.extract_strided_slice %930 {offsets = [1, 0], sizes = [1, 16], strides = [1, 1]} : vector<2x16xf32> to vector<1x16xf32>
    %cst_419 = arith.constant dense<0.000000e+00> : vector<16xf32>
    %1038 = vector.multi_reduction <add>, %1035, %cst_419 [1] : vector<16x16xf32> to vector<16xf32>
    %1039 = vector.shape_cast %1038 : vector<16xf32> to vector<16x1xf32>
    %cst_420 = arith.constant 1.600000e+01 : f32
    %1040 = vector.broadcast %cst_420 : f32 to vector<16x1xf32>
    %1041 = arith.divf %1039, %1040 : vector<16x1xf32>
    %1042 = vector.broadcast %1041 : vector<16x1xf32> to vector<16x16xf32>
    %1043 = arith.subf %1035, %1042 : vector<16x16xf32>
    %1044 = arith.mulf %1043, %1043 : vector<16x16xf32>
    %cst_421 = arith.constant dense<0.000000e+00> : vector<16xf32>
    %1045 = vector.multi_reduction <add>, %1044, %cst_421 [1] : vector<16x16xf32> to vector<16xf32>
    %1046 = vector.shape_cast %1045 : vector<16xf32> to vector<16x1xf32>
    %cst_422 = arith.constant 0.0666666701 : f32
    %1047 = vector.broadcast %cst_422 : f32 to vector<16x1xf32>
    %1048 = arith.mulf %1046, %1047 : vector<16x1xf32>
    %1049 = math.sqrt %1048 : vector<16x1xf32>
    %cst_423 = arith.constant 9.99999997E-7 : f32
    %1050 = vector.broadcast %cst_423 : f32 to vector<16x1xf32>
    %1051 = arith.addf %1049, %1050 : vector<16x1xf32>
    %1052 = tpu.reciprocal %1051 {approx = true} : vector<16x1xf32> -> vector<16x1xf32>
    %1053 = vector.broadcast %1036 : vector<1x16xf32> to vector<16x16xf32>
    %1054 = arith.mulf %1053, %1043 : vector<16x16xf32>
    %1055 = vector.broadcast %1052 : vector<16x1xf32> to vector<16x16xf32>
    %1056 = arith.mulf %1054, %1055 : vector<16x16xf32>
    %1057 = vector.broadcast %1037 : vector<1x16xf32> to vector<16x16xf32>
    %1058 = arith.addf %1056, %1057 : vector<16x16xf32>
    %cst_424 = arith.constant dense<0.000000e+00> : vector<16x16xf32>
    %1059 = tpu.matmul %1, %1058, %cst_424 {dimension_numbers = #tpu.dot_dimension_numbers<[1], [0], [0], [1], [0, 0, 1, 1], [], []>} : vector<16x16xf32>, vector<16x16xf32>, vector<16x16xf32> -> vector<16x16xf32>
    %cst_425 = arith.constant dense<0.000000e+00> : vector<16x32xf32>
    %1060 = tpu.matmul %1059, %940, %cst_425 {dimension_numbers = #tpu.dot_dimension_numbers<[1], [0], [0], [1], [0, 0, 1, 1], [], []>} : vector<16x16xf32>, vector<16x32xf32>, vector<16x32xf32> -> vector<16x32xf32>
    %1061 = vector.broadcast %942 : vector<1x32xf32> to vector<16x32xf32>
    %1062 = arith.addf %1060, %1061 : vector<16x32xf32>
    %cst_426 = arith.constant 0.000000e+00 : f32
    %1063 = vector.broadcast %cst_426 : f32 to vector<16x32xf32>
    %1064 = arith.maximumf %1062, %1063 : vector<16x32xf32>
    %cst_427 = arith.constant dense<0.000000e+00> : vector<16x32xf32>
    %1065 = tpu.matmul %1, %1064, %cst_427 {dimension_numbers = #tpu.dot_dimension_numbers<[1], [0], [0], [1], [0, 0, 1, 1], [], []>} : vector<16x16xf32>, vector<16x32xf32>, vector<16x32xf32> -> vector<16x32xf32>
    %cst_428 = arith.constant dense<0.000000e+00> : vector<16x16xf32>
    %1066 = tpu.matmul %1065, %944, %cst_428 {dimension_numbers = #tpu.dot_dimension_numbers<[1], [0], [0], [1], [0, 0, 1, 1], [], []>} : vector<16x32xf32>, vector<32x16xf32>, vector<16x16xf32> -> vector<16x16xf32>
    %1067 = vector.broadcast %946 : vector<1x16xf32> to vector<16x16xf32>
    %1068 = arith.addf %1066, %1067 : vector<16x16xf32>
    %1069 = arith.addf %1035, %1068 : vector<16x16xf32>
    %c0_429 = arith.constant 0 : index
    %c0_430 = arith.constant 0 : index
    %1070 = vector.load %arg35[%c0_429, %c0_430] : memref<64x16xf32, #tpu.memory_space<vmem>>, vector<64x16xf32>
    %cst_431 = arith.constant dense<0.000000e+00> : vector<64x16xf32>
    %1071 = tpu.matmul %1070, %1069, %cst_431 {dimension_numbers = #tpu.dot_dimension_numbers<[1], [0], [0], [1], [0, 0, 1, 1], [], []>} : vector<64x16xf32>, vector<16x16xf32>, vector<64x16xf32> -> vector<64x16xf32>
    %c0_432 = arith.constant 0 : index
    %c0_433 = arith.constant 0 : index
    %1072 = vector.load %arg36[%c0_432, %c0_433] : memref<16x3xf32, #tpu.memory_space<vmem>>, vector<16x3xf32>
    %cst_434 = arith.constant dense<0.000000e+00> : vector<64x3xf32>
    %1073 = tpu.matmul %1071, %1072, %cst_434 {dimension_numbers = #tpu.dot_dimension_numbers<[1], [0], [0], [1], [0, 0, 1, 1], [], []>} : vector<64x16xf32>, vector<16x3xf32>, vector<64x3xf32> -> vector<64x3xf32>
    %c0_435 = arith.constant 0 : index
    %c0_436 = arith.constant 0 : index
    %1074 = vector.load %arg37[%c0_435, %c0_436] : memref<1x3xf32, #tpu.memory_space<vmem>>, vector<1x3xf32>
    %1075 = vector.broadcast %1074 : vector<1x3xf32> to vector<64x3xf32>
    %1076 = arith.addf %1073, %1075 : vector<64x3xf32>
    %c0_437 = arith.constant 0 : index
    %c0_438 = arith.constant 0 : index
    %c0_439 = arith.constant 0 : index
    %1077 = vector.load %arg39[%c0_437, %c0_438, %c0_439] : memref<1x64x3xf32, #tpu.memory_space<vmem>>, vector<1x64x3xf32>
    %1078 = vector.shape_cast %1077 : vector<1x64x3xf32> to vector<64x3xf32>
    %1079 = vector.shape_cast %1076 : vector<64x3xf32> to vector<1x64x3xf32>
    tpu.vector_store %arg39[%c0_437, %c0_438, %c0_439], %1079 {strides = array<i32>} : memref<1x64x3xf32, #tpu.memory_space<vmem>>, vector<1x64x3xf32>,
    return
  }
  func.func @transform_0(%arg0: i32) -> (i32, i32, i32) {
    %c0_i32 = arith.constant 0 : i32
    %c0_i32_0 = arith.constant 0 : i32
    %c0_i32_1 = arith.constant 0 : i32
    return %arg0, %c0_i32, %c0_i32_0 : i32, i32, i32
  }
  func.func @transform_1(%arg0: i32) -> (i32, i32, i32) {
    %c0_i32 = arith.constant 0 : i32
    %c0_i32_0 = arith.constant 0 : i32
    %c0_i32_1 = arith.constant 0 : i32
    return %arg0, %c0_i32, %c0_i32_0 : i32, i32, i32
  }
  func.func @transform_2(%arg0: i32) -> (i32, i32, i32) {
    %c0_i32 = arith.constant 0 : i32
    %c0_i32_0 = arith.constant 0 : i32
    %c0_i32_1 = arith.constant 0 : i32
    %c0_i32_2 = arith.constant 0 : i32
    return %c0_i32, %c0_i32_0, %c0_i32_1 : i32, i32, i32
  }
  func.func @transform_3(%arg0: i32) -> (i32, i32) {
    %c0_i32 = arith.constant 0 : i32
    %c0_i32_0 = arith.constant 0 : i32
    %c0_i32_1 = arith.constant 0 : i32
    return %c0_i32, %c0_i32_0 : i32, i32
  }
  func.func @transform_4(%arg0: i32) -> (i32, i32) {
    %c0_i32 = arith.constant 0 : i32
    %c0_i32_0 = arith.constant 0 : i32
    %c0_i32_1 = arith.constant 0 : i32
    return %c0_i32, %c0_i32_0 : i32, i32
  }
  func.func @transform_5(%arg0: i32) -> (i32, i32) {
    %c0_i32 = arith.constant 0 : i32
    %c0_i32_0 = arith.constant 0 : i32
    %c0_i32_1 = arith.constant 0 : i32
    return %c0_i32, %c0_i32_0 : i32, i32
  }
  func.func @transform_6(%arg0: i32) -> (i32, i32, i32) {
    %c0_i32 = arith.constant 0 : i32
    %c0_i32_0 = arith.constant 0 : i32
    %c0_i32_1 = arith.constant 0 : i32
    %c0_i32_2 = arith.constant 0 : i32
    return %c0_i32, %c0_i32_0, %c0_i32_1 : i32, i32, i32
  }
  func.func @transform_7(%arg0: i32) -> (i32, i32, i32) {
    %c0_i32 = arith.constant 0 : i32
    %c0_i32_0 = arith.constant 0 : i32
    %c0_i32_1 = arith.constant 0 : i32
    %c0_i32_2 = arith.constant 0 : i32
    return %c0_i32, %c0_i32_0, %c0_i32_1 : i32, i32, i32
  }
  func.func @transform_8(%arg0: i32) -> (i32, i32, i32) {
    %c0_i32 = arith.constant 0 : i32
    %c0_i32_0 = arith.constant 0 : i32
    %c0_i32_1 = arith.constant 0 : i32
    %c0_i32_2 = arith.constant 0 : i32
    return %c0_i32, %c0_i32_0, %c0_i32_1 : i32, i32, i32
  }
  func.func @transform_9(%arg0: i32) -> (i32, i32, i32) {
    %c0_i32 = arith.constant 0 : i32
    %c0_i32_0 = arith.constant 0 : i32
    %c0_i32_1 = arith.constant 0 : i32
    %c0_i32_2 = arith.constant 0 : i32
    return %c0_i32, %c0_i32_0, %c0_i32_1 : i32, i32, i32
  }
  func.func @transform_10(%arg0: i32) -> (i32, i32, i32) {
    %c0_i32 = arith.constant 0 : i32
    %c0_i32_0 = arith.constant 0 : i32
    %c0_i32_1 = arith.constant 0 : i32
    %c0_i32_2 = arith.constant 0 : i32
    return %c0_i32, %c0_i32_0, %c0_i32_1 : i32, i32, i32
  }
  func.func @transform_11(%arg0: i32) -> (i32, i32, i32) {
    %c0_i32 = arith.constant 0 : i32
    %c0_i32_0 = arith.constant 0 : i32
    %c0_i32_1 = arith.constant 0 : i32
    %c0_i32_2 = arith.constant 0 : i32
    return %c0_i32, %c0_i32_0, %c0_i32_1 : i32, i32, i32
  }
  func.func @transform_12(%arg0: i32) -> (i32, i32, i32) {
    %c0_i32 = arith.constant 0 : i32
    %c0_i32_0 = arith.constant 0 : i32
    %c0_i32_1 = arith.constant 0 : i32
    %c0_i32_2 = arith.constant 0 : i32
    return %c0_i32, %c0_i32_0, %c0_i32_1 : i32, i32, i32
  }
  func.func @transform_13(%arg0: i32) -> (i32, i32, i32) {
    %c0_i32 = arith.constant 0 : i32
    %c0_i32_0 = arith.constant 0 : i32
    %c0_i32_1 = arith.constant 0 : i32
    %c0_i32_2 = arith.constant 0 : i32
    return %c0_i32, %c0_i32_0, %c0_i32_1 : i32, i32, i32
  }
  func.func @transform_14(%arg0: i32) -> (i32, i32, i32) {
    %c0_i32 = arith.constant 0 : i32
    %c0_i32_0 = arith.constant 0 : i32
    %c0_i32_1 = arith.constant 0 : i32
    %c0_i32_2 = arith.constant 0 : i32
    return %c0_i32, %c0_i32_0, %c0_i32_1 : i32, i32, i32
  }
  func.func @transform_15(%arg0: i32) -> (i32, i32, i32) {
    %c0_i32 = arith.constant 0 : i32
    %c0_i32_0 = arith.constant 0 : i32
    %c0_i32_1 = arith.constant 0 : i32
    %c0_i32_2 = arith.constant 0 : i32
    return %c0_i32, %c0_i32_0, %c0_i32_1 : i32, i32, i32
  }
  func.func @transform_16(%arg0: i32) -> (i32, i32) {
    %c0_i32 = arith.constant 0 : i32
    %c0_i32_0 = arith.constant 0 : i32
    %c0_i32_1 = arith.constant 0 : i32
    return %c0_i32, %c0_i32_0 : i32, i32
  }
  func.func @transform_17(%arg0: i32) -> (i32, i32) {
    %c0_i32 = arith.constant 0 : i32
    %c0_i32_0 = arith.constant 0 : i32
    %c0_i32_1 = arith.constant 0 : i32
    return %c0_i32, %c0_i32_0 : i32, i32
  }
  func.func @transform_18(%arg0: i32) -> (i32, i32) {
    %c0_i32 = arith.constant 0 : i32
    %c0_i32_0 = arith.constant 0 : i32
    %c0_i32_1 = arith.constant 0 : i32
    return %c0_i32, %c0_i32_0 : i32, i32
  }
  func.func @transform_19(%arg0: i32) -> (i32, i32) {
    %c0_i32 = arith.constant 0 : i32
    %c0_i32_0 = arith.constant 0 : i32
    %c0_i32_1 = arith.constant 0 : i32
    return %c0_i32, %c0_i32_0 : i32, i32
  }
  func.func @transform_20(%arg0: i32) -> (i32, i32) {
    %c0_i32 = arith.constant 0 : i32
    %c0_i32_0 = arith.constant 0 : i32
    %c0_i32_1 = arith.constant 0 : i32
    return %c0_i32, %c0_i32_0 : i32, i32
  }
  func.func @transform_21(%arg0: i32) -> (i32, i32) {
    %c0_i32 = arith.constant 0 : i32
    %c0_i32_0 = arith.constant 0 : i32
    %c0_i32_1 = arith.constant 0 : i32
    return %c0_i32, %c0_i32_0 : i32, i32
  }
  func.func @transform_22(%arg0: i32) -> (i32, i32) {
    %c0_i32 = arith.constant 0 : i32
    %c0_i32_0 = arith.constant 0 : i32
    %c0_i32_1 = arith.constant 0 : i32
    return %c0_i32, %c0_i32_0 : i32, i32
  }
  func.func @transform_23(%arg0: i32) -> (i32, i32) {
    %c0_i32 = arith.constant 0 : i32
    %c0_i32_0 = arith.constant 0 : i32
    %c0_i32_1 = arith.constant 0 : i32
    return %c0_i32, %c0_i32_0 : i32, i32
  }
  func.func @transform_24(%arg0: i32) -> (i32, i32, i32) {
    %c0_i32 = arith.constant 0 : i32
    %c0_i32_0 = arith.constant 0 : i32
    %c0_i32_1 = arith.constant 0 : i32
    %c0_i32_2 = arith.constant 0 : i32
    return %c0_i32, %c0_i32_0, %c0_i32_1 : i32, i32, i32
  }
  func.func @transform_25(%arg0: i32) -> (i32, i32, i32) {
    %c0_i32 = arith.constant 0 : i32
    %c0_i32_0 = arith.constant 0 : i32
    %c0_i32_1 = arith.constant 0 : i32
    %c0_i32_2 = arith.constant 0 : i32
    return %c0_i32, %c0_i32_0, %c0_i32_1 : i32, i32, i32
  }
  func.func @transform_26(%arg0: i32) -> (i32, i32, i32) {
    %c0_i32 = arith.constant 0 : i32
    %c0_i32_0 = arith.constant 0 : i32
    %c0_i32_1 = arith.constant 0 : i32
    %c0_i32_2 = arith.constant 0 : i32
    return %c0_i32, %c0_i32_0, %c0_i32_1 : i32, i32, i32
  }
  func.func @transform_27(%arg0: i32) -> (i32, i32, i32) {
    %c0_i32 = arith.constant 0 : i32
    %c0_i32_0 = arith.constant 0 : i32
    %c0_i32_1 = arith.constant 0 : i32
    %c0_i32_2 = arith.constant 0 : i32
    return %c0_i32, %c0_i32_0, %c0_i32_1 : i32, i32, i32
  }
  func.func @transform_28(%arg0: i32) -> (i32, i32, i32) {
    %c0_i32 = arith.constant 0 : i32
    %c0_i32_0 = arith.constant 0 : i32
    %c0_i32_1 = arith.constant 0 : i32
    %c0_i32_2 = arith.constant 0 : i32
    return %c0_i32, %c0_i32_0, %c0_i32_1 : i32, i32, i32
  }
  func.func @transform_29(%arg0: i32) -> (i32, i32, i32) {
    %c0_i32 = arith.constant 0 : i32
    %c0_i32_0 = arith.constant 0 : i32
    %c0_i32_1 = arith.constant 0 : i32
    %c0_i32_2 = arith.constant 0 : i32
    return %c0_i32, %c0_i32_0, %c0_i32_1 : i32, i32, i32
  }
  func.func @transform_30(%arg0: i32) -> (i32, i32, i32) {
    %c0_i32 = arith.constant 0 : i32
    %c0_i32_0 = arith.constant 0 : i32
    %c0_i32_1 = arith.constant 0 : i32
    %c0_i32_2 = arith.constant 0 : i32
    return %c0_i32, %c0_i32_0, %c0_i32_1 : i32, i32, i32
  }
  func.func @transform_31(%arg0: i32) -> (i32, i32, i32) {
    %c0_i32 = arith.constant 0 : i32
    %c0_i32_0 = arith.constant 0 : i32
    %c0_i32_1 = arith.constant 0 : i32
    %c0_i32_2 = arith.constant 0 : i32
    return %c0_i32, %c0_i32_0, %c0_i32_1 : i32, i32, i32
  }
  func.func @transform_32(%arg0: i32) -> (i32, i32, i32) {
    %c0_i32 = arith.constant 0 : i32
    %c0_i32_0 = arith.constant 0 : i32
    %c0_i32_1 = arith.constant 0 : i32
    %c0_i32_2 = arith.constant 0 : i32
    return %c0_i32, %c0_i32_0, %c0_i32_1 : i32, i32, i32
  }
  func.func @transform_33(%arg0: i32) -> (i32, i32, i32) {
    %c0_i32 = arith.constant 0 : i32
    %c0_i32_0 = arith.constant 0 : i32
    %c0_i32_1 = arith.constant 0 : i32
    %c0_i32_2 = arith.constant 0 : i32
    return %c0_i32, %c0_i32_0, %c0_i32_1 : i32, i32, i32
  }
  func.func @transform_34(%arg0: i32) -> (i32, i32) {
    %c0_i32 = arith.constant 0 : i32
    %c0_i32_0 = arith.constant 0 : i32
    %c0_i32_1 = arith.constant 0 : i32
    return %c0_i32, %c0_i32_0 : i32, i32
  }
  func.func @transform_35(%arg0: i32) -> (i32, i32) {
    %c0_i32 = arith.constant 0 : i32
    %c0_i32_0 = arith.constant 0 : i32
    %c0_i32_1 = arith.constant 0 : i32
    return %c0_i32, %c0_i32_0 : i32, i32
  }
  func.func @transform_36(%arg0: i32) -> (i32, i32) {
    %c0_i32 = arith.constant 0 : i32
    %c0_i32_0 = arith.constant 0 : i32
    %c0_i32_1 = arith.constant 0 : i32
    return %c0_i32, %c0_i32_0 : i32, i32
  }
  func.func @transform_37(%arg0: i32) -> (i32, i32, i32) {
    %c0_i32 = arith.constant 0 : i32
    %c0_i32_0 = arith.constant 0 : i32
    %c0_i32_1 = arith.constant 0 : i32
    return %arg0, %c0_i32, %c0_i32_0 : i32, i32, i32
  }
  func.func @transform_38(%arg0: i32) -> (i32, i32, i32) {
    %c0_i32 = arith.constant 0 : i32
    %c0_i32_0 = arith.constant 0 : i32
    %c0_i32_1 = arith.constant 0 : i32
    return %arg0, %c0_i32, %c0_i32_0 : i32, i32, i32
  }
}

</mosaic_0001>

<llo_original>
// kernel: tpu_custom_call.1
$region0: #{tpu_custom_call.1}
  #allocation0 [shape = 'u32[]', space=smem, size = 0x4, offset = 0x4, fixed_abs, tag = 'smem constant byte address 0x4 - core index']
  #allocation1 [shape = 'u32[72,128]{1,0:T(1,128)}', space=vmem, size = 0x9000, scoped, tag = 'internal scratch']
  %s0 = inlined_call_operand.smem [shape: u32[39], index: -1, kind: input, shape index: {}]
  %s1 = sld [smem:[%s0]]
  %s2 = scalar_lea.smem %s0, 1
  %s3 = sld [smem:[%s2]]
  %s4 = scalar_lea.smem %s0, 2
  %s5 = sld [smem:[%s4]]
  %s6 = scalar_lea.smem %s0, 3
  %s7 = sld [smem:[%s6]]
  %s8 = scalar_lea.smem %s0, 4
  %s9 = sld [smem:[%s8]]
  %s10 = scalar_lea.smem %s0, 5
  %s11 = sld [smem:[%s10]]
  %s12 = scalar_lea.smem %s0, 6
  %s13 = sld [smem:[%s12]]
  %s14 = scalar_lea.smem %s0, 7
  %s15 = sld [smem:[%s14]]
  %s16 = scalar_lea.smem %s0, 8
  %s17 = sld [smem:[%s16]]
  %s18 = scalar_lea.smem %s0, 9
  %s19 = sld [smem:[%s18]]
  %s20 = scalar_lea.smem %s0, 10
  %s21 = sld [smem:[%s20]]
  %s22 = scalar_lea.smem %s0, 11
  %s23 = sld [smem:[%s22]]
  %s24 = scalar_lea.smem %s0, 12
  %s25 = sld [smem:[%s24]]
  %s26 = scalar_lea.smem %s0, 13
  %s27 = sld [smem:[%s26]]
  %s28 = scalar_lea.smem %s0, 14
  %s29 = sld [smem:[%s28]]
  %s30 = scalar_lea.smem %s0, 15
  %s31 = sld [smem:[%s30]]
  %s32 = scalar_lea.smem %s0, 16
  %s33 = sld [smem:[%s32]]
  %s34 = scalar_lea.smem %s0, 17
  %s35 = sld [smem:[%s34]]
  %s36 = scalar_lea.smem %s0, 18
  %s37 = sld [smem:[%s36]]
  %s38 = scalar_lea.smem %s0, 19
  %s39 = sld [smem:[%s38]]
  %s40 = scalar_lea.smem %s0, 20
  %s41 = sld [smem:[%s40]]
  %s42 = scalar_lea.smem %s0, 21
  %s43 = sld [smem:[%s42]]
  %s44 = scalar_lea.smem %s0, 22
  %s45 = sld [smem:[%s44]]
  %s46 = scalar_lea.smem %s0, 23
  %s47 = sld [smem:[%s46]]
  %s48 = scalar_lea.smem %s0, 24
  %s49 = sld [smem:[%s48]]
  %s50 = scalar_lea.smem %s0, 25
  %s51 = sld [smem:[%s50]]
  %s52 = scalar_lea.smem %s0, 26
  %s53 = sld [smem:[%s52]]
  %s54 = scalar_lea.smem %s0, 27
  %s55 = sld [smem:[%s54]]
  %s56 = scalar_lea.smem %s0, 28
  %s57 = sld [smem:[%s56]]
  %s58 = scalar_lea.smem %s0, 29
  %s59 = sld [smem:[%s58]]
  %s60 = scalar_lea.smem %s0, 30
  %s61 = sld [smem:[%s60]]
  %s62 = scalar_lea.smem %s0, 31
  %s63 = sld [smem:[%s62]]
  %s64 = scalar_lea.smem %s0, 32
  %s65 = sld [smem:[%s64]]
  %s66 = scalar_lea.smem %s0, 33
  %s67 = sld [smem:[%s66]]
  %s68 = scalar_lea.smem %s0, 34
  %s69 = sld [smem:[%s68]]
  %s70 = scalar_lea.smem %s0, 35
  %s71 = sld [smem:[%s70]]
  %s72 = scalar_lea.smem %s0, 36
  %s73 = sld [smem:[%s72]]
  %s74 = scalar_lea.smem %s0, 37
  %s75 = sld [smem:[%s74]]
  %s76 = scalar_lea.smem %s0, 38
  %s77 = sld [smem:[%s76]]
  %78 = xla_tuple %s75, %s77
  %s79 = sld [smem:[#allocation0]]
  $region189: #{tpu_custom_call.1} parent=0
    _
  %s81 = ssub.s32 1, %s79
  %s82 = scalar_select 0, %s81, %s79
  loop: start=0, step=1, limit=4
  $region2: #{tpu_custom_call.1} parent=0 // loop_pre_header
    _
  $region3: #{tpu_custom_call.1} parent=0 // loop_header
    %s84 = sphi 0, %s88
    %p85 = scmp.ge.s32.totalorder %s84, 4
    %s94 = sphi 0, %s96
    %s97 = sphi 0, %s94
    %s98 = sphi 0, %s97
    %s114 = sphi 0, %s98
    %s120 = sphi 0, %s122
    %s123 = sphi 0, %s120
    %s124 = sphi 0, %s123
    %s140 = sphi 0, %s124
    %s144 = sphi 0, %s144
    %s146 = sphi 0, %s144
    %s147 = sphi 0, %s146
    %s161 = sphi 0, %s147
    %s165 = sphi 0, %s165
    %s167 = sphi 0, %s165
    %s168 = sphi 0, %s167
    %s182 = sphi 0, %s168
    %s186 = sphi 0, %s186
    %s188 = sphi 0, %s186
    %s189 = sphi 0, %s188
    %s203 = sphi 0, %s189
    %s207 = sphi 0, %s207
    %s209 = sphi 0, %s207
    %s210 = sphi 0, %s209
    %s224 = sphi 0, %s210
    %s228 = sphi 0, %s228
    %s230 = sphi 0, %s228
    %s231 = sphi 0, %s230
    %s245 = sphi 0, %s231
    %s249 = sphi 0, %s249
    %s251 = sphi 0, %s249
    %s252 = sphi 0, %s251
    %s266 = sphi 0, %s252
    %s270 = sphi 0, %s270
    %s272 = sphi 0, %s270
    %s273 = sphi 0, %s272
    %s287 = sphi 0, %s273
    %s291 = sphi 0, %s291
    %s293 = sphi 0, %s291
    %s294 = sphi 0, %s293
    %s308 = sphi 0, %s294
    %s312 = sphi 0, %s312
    %s314 = sphi 0, %s312
    %s315 = sphi 0, %s314
    %s329 = sphi 0, %s315
    %s333 = sphi 0, %s333
    %s335 = sphi 0, %s333
    %s336 = sphi 0, %s335
    %s350 = sphi 0, %s336
    %s354 = sphi 0, %s354
    %s356 = sphi 0, %s354
    %s357 = sphi 0, %s356
    %s371 = sphi 0, %s357
    %s375 = sphi 0, %s375
    %s377 = sphi 0, %s375
    %s378 = sphi 0, %s377
    %s392 = sphi 0, %s378
    %s396 = sphi 0, %s396
    %s398 = sphi 0, %s396
    %s399 = sphi 0, %s398
    %s413 = sphi 0, %s399
    %s417 = sphi 0, %s417
    %s419 = sphi 0, %s417
    %s420 = sphi 0, %s419
    %s434 = sphi 0, %s420
    %s438 = sphi 0, %s438
    %s440 = sphi 0, %s438
    %s441 = sphi 0, %s440
    %s455 = sphi 0, %s441
    %s459 = sphi 0, %s459
    %s461 = sphi 0, %s459
    %s462 = sphi 0, %s461
    %s476 = sphi 0, %s462
    %s480 = sphi 0, %s480
    %s482 = sphi 0, %s480
    %s483 = sphi 0, %s482
    %s497 = sphi 0, %s483
    %s501 = sphi 0, %s501
    %s503 = sphi 0, %s501
    %s504 = sphi 0, %s503
    %s518 = sphi 0, %s504
    %s522 = sphi 0, %s522
    %s524 = sphi 0, %s522
    %s525 = sphi 0, %s524
    %s539 = sphi 0, %s525
    %s543 = sphi 0, %s543
    %s545 = sphi 0, %s543
    %s546 = sphi 0, %s545
    %s560 = sphi 0, %s546
    %s564 = sphi 0, %s564
    %s566 = sphi 0, %s564
    %s567 = sphi 0, %s566
    %s581 = sphi 0, %s567
    %s585 = sphi 0, %s585
    %s587 = sphi 0, %s585
    %s588 = sphi 0, %s587
    %s602 = sphi 0, %s588
    %s606 = sphi 0, %s606
    %s608 = sphi 0, %s606
    %s609 = sphi 0, %s608
    %s623 = sphi 0, %s609
    %s627 = sphi 0, %s627
    %s629 = sphi 0, %s627
    %s630 = sphi 0, %s629
    %s644 = sphi 0, %s630
    %s648 = sphi 0, %s648
    %s650 = sphi 0, %s648
    %s651 = sphi 0, %s650
    %s665 = sphi 0, %s651
    %s669 = sphi 0, %s669
    %s671 = sphi 0, %s669
    %s672 = sphi 0, %s671
    %s686 = sphi 0, %s672
    %s690 = sphi 0, %s690
    %s692 = sphi 0, %s690
    %s693 = sphi 0, %s692
    %s707 = sphi 0, %s693
    %s711 = sphi 0, %s711
    %s713 = sphi 0, %s711
    %s714 = sphi 0, %s713
    %s728 = sphi 0, %s714
    %s732 = sphi 0, %s732
    %s734 = sphi 0, %s732
    %s735 = sphi 0, %s734
    %s749 = sphi 0, %s735
    %s753 = sphi 0, %s753
    %s755 = sphi 0, %s753
    %s756 = sphi 0, %s755
    %s770 = sphi 0, %s756
    %s774 = sphi 0, %s774
    %s776 = sphi 0, %s774
    %s777 = sphi 0, %s776
    %s791 = sphi 0, %s777
    %s795 = sphi 0, %s795
    %s797 = sphi 0, %s795
    %s798 = sphi 0, %s797
    %s812 = sphi 0, %s798
    %s816 = sphi 0, %s816
    %s818 = sphi 0, %s816
    %s819 = sphi 0, %s818
    %s833 = sphi 0, %s819
    %s837 = sphi 0, %s837
    %s839 = sphi 0, %s837
    %s840 = sphi 0, %s839
    %s854 = sphi 0, %s840
    %s858 = sphi 0, %s858
    %s860 = sphi 0, %s858
    %s861 = sphi 0, %s860
    %s875 = sphi 0, %s861
    %s881 = sphi 0, %s883
    %s884 = sphi 0, %s881
    %s885 = sphi 0, %s884
    %s901 = sphi 0, %s885
    %s907 = sphi 0, %s909
    %s910 = sphi 0, %s907
    %s911 = sphi 0, %s910
    %s927 = sphi 0, %s911
  $region4: #{tpu_custom_call.1} parent=0 // loop_header_branch
    %87 = sbr.rel (%p85) target = $region8
  $region5: #{tpu_custom_call.1} parent=0 // loop_body
    %s89 = ssub.s32 %s84, 1
    %s90 = ssub.s32 %s84, 2
    %s91 = sadd.s32 %s84, 1
    %s92 = ssub.s32 %s84, %s91
    %p93 = scmp.eq.s32.totalorder %s92, 0
    %s95 = sadd.s32 %s94, 1
    %s96 = scalar_select %p93, %s94, %s95
    %p99 = pneg %p93
    %p100 = scmp.eq.s32.totalorder %s84, 1
    %p101 = por %p99, %p100
    %p102 = scmp.ne.s32.totalorder %s94, %s97
    %p103 = scmp.eq.s32.totalorder %s84, 0
    %p104 = por %p102, %p103
    %p105 = scmp.ne.s32.totalorder %s94, %s97
    %p106 = scmp.eq.s32.totalorder %s89, 1
    %p107 = por %p105, %p106
    %p108 = scmp.ne.s32.totalorder %s97, %s98
    %p109 = scmp.eq.s32.totalorder %s89, 0
    %p110 = por %p108, %p109
    %p111 = scmp.ne.s32.totalorder %s97, %s98
    %p112 = scmp.eq.s32.totalorder %s90, 1
    %p113 = por %p111, %p112
    %p115 = scmp.ne.s32.totalorder %s98, %s114
    %p116 = scmp.eq.s32.totalorder %s90, 0
    %p117 = por %p115, %p116
    %s118 = ssub.s32 %s84, %s91
    %p119 = scmp.eq.s32.totalorder %s118, 0
    %s121 = sadd.s32 %s120, 1
    %s122 = scalar_select %p119, %s120, %s121
    %p125 = pneg %p119
    %p126 = scmp.eq.s32.totalorder %s84, 1
    %p127 = por %p125, %p126
    %p128 = scmp.ne.s32.totalorder %s120, %s123
    %p129 = scmp.eq.s32.totalorder %s84, 0
    %p130 = por %p128, %p129
    %p131 = scmp.ne.s32.totalorder %s120, %s123
    %p132 = scmp.eq.s32.totalorder %s89, 1
    %p133 = por %p131, %p132
    %p134 = scmp.ne.s32.totalorder %s123, %s124
    %p135 = scmp.eq.s32.totalorder %s89, 0
    %p136 = por %p134, %p135
    %p137 = scmp.ne.s32.totalorder %s123, %s124
    %p138 = scmp.eq.s32.totalorder %s90, 1
    %p139 = por %p137, %p138
    %p141 = scmp.ne.s32.totalorder %s124, %s140
    %p142 = scmp.eq.s32.totalorder %s90, 0
    %p143 = por %p141, %p142
    %s145 = sadd.s32 %s144, 1
    %p148 = scmp.eq.s32.totalorder %s84, 1
    %p149 = scmp.ne.s32.totalorder %s144, %s146
    %p150 = scmp.eq.s32.totalorder %s84, 0
    %p151 = por %p149, %p150
    %p152 = scmp.ne.s32.totalorder %s144, %s146
    %p153 = scmp.eq.s32.totalorder %s89, 1
    %p154 = por %p152, %p153
    %p155 = scmp.ne.s32.totalorder %s146, %s147
    %p156 = scmp.eq.s32.totalorder %s89, 0
    %p157 = por %p155, %p156
    %p158 = scmp.ne.s32.totalorder %s146, %s147
    %p159 = scmp.eq.s32.totalorder %s90, 1
    %p160 = por %p158, %p159
    %p162 = scmp.ne.s32.totalorder %s147, %s161
    %p163 = scmp.eq.s32.totalorder %s90, 0
    %p164 = por %p162, %p163
    %s166 = sadd.s32 %s165, 1
    %p169 = scmp.eq.s32.totalorder %s84, 1
    %p170 = scmp.ne.s32.totalorder %s165, %s167
    %p171 = scmp.eq.s32.totalorder %s84, 0
    %p172 = por %p170, %p171
    %p173 = scmp.ne.s32.totalorder %s165, %s167
    %p174 = scmp.eq.s32.totalorder %s89, 1
    %p175 = por %p173, %p174
    %p176 = scmp.ne.s32.totalorder %s167, %s168
    %p177 = scmp.eq.s32.totalorder %s89, 0
    %p178 = por %p176, %p177
    %p179 = scmp.ne.s32.totalorder %s167, %s168
    %p180 = scmp.eq.s32.totalorder %s90, 1
    %p181 = por %p179, %p180
    %p183 = scmp.ne.s32.totalorder %s168, %s182
    %p184 = scmp.eq.s32.totalorder %s90, 0
    %p185 = por %p183, %p184
    %s187 = sadd.s32 %s186, 1
    %p190 = scmp.eq.s32.totalorder %s84, 1
    %p191 = scmp.ne.s32.totalorder %s186, %s188
    %p192 = scmp.eq.s32.totalorder %s84, 0
    %p193 = por %p191, %p192
    %p194 = scmp.ne.s32.totalorder %s186, %s188
    %p195 = scmp.eq.s32.totalorder %s89, 1
    %p196 = por %p194, %p195
    %p197 = scmp.ne.s32.totalorder %s188, %s189
    %p198 = scmp.eq.s32.totalorder %s89, 0
    %p199 = por %p197, %p198
    %p200 = scmp.ne.s32.totalorder %s188, %s189
    %p201 = scmp.eq.s32.totalorder %s90, 1
    %p202 = por %p200, %p201
    %p204 = scmp.ne.s32.totalorder %s189, %s203
    %p205 = scmp.eq.s32.totalorder %s90, 0
    %p206 = por %p204, %p205
    %s208 = sadd.s32 %s207, 1
    %p211 = scmp.eq.s32.totalorder %s84, 1
    %p212 = scmp.ne.s32.totalorder %s207, %s209
    %p213 = scmp.eq.s32.totalorder %s84, 0
    %p214 = por %p212, %p213
    %p215 = scmp.ne.s32.totalorder %s207, %s209
    %p216 = scmp.eq.s32.totalorder %s89, 1
    %p217 = por %p215, %p216
    %p218 = scmp.ne.s32.totalorder %s209, %s210
    %p219 = scmp.eq.s32.totalorder %s89, 0
    %p220 = por %p218, %p219
    %p221 = scmp.ne.s32.totalorder %s209, %s210
    %p222 = scmp.eq.s32.totalorder %s90, 1
    %p223 = por %p221, %p222
    %p225 = scmp.ne.s32.totalorder %s210, %s224
    %p226 = scmp.eq.s32.totalorder %s90, 0
    %p227 = por %p225, %p226
    %s229 = sadd.s32 %s228, 1
    %p232 = scmp.eq.s32.totalorder %s84, 1
    %p233 = scmp.ne.s32.totalorder %s228, %s230
    %p234 = scmp.eq.s32.totalorder %s84, 0
    %p235 = por %p233, %p234
    %p236 = scmp.ne.s32.totalorder %s228, %s230
    %p237 = scmp.eq.s32.totalorder %s89, 1
    %p238 = por %p236, %p237
    %p239 = scmp.ne.s32.totalorder %s230, %s231
    %p240 = scmp.eq.s32.totalorder %s89, 0
    %p241 = por %p239, %p240
    %p242 = scmp.ne.s32.totalorder %s230, %s231
    %p243 = scmp.eq.s32.totalorder %s90, 1
    %p244 = por %p242, %p243
    %p246 = scmp.ne.s32.totalorder %s231, %s245
    %p247 = scmp.eq.s32.totalorder %s90, 0
    %p248 = por %p246, %p247
    %s250 = sadd.s32 %s249, 1
    %p253 = scmp.eq.s32.totalorder %s84, 1
    %p254 = scmp.ne.s32.totalorder %s249, %s251
    %p255 = scmp.eq.s32.totalorder %s84, 0
    %p256 = por %p254, %p255
    %p257 = scmp.ne.s32.totalorder %s249, %s251
    %p258 = scmp.eq.s32.totalorder %s89, 1
    %p259 = por %p257, %p258
    %p260 = scmp.ne.s32.totalorder %s251, %s252
    %p261 = scmp.eq.s32.totalorder %s89, 0
    %p262 = por %p260, %p261
    %p263 = scmp.ne.s32.totalorder %s251, %s252
    %p264 = scmp.eq.s32.totalorder %s90, 1
    %p265 = por %p263, %p264
    %p267 = scmp.ne.s32.totalorder %s252, %s266
    %p268 = scmp.eq.s32.totalorder %s90, 0
    %p269 = por %p267, %p268
    %s271 = sadd.s32 %s270, 1
    %p274 = scmp.eq.s32.totalorder %s84, 1
    %p275 = scmp.ne.s32.totalorder %s270, %s272
    %p276 = scmp.eq.s32.totalorder %s84, 0
    %p277 = por %p275, %p276
    %p278 = scmp.ne.s32.totalorder %s270, %s272
    %p279 = scmp.eq.s32.totalorder %s89, 1
    %p280 = por %p278, %p279
    %p281 = scmp.ne.s32.totalorder %s272, %s273
    %p282 = scmp.eq.s32.totalorder %s89, 0
    %p283 = por %p281, %p282
    %p284 = scmp.ne.s32.totalorder %s272, %s273
    %p285 = scmp.eq.s32.totalorder %s90, 1
    %p286 = por %p284, %p285
    %p288 = scmp.ne.s32.totalorder %s273, %s287
    %p289 = scmp.eq.s32.totalorder %s90, 0
    %p290 = por %p288, %p289
    %s292 = sadd.s32 %s291, 1
    %p295 = scmp.eq.s32.totalorder %s84, 1
    %p296 = scmp.ne.s32.totalorder %s291, %s293
    %p297 = scmp.eq.s32.totalorder %s84, 0
    %p298 = por %p296, %p297
    %p299 = scmp.ne.s32.totalorder %s291, %s293
    %p300 = scmp.eq.s32.totalorder %s89, 1
    %p301 = por %p299, %p300
    %p302 = scmp.ne.s32.totalorder %s293, %s294
    %p303 = scmp.eq.s32.totalorder %s89, 0
    %p304 = por %p302, %p303
    %p305 = scmp.ne.s32.totalorder %s293, %s294
    %p306 = scmp.eq.s32.totalorder %s90, 1
    %p307 = por %p305, %p306
    %p309 = scmp.ne.s32.totalorder %s294, %s308
    %p310 = scmp.eq.s32.totalorder %s90, 0
    %p311 = por %p309, %p310
    %s313 = sadd.s32 %s312, 1
    %p316 = scmp.eq.s32.totalorder %s84, 1
    %p317 = scmp.ne.s32.totalorder %s312, %s314
    %p318 = scmp.eq.s32.totalorder %s84, 0
    %p319 = por %p317, %p318
    %p320 = scmp.ne.s32.totalorder %s312, %s314
    %p321 = scmp.eq.s32.totalorder %s89, 1
    %p322 = por %p320, %p321
    %p323 = scmp.ne.s32.totalorder %s314, %s315
    %p324 = scmp.eq.s32.totalorder %s89, 0
    %p325 = por %p323, %p324
    %p326 = scmp.ne.s32.totalorder %s314, %s315
    %p327 = scmp.eq.s32.totalorder %s90, 1
    %p328 = por %p326, %p327
    %p330 = scmp.ne.s32.totalorder %s315, %s329
    %p331 = scmp.eq.s32.totalorder %s90, 0
    %p332 = por %p330, %p331
    %s334 = sadd.s32 %s333, 1
    %p337 = scmp.eq.s32.totalorder %s84, 1
    %p338 = scmp.ne.s32.totalorder %s333, %s335
    %p339 = scmp.eq.s32.totalorder %s84, 0
    %p340 = por %p338, %p339
    %p341 = scmp.ne.s32.totalorder %s333, %s335
    %p342 = scmp.eq.s32.totalorder %s89, 1
    %p343 = por %p341, %p342
    %p344 = scmp.ne.s32.totalorder %s335, %s336
    %p345 = scmp.eq.s32.totalorder %s89, 0
    %p346 = por %p344, %p345
    %p347 = scmp.ne.s32.totalorder %s335, %s336
    %p348 = scmp.eq.s32.totalorder %s90, 1
    %p349 = por %p347, %p348
    %p351 = scmp.ne.s32.totalorder %s336, %s350
    %p352 = scmp.eq.s32.totalorder %s90, 0
    %p353 = por %p351, %p352
    %s355 = sadd.s32 %s354, 1
    %p358 = scmp.eq.s32.totalorder %s84, 1
    %p359 = scmp.ne.s32.totalorder %s354, %s356
    %p360 = scmp.eq.s32.totalorder %s84, 0
    %p361 = por %p359, %p360
    %p362 = scmp.ne.s32.totalorder %s354, %s356
    %p363 = scmp.eq.s32.totalorder %s89, 1
    %p364 = por %p362, %p363
    %p365 = scmp.ne.s32.totalorder %s356, %s357
    %p366 = scmp.eq.s32.totalorder %s89, 0
    %p367 = por %p365, %p366
    %p368 = scmp.ne.s32.totalorder %s356, %s357
    %p369 = scmp.eq.s32.totalorder %s90, 1
    %p370 = por %p368, %p369
    %p372 = scmp.ne.s32.totalorder %s357, %s371
    %p373 = scmp.eq.s32.totalorder %s90, 0
    %p374 = por %p372, %p373
    %s376 = sadd.s32 %s375, 1
    %p379 = scmp.eq.s32.totalorder %s84, 1
    %p380 = scmp.ne.s32.totalorder %s375, %s377
    %p381 = scmp.eq.s32.totalorder %s84, 0
    %p382 = por %p380, %p381
    %p383 = scmp.ne.s32.totalorder %s375, %s377
    %p384 = scmp.eq.s32.totalorder %s89, 1
    %p385 = por %p383, %p384
    %p386 = scmp.ne.s32.totalorder %s377, %s378
    %p387 = scmp.eq.s32.totalorder %s89, 0
    %p388 = por %p386, %p387
    %p389 = scmp.ne.s32.totalorder %s377, %s378
    %p390 = scmp.eq.s32.totalorder %s90, 1
    %p391 = por %p389, %p390
    %p393 = scmp.ne.s32.totalorder %s378, %s392
    %p394 = scmp.eq.s32.totalorder %s90, 0
    %p395 = por %p393, %p394
    %s397 = sadd.s32 %s396, 1
    %p400 = scmp.eq.s32.totalorder %s84, 1
    %p401 = scmp.ne.s32.totalorder %s396, %s398
    %p402 = scmp.eq.s32.totalorder %s84, 0
    %p403 = por %p401, %p402
    %p404 = scmp.ne.s32.totalorder %s396, %s398
    %p405 = scmp.eq.s32.totalorder %s89, 1
    %p406 = por %p404, %p405
    %p407 = scmp.ne.s32.totalorder %s398, %s399
    %p408 = scmp.eq.s32.totalorder %s89, 0
    %p409 = por %p407, %p408
    %p410 = scmp.ne.s32.totalorder %s398, %s399
    %p411 = scmp.eq.s32.totalorder %s90, 1
    %p412 = por %p410, %p411
    %p414 = scmp.ne.s32.totalorder %s399, %s413
    %p415 = scmp.eq.s32.totalorder %s90, 0
    %p416 = por %p414, %p415
    %s418 = sadd.s32 %s417, 1
    %p421 = scmp.eq.s32.totalorder %s84, 1
    %p422 = scmp.ne.s32.totalorder %s417, %s419
    %p423 = scmp.eq.s32.totalorder %s84, 0
    %p424 = por %p422, %p423
    %p425 = scmp.ne.s32.totalorder %s417, %s419
    %p426 = scmp.eq.s32.totalorder %s89, 1
    %p427 = por %p425, %p426
    %p428 = scmp.ne.s32.totalorder %s419, %s420
    %p429 = scmp.eq.s32.totalorder %s89, 0
    %p430 = por %p428, %p429
    %p431 = scmp.ne.s32.totalorder %s419, %s420
    %p432 = scmp.eq.s32.totalorder %s90, 1
    %p433 = por %p431, %p432
    %p435 = scmp.ne.s32.totalorder %s420, %s434
    %p436 = scmp.eq.s32.totalorder %s90, 0
    %p437 = por %p435, %p436
    %s439 = sadd.s32 %s438, 1
    %p442 = scmp.eq.s32.totalorder %s84, 1
    %p443 = scmp.ne.s32.totalorder %s438, %s440
    %p444 = scmp.eq.s32.totalorder %s84, 0
    %p445 = por %p443, %p444
    %p446 = scmp.ne.s32.totalorder %s438, %s440
    %p447 = scmp.eq.s32.totalorder %s89, 1
    %p448 = por %p446, %p447
    %p449 = scmp.ne.s32.totalorder %s440, %s441
    %p450 = scmp.eq.s32.totalorder %s89, 0
    %p451 = por %p449, %p450
    %p452 = scmp.ne.s32.totalorder %s440, %s441
    %p453 = scmp.eq.s32.totalorder %s90, 1
    %p454 = por %p452, %p453
    %p456 = scmp.ne.s32.totalorder %s441, %s455
    %p457 = scmp.eq.s32.totalorder %s90, 0
    %p458 = por %p456, %p457
    %s460 = sadd.s32 %s459, 1
    %p463 = scmp.eq.s32.totalorder %s84, 1
    %p464 = scmp.ne.s32.totalorder %s459, %s461
    %p465 = scmp.eq.s32.totalorder %s84, 0
    %p466 = por %p464, %p465
    %p467 = scmp.ne.s32.totalorder %s459, %s461
    %p468 = scmp.eq.s32.totalorder %s89, 1
    %p469 = por %p467, %p468
    %p470 = scmp.ne.s32.totalorder %s461, %s462
    %p471 = scmp.eq.s32.totalorder %s89, 0
    %p472 = por %p470, %p471
    %p473 = scmp.ne.s32.totalorder %s461, %s462
    %p474 = scmp.eq.s32.totalorder %s90, 1
    %p475 = por %p473, %p474
    %p477 = scmp.ne.s32.totalorder %s462, %s476
    %p478 = scmp.eq.s32.totalorder %s90, 0
    %p479 = por %p477, %p478
    %s481 = sadd.s32 %s480, 1
    %p484 = scmp.eq.s32.totalorder %s84, 1
    %p485 = scmp.ne.s32.totalorder %s480, %s482
    %p486 = scmp.eq.s32.totalorder %s84, 0
    %p487 = por %p485, %p486
    %p488 = scmp.ne.s32.totalorder %s480, %s482
    %p489 = scmp.eq.s32.totalorder %s89, 1
    %p490 = por %p488, %p489
    %p491 = scmp.ne.s32.totalorder %s482, %s483
    %p492 = scmp.eq.s32.totalorder %s89, 0
    %p493 = por %p491, %p492
    %p494 = scmp.ne.s32.totalorder %s482, %s483
    %p495 = scmp.eq.s32.totalorder %s90, 1
    %p496 = por %p494, %p495
    %p498 = scmp.ne.s32.totalorder %s483, %s497
    %p499 = scmp.eq.s32.totalorder %s90, 0
    %p500 = por %p498, %p499
    %s502 = sadd.s32 %s501, 1
    %p505 = scmp.eq.s32.totalorder %s84, 1
    %p506 = scmp.ne.s32.totalorder %s501, %s503
    %p507 = scmp.eq.s32.totalorder %s84, 0
    %p508 = por %p506, %p507
    %p509 = scmp.ne.s32.totalorder %s501, %s503
    %p510 = scmp.eq.s32.totalorder %s89, 1
    %p511 = por %p509, %p510
    %p512 = scmp.ne.s32.totalorder %s503, %s504
    %p513 = scmp.eq.s32.totalorder %s89, 0
    %p514 = por %p512, %p513
    %p515 = scmp.ne.s32.totalorder %s503, %s504
    %p516 = scmp.eq.s32.totalorder %s90, 1
    %p517 = por %p515, %p516
    %p519 = scmp.ne.s32.totalorder %s504, %s518
    %p520 = scmp.eq.s32.totalorder %s90, 0
    %p521 = por %p519, %p520
    %s523 = sadd.s32 %s522, 1
    %p526 = scmp.eq.s32.totalorder %s84, 1
    %p527 = scmp.ne.s32.totalorder %s522, %s524
    %p528 = scmp.eq.s32.totalorder %s84, 0
    %p529 = por %p527, %p528
    %p530 = scmp.ne.s32.totalorder %s522, %s524
    %p531 = scmp.eq.s32.totalorder %s89, 1
    %p532 = por %p530, %p531
    %p533 = scmp.ne.s32.totalorder %s524, %s525
    %p534 = scmp.eq.s32.totalorder %s89, 0
    %p535 = por %p533, %p534
    %p536 = scmp.ne.s32.totalorder %s524, %s525
    %p537 = scmp.eq.s32.totalorder %s90, 1
    %p538 = por %p536, %p537
    %p540 = scmp.ne.s32.totalorder %s525, %s539
    %p541 = scmp.eq.s32.totalorder %s90, 0
    %p542 = por %p540, %p541
    %s544 = sadd.s32 %s543, 1
    %p547 = scmp.eq.s32.totalorder %s84, 1
    %p548 = scmp.ne.s32.totalorder %s543, %s545
    %p549 = scmp.eq.s32.totalorder %s84, 0
    %p550 = por %p548, %p549
    %p551 = scmp.ne.s32.totalorder %s543, %s545
    %p552 = scmp.eq.s32.totalorder %s89, 1
    %p553 = por %p551, %p552
    %p554 = scmp.ne.s32.totalorder %s545, %s546
    %p555 = scmp.eq.s32.totalorder %s89, 0
    %p556 = por %p554, %p555
    %p557 = scmp.ne.s32.totalorder %s545, %s546
    %p558 = scmp.eq.s32.totalorder %s90, 1
    %p559 = por %p557, %p558
    %p561 = scmp.ne.s32.totalorder %s546, %s560
    %p562 = scmp.eq.s32.totalorder %s90, 0
    %p563 = por %p561, %p562
    %s565 = sadd.s32 %s564, 1
    %p568 = scmp.eq.s32.totalorder %s84, 1
    %p569 = scmp.ne.s32.totalorder %s564, %s566
    %p570 = scmp.eq.s32.totalorder %s84, 0
    %p571 = por %p569, %p570
    %p572 = scmp.ne.s32.totalorder %s564, %s566
    %p573 = scmp.eq.s32.totalorder %s89, 1
    %p574 = por %p572, %p573
    %p575 = scmp.ne.s32.totalorder %s566, %s567
    %p576 = scmp.eq.s32.totalorder %s89, 0
    %p577 = por %p575, %p576
    %p578 = scmp.ne.s32.totalorder %s566, %s567
    %p579 = scmp.eq.s32.totalorder %s90, 1
    %p580 = por %p578, %p579
    %p582 = scmp.ne.s32.totalorder %s567, %s581
    %p583 = scmp.eq.s32.totalorder %s90, 0
    %p584 = por %p582, %p583
    %s586 = sadd.s32 %s585, 1
    %p589 = scmp.eq.s32.totalorder %s84, 1
    %p590 = scmp.ne.s32.totalorder %s585, %s587
    %p591 = scmp.eq.s32.totalorder %s84, 0
    %p592 = por %p590, %p591
    %p593 = scmp.ne.s32.totalorder %s585, %s587
    %p594 = scmp.eq.s32.totalorder %s89, 1
    %p595 = por %p593, %p594
    %p596 = scmp.ne.s32.totalorder %s587, %s588
    %p597 = scmp.eq.s32.totalorder %s89, 0
    %p598 = por %p596, %p597
    %p599 = scmp.ne.s32.totalorder %s587, %s588
    %p600 = scmp.eq.s32.totalorder %s90, 1
    %p601 = por %p599, %p600
    %p603 = scmp.ne.s32.totalorder %s588, %s602
    %p604 = scmp.eq.s32.totalorder %s90, 0
    %p605 = por %p603, %p604
    %s607 = sadd.s32 %s606, 1
    %p610 = scmp.eq.s32.totalorder %s84, 1
    %p611 = scmp.ne.s32.totalorder %s606, %s608
    %p612 = scmp.eq.s32.totalorder %s84, 0
    %p613 = por %p611, %p612
    %p614 = scmp.ne.s32.totalorder %s606, %s608
    %p615 = scmp.eq.s32.totalorder %s89, 1
    %p616 = por %p614, %p615
    %p617 = scmp.ne.s32.totalorder %s608, %s609
    %p618 = scmp.eq.s32.totalorder %s89, 0
    %p619 = por %p617, %p618
    %p620 = scmp.ne.s32.totalorder %s608, %s609
    %p621 = scmp.eq.s32.totalorder %s90, 1
    %p622 = por %p620, %p621
    %p624 = scmp.ne.s32.totalorder %s609, %s623
    %p625 = scmp.eq.s32.totalorder %s90, 0
    %p626 = por %p624, %p625
    %s628 = sadd.s32 %s627, 1
    %p631 = scmp.eq.s32.totalorder %s84, 1
    %p632 = scmp.ne.s32.totalorder %s627, %s629
    %p633 = scmp.eq.s32.totalorder %s84, 0
    %p634 = por %p632, %p633
    %p635 = scmp.ne.s32.totalorder %s627, %s629
    %p636 = scmp.eq.s32.totalorder %s89, 1
    %p637 = por %p635, %p636
    %p638 = scmp.ne.s32.totalorder %s629, %s630
    %p639 = scmp.eq.s32.totalorder %s89, 0
    %p640 = por %p638, %p639
    %p641 = scmp.ne.s32.totalorder %s629, %s630
    %p642 = scmp.eq.s32.totalorder %s90, 1
    %p643 = por %p641, %p642
    %p645 = scmp.ne.s32.totalorder %s630, %s644
    %p646 = scmp.eq.s32.totalorder %s90, 0
    %p647 = por %p645, %p646
    %s649 = sadd.s32 %s648, 1
    %p652 = scmp.eq.s32.totalorder %s84, 1
    %p653 = scmp.ne.s32.totalorder %s648, %s650
    %p654 = scmp.eq.s32.totalorder %s84, 0
    %p655 = por %p653, %p654
    %p656 = scmp.ne.s32.totalorder %s648, %s650
    %p657 = scmp.eq.s32.totalorder %s89, 1
    %p658 = por %p656, %p657
    %p659 = scmp.ne.s32.totalorder %s650, %s651
    %p660 = scmp.eq.s32.totalorder %s89, 0
    %p661 = por %p659, %p660
    %p662 = scmp.ne.s32.totalorder %s650, %s651
    %p663 = scmp.eq.s32.totalorder %s90, 1
    %p664 = por %p662, %p663
    %p666 = scmp.ne.s32.totalorder %s651, %s665
    %p667 = scmp.eq.s32.totalorder %s90, 0
    %p668 = por %p666, %p667
    %s670 = sadd.s32 %s669, 1
    %p673 = scmp.eq.s32.totalorder %s84, 1
    %p674 = scmp.ne.s32.totalorder %s669, %s671
    %p675 = scmp.eq.s32.totalorder %s84, 0
    %p676 = por %p674, %p675
    %p677 = scmp.ne.s32.totalorder %s669, %s671
    %p678 = scmp.eq.s32.totalorder %s89, 1
    %p679 = por %p677, %p678
    %p680 = scmp.ne.s32.totalorder %s671, %s672
    %p681 = scmp.eq.s32.totalorder %s89, 0
    %p682 = por %p680, %p681
    %p683 = scmp.ne.s32.totalorder %s671, %s672
    %p684 = scmp.eq.s32.totalorder %s90, 1
    %p685 = por %p683, %p684
    %p687 = scmp.ne.s32.totalorder %s672, %s686
    %p688 = scmp.eq.s32.totalorder %s90, 0
    %p689 = por %p687, %p688
    %s691 = sadd.s32 %s690, 1
    %p694 = scmp.eq.s32.totalorder %s84, 1
    %p695 = scmp.ne.s32.totalorder %s690, %s692
    %p696 = scmp.eq.s32.totalorder %s84, 0
    %p697 = por %p695, %p696
    %p698 = scmp.ne.s32.totalorder %s690, %s692
    %p699 = scmp.eq.s32.totalorder %s89, 1
    %p700 = por %p698, %p699
    %p701 = scmp.ne.s32.totalorder %s692, %s693
    %p702 = scmp.eq.s32.totalorder %s89, 0
    %p703 = por %p701, %p702
    %p704 = scmp.ne.s32.totalorder %s692, %s693
    %p705 = scmp.eq.s32.totalorder %s90, 1
    %p706 = por %p704, %p705
    %p708 = scmp.ne.s32.totalorder %s693, %s707
    %p709 = scmp.eq.s32.totalorder %s90, 0
    %p710 = por %p708, %p709
    %s712 = sadd.s32 %s711, 1
    %p715 = scmp.eq.s32.totalorder %s84, 1
    %p716 = scmp.ne.s32.totalorder %s711, %s713
    %p717 = scmp.eq.s32.totalorder %s84, 0
    %p718 = por %p716, %p717
    %p719 = scmp.ne.s32.totalorder %s711, %s713
    %p720 = scmp.eq.s32.totalorder %s89, 1
    %p721 = por %p719, %p720
    %p722 = scmp.ne.s32.totalorder %s713, %s714
    %p723 = scmp.eq.s32.totalorder %s89, 0
    %p724 = por %p722, %p723
    %p725 = scmp.ne.s32.totalorder %s713, %s714
    %p726 = scmp.eq.s32.totalorder %s90, 1
    %p727 = por %p725, %p726
    %p729 = scmp.ne.s32.totalorder %s714, %s728
    %p730 = scmp.eq.s32.totalorder %s90, 0
    %p731 = por %p729, %p730
    %s733 = sadd.s32 %s732, 1
    %p736 = scmp.eq.s32.totalorder %s84, 1
    %p737 = scmp.ne.s32.totalorder %s732, %s734
    %p738 = scmp.eq.s32.totalorder %s84, 0
    %p739 = por %p737, %p738
    %p740 = scmp.ne.s32.totalorder %s732, %s734
    %p741 = scmp.eq.s32.totalorder %s89, 1
    %p742 = por %p740, %p741
    %p743 = scmp.ne.s32.totalorder %s734, %s735
    %p744 = scmp.eq.s32.totalorder %s89, 0
    %p745 = por %p743, %p744
    %p746 = scmp.ne.s32.totalorder %s734, %s735
    %p747 = scmp.eq.s32.totalorder %s90, 1
    %p748 = por %p746, %p747
    %p750 = scmp.ne.s32.totalorder %s735, %s749
    %p751 = scmp.eq.s32.totalorder %s90, 0
    %p752 = por %p750, %p751
    %s754 = sadd.s32 %s753, 1
    %p757 = scmp.eq.s32.totalorder %s84, 1
    %p758 = scmp.ne.s32.totalorder %s753, %s755
    %p759 = scmp.eq.s32.totalorder %s84, 0
    %p760 = por %p758, %p759
    %p761 = scmp.ne.s32.totalorder %s753, %s755
    %p762 = scmp.eq.s32.totalorder %s89, 1
    %p763 = por %p761, %p762
    %p764 = scmp.ne.s32.totalorder %s755, %s756
    %p765 = scmp.eq.s32.totalorder %s89, 0
    %p766 = por %p764, %p765
    %p767 = scmp.ne.s32.totalorder %s755, %s756
    %p768 = scmp.eq.s32.totalorder %s90, 1
    %p769 = por %p767, %p768
    %p771 = scmp.ne.s32.totalorder %s756, %s770
    %p772 = scmp.eq.s32.totalorder %s90, 0
    %p773 = por %p771, %p772
    %s775 = sadd.s32 %s774, 1
    %p778 = scmp.eq.s32.totalorder %s84, 1
    %p779 = scmp.ne.s32.totalorder %s774, %s776
    %p780 = scmp.eq.s32.totalorder %s84, 0
    %p781 = por %p779, %p780
    %p782 = scmp.ne.s32.totalorder %s774, %s776
    %p783 = scmp.eq.s32.totalorder %s89, 1
    %p784 = por %p782, %p783
    %p785 = scmp.ne.s32.totalorder %s776, %s777
    %p786 = scmp.eq.s32.totalorder %s89, 0
    %p787 = por %p785, %p786
    %p788 = scmp.ne.s32.totalorder %s776, %s777
    %p789 = scmp.eq.s32.totalorder %s90, 1
    %p790 = por %p788, %p789
    %p792 = scmp.ne.s32.totalorder %s777, %s791
    %p793 = scmp.eq.s32.totalorder %s90, 0
    %p794 = por %p792, %p793
    %s796 = sadd.s32 %s795, 1
    %p799 = scmp.eq.s32.totalorder %s84, 1
    %p800 = scmp.ne.s32.totalorder %s795, %s797
    %p801 = scmp.eq.s32.totalorder %s84, 0
    %p802 = por %p800, %p801
    %p803 = scmp.ne.s32.totalorder %s795, %s797
    %p804 = scmp.eq.s32.totalorder %s89, 1
    %p805 = por %p803, %p804
    %p806 = scmp.ne.s32.totalorder %s797, %s798
    %p807 = scmp.eq.s32.totalorder %s89, 0
    %p808 = por %p806, %p807
    %p809 = scmp.ne.s32.totalorder %s797, %s798
    %p810 = scmp.eq.s32.totalorder %s90, 1
    %p811 = por %p809, %p810
    %p813 = scmp.ne.s32.totalorder %s798, %s812
    %p814 = scmp.eq.s32.totalorder %s90, 0
    %p815 = por %p813, %p814
    %s817 = sadd.s32 %s816, 1
    %p820 = scmp.eq.s32.totalorder %s84, 1
    %p821 = scmp.ne.s32.totalorder %s816, %s818
    %p822 = scmp.eq.s32.totalorder %s84, 0
    %p823 = por %p821, %p822
    %p824 = scmp.ne.s32.totalorder %s816, %s818
    %p825 = scmp.eq.s32.totalorder %s89, 1
    %p826 = por %p824, %p825
    %p827 = scmp.ne.s32.totalorder %s818, %s819
    %p828 = scmp.eq.s32.totalorder %s89, 0
    %p829 = por %p827, %p828
    %p830 = scmp.ne.s32.totalorder %s818, %s819
    %p831 = scmp.eq.s32.totalorder %s90, 1
    %p832 = por %p830, %p831
    %p834 = scmp.ne.s32.totalorder %s819, %s833
    %p835 = scmp.eq.s32.totalorder %s90, 0
    %p836 = por %p834, %p835
    %s838 = sadd.s32 %s837, 1
    %p841 = scmp.eq.s32.totalorder %s84, 1
    %p842 = scmp.ne.s32.totalorder %s837, %s839
    %p843 = scmp.eq.s32.totalorder %s84, 0
    %p844 = por %p842, %p843
    %p845 = scmp.ne.s32.totalorder %s837, %s839
    %p846 = scmp.eq.s32.totalorder %s89, 1
    %p847 = por %p845, %p846
    %p848 = scmp.ne.s32.totalorder %s839, %s840
    %p849 = scmp.eq.s32.totalorder %s89, 0
    %p850 = por %p848, %p849
    %p851 = scmp.ne.s32.totalorder %s839, %s840
    %p852 = scmp.eq.s32.totalorder %s90, 1
    %p853 = por %p851, %p852
    %p855 = scmp.ne.s32.totalorder %s840, %s854
    %p856 = scmp.eq.s32.totalorder %s90, 0
    %p857 = por %p855, %p856
    %s859 = sadd.s32 %s858, 1
    %p862 = scmp.eq.s32.totalorder %s84, 1
    %p863 = scmp.ne.s32.totalorder %s858, %s860
    %p864 = scmp.eq.s32.totalorder %s84, 0
    %p865 = por %p863, %p864
    %p866 = scmp.ne.s32.totalorder %s858, %s860
    %p867 = scmp.eq.s32.totalorder %s89, 1
    %p868 = por %p866, %p867
    %p869 = scmp.ne.s32.totalorder %s860, %s861
    %p870 = scmp.eq.s32.totalorder %s89, 0
    %p871 = por %p869, %p870
    %p872 = scmp.ne.s32.totalorder %s860, %s861
    %p873 = scmp.eq.s32.totalorder %s90, 1
    %p874 = por %p872, %p873
    %p876 = scmp.ne.s32.totalorder %s861, %s875
    %p877 = scmp.eq.s32.totalorder %s90, 0
    %p878 = por %p876, %p877
    %s879 = ssub.s32 %s84, %s91
    %p880 = scmp.eq.s32.totalorder %s879, 0
    %s882 = sadd.s32 %s881, 1
    %s883 = scalar_select %p880, %s881, %s882
    %p886 = pneg %p880
    %p887 = scmp.eq.s32.totalorder %s84, 1
    %p888 = por %p886, %p887
    %p889 = scmp.ne.s32.totalorder %s881, %s884
    %p890 = scmp.eq.s32.totalorder %s84, 0
    %p891 = por %p889, %p890
    %p892 = scmp.ne.s32.totalorder %s881, %s884
    %p893 = scmp.eq.s32.totalorder %s89, 1
    %p894 = por %p892, %p893
    %p895 = scmp.ne.s32.totalorder %s884, %s885
    %p896 = scmp.eq.s32.totalorder %s89, 0
    %p897 = por %p895, %p896
    %p898 = scmp.ne.s32.totalorder %s884, %s885
    %p899 = scmp.eq.s32.totalorder %s90, 1
    %p900 = por %p898, %p899
    %p902 = scmp.ne.s32.totalorder %s885, %s901
    %p903 = scmp.eq.s32.totalorder %s90, 0
    %p904 = por %p902, %p903
    %s905 = ssub.s32 %s84, %s91
    %p906 = scmp.eq.s32.totalorder %s905, 0
    %s908 = sadd.s32 %s907, 1
    %s909 = scalar_select %p906, %s907, %s908
    %p912 = pneg %p906
    %p913 = scmp.eq.s32.totalorder %s84, 1
    %p914 = por %p912, %p913
    %p915 = scmp.ne.s32.totalorder %s907, %s910
    %p916 = scmp.eq.s32.totalorder %s84, 0
    %p917 = por %p915, %p916
    %p918 = scmp.ne.s32.totalorder %s907, %s910
    %p919 = scmp.eq.s32.totalorder %s89, 1
    %p920 = por %p918, %p919
    %p921 = scmp.ne.s32.totalorder %s910, %s911
    %p922 = scmp.eq.s32.totalorder %s89, 0
    %p923 = por %p921, %p922
    %p924 = scmp.ne.s32.totalorder %s910, %s911
    %p925 = scmp.eq.s32.totalorder %s90, 1
    %p926 = por %p924, %p925
    %p928 = scmp.ne.s32.totalorder %s911, %s927
    %p929 = scmp.eq.s32.totalorder %s90, 0
    %p930 = por %p928, %p929
    %p931 = scmp.le.s32.totalorder 1, %s84
    %p932 = scmp.lt.s32.totalorder %s84, 3
    %p933 = pnand %p931, %p932
    %p934 = pneg %p933
    // Predicated region
    $region9: #{tpu_custom_call.1} parent=5 // pred_check
      _
    $region10: #{tpu_custom_call.1} parent=5 // pred_check_branch
      %936 = sbr.rel (%p933) target = $region12
    $region11: #{tpu_custom_call.1} parent=5 // pred_region
      %s937 = ssub.s32 %s84, 1
      // Predicated region
      $region13: #{tpu_custom_call.1} parent=11 // pred_check
        %p938 = pneg %p157
      $region14: #{tpu_custom_call.1} parent=11 // pred_check_branch
        %940 = sbr.rel (%p938) target = $region16
      $region15: #{tpu_custom_call.1} parent=11 // pred_region
        _
      $region16: #{tpu_custom_call.1} parent=11 // pred_fallthru
        _
      // Predicated region
      $region17: #{tpu_custom_call.1} parent=11 // pred_check
        %p941 = pneg %p178
      $region18: #{tpu_custom_call.1} parent=11 // pred_check_branch
        %943 = sbr.rel (%p941) target = $region20
      $region19: #{tpu_custom_call.1} parent=11 // pred_region
        _
      $region20: #{tpu_custom_call.1} parent=11 // pred_fallthru
        _
      // Predicated region
      $region21: #{tpu_custom_call.1} parent=11 // pred_check
        %p944 = pneg %p199
      $region22: #{tpu_custom_call.1} parent=11 // pred_check_branch
        %946 = sbr.rel (%p944) target = $region24
      $region23: #{tpu_custom_call.1} parent=11 // pred_region
        _
      $region24: #{tpu_custom_call.1} parent=11 // pred_fallthru
        _
      // Predicated region
      $region25: #{tpu_custom_call.1} parent=11 // pred_check
        %p947 = pneg %p220
      $region26: #{tpu_custom_call.1} parent=11 // pred_check_branch
        %949 = sbr.rel (%p947) target = $region28
      $region27: #{tpu_custom_call.1} parent=11 // pred_region
        _
      $region28: #{tpu_custom_call.1} parent=11 // pred_fallthru
        _
      // Predicated region
      $region29: #{tpu_custom_call.1} parent=11 // pred_check
        %p950 = pneg %p241
      $region30: #{tpu_custom_call.1} parent=11 // pred_check_branch
        %952 = sbr.rel (%p950) target = $region32
      $region31: #{tpu_custom_call.1} parent=11 // pred_region
        _
      $region32: #{tpu_custom_call.1} parent=11 // pred_fallthru
        _
      // Predicated region
      $region33: #{tpu_custom_call.1} parent=11 // pred_check
        %p953 = pneg %p262
      $region34: #{tpu_custom_call.1} parent=11 // pred_check_branch
        %955 = sbr.rel (%p953) target = $region36
      $region35: #{tpu_custom_call.1} parent=11 // pred_region
        _
      $region36: #{tpu_custom_call.1} parent=11 // pred_fallthru
        _
      // Predicated region
      $region37: #{tpu_custom_call.1} parent=11 // pred_check
        %p956 = pneg %p283
      $region38: #{tpu_custom_call.1} parent=11 // pred_check_branch
        %958 = sbr.rel (%p956) target = $region40
      $region39: #{tpu_custom_call.1} parent=11 // pred_region
        _
      $region40: #{tpu_custom_call.1} parent=11 // pred_fallthru
        _
      // Predicated region
      $region41: #{tpu_custom_call.1} parent=11 // pred_check
        %p959 = pneg %p304
      $region42: #{tpu_custom_call.1} parent=11 // pred_check_branch
        %961 = sbr.rel (%p959) target = $region44
      $region43: #{tpu_custom_call.1} parent=11 // pred_region
        _
      $region44: #{tpu_custom_call.1} parent=11 // pred_fallthru
        _
      // Predicated region
      $region45: #{tpu_custom_call.1} parent=11 // pred_check
        %p962 = pneg %p325
      $region46: #{tpu_custom_call.1} parent=11 // pred_check_branch
        %964 = sbr.rel (%p962) target = $region48
      $region47: #{tpu_custom_call.1} parent=11 // pred_region
        _
      $region48: #{tpu_custom_call.1} parent=11 // pred_fallthru
        _
      // Predicated region
      $region49: #{tpu_custom_call.1} parent=11 // pred_check
        %p965 = pneg %p346
      $region50: #{tpu_custom_call.1} parent=11 // pred_check_branch
        %967 = sbr.rel (%p965) target = $region52
      $region51: #{tpu_custom_call.1} parent=11 // pred_region
        _
      $region52: #{tpu_custom_call.1} parent=11 // pred_fallthru
        _
      // Predicated region
      $region53: #{tpu_custom_call.1} parent=11 // pred_check
        %p968 = pneg %p367
      $region54: #{tpu_custom_call.1} parent=11 // pred_check_branch
        %970 = sbr.rel (%p968) target = $region56
      $region55: #{tpu_custom_call.1} parent=11 // pred_region
        _
      $region56: #{tpu_custom_call.1} parent=11 // pred_fallthru
        _
      // Predicated region
      $region57: #{tpu_custom_call.1} parent=11 // pred_check
        %p971 = pneg %p388
      $region58: #{tpu_custom_call.1} parent=11 // pred_check_branch
        %973 = sbr.rel (%p971) target = $region60
      $region59: #{tpu_custom_call.1} parent=11 // pred_region
        _
      $region60: #{tpu_custom_call.1} parent=11 // pred_fallthru
        _
      // Predicated region
      $region61: #{tpu_custom_call.1} parent=11 // pred_check
        %p974 = pneg %p409
      $region62: #{tpu_custom_call.1} parent=11 // pred_check_branch
        %976 = sbr.rel (%p974) target = $region64
      $region63: #{tpu_custom_call.1} parent=11 // pred_region
        _
      $region64: #{tpu_custom_call.1} parent=11 // pred_fallthru
        _
      // Predicated region
      $region65: #{tpu_custom_call.1} parent=11 // pred_check
        %p977 = pneg %p430
      $region66: #{tpu_custom_call.1} parent=11 // pred_check_branch
        %979 = sbr.rel (%p977) target = $region68
      $region67: #{tpu_custom_call.1} parent=11 // pred_region
        _
      $region68: #{tpu_custom_call.1} parent=11 // pred_fallthru
        _
      // Predicated region
      $region69: #{tpu_custom_call.1} parent=11 // pred_check
        %p980 = pneg %p451
      $region70: #{tpu_custom_call.1} parent=11 // pred_check_branch
        %982 = sbr.rel (%p980) target = $region72
      $region71: #{tpu_custom_call.1} parent=11 // pred_region
        _
      $region72: #{tpu_custom_call.1} parent=11 // pred_fallthru
        _
      // Predicated region
      $region73: #{tpu_custom_call.1} parent=11 // pred_check
        %p983 = pneg %p472
      $region74: #{tpu_custom_call.1} parent=11 // pred_check_branch
        %985 = sbr.rel (%p983) target = $region76
      $region75: #{tpu_custom_call.1} parent=11 // pred_region
        _
      $region76: #{tpu_custom_call.1} parent=11 // pred_fallthru
        _
      // Predicated region
      $region77: #{tpu_custom_call.1} parent=11 // pred_check
        %p986 = pneg %p493
      $region78: #{tpu_custom_call.1} parent=11 // pred_check_branch
        %988 = sbr.rel (%p986) target = $region80
      $region79: #{tpu_custom_call.1} parent=11 // pred_region
        _
      $region80: #{tpu_custom_call.1} parent=11 // pred_fallthru
        _
      // Predicated region
      $region81: #{tpu_custom_call.1} parent=11 // pred_check
        %p989 = pneg %p514
      $region82: #{tpu_custom_call.1} parent=11 // pred_check_branch
        %991 = sbr.rel (%p989) target = $region84
      $region83: #{tpu_custom_call.1} parent=11 // pred_region
        _
      $region84: #{tpu_custom_call.1} parent=11 // pred_fallthru
        _
      // Predicated region
      $region85: #{tpu_custom_call.1} parent=11 // pred_check
        %p992 = pneg %p535
      $region86: #{tpu_custom_call.1} parent=11 // pred_check_branch
        %994 = sbr.rel (%p992) target = $region88
      $region87: #{tpu_custom_call.1} parent=11 // pred_region
        _
      $region88: #{tpu_custom_call.1} parent=11 // pred_fallthru
        _
      // Predicated region
      $region89: #{tpu_custom_call.1} parent=11 // pred_check
        %p995 = pneg %p556
      $region90: #{tpu_custom_call.1} parent=11 // pred_check_branch
        %997 = sbr.rel (%p995) target = $region92
      $region91: #{tpu_custom_call.1} parent=11 // pred_region
        _
      $region92: #{tpu_custom_call.1} parent=11 // pred_fallthru
        _
      // Predicated region
      $region93: #{tpu_custom_call.1} parent=11 // pred_check
        %p998 = pneg %p577
      $region94: #{tpu_custom_call.1} parent=11 // pred_check_branch
        %1000 = sbr.rel (%p998) target = $region96
      $region95: #{tpu_custom_call.1} parent=11 // pred_region
        _
      $region96: #{tpu_custom_call.1} parent=11 // pred_fallthru
        _
      // Predicated region
      $region97: #{tpu_custom_call.1} parent=11 // pred_check
        %p1001 = pneg %p598
      $region98: #{tpu_custom_call.1} parent=11 // pred_check_branch
        %1003 = sbr.rel (%p1001) target = $region100
      $region99: #{tpu_custom_call.1} parent=11 // pred_region
        _
      $region100: #{tpu_custom_call.1} parent=11 // pred_fallthru
        _
      // Predicated region
      $region101: #{tpu_custom_call.1} parent=11 // pred_check
        %p1004 = pneg %p619
      $region102: #{tpu_custom_call.1} parent=11 // pred_check_branch
        %1006 = sbr.rel (%p1004) target = $region104
      $region103: #{tpu_custom_call.1} parent=11 // pred_region
        _
      $region104: #{tpu_custom_call.1} parent=11 // pred_fallthru
        _
      // Predicated region
      $region105: #{tpu_custom_call.1} parent=11 // pred_check
        %p1007 = pneg %p640
      $region106: #{tpu_custom_call.1} parent=11 // pred_check_branch
        %1009 = sbr.rel (%p1007) target = $region108
      $region107: #{tpu_custom_call.1} parent=11 // pred_region
        _
      $region108: #{tpu_custom_call.1} parent=11 // pred_fallthru
        _
      // Predicated region
      $region109: #{tpu_custom_call.1} parent=11 // pred_check
        %p1010 = pneg %p661
      $region110: #{tpu_custom_call.1} parent=11 // pred_check_branch
        %1012 = sbr.rel (%p1010) target = $region112
      $region111: #{tpu_custom_call.1} parent=11 // pred_region
        _
      $region112: #{tpu_custom_call.1} parent=11 // pred_fallthru
        _
      // Predicated region
      $region113: #{tpu_custom_call.1} parent=11 // pred_check
        %p1013 = pneg %p682
      $region114: #{tpu_custom_call.1} parent=11 // pred_check_branch
        %1015 = sbr.rel (%p1013) target = $region116
      $region115: #{tpu_custom_call.1} parent=11 // pred_region
        _
      $region116: #{tpu_custom_call.1} parent=11 // pred_fallthru
        _
      // Predicated region
      $region117: #{tpu_custom_call.1} parent=11 // pred_check
        %p1016 = pneg %p703
      $region118: #{tpu_custom_call.1} parent=11 // pred_check_branch
        %1018 = sbr.rel (%p1016) target = $region120
      $region119: #{tpu_custom_call.1} parent=11 // pred_region
        _
      $region120: #{tpu_custom_call.1} parent=11 // pred_fallthru
        _
      // Predicated region
      $region121: #{tpu_custom_call.1} parent=11 // pred_check
        %p1019 = pneg %p724
      $region122: #{tpu_custom_call.1} parent=11 // pred_check_branch
        %1021 = sbr.rel (%p1019) target = $region124
      $region123: #{tpu_custom_call.1} parent=11 // pred_region
        _
      $region124: #{tpu_custom_call.1} parent=11 // pred_fallthru
        _
      // Predicated region
      $region125: #{tpu_custom_call.1} parent=11 // pred_check
        %p1022 = pneg %p745
      $region126: #{tpu_custom_call.1} parent=11 // pred_check_branch
        %1024 = sbr.rel (%p1022) target = $region128
      $region127: #{tpu_custom_call.1} parent=11 // pred_region
        _
      $region128: #{tpu_custom_call.1} parent=11 // pred_fallthru
        _
      // Predicated region
      $region129: #{tpu_custom_call.1} parent=11 // pred_check
        %p1025 = pneg %p766
      $region130: #{tpu_custom_call.1} parent=11 // pred_check_branch
        %1027 = sbr.rel (%p1025) target = $region132
      $region131: #{tpu_custom_call.1} parent=11 // pred_region
        _
      $region132: #{tpu_custom_call.1} parent=11 // pred_fallthru
        _
      // Predicated region
      $region133: #{tpu_custom_call.1} parent=11 // pred_check
        %p1028 = pneg %p787
      $region134: #{tpu_custom_call.1} parent=11 // pred_check_branch
        %1030 = sbr.rel (%p1028) target = $region136
      $region135: #{tpu_custom_call.1} parent=11 // pred_region
        _
      $region136: #{tpu_custom_call.1} parent=11 // pred_fallthru
        _
      // Predicated region
      $region137: #{tpu_custom_call.1} parent=11 // pred_check
        %p1031 = pneg %p808
      $region138: #{tpu_custom_call.1} parent=11 // pred_check_branch
        %1033 = sbr.rel (%p1031) target = $region140
      $region139: #{tpu_custom_call.1} parent=11 // pred_region
        _
      $region140: #{tpu_custom_call.1} parent=11 // pred_fallthru
        _
      // Predicated region
      $region141: #{tpu_custom_call.1} parent=11 // pred_check
        %p1034 = pneg %p829
      $region142: #{tpu_custom_call.1} parent=11 // pred_check_branch
        %1036 = sbr.rel (%p1034) target = $region144
      $region143: #{tpu_custom_call.1} parent=11 // pred_region
        _
      $region144: #{tpu_custom_call.1} parent=11 // pred_fallthru
        _
      // Predicated region
      $region145: #{tpu_custom_call.1} parent=11 // pred_check
        %p1037 = pneg %p850
      $region146: #{tpu_custom_call.1} parent=11 // pred_check_branch
        %1039 = sbr.rel (%p1037) target = $region148
      $region147: #{tpu_custom_call.1} parent=11 // pred_region
        _
      $region148: #{tpu_custom_call.1} parent=11 // pred_fallthru
        _
      // Predicated region
      $region149: #{tpu_custom_call.1} parent=11 // pred_check
        %p1040 = pneg %p871
      $region150: #{tpu_custom_call.1} parent=11 // pred_check_branch
        %1042 = sbr.rel (%p1040) target = $region152
      $region151: #{tpu_custom_call.1} parent=11 // pred_region
        _
      $region152: #{tpu_custom_call.1} parent=11 // pred_fallthru
        _
    $region12: #{tpu_custom_call.1} parent=5 // pred_fallthru
      _
    %p1043 = scmp.lt.s32.totalorder %s84, 2
    // Predicated region
    $region153: #{tpu_custom_call.1} parent=5 // pred_check
      %p1044 = pneg %p1043
    $region154: #{tpu_custom_call.1} parent=5 // pred_check_branch
      %1046 = sbr.rel (%p1044) target = $region156
    $region155: #{tpu_custom_call.1} parent=5 // pred_region
      // Predicated region
      $region157: #{tpu_custom_call.1} parent=155 // pred_check
        %p1047 = pneg %p104
      $region158: #{tpu_custom_call.1} parent=155 // pred_check_branch
        %1049 = sbr.rel (%p1047) target = $region160
      $region159: #{tpu_custom_call.1} parent=155 // pred_region
        %p1050 = scmp.lt.s32.totalorder %s84, 1
        %s1051 = scalar_select %p1050, %s84, 1
        %s1052 = smul.addr %s1051, 2
        %s1053 = smul.addr %s1052, 8
        %s1054 = scalar_lea.vmem %s1, %s1053
      $region160: #{tpu_custom_call.1} parent=155 // pred_fallthru
        _
      // Predicated region
      $region161: #{tpu_custom_call.1} parent=155 // pred_check
        %p1055 = pneg %p130
      $region162: #{tpu_custom_call.1} parent=155 // pred_check_branch
        %1057 = sbr.rel (%p1055) target = $region164
      $region163: #{tpu_custom_call.1} parent=155 // pred_region
        %p1058 = scmp.lt.s32.totalorder %s84, 1
        %s1059 = scalar_select %p1058, %s84, 1
        %s1060 = smul.addr %s1059, 2
        %s1061 = scalar_lea.vmem %s3, %s1060
      $region164: #{tpu_custom_call.1} parent=155 // pred_fallthru
        _
    $region156: #{tpu_custom_call.1} parent=5 // pred_fallthru
      _
    %p1062 = scmp.le.s32.totalorder 1, %s84
    %p1063 = scmp.lt.s32.totalorder %s84, 3
    %p1064 = pnand %p1062, %p1063
    %p1065 = pneg %p1064
    // Predicated region
    $region165: #{tpu_custom_call.1} parent=5 // pred_check
      _
    $region166: #{tpu_custom_call.1} parent=5 // pred_check_branch
      %1067 = sbr.rel (%p1064) target = $region168
    $region167: #{tpu_custom_call.1} parent=5 // pred_region
      %s1068 = ssub.s32 %s84, 1
      %p1069 = scmp.lt.s32.totalorder %s89, 1
      %s1070 = scalar_select %p1069, %s89, 1
      %s1071 = smul.addr %s1070, 2
      %s1072 = smul.addr %s1071, 8
      %s1073 = scalar_lea.vmem %s1, %s1072
      %p1074 = pneg %p110
      %p1075 = pneg %p107
      %p1076 = scmp.lt.s32.totalorder %s89, 1
      %s1077 = scalar_select %p1076, %s89, 1
      %s1078 = smul.addr %s1077, 2
      %s1079 = scalar_lea.vmem %s3, %s1078
      %p1080 = pneg %p136
      %p1081 = pneg %p133
      %p1082 = pneg %p157
      %p1083 = pneg %p154
      %p1084 = pneg %p178
      %p1085 = pneg %p175
      %p1086 = pneg %p199
      %p1087 = pneg %p196
      %p1088 = pneg %p220
      %p1089 = pneg %p217
      %p1090 = pneg %p241
      %p1091 = pneg %p238
      %p1092 = pneg %p262
      %p1093 = pneg %p259
      %p1094 = pneg %p283
      %p1095 = pneg %p280
      %p1096 = pneg %p304
      %p1097 = pneg %p301
      %p1098 = pneg %p325
      %p1099 = pneg %p322
      %p1100 = pneg %p346
      %p1101 = pneg %p343
      %p1102 = pneg %p367
      %p1103 = pneg %p364
      %p1104 = pneg %p388
      %p1105 = pneg %p385
      %p1106 = pneg %p409
      %p1107 = pneg %p406
      %p1108 = pneg %p430
      %p1109 = pneg %p427
      %p1110 = pneg %p451
      %p1111 = pneg %p448
      %p1112 = pneg %p472
      %p1113 = pneg %p469
      %p1114 = pneg %p493
      %p1115 = pneg %p490
      %p1116 = pneg %p514
      %p1117 = pneg %p511
      %p1118 = pneg %p535
      %p1119 = pneg %p532
      %p1120 = pneg %p556
      %p1121 = pneg %p553
      %p1122 = pneg %p577
      %p1123 = pneg %p574
      %p1124 = pneg %p598
      %p1125 = pneg %p595
      %p1126 = pneg %p619
      %p1127 = pneg %p616
      %p1128 = pneg %p640
      %p1129 = pneg %p637
      %p1130 = pneg %p661
      %p1131 = pneg %p658
      %p1132 = pneg %p682
      %p1133 = pneg %p679
      %p1134 = pneg %p703
      %p1135 = pneg %p700
      %p1136 = pneg %p724
      %p1137 = pneg %p721
      %p1138 = pneg %p745
      %p1139 = pneg %p742
      %p1140 = pneg %p766
      %p1141 = pneg %p763
      %p1142 = pneg %p787
      %p1143 = pneg %p784
      %p1144 = pneg %p808
      %p1145 = pneg %p805
      %p1146 = pneg %p829
      %p1147 = pneg %p826
      %p1148 = pneg %p850
      %p1149 = pneg %p847
      %p1150 = pneg %p871
      %p1151 = pneg %p868
      %p1152 = pneg %p897
      %p1153 = pneg %p894
      %p1154 = scmp.lt.s32.totalorder %s89, 1
      %s1155 = scalar_select %p1154, %s89, 1
      %s1156 = smul.addr %s1155, 2
      %s1157 = smul.addr %s1156, 8
      %s1158 = scalar_lea.vmem %s75, %s1157
      %p1159 = pneg %p923
      %p1160 = pneg %p920
      %p1161 = scmp.lt.s32.totalorder %s89, 1
      %s1162 = scalar_select %p1161, %s89, 1
      %s1163 = smul.addr %s1162, 8
      %s1164 = smul.addr %s1163, 8
      %s1165 = scalar_lea.vmem %s77, %s1164
      %p1166 = scmp.lt.s32.totalorder %s89, 1
      %s1167 = scalar_select %p1166, %s89, 1
      %s1168 = smul.addr %s1167, 2
      %s1169 = smul.addr %s1168, 8
      %s1170 = scalar_lea.vmem %s1, %s1169
      %p1171 = scmp.lt.s32.totalorder %s89, 1
      %s1172 = scalar_select %p1171, %s89, 1
      %s1173 = smul.addr %s1172, 2
      %s1174 = scalar_lea.vmem %s3, %s1173
      %p1175 = scmp.lt.s32.totalorder %s89, 1
      %s1176 = scalar_select %p1175, %s89, 1
      %s1177 = smul.addr %s1176, 2
      %s1178 = smul.addr %s1177, 8
      %s1179 = scalar_lea.vmem %s75, %s1178
      %p1180 = scmp.lt.s32.totalorder %s89, 1
      %s1181 = scalar_select %p1180, %s89, 1
      %s1182 = smul.addr %s1181, 8
      %s1183 = smul.addr %s1182, 8
      %s1184 = scalar_lea.vmem %s77, %s1183
      %v1185 = vld [vmem:[%s5] sm:$0xff]
      %v1186 = vld [vmem:[%s5 + $0x8] sm:$0xff]
      %v1187 = vld [vmem:[%s5 + $0x10] sm:$0xff]
      %v1188 = vld [vmem:[%s5 + $0x18] sm:$0xff]
      %v1189 = vld [vmem:[%s5 + $0x20] sm:$0xff]
      %v1190 = vld [vmem:[%s5 + $0x28] sm:$0xff]
      %v1191 = vld [vmem:[%s7] sm:$0xff]
      %v1192 = vld [vmem:[%s7 + $0x8] sm:$0xff]
      %v1193 = vld [vmem:[%s1170] sm:$0xff]
      %v1194 = vld [vmem:[%s1170 + $0x8] sm:$0xff]
      %v1195 = vld [vmem:[%s9] sm:$0x3f]
      %v1196 = vld [vmem:[%s11] sm:$0x1]
      %vm1197 = vcmask 130048
      %v1199 = vsel %vm1197, %v1185, 0
      %v1202 = vsel %vm1197, %v1186, 0
      %1204 = vmatpush.msra.mxu0 0.0
      %1205 = vmatpush.msra.mxu0 0.0
      %1206 = vmatpush.msra.mxu0 0.0
      %1207 = vmatpush.msra.mxu0 0.0
      %1208 = vmatpush.msra.mxu0 0.0
      %1209 = vmatpush.msra.mxu0 0.0
      %1210 = vmatpush.msra.mxu0 0.0
      %1211 = vmatpush.msra.mxu0 0.0
      %1212 = vmatpush.msra.mxu0 0.0
      %1213 = vmatpush.msra.mxu0 0.0
      %1214 = vmatpush.msra.mxu0 0.0
      %1215 = vmatpush.msra.mxu0 0.0
      %1216 = vmatpush.msra.mxu0 0.0
      %1217 = vmatpush.msra.mxu0 0.0
      %1218 = vmatpush.msra.mxu0 %v1194
      %1219 = vmatpush.msra.mxu0 %v1193
      %1220 = vmatmul.f32.gmra.mxu0 %v1199
      %v1221 = vpop.f32.mrf.mxu0
      %v1222 = vadd.f32 0.0, %v1221
      %1223 = vmatmul.f32.gmra.mxu0 %v1202
      %v1224 = vpop.f32.mrf.mxu0
      %v1225 = vadd.f32 0.0, %v1224
      %1226 = vdwg.mxu0
      %v1228 = vsel %vm1197, %v1187, 0
      %v1231 = vsel %vm1197, %v1188, 0
      %1233 = vmatpush.msra.mxu0 0.0
      %1234 = vmatpush.msra.mxu0 0.0
      %1235 = vmatpush.msra.mxu0 0.0
      %1236 = vmatpush.msra.mxu0 0.0
      %1237 = vmatpush.msra.mxu0 0.0
      %1238 = vmatpush.msra.mxu0 0.0
      %1239 = vmatpush.msra.mxu0 0.0
      %1240 = vmatpush.msra.mxu0 0.0
      %1241 = vmatpush.msra.mxu0 0.0
      %1242 = vmatpush.msra.mxu0 0.0
      %1243 = vmatpush.msra.mxu0 0.0
      %1244 = vmatpush.msra.mxu0 0.0
      %1245 = vmatpush.msra.mxu0 0.0
      %1246 = vmatpush.msra.mxu0 0.0
      %1247 = vmatpush.msra.mxu0 %v1194
      %1248 = vmatpush.msra.mxu0 %v1193
      %1249 = vmatmul.f32.gmra.mxu0 %v1228
      %v1250 = vpop.f32.mrf.mxu0
      %v1251 = vadd.f32 0.0, %v1250
      %1252 = vmatmul.f32.gmra.mxu0 %v1231
      %v1253 = vpop.f32.mrf.mxu0
      %v1254 = vadd.f32 0.0, %v1253
      %1255 = vdwg.mxu0
      %v1257 = vsel %vm1197, %v1189, 0
      %v1260 = vsel %vm1197, %v1190, 0
      %1262 = vmatpush.msra.mxu0 0.0
      %1263 = vmatpush.msra.mxu0 0.0
      %1264 = vmatpush.msra.mxu0 0.0
      %1265 = vmatpush.msra.mxu0 0.0
      %1266 = vmatpush.msra.mxu0 0.0
      %1267 = vmatpush.msra.mxu0 0.0
      %1268 = vmatpush.msra.mxu0 0.0
      %1269 = vmatpush.msra.mxu0 0.0
      %1270 = vmatpush.msra.mxu0 0.0
      %1271 = vmatpush.msra.mxu0 0.0
      %1272 = vmatpush.msra.mxu0 0.0
      %1273 = vmatpush.msra.mxu0 0.0
      %1274 = vmatpush.msra.mxu0 0.0
      %1275 = vmatpush.msra.mxu0 0.0
      %1276 = vmatpush.msra.mxu0 %v1194
      %1277 = vmatpush.msra.mxu0 %v1193
      %1278 = vmatmul.f32.gmra.mxu0 %v1257
      %v1279 = vpop.f32.mrf.mxu0
      %v1280 = vadd.f32 0.0, %v1279
      %1281 = vmatmul.f32.gmra.mxu0 %v1260
      %v1282 = vpop.f32.mrf.mxu0
      %v1283 = vadd.f32 0.0, %v1282
      %1284 = vdwg.mxu0
      %1287 = vrot.lane.b32.xlu0 %v1251, 2
      %v1288 = vpop.permute.xlu0 %1287
      %1289 = vrot.lane.b32.xlu0 %v1254, 2
      %v1290 = vpop.permute.xlu0 %1289
      %1295 = vrot.lane.b32.xlu0 %v1280, 4
      %v1296 = vpop.permute.xlu0 %1295
      %1297 = vrot.lane.b32.xlu0 %v1283, 4
      %v1298 = vpop.permute.xlu0 %1297
      %vm1301 = vcmask 15360
      %v1302 = vsel %vm1301, %v1222, %v1288
      %v1303 = vsel %vm1301, %v1225, %v1290
      %vm1304 = vcmask 31744
      %v1305 = vsel %vm1304, %v1302, %v1296
      %v1306 = vsel %vm1304, %v1303, %v1298
      %v1308 = vperm.slane %v1196, 0
      %vm1310 = vcmask 48128
      %v1312 = vsel %vm1310, %v1305, 0
      %v1315 = vsel %vm1310, %v1306, 0
      %vm1317 = vcmask 1045504
      %v1319 = vsel %vm1317, %v1195, 0
      %1321 = vmatpush.msra.mxu0 0.0
      %1322 = vmatpush.msra.mxu0 0.0
      %1323 = vmatpush.msra.mxu0 0.0
      %1324 = vmatpush.msra.mxu0 0.0
      %1325 = vmatpush.msra.mxu0 0.0
      %1326 = vmatpush.msra.mxu0 0.0
      %1327 = vmatpush.msra.mxu0 0.0
      %1328 = vmatpush.msra.mxu0 0.0
      %1329 = vmatpush.msra.mxu0 0.0
      %1330 = vmatpush.msra.mxu0 0.0
      %1331 = vmatpush.msra.mxu0 0.0
      %1332 = vmatpush.msra.mxu0 0.0
      %1333 = vmatpush.msra.mxu0 0.0
      %1334 = vmatpush.msra.mxu0 0.0
      %1335 = vmatpush.msra.mxu0 0.0
      %1336 = vmatpush.msra.mxu0 %v1319
      %1337 = vmatmul.f32.gmra.mxu0 %v1312
      %v1338 = vpop.f32.mrf.mxu0
      %v1339 = vadd.f32 %v1308, %v1338
      %1340 = vmatmul.f32.gmra.mxu0 %v1315
      %v1341 = vpop.f32.mrf.mxu0
      %v1342 = vadd.f32 %v1308, %v1341
      %1343 = vdwg.mxu0
      %v1344 = vld [vmem:[%s13] sm:$0x3]
      %v1345 = vld [vmem:[%s15] sm:$0x3]
      %v1346 = vld [vmem:[%s17] sm:$0xff]
      %v1347 = vld [vmem:[%s17 + $0x8] sm:$0xff]
      %v1348 = vld [vmem:[%s17 + $0x10] sm:$0xff]
      %v1349 = vld [vmem:[%s17 + $0x18] sm:$0xff]
      %v1350 = vld [vmem:[%s19] sm:$0x1]
      %v1351 = vld [vmem:[%s21] sm:$0xff]
      %v1352 = vld [vmem:[%s21 + $0x8] sm:$0xff]
      %v1353 = vld [vmem:[%s21 + $0x10] sm:$0xff]
      %v1354 = vld [vmem:[%s21 + $0x18] sm:$0xff]
      %v1355 = vld [vmem:[%s23] sm:$0x1]
      %v1356 = vld [vmem:[%s25] sm:$0xff]
      %v1357 = vld [vmem:[%s25 + $0x8] sm:$0xff]
      %v1358 = vld [vmem:[%s25 + $0x10] sm:$0xff]
      %v1359 = vld [vmem:[%s25 + $0x18] sm:$0xff]
      %v1360 = vld [vmem:[%s27] sm:$0x1]
      %v1361 = vld [vmem:[%s29] sm:$0xff]
      %v1362 = vld [vmem:[%s29 + $0x8] sm:$0xff]
      %v1363 = vld [vmem:[%s29 + $0x10] sm:$0xff]
      %v1364 = vld [vmem:[%s29 + $0x18] sm:$0xff]
      %v1365 = vld [vmem:[%s29 + $0x20] sm:$0xff]
      %v1366 = vld [vmem:[%s29 + $0x28] sm:$0xff]
      %v1367 = vld [vmem:[%s29 + $0x30] sm:$0xff]
      %v1368 = vld [vmem:[%s29 + $0x38] sm:$0xff]
      %v1369 = vld [vmem:[%s31] sm:$0x1]
      %vm1370 = vcmask 261120
      %v1371 = vsel %vm1370, %v1339, 0.0
      %1372 = vadd.xlane.f32.xlu0 %v1371
      %v1373 = vpop.xlane.xlu0 %1372
      %v1374 = vsel %vm1370, %v1342, 0.0
      %1375 = vadd.xlane.f32.xlu0 %v1374
      %v1376 = vpop.xlane.xlu0 %1375
      %v1377 = vrcp.pop 32.0
      %v1378 = vmul.f32 32.0, %v1377
      %v1379 = vsub.f32 1.0, %v1378
      %v1380 = vmul.f32 %v1377, %v1379
      %v1381 = vadd.f32 %v1377, %v1380
      %vm1382 = vweird.f32 %v1377
      %v1383 = vsel %vm1382, %v1377, %v1381
      %v1384 = vmul.f32 %v1373, %v1383
      %v1385 = vmul.f32 %v1376, %v1383
      %v1386 = vsub.f32 %v1339, %v1384
      %v1387 = vsub.f32 %v1342, %v1385
      %v1388 = vmul.f32 %v1386, %v1386
      %v1389 = vmul.f32 %v1387, %v1387
      %v1390 = vsel %vm1370, %v1388, 0.0
      %1391 = vadd.xlane.f32.xlu0 %v1390
      %v1392 = vpop.xlane.xlu0 %1391
      %v1393 = vsel %vm1370, %v1389, 0.0
      %1394 = vadd.xlane.f32.xlu0 %v1393
      %v1395 = vpop.xlane.xlu0 %1394
      %v1396 = vmul.f32 %v1392, 0.032258064
      %v1397 = vmul.f32 %v1395, 0.032258064
      %v1398 = vrsqrt.pop %v1396
      %v1399 = vmul.f32 %v1398, %v1396
      %v1400 = vmul.f32 %v1399, %v1398
      %v1401 = vmul.f32 0.5, %v1400
      %v1402 = vsub.f32 1.5, %v1401
      %v1403 = vmul.f32 %v1398, %v1402
      %v1404 = vmul.f32 %v1396, %v1403
      %vm1405 = vcmp.eq.f32.partialorder %v1396, inf
      %v1406 = vsel %vm1405, %v1396, %v1404
      %vm1407 = vcmp.eq.f32.partialorder %v1396, 0.0
      %v1408 = vand.u32 %v1396, 2147483648
      %v1409 = vsel %vm1407, %v1408, %v1406
      %v1410 = vrsqrt.pop %v1397
      %v1411 = vmul.f32 %v1410, %v1397
      %v1412 = vmul.f32 %v1411, %v1410
      %v1413 = vmul.f32 0.5, %v1412
      %v1414 = vsub.f32 1.5, %v1413
      %v1415 = vmul.f32 %v1410, %v1414
      %v1416 = vmul.f32 %v1397, %v1415
      %vm1417 = vcmp.eq.f32.partialorder %v1397, inf
      %v1418 = vsel %vm1417, %v1397, %v1416
      %vm1419 = vcmp.eq.f32.partialorder %v1397, 0.0
      %v1420 = vand.u32 %v1397, 2147483648
      %v1421 = vsel %vm1419, %v1420, %v1418
      %v1422 = vadd.f32 %v1409, 1e-06
      %v1423 = vadd.f32 %v1421, 1e-06
      %v1424 = vrcp.pop %v1422
      %v1425 = vrcp.pop %v1423
      %v1426 = vperm.slane %v1344, 0
      %v1427 = vmul.f32 %v1426, %v1386
      %v1428 = vmul.f32 %v1426, %v1387
      %v1429 = vmul.f32 %v1427, %v1424
      %v1430 = vmul.f32 %v1428, %v1425
      %v1431 = vperm.slane %v1345, 0
      %v1432 = vadd.f32 %v1429, %v1431
      %v1433 = vadd.f32 %v1430, %v1431
      %v1435 = vperm.slane %v1350, 0
      %v1438 = vsel %vm1370, %v1432, 0
      %v1441 = vsel %vm1370, %v1433, 0
      %1443 = vmatpush.msra.mxu0 0.0
      %1444 = vmatpush.msra.mxu0 0.0
      %1445 = vmatpush.msra.mxu0 0.0
      %1446 = vmatpush.msra.mxu0 0.0
      %1447 = vmatpush.msra.mxu0 0.0
      %1448 = vmatpush.msra.mxu0 0.0
      %1449 = vmatpush.msra.mxu0 0.0
      %1450 = vmatpush.msra.mxu0 0.0
      %1451 = vmatpush.msra.mxu0 0.0
      %1452 = vmatpush.msra.mxu0 0.0
      %1453 = vmatpush.msra.mxu0 0.0
      %1454 = vmatpush.msra.mxu0 0.0
      %1455 = vmatpush.msra.mxu0 %v1349
      %1456 = vmatpush.msra.mxu0 %v1348
      %1457 = vmatpush.msra.mxu0 %v1347
      %1458 = vmatpush.msra.mxu0 %v1346
      %1459 = vmatmul.f32.gmra.mxu0 %v1438
      %v1460 = vpop.f32.mrf.mxu0
      %v1461 = vadd.f32 %v1435, %v1460
      %1462 = vmatmul.f32.gmra.mxu0 %v1441
      %v1463 = vpop.f32.mrf.mxu0
      %v1464 = vadd.f32 %v1435, %v1463
      %1465 = vdwg.mxu0
      %v1466 = vmul.f32 %v1461, 0.35355338
      %v1467 = vmul.f32 %v1464, 0.35355338
      %1470 = vrot.lane.b32.xlu0 %v1466, 120
      %v1471 = vpop.permute.xlu0 %1470
      %1472 = vrot.lane.b32.xlu0 %v1467, 120
      %v1473 = vpop.permute.xlu0 %1472
      %1474 = vrot.lane.b32.xlu0 %v1466, 112
      %v1475 = vpop.permute.xlu0 %1474
      %1476 = vrot.lane.b32.xlu0 %v1467, 112
      %v1477 = vpop.permute.xlu0 %1476
      %1478 = vrot.lane.b32.xlu0 %v1466, 104
      %v1479 = vpop.permute.xlu0 %1478
      %1480 = vrot.lane.b32.xlu0 %v1467, 104
      %v1481 = vpop.permute.xlu0 %1480
      %1484 = vrot.lane.b32.xlu0 %v1461, 120
      %v1485 = vpop.permute.xlu0 %1484
      %1486 = vrot.lane.b32.xlu0 %v1464, 120
      %v1487 = vpop.permute.xlu0 %1486
      %1488 = vrot.lane.b32.xlu0 %v1461, 112
      %v1489 = vpop.permute.xlu0 %1488
      %1490 = vrot.lane.b32.xlu0 %v1464, 112
      %v1491 = vpop.permute.xlu0 %1490
      %1492 = vrot.lane.b32.xlu0 %v1461, 104
      %v1493 = vpop.permute.xlu0 %1492
      %1494 = vrot.lane.b32.xlu0 %v1464, 104
      %v1495 = vpop.permute.xlu0 %1494
      %1496 = vrot.lane.b32.xlu0 %v1461, 96
      %v1497 = vpop.permute.xlu0 %1496
      %1498 = vrot.lane.b32.xlu0 %v1464, 96
      %v1499 = vpop.permute.xlu0 %1498
      %vm1500 = vcmask 64512
      %v1501 = vsel %vm1500, %v1466, 0
      %v1503 = vsel %vm1500, %v1467, 0
      %v1505 = vsel %vm1500, %v1497, 0
      %v1507 = vsel %vm1500, %v1499, 0
      %1509 = vmatpush.xpose.msra.mxu0 0.0
      %1510 = vmatpush.xpose.msra.mxu0 0.0
      %1511 = vmatpush.xpose.msra.mxu0 0.0
      %1512 = vmatpush.xpose.msra.mxu0 0.0
      %1513 = vmatpush.xpose.msra.mxu0 0.0
      %1514 = vmatpush.xpose.msra.mxu0 0.0
      %1515 = vmatpush.xpose.msra.mxu0 0.0
      %1516 = vmatpush.xpose.msra.mxu0 0.0
      %1517 = vmatpush.xpose.msra.mxu0 0.0
      %1518 = vmatpush.xpose.msra.mxu0 0.0
      %1519 = vmatpush.xpose.msra.mxu0 0.0
      %1520 = vmatpush.xpose.msra.mxu0 0.0
      %1521 = vmatpush.xpose.msra.mxu0 0.0
      %1522 = vmatpush.xpose.msra.mxu0 0.0
      %1523 = vmatpush.xpose.msra.mxu0 %v1507
      %1524 = vmatpush.xpose.msra.mxu0 %v1505
      %1525 = vmatmul.f32.gmra.mxu0 %v1501
      %v1526 = vpop.f32.mrf.mxu0
      %v1527 = vadd.f32 0.0, %v1526
      %1528 = vmatmul.f32.gmra.mxu0 %v1503
      %v1529 = vpop.f32.mrf.mxu0
      %v1530 = vadd.f32 0.0, %v1529
      %1531 = vdwg.mxu0
      %1532 = vrot.lane.b32.xlu0 %v1485, 96
      %v1533 = vpop.permute.xlu0 %1532
      %1534 = vrot.lane.b32.xlu0 %v1487, 96
      %v1535 = vpop.permute.xlu0 %1534
      %v1536 = vsel %vm1500, %v1471, 0
      %v1538 = vsel %vm1500, %v1473, 0
      %v1540 = vsel %vm1500, %v1533, 0
      %v1542 = vsel %vm1500, %v1535, 0
      %1544 = vmatpush.xpose.msra.mxu0 0.0
      %1545 = vmatpush.xpose.msra.mxu0 0.0
      %1546 = vmatpush.xpose.msra.mxu0 0.0
      %1547 = vmatpush.xpose.msra.mxu0 0.0
      %1548 = vmatpush.xpose.msra.mxu0 0.0
      %1549 = vmatpush.xpose.msra.mxu0 0.0
      %1550 = vmatpush.xpose.msra.mxu0 0.0
      %1551 = vmatpush.xpose.msra.mxu0 0.0
      %1552 = vmatpush.xpose.msra.mxu0 0.0
      %1553 = vmatpush.xpose.msra.mxu0 0.0
      %1554 = vmatpush.xpose.msra.mxu0 0.0
      %1555 = vmatpush.xpose.msra.mxu0 0.0
      %1556 = vmatpush.xpose.msra.mxu0 0.0
      %1557 = vmatpush.xpose.msra.mxu0 0.0
      %1558 = vmatpush.xpose.msra.mxu0 %v1542
      %1559 = vmatpush.xpose.msra.mxu0 %v1540
      %1560 = vmatmul.f32.gmra.mxu0 %v1536
      %v1561 = vpop.f32.mrf.mxu0
      %v1562 = vadd.f32 0.0, %v1561
      %1563 = vmatmul.f32.gmra.mxu0 %v1538
      %v1564 = vpop.f32.mrf.mxu0
      %v1565 = vadd.f32 0.0, %v1564
      %1566 = vdwg.mxu0
      %1567 = vrot.lane.b32.xlu0 %v1489, 96
      %v1568 = vpop.permute.xlu0 %1567
      %1569 = vrot.lane.b32.xlu0 %v1491, 96
      %v1570 = vpop.permute.xlu0 %1569
      %v1571 = vsel %vm1500, %v1475, 0
      %v1573 = vsel %vm1500, %v1477, 0
      %v1575 = vsel %vm1500, %v1568, 0
      %v1577 = vsel %vm1500, %v1570, 0
      %1579 = vmatpush.xpose.msra.mxu0 0.0
      %1580 = vmatpush.xpose.msra.mxu0 0.0
      %1581 = vmatpush.xpose.msra.mxu0 0.0
      %1582 = vmatpush.xpose.msra.mxu0 0.0
      %1583 = vmatpush.xpose.msra.mxu0 0.0
      %1584 = vmatpush.xpose.msra.mxu0 0.0
      %1585 = vmatpush.xpose.msra.mxu0 0.0
      %1586 = vmatpush.xpose.msra.mxu0 0.0
      %1587 = vmatpush.xpose.msra.mxu0 0.0
      %1588 = vmatpush.xpose.msra.mxu0 0.0
      %1589 = vmatpush.xpose.msra.mxu0 0.0
      %1590 = vmatpush.xpose.msra.mxu0 0.0
      %1591 = vmatpush.xpose.msra.mxu0 0.0
      %1592 = vmatpush.xpose.msra.mxu0 0.0
      %1593 = vmatpush.xpose.msra.mxu0 %v1577
      %1594 = vmatpush.xpose.msra.mxu0 %v1575
      %1595 = vmatmul.f32.gmra.mxu0 %v1571
      %v1596 = vpop.f32.mrf.mxu0
      %v1597 = vadd.f32 0.0, %v1596
      %1598 = vmatmul.f32.gmra.mxu0 %v1573
      %v1599 = vpop.f32.mrf.mxu0
      %v1600 = vadd.f32 0.0, %v1599
      %1601 = vdwg.mxu0
      %1602 = vrot.lane.b32.xlu0 %v1493, 96
      %v1603 = vpop.permute.xlu0 %1602
      %1604 = vrot.lane.b32.xlu0 %v1495, 96
      %v1605 = vpop.permute.xlu0 %1604
      %v1606 = vsel %vm1500, %v1479, 0
      %v1608 = vsel %vm1500, %v1481, 0
      %v1610 = vsel %vm1500, %v1603, 0
      %v1612 = vsel %vm1500, %v1605, 0
      %1614 = vmatpush.xpose.msra.mxu0 0.0
      %1615 = vmatpush.xpose.msra.mxu0 0.0
      %1616 = vmatpush.xpose.msra.mxu0 0.0
      %1617 = vmatpush.xpose.msra.mxu0 0.0
      %1618 = vmatpush.xpose.msra.mxu0 0.0
      %1619 = vmatpush.xpose.msra.mxu0 0.0
      %1620 = vmatpush.xpose.msra.mxu0 0.0
      %1621 = vmatpush.xpose.msra.mxu0 0.0
      %1622 = vmatpush.xpose.msra.mxu0 0.0
      %1623 = vmatpush.xpose.msra.mxu0 0.0
      %1624 = vmatpush.xpose.msra.mxu0 0.0
      %1625 = vmatpush.xpose.msra.mxu0 0.0
      %1626 = vmatpush.xpose.msra.mxu0 0.0
      %1627 = vmatpush.xpose.msra.mxu0 0.0
      %1628 = vmatpush.xpose.msra.mxu0 %v1612
      %1629 = vmatpush.xpose.msra.mxu0 %v1610
      %1630 = vmatmul.f32.gmra.mxu0 %v1606
      %v1631 = vpop.f32.mrf.mxu0
      %v1632 = vadd.f32 0.0, %v1631
      %1633 = vmatmul.f32.gmra.mxu0 %v1608
      %v1634 = vpop.f32.mrf.mxu0
      %v1635 = vadd.f32 0.0, %v1634
      %1636 = vdwg.mxu0
      %v1637 = vsel %vm1197, %v1527, -inf
      %1638 = vmax.xlane.f32.xlu0 %v1637
      %v1639 = vpop.xlane.xlu0 %1638
      %v1640 = vsel %vm1197, %v1530, -inf
      %1641 = vmax.xlane.f32.xlu0 %v1640
      %v1642 = vpop.xlane.xlu0 %1641
      %v1643 = vsel %vm1197, %v1562, -inf
      %1644 = vmax.xlane.f32.xlu0 %v1643
      %v1645 = vpop.xlane.xlu0 %1644
      %v1646 = vsel %vm1197, %v1565, -inf
      %1647 = vmax.xlane.f32.xlu0 %v1646
      %v1648 = vpop.xlane.xlu0 %1647
      %v1649 = vsel %vm1197, %v1597, -inf
      %1650 = vmax.xlane.f32.xlu0 %v1649
      %v1651 = vpop.xlane.xlu0 %1650
      %v1652 = vsel %vm1197, %v1600, -inf
      %1653 = vmax.xlane.f32.xlu0 %v1652
      %v1654 = vpop.xlane.xlu0 %1653
      %v1655 = vsel %vm1197, %v1632, -inf
      %1656 = vmax.xlane.f32.xlu0 %v1655
      %v1657 = vpop.xlane.xlu0 %1656
      %v1658 = vsel %vm1197, %v1635, -inf
      %1659 = vmax.xlane.f32.xlu0 %v1658
      %v1660 = vpop.xlane.xlu0 %1659
      %v1661 = vsub.f32 %v1527, %v1639
      %v1662 = vsub.f32 %v1530, %v1642
      %v1663 = vsub.f32 %v1562, %v1645
      %v1664 = vsub.f32 %v1565, %v1648
      %v1665 = vsub.f32 %v1597, %v1651
      %v1666 = vsub.f32 %v1600, %v1654
      %v1667 = vsub.f32 %v1632, %v1657
      %v1668 = vsub.f32 %v1635, %v1660
      %v1669 = vmul.f32 %v1661, 1.442695
      %v1670 = vpow.pop %v1669
      %v1671 = vmul.f32 %v1662, 1.442695
      %v1672 = vpow.pop %v1671
      %v1673 = vmul.f32 %v1663, 1.442695
      %v1674 = vpow.pop %v1673
      %v1675 = vmul.f32 %v1664, 1.442695
      %v1676 = vpow.pop %v1675
      %v1677 = vmul.f32 %v1665, 1.442695
      %v1678 = vpow.pop %v1677
      %v1679 = vmul.f32 %v1666, 1.442695
      %v1680 = vpow.pop %v1679
      %v1681 = vmul.f32 %v1667, 1.442695
      %v1682 = vpow.pop %v1681
      %v1683 = vmul.f32 %v1668, 1.442695
      %v1684 = vpow.pop %v1683
      %v1685 = vsel %vm1197, %v1670, 0.0
      %1686 = vadd.xlane.f32.xlu0 %v1685
      %v1687 = vpop.xlane.xlu0 %1686
      %v1688 = vsel %vm1197, %v1672, 0.0
      %1689 = vadd.xlane.f32.xlu0 %v1688
      %v1690 = vpop.xlane.xlu0 %1689
      %v1691 = vsel %vm1197, %v1674, 0.0
      %1692 = vadd.xlane.f32.xlu0 %v1691
      %v1693 = vpop.xlane.xlu0 %1692
      %v1694 = vsel %vm1197, %v1676, 0.0
      %1695 = vadd.xlane.f32.xlu0 %v1694
      %v1696 = vpop.xlane.xlu0 %1695
      %v1697 = vsel %vm1197, %v1678, 0.0
      %1698 = vadd.xlane.f32.xlu0 %v1697
      %v1699 = vpop.xlane.xlu0 %1698
      %v1700 = vsel %vm1197, %v1680, 0.0
      %1701 = vadd.xlane.f32.xlu0 %v1700
      %v1702 = vpop.xlane.xlu0 %1701
      %v1703 = vsel %vm1197, %v1682, 0.0
      %1704 = vadd.xlane.f32.xlu0 %v1703
      %v1705 = vpop.xlane.xlu0 %1704
      %v1706 = vsel %vm1197, %v1684, 0.0
      %1707 = vadd.xlane.f32.xlu0 %v1706
      %v1708 = vpop.xlane.xlu0 %1707
      %v1709 = vrcp.pop %v1687
      %v1710 = vrcp.pop %v1690
      %v1711 = vrcp.pop %v1693
      %v1712 = vrcp.pop %v1696
      %v1713 = vrcp.pop %v1699
      %v1714 = vrcp.pop %v1702
      %v1715 = vrcp.pop %v1705
      %v1716 = vrcp.pop %v1708
      %v1717 = vmul.f32 %v1670, %v1709
      %v1718 = vmul.f32 %v1672, %v1710
      %v1719 = vmul.f32 %v1674, %v1711
      %v1720 = vmul.f32 %v1676, %v1712
      %v1721 = vmul.f32 %v1678, %v1713
      %v1722 = vmul.f32 %v1680, %v1714
      %v1723 = vmul.f32 %v1682, %v1715
      %v1724 = vmul.f32 %v1684, %v1716
      %1725 = vrot.lane.b32.xlu0 %v1461, 64
      %v1726 = vpop.permute.xlu0 %1725
      %1727 = vrot.lane.b32.xlu0 %v1464, 64
      %v1728 = vpop.permute.xlu0 %1727
      %v1732 = vsel %vm1197, %v1717, 0
      %v1735 = vsel %vm1197, %v1718, 0
      %1737 = vmatpush.msra.mxu0 0.0
      %1738 = vmatpush.msra.mxu0 0.0
      %1739 = vmatpush.msra.mxu0 0.0
      %1740 = vmatpush.msra.mxu0 0.0
      %1741 = vmatpush.msra.mxu0 0.0
      %1742 = vmatpush.msra.mxu0 0.0
      %1743 = vmatpush.msra.mxu0 0.0
      %1744 = vmatpush.msra.mxu0 0.0
      %1745 = vmatpush.msra.mxu0 0.0
      %1746 = vmatpush.msra.mxu0 0.0
      %1747 = vmatpush.msra.mxu0 0.0
      %1748 = vmatpush.msra.mxu0 0.0
      %1749 = vmatpush.msra.mxu0 0.0
      %1750 = vmatpush.msra.mxu0 0.0
      %1751 = vmatpush.msra.mxu0 %v1728
      %1752 = vmatpush.msra.mxu0 %v1726
      %1753 = vmatmul.f32.gmra.mxu0 %v1732
      %v1754 = vpop.f32.mrf.mxu0
      %v1755 = vadd.f32 0.0, %v1754
      %1756 = vmatmul.f32.gmra.mxu0 %v1735
      %v1757 = vpop.f32.mrf.mxu0
      %v1758 = vadd.f32 0.0, %v1757
      %1759 = vdwg.mxu0
      %1760 = vrot.lane.b32.xlu0 %v1485, 64
      %v1761 = vpop.permute.xlu0 %1760
      %1762 = vrot.lane.b32.xlu0 %v1487, 64
      %v1763 = vpop.permute.xlu0 %1762
      %v1767 = vsel %vm1197, %v1719, 0
      %v1770 = vsel %vm1197, %v1720, 0
      %1772 = vmatpush.msra.mxu0 0.0
      %1773 = vmatpush.msra.mxu0 0.0
      %1774 = vmatpush.msra.mxu0 0.0
      %1775 = vmatpush.msra.mxu0 0.0
      %1776 = vmatpush.msra.mxu0 0.0
      %1777 = vmatpush.msra.mxu0 0.0
      %1778 = vmatpush.msra.mxu0 0.0
      %1779 = vmatpush.msra.mxu0 0.0
      %1780 = vmatpush.msra.mxu0 0.0
      %1781 = vmatpush.msra.mxu0 0.0
      %1782 = vmatpush.msra.mxu0 0.0
      %1783 = vmatpush.msra.mxu0 0.0
      %1784 = vmatpush.msra.mxu0 0.0
      %1785 = vmatpush.msra.mxu0 0.0
      %1786 = vmatpush.msra.mxu0 %v1763
      %1787 = vmatpush.msra.mxu0 %v1761
      %1788 = vmatmul.f32.gmra.mxu0 %v1767
      %v1789 = vpop.f32.mrf.mxu0
      %v1790 = vadd.f32 0.0, %v1789
      %1791 = vmatmul.f32.gmra.mxu0 %v1770
      %v1792 = vpop.f32.mrf.mxu0
      %v1793 = vadd.f32 0.0, %v1792
      %1794 = vdwg.mxu0
      %1795 = vrot.lane.b32.xlu0 %v1489, 64
      %v1796 = vpop.permute.xlu0 %1795
      %1797 = vrot.lane.b32.xlu0 %v1491, 64
      %v1798 = vpop.permute.xlu0 %1797
      %v1802 = vsel %vm1197, %v1721, 0
      %v1805 = vsel %vm1197, %v1722, 0
      %1807 = vmatpush.msra.mxu0 0.0
      %1808 = vmatpush.msra.mxu0 0.0
      %1809 = vmatpush.msra.mxu0 0.0
      %1810 = vmatpush.msra.mxu0 0.0
      %1811 = vmatpush.msra.mxu0 0.0
      %1812 = vmatpush.msra.mxu0 0.0
      %1813 = vmatpush.msra.mxu0 0.0
      %1814 = vmatpush.msra.mxu0 0.0
      %1815 = vmatpush.msra.mxu0 0.0
      %1816 = vmatpush.msra.mxu0 0.0
      %1817 = vmatpush.msra.mxu0 0.0
      %1818 = vmatpush.msra.mxu0 0.0
      %1819 = vmatpush.msra.mxu0 0.0
      %1820 = vmatpush.msra.mxu0 0.0
      %1821 = vmatpush.msra.mxu0 %v1798
      %1822 = vmatpush.msra.mxu0 %v1796
      %1823 = vmatmul.f32.gmra.mxu0 %v1802
      %v1824 = vpop.f32.mrf.mxu0
      %v1825 = vadd.f32 0.0, %v1824
      %1826 = vmatmul.f32.gmra.mxu0 %v1805
      %v1827 = vpop.f32.mrf.mxu0
      %v1828 = vadd.f32 0.0, %v1827
      %1829 = vdwg.mxu0
      %1830 = vrot.lane.b32.xlu0 %v1493, 64
      %v1831 = vpop.permute.xlu0 %1830
      %1832 = vrot.lane.b32.xlu0 %v1495, 64
      %v1833 = vpop.permute.xlu0 %1832
      %v1837 = vsel %vm1197, %v1723, 0
      %v1840 = vsel %vm1197, %v1724, 0
      %1842 = vmatpush.msra.mxu0 0.0
      %1843 = vmatpush.msra.mxu0 0.0
      %1844 = vmatpush.msra.mxu0 0.0
      %1845 = vmatpush.msra.mxu0 0.0
      %1846 = vmatpush.msra.mxu0 0.0
      %1847 = vmatpush.msra.mxu0 0.0
      %1848 = vmatpush.msra.mxu0 0.0
      %1849 = vmatpush.msra.mxu0 0.0
      %1850 = vmatpush.msra.mxu0 0.0
      %1851 = vmatpush.msra.mxu0 0.0
      %1852 = vmatpush.msra.mxu0 0.0
      %1853 = vmatpush.msra.mxu0 0.0
      %1854 = vmatpush.msra.mxu0 0.0
      %1855 = vmatpush.msra.mxu0 0.0
      %1856 = vmatpush.msra.mxu0 %v1833
      %1857 = vmatpush.msra.mxu0 %v1831
      %1858 = vmatmul.f32.gmra.mxu0 %v1837
      %v1859 = vpop.f32.mrf.mxu0
      %v1860 = vadd.f32 0.0, %v1859
      %1861 = vmatmul.f32.gmra.mxu0 %v1840
      %v1862 = vpop.f32.mrf.mxu0
      %v1863 = vadd.f32 0.0, %v1862
      %1864 = vdwg.mxu0
      %1867 = vrot.lane.b32.xlu0 %v1790, 8
      %v1868 = vpop.permute.xlu0 %1867
      %1869 = vrot.lane.b32.xlu0 %v1793, 8
      %v1870 = vpop.permute.xlu0 %1869
      %1875 = vrot.lane.b32.xlu0 %v1825, 16
      %v1876 = vpop.permute.xlu0 %1875
      %1877 = vrot.lane.b32.xlu0 %v1828, 16
      %v1878 = vpop.permute.xlu0 %1877
      %1883 = vrot.lane.b32.xlu0 %v1860, 24
      %v1884 = vpop.permute.xlu0 %1883
      %1885 = vrot.lane.b32.xlu0 %v1863, 24
      %v1886 = vpop.permute.xlu0 %1885
      %v1889 = vsel %vm1500, %v1755, %v1868
      %v1890 = vsel %vm1500, %v1758, %v1870
      %v1891 = vsel %vm1197, %v1889, %v1876
      %v1892 = vsel %vm1197, %v1890, %v1878
      %vm1893 = vcmask 195584
      %v1894 = vsel %vm1893, %v1891, %v1884
      %v1895 = vsel %vm1893, %v1892, %v1886
      %v1897 = vsel %vm1370, %v1894, 0
      %v1900 = vsel %vm1370, %v1895, 0
      %1902 = vmatpush.msra.mxu0 0.0
      %1903 = vmatpush.msra.mxu0 0.0
      %1904 = vmatpush.msra.mxu0 0.0
      %1905 = vmatpush.msra.mxu0 0.0
      %1906 = vmatpush.msra.mxu0 0.0
      %1907 = vmatpush.msra.mxu0 0.0
      %1908 = vmatpush.msra.mxu0 0.0
      %1909 = vmatpush.msra.mxu0 0.0
      %1910 = vmatpush.msra.mxu0 0.0
      %1911 = vmatpush.msra.mxu0 0.0
      %1912 = vmatpush.msra.mxu0 0.0
      %1913 = vmatpush.msra.mxu0 0.0
      %1914 = vmatpush.msra.mxu0 %v1354
      %1915 = vmatpush.msra.mxu0 %v1353
      %1916 = vmatpush.msra.mxu0 %v1352
      %1917 = vmatpush.msra.mxu0 %v1351
      %1918 = vmatmul.f32.gmra.mxu0 %v1897
      %v1919 = vpop.f32.mrf.mxu0
      %v1920 = vadd.f32 0.0, %v1919
      %1921 = vmatmul.f32.gmra.mxu0 %v1900
      %v1922 = vpop.f32.mrf.mxu0
      %v1923 = vadd.f32 0.0, %v1922
      %1924 = vdwg.mxu0
      %v1925 = vadd.f32 %v1339, %v1920
      %v1926 = vadd.f32 %v1342, %v1923
      %v1928 = vperm.slane %v1355, 0
      %v1930 = vadd.f32 %v1925, %v1928
      %v1931 = vadd.f32 %v1926, %v1928
      %v1932 = vsel %vm1370, %v1930, 0.0
      %1933 = vadd.xlane.f32.xlu0 %v1932
      %v1934 = vpop.xlane.xlu0 %1933
      %v1935 = vsel %vm1370, %v1931, 0.0
      %1936 = vadd.xlane.f32.xlu0 %v1935
      %v1937 = vpop.xlane.xlu0 %1936
      %v1938 = vmul.f32 %v1934, %v1383
      %v1939 = vmul.f32 %v1937, %v1383
      %v1940 = vsub.f32 %v1930, %v1938
      %v1941 = vsub.f32 %v1931, %v1939
      %v1942 = vmul.f32 %v1940, %v1940
      %v1943 = vmul.f32 %v1941, %v1941
      %v1944 = vsel %vm1370, %v1942, 0.0
      %1945 = vadd.xlane.f32.xlu0 %v1944
      %v1946 = vpop.xlane.xlu0 %1945
      %v1947 = vsel %vm1370, %v1943, 0.0
      %1948 = vadd.xlane.f32.xlu0 %v1947
      %v1949 = vpop.xlane.xlu0 %1948
      %v1950 = vmul.f32 %v1946, 0.032258064
      %v1951 = vmul.f32 %v1949, 0.032258064
      %v1952 = vrsqrt.pop %v1950
      %v1953 = vmul.f32 %v1952, %v1950
      %v1954 = vmul.f32 %v1953, %v1952
      %v1955 = vmul.f32 0.5, %v1954
      %v1956 = vsub.f32 1.5, %v1955
      %v1957 = vmul.f32 %v1952, %v1956
      %v1958 = vmul.f32 %v1950, %v1957
      %vm1959 = vcmp.eq.f32.partialorder %v1950, inf
      %v1960 = vsel %vm1959, %v1950, %v1958
      %vm1961 = vcmp.eq.f32.partialorder %v1950, 0.0
      %v1962 = vand.u32 %v1950, 2147483648
      %v1963 = vsel %vm1961, %v1962, %v1960
      %v1964 = vrsqrt.pop %v1951
      %v1965 = vmul.f32 %v1964, %v1951
      %v1966 = vmul.f32 %v1965, %v1964
      %v1967 = vmul.f32 0.5, %v1966
      %v1968 = vsub.f32 1.5, %v1967
      %v1969 = vmul.f32 %v1964, %v1968
      %v1970 = vmul.f32 %v1951, %v1969
      %vm1971 = vcmp.eq.f32.partialorder %v1951, inf
      %v1972 = vsel %vm1971, %v1951, %v1970
      %vm1973 = vcmp.eq.f32.partialorder %v1951, 0.0
      %v1974 = vand.u32 %v1951, 2147483648
      %v1975 = vsel %vm1973, %v1974, %v1972
      %v1976 = vadd.f32 %v1963, 1e-06
      %v1977 = vadd.f32 %v1975, 1e-06
      %v1978 = vrcp.pop %v1976
      %v1979 = vrcp.pop %v1977
      %v1980 = vperm.slane %v1344, 1
      %v1981 = vmul.f32 %v1980, %v1940
      %v1982 = vmul.f32 %v1980, %v1941
      %v1983 = vmul.f32 %v1981, %v1978
      %v1984 = vmul.f32 %v1982, %v1979
      %v1985 = vperm.slane %v1345, 1
      %v1986 = vadd.f32 %v1983, %v1985
      %v1987 = vadd.f32 %v1984, %v1985
      %v1989 = vsel %vm1197, %v1191, 0
      %v1992 = vsel %vm1197, %v1192, 0
      %1994 = vmatpush.msra.mxu0 0.0
      %1995 = vmatpush.msra.mxu0 0.0
      %1996 = vmatpush.msra.mxu0 0.0
      %1997 = vmatpush.msra.mxu0 0.0
      %1998 = vmatpush.msra.mxu0 0.0
      %1999 = vmatpush.msra.mxu0 0.0
      %2000 = vmatpush.msra.mxu0 0.0
      %2001 = vmatpush.msra.mxu0 0.0
      %2002 = vmatpush.msra.mxu0 0.0
      %2003 = vmatpush.msra.mxu0 0.0
      %2004 = vmatpush.msra.mxu0 0.0
      %2005 = vmatpush.msra.mxu0 0.0
      %2006 = vmatpush.msra.mxu0 0.0
      %2007 = vmatpush.msra.mxu0 0.0
      %2008 = vmatpush.msra.mxu0 %v1987
      %2009 = vmatpush.msra.mxu0 %v1986
      %2010 = vmatmul.f32.gmra.mxu0 %v1989
      %v2011 = vpop.f32.mrf.mxu0
      %v2012 = vadd.f32 0.0, %v2011
      %2013 = vmatmul.f32.gmra.mxu0 %v1992
      %v2014 = vpop.f32.mrf.mxu0
      %v2015 = vadd.f32 0.0, %v2014
      %2016 = vdwg.mxu0
      %v2018 = vperm.slane %v1360, 0
      %v2021 = vsel %vm1370, %v2012, 0
      %v2024 = vsel %vm1370, %v2015, 0
      %2026 = vmatpush.msra.mxu0 0.0
      %2027 = vmatpush.msra.mxu0 0.0
      %2028 = vmatpush.msra.mxu0 0.0
      %2029 = vmatpush.msra.mxu0 0.0
      %2030 = vmatpush.msra.mxu0 0.0
      %2031 = vmatpush.msra.mxu0 0.0
      %2032 = vmatpush.msra.mxu0 0.0
      %2033 = vmatpush.msra.mxu0 0.0
      %2034 = vmatpush.msra.mxu0 0.0
      %2035 = vmatpush.msra.mxu0 0.0
      %2036 = vmatpush.msra.mxu0 0.0
      %2037 = vmatpush.msra.mxu0 0.0
      %2038 = vmatpush.msra.mxu0 %v1359
      %2039 = vmatpush.msra.mxu0 %v1358
      %2040 = vmatpush.msra.mxu0 %v1357
      %2041 = vmatpush.msra.mxu0 %v1356
      %2042 = vmatmul.f32.gmra.mxu0 %v2021
      %v2043 = vpop.f32.mrf.mxu0
      %v2044 = vadd.f32 %v2018, %v2043
      %2045 = vmatmul.f32.gmra.mxu0 %v2024
      %v2046 = vpop.f32.mrf.mxu0
      %v2047 = vadd.f32 %v2018, %v2046
      %2048 = vdwg.mxu0
      %v2049 = vmax.f32 %v2044, 0.0
      %v2050 = vmax.f32 %v2047, 0.0
      %2051 = vmatpush.msra.mxu0 0.0
      %2052 = vmatpush.msra.mxu0 0.0
      %2053 = vmatpush.msra.mxu0 0.0
      %2054 = vmatpush.msra.mxu0 0.0
      %2055 = vmatpush.msra.mxu0 0.0
      %2056 = vmatpush.msra.mxu0 0.0
      %2057 = vmatpush.msra.mxu0 0.0
      %2058 = vmatpush.msra.mxu0 0.0
      %2059 = vmatpush.msra.mxu0 0.0
      %2060 = vmatpush.msra.mxu0 0.0
      %2061 = vmatpush.msra.mxu0 0.0
      %2062 = vmatpush.msra.mxu0 0.0
      %2063 = vmatpush.msra.mxu0 0.0
      %2064 = vmatpush.msra.mxu0 0.0
      %2065 = vmatpush.msra.mxu0 %v2050
      %2066 = vmatpush.msra.mxu0 %v2049
      %2067 = vmatmul.f32.gmra.mxu0 %v1989
      %v2068 = vpop.f32.mrf.mxu0
      %v2069 = vadd.f32 0.0, %v2068
      %2070 = vmatmul.f32.gmra.mxu0 %v1992
      %v2071 = vpop.f32.mrf.mxu0
      %v2072 = vadd.f32 0.0, %v2071
      %2073 = vdwg.mxu0
      %v2075 = vperm.slane %v1369, 0
      %vm2077 = vcmask 523264
      %v2079 = vsel %vm2077, %v2069, 0
      %v2082 = vsel %vm2077, %v2072, 0
      %2084 = vmatpush.msra.mxu0 0.0
      %2085 = vmatpush.msra.mxu0 0.0
      %2086 = vmatpush.msra.mxu0 0.0
      %2087 = vmatpush.msra.mxu0 0.0
      %2088 = vmatpush.msra.mxu0 0.0
      %2089 = vmatpush.msra.mxu0 0.0
      %2090 = vmatpush.msra.mxu0 0.0
      %2091 = vmatpush.msra.mxu0 0.0
      %2092 = vmatpush.msra.mxu0 %v1368
      %2093 = vmatpush.msra.mxu0 %v1367
      %2094 = vmatpush.msra.mxu0 %v1366
      %2095 = vmatpush.msra.mxu0 %v1365
      %2096 = vmatpush.msra.mxu0 %v1364
      %2097 = vmatpush.msra.mxu0 %v1363
      %2098 = vmatpush.msra.mxu0 %v1362
      %2099 = vmatpush.msra.mxu0 %v1361
      %2100 = vmatmul.f32.gmra.mxu0 %v2079
      %v2101 = vpop.f32.mrf.mxu0
      %v2102 = vadd.f32 %v2075, %v2101
      %2103 = vmatmul.f32.gmra.mxu0 %v2082
      %v2104 = vpop.f32.mrf.mxu0
      %v2105 = vadd.f32 %v2075, %v2104
      %2106 = vdwg.mxu0
      %v2107 = vadd.f32 %v1930, %v2102
      %v2108 = vadd.f32 %v1931, %v2105
      %s2109 = scalar_lea.vmem %s13, 2
      %v2110 = vld [vmem:[%s2109] sm:$0x3]
      %s2111 = scalar_lea.vmem %s15, 2
      %v2112 = vld [vmem:[%s2111] sm:$0x3]
      %s2113 = scalar_lea.vmem %s17, 32
      %v2114 = vld [vmem:[%s2113] sm:$0xff]
      %v2115 = vld [vmem:[%s2113 + $0x8] sm:$0xff]
      %v2116 = vld [vmem:[%s2113 + $0x10] sm:$0xff]
      %v2117 = vld [vmem:[%s2113 + $0x18] sm:$0xff]
      %s2118 = scalar_lea.vmem %s19, 1
      %v2119 = vld [vmem:[%s2118] sm:$0x1]
      %s2120 = scalar_lea.vmem %s21, 32
      %v2121 = vld [vmem:[%s2120] sm:$0xff]
      %v2122 = vld [vmem:[%s2120 + $0x8] sm:$0xff]
      %v2123 = vld [vmem:[%s2120 + $0x10] sm:$0xff]
      %v2124 = vld [vmem:[%s2120 + $0x18] sm:$0xff]
      %s2125 = scalar_lea.vmem %s23, 1
      %v2126 = vld [vmem:[%s2125] sm:$0x1]
      %s2127 = scalar_lea.vmem %s25, 32
      %v2128 = vld [vmem:[%s2127] sm:$0xff]
      %v2129 = vld [vmem:[%s2127 + $0x8] sm:$0xff]
      %v2130 = vld [vmem:[%s2127 + $0x10] sm:$0xff]
      %v2131 = vld [vmem:[%s2127 + $0x18] sm:$0xff]
      %s2132 = scalar_lea.vmem %s27, 1
      %v2133 = vld [vmem:[%s2132] sm:$0x1]
      %s2134 = scalar_lea.vmem %s29, 64
      %v2135 = vld [vmem:[%s2134] sm:$0xff]
      %v2136 = vld [vmem:[%s2134 + $0x8] sm:$0xff]
      %v2137 = vld [vmem:[%s2134 + $0x10] sm:$0xff]
      %v2138 = vld [vmem:[%s2134 + $0x18] sm:$0xff]
      %v2139 = vld [vmem:[%s2134 + $0x20] sm:$0xff]
      %v2140 = vld [vmem:[%s2134 + $0x28] sm:$0xff]
      %v2141 = vld [vmem:[%s2134 + $0x30] sm:$0xff]
      %v2142 = vld [vmem:[%s2134 + $0x38] sm:$0xff]
      %s2143 = scalar_lea.vmem %s31, 1
      %v2144 = vld [vmem:[%s2143] sm:$0x1]
      %v2145 = vsel %vm1370, %v2107, 0.0
      %2146 = vadd.xlane.f32.xlu0 %v2145
      %v2147 = vpop.xlane.xlu0 %2146
      %v2148 = vsel %vm1370, %v2108, 0.0
      %2149 = vadd.xlane.f32.xlu0 %v2148
      %v2150 = vpop.xlane.xlu0 %2149
      %v2151 = vmul.f32 %v2147, %v1383
      %v2152 = vmul.f32 %v2150, %v1383
      %v2153 = vsub.f32 %v2107, %v2151
      %v2154 = vsub.f32 %v2108, %v2152
      %v2155 = vmul.f32 %v2153, %v2153
      %v2156 = vmul.f32 %v2154, %v2154
      %v2157 = vsel %vm1370, %v2155, 0.0
      %2158 = vadd.xlane.f32.xlu0 %v2157
      %v2159 = vpop.xlane.xlu0 %2158
      %v2160 = vsel %vm1370, %v2156, 0.0
      %2161 = vadd.xlane.f32.xlu0 %v2160
      %v2162 = vpop.xlane.xlu0 %2161
      %v2163 = vmul.f32 %v2159, 0.032258064
      %v2164 = vmul.f32 %v2162, 0.032258064
      %v2165 = vrsqrt.pop %v2163
      %v2166 = vmul.f32 %v2165, %v2163
      %v2167 = vmul.f32 %v2166, %v2165
      %v2168 = vmul.f32 0.5, %v2167
      %v2169 = vsub.f32 1.5, %v2168
      %v2170 = vmul.f32 %v2165, %v2169
      %v2171 = vmul.f32 %v2163, %v2170
      %vm2172 = vcmp.eq.f32.partialorder %v2163, inf
      %v2173 = vsel %vm2172, %v2163, %v2171
      %vm2174 = vcmp.eq.f32.partialorder %v2163, 0.0
      %v2175 = vand.u32 %v2163, 2147483648
      %v2176 = vsel %vm2174, %v2175, %v2173
      %v2177 = vrsqrt.pop %v2164
      %v2178 = vmul.f32 %v2177, %v2164
      %v2179 = vmul.f32 %v2178, %v2177
      %v2180 = vmul.f32 0.5, %v2179
      %v2181 = vsub.f32 1.5, %v2180
      %v2182 = vmul.f32 %v2177, %v2181
      %v2183 = vmul.f32 %v2164, %v2182
      %vm2184 = vcmp.eq.f32.partialorder %v2164, inf
      %v2185 = vsel %vm2184, %v2164, %v2183
      %vm2186 = vcmp.eq.f32.partialorder %v2164, 0.0
      %v2187 = vand.u32 %v2164, 2147483648
      %v2188 = vsel %vm2186, %v2187, %v2185
      %v2189 = vadd.f32 %v2176, 1e-06
      %v2190 = vadd.f32 %v2188, 1e-06
      %v2191 = vrcp.pop %v2189
      %v2192 = vrcp.pop %v2190
      %v2193 = vperm.slane %v2110, 0
      %v2194 = vmul.f32 %v2193, %v2153
      %v2195 = vmul.f32 %v2193, %v2154
      %v2196 = vmul.f32 %v2194, %v2191
      %v2197 = vmul.f32 %v2195, %v2192
      %v2198 = vperm.slane %v2112, 0
      %v2199 = vadd.f32 %v2196, %v2198
      %v2200 = vadd.f32 %v2197, %v2198
      %v2202 = vperm.slane %v2119, 0
      %v2205 = vsel %vm1370, %v2199, 0
      %v2208 = vsel %vm1370, %v2200, 0
      %2210 = vmatpush.msra.mxu0 0.0
      %2211 = vmatpush.msra.mxu0 0.0
      %2212 = vmatpush.msra.mxu0 0.0
      %2213 = vmatpush.msra.mxu0 0.0
      %2214 = vmatpush.msra.mxu0 0.0
      %2215 = vmatpush.msra.mxu0 0.0
      %2216 = vmatpush.msra.mxu0 0.0
      %2217 = vmatpush.msra.mxu0 0.0
      %2218 = vmatpush.msra.mxu0 0.0
      %2219 = vmatpush.msra.mxu0 0.0
      %2220 = vmatpush.msra.mxu0 0.0
      %2221 = vmatpush.msra.mxu0 0.0
      %2222 = vmatpush.msra.mxu0 %v2117
      %2223 = vmatpush.msra.mxu0 %v2116
      %2224 = vmatpush.msra.mxu0 %v2115
      %2225 = vmatpush.msra.mxu0 %v2114
      %2226 = vmatmul.f32.gmra.mxu0 %v2205
      %v2227 = vpop.f32.mrf.mxu0
      %v2228 = vadd.f32 %v2202, %v2227
      %2229 = vmatmul.f32.gmra.mxu0 %v2208
      %v2230 = vpop.f32.mrf.mxu0
      %v2231 = vadd.f32 %v2202, %v2230
      %2232 = vdwg.mxu0
      %v2233 = vmul.f32 %v2228, 0.35355338
      %v2234 = vmul.f32 %v2231, 0.35355338
      %2237 = vrot.lane.b32.xlu0 %v2233, 120
      %v2238 = vpop.permute.xlu0 %2237
      %2239 = vrot.lane.b32.xlu0 %v2234, 120
      %v2240 = vpop.permute.xlu0 %2239
      %2241 = vrot.lane.b32.xlu0 %v2233, 112
      %v2242 = vpop.permute.xlu0 %2241
      %2243 = vrot.lane.b32.xlu0 %v2234, 112
      %v2244 = vpop.permute.xlu0 %2243
      %2245 = vrot.lane.b32.xlu0 %v2233, 104
      %v2246 = vpop.permute.xlu0 %2245
      %2247 = vrot.lane.b32.xlu0 %v2234, 104
      %v2248 = vpop.permute.xlu0 %2247
      %2251 = vrot.lane.b32.xlu0 %v2228, 120
      %v2252 = vpop.permute.xlu0 %2251
      %2253 = vrot.lane.b32.xlu0 %v2231, 120
      %v2254 = vpop.permute.xlu0 %2253
      %2255 = vrot.lane.b32.xlu0 %v2228, 112
      %v2256 = vpop.permute.xlu0 %2255
      %2257 = vrot.lane.b32.xlu0 %v2231, 112
      %v2258 = vpop.permute.xlu0 %2257
      %2259 = vrot.lane.b32.xlu0 %v2228, 104
      %v2260 = vpop.permute.xlu0 %2259
      %2261 = vrot.lane.b32.xlu0 %v2231, 104
      %v2262 = vpop.permute.xlu0 %2261
      %2263 = vrot.lane.b32.xlu0 %v2228, 96
      %v2264 = vpop.permute.xlu0 %2263
      %2265 = vrot.lane.b32.xlu0 %v2231, 96
      %v2266 = vpop.permute.xlu0 %2265
      %v2267 = vsel %vm1500, %v2233, 0
      %v2269 = vsel %vm1500, %v2234, 0
      %v2271 = vsel %vm1500, %v2264, 0
      %v2273 = vsel %vm1500, %v2266, 0
      %2275 = vmatpush.xpose.msra.mxu0 0.0
      %2276 = vmatpush.xpose.msra.mxu0 0.0
      %2277 = vmatpush.xpose.msra.mxu0 0.0
      %2278 = vmatpush.xpose.msra.mxu0 0.0
      %2279 = vmatpush.xpose.msra.mxu0 0.0
      %2280 = vmatpush.xpose.msra.mxu0 0.0
      %2281 = vmatpush.xpose.msra.mxu0 0.0
      %2282 = vmatpush.xpose.msra.mxu0 0.0
      %2283 = vmatpush.xpose.msra.mxu0 0.0
      %2284 = vmatpush.xpose.msra.mxu0 0.0
      %2285 = vmatpush.xpose.msra.mxu0 0.0
      %2286 = vmatpush.xpose.msra.mxu0 0.0
      %2287 = vmatpush.xpose.msra.mxu0 0.0
      %2288 = vmatpush.xpose.msra.mxu0 0.0
      %2289 = vmatpush.xpose.msra.mxu0 %v2273
      %2290 = vmatpush.xpose.msra.mxu0 %v2271
      %2291 = vmatmul.f32.gmra.mxu0 %v2267
      %v2292 = vpop.f32.mrf.mxu0
      %v2293 = vadd.f32 0.0, %v2292
      %2294 = vmatmul.f32.gmra.mxu0 %v2269
      %v2295 = vpop.f32.mrf.mxu0
      %v2296 = vadd.f32 0.0, %v2295
      %2297 = vdwg.mxu0
      %2298 = vrot.lane.b32.xlu0 %v2252, 96
      %v2299 = vpop.permute.xlu0 %2298
      %2300 = vrot.lane.b32.xlu0 %v2254, 96
      %v2301 = vpop.permute.xlu0 %2300
      %v2302 = vsel %vm1500, %v2238, 0
      %v2304 = vsel %vm1500, %v2240, 0
      %v2306 = vsel %vm1500, %v2299, 0
      %v2308 = vsel %vm1500, %v2301, 0
      %2310 = vmatpush.xpose.msra.mxu0 0.0
      %2311 = vmatpush.xpose.msra.mxu0 0.0
      %2312 = vmatpush.xpose.msra.mxu0 0.0
      %2313 = vmatpush.xpose.msra.mxu0 0.0
      %2314 = vmatpush.xpose.msra.mxu0 0.0
      %2315 = vmatpush.xpose.msra.mxu0 0.0
      %2316 = vmatpush.xpose.msra.mxu0 0.0
      %2317 = vmatpush.xpose.msra.mxu0 0.0
      %2318 = vmatpush.xpose.msra.mxu0 0.0
      %2319 = vmatpush.xpose.msra.mxu0 0.0
      %2320 = vmatpush.xpose.msra.mxu0 0.0
      %2321 = vmatpush.xpose.msra.mxu0 0.0
      %2322 = vmatpush.xpose.msra.mxu0 0.0
      %2323 = vmatpush.xpose.msra.mxu0 0.0
      %2324 = vmatpush.xpose.msra.mxu0 %v2308
      %2325 = vmatpush.xpose.msra.mxu0 %v2306
      %2326 = vmatmul.f32.gmra.mxu0 %v2302
      %v2327 = vpop.f32.mrf.mxu0
      %v2328 = vadd.f32 0.0, %v2327
      %2329 = vmatmul.f32.gmra.mxu0 %v2304
      %v2330 = vpop.f32.mrf.mxu0
      %v2331 = vadd.f32 0.0, %v2330
      %2332 = vdwg.mxu0
      %2333 = vrot.lane.b32.xlu0 %v2256, 96
      %v2334 = vpop.permute.xlu0 %2333
      %2335 = vrot.lane.b32.xlu0 %v2258, 96
      %v2336 = vpop.permute.xlu0 %2335
      %v2337 = vsel %vm1500, %v2242, 0
      %v2339 = vsel %vm1500, %v2244, 0
      %v2341 = vsel %vm1500, %v2334, 0
      %v2343 = vsel %vm1500, %v2336, 0
      %2345 = vmatpush.xpose.msra.mxu0 0.0
      %2346 = vmatpush.xpose.msra.mxu0 0.0
      %2347 = vmatpush.xpose.msra.mxu0 0.0
      %2348 = vmatpush.xpose.msra.mxu0 0.0
      %2349 = vmatpush.xpose.msra.mxu0 0.0
      %2350 = vmatpush.xpose.msra.mxu0 0.0
      %2351 = vmatpush.xpose.msra.mxu0 0.0
      %2352 = vmatpush.xpose.msra.mxu0 0.0
      %2353 = vmatpush.xpose.msra.mxu0 0.0
      %2354 = vmatpush.xpose.msra.mxu0 0.0
      %2355 = vmatpush.xpose.msra.mxu0 0.0
      %2356 = vmatpush.xpose.msra.mxu0 0.0
      %2357 = vmatpush.xpose.msra.mxu0 0.0
      %2358 = vmatpush.xpose.msra.mxu0 0.0
      %2359 = vmatpush.xpose.msra.mxu0 %v2343
      %2360 = vmatpush.xpose.msra.mxu0 %v2341
      %2361 = vmatmul.f32.gmra.mxu0 %v2337
      %v2362 = vpop.f32.mrf.mxu0
      %v2363 = vadd.f32 0.0, %v2362
      %2364 = vmatmul.f32.gmra.mxu0 %v2339
      %v2365 = vpop.f32.mrf.mxu0
      %v2366 = vadd.f32 0.0, %v2365
      %2367 = vdwg.mxu0
      %2368 = vrot.lane.b32.xlu0 %v2260, 96
      %v2369 = vpop.permute.xlu0 %2368
      %2370 = vrot.lane.b32.xlu0 %v2262, 96
      %v2371 = vpop.permute.xlu0 %2370
      %v2372 = vsel %vm1500, %v2246, 0
      %v2374 = vsel %vm1500, %v2248, 0
      %v2376 = vsel %vm1500, %v2369, 0
      %v2378 = vsel %vm1500, %v2371, 0
      %2380 = vmatpush.xpose.msra.mxu0 0.0
      %2381 = vmatpush.xpose.msra.mxu0 0.0
      %2382 = vmatpush.xpose.msra.mxu0 0.0
      %2383 = vmatpush.xpose.msra.mxu0 0.0
      %2384 = vmatpush.xpose.msra.mxu0 0.0
      %2385 = vmatpush.xpose.msra.mxu0 0.0
      %2386 = vmatpush.xpose.msra.mxu0 0.0
      %2387 = vmatpush.xpose.msra.mxu0 0.0
      %2388 = vmatpush.xpose.msra.mxu0 0.0
      %2389 = vmatpush.xpose.msra.mxu0 0.0
      %2390 = vmatpush.xpose.msra.mxu0 0.0
      %2391 = vmatpush.xpose.msra.mxu0 0.0
      %2392 = vmatpush.xpose.msra.mxu0 0.0
      %2393 = vmatpush.xpose.msra.mxu0 0.0
      %2394 = vmatpush.xpose.msra.mxu0 %v2378
      %2395 = vmatpush.xpose.msra.mxu0 %v2376
      %2396 = vmatmul.f32.gmra.mxu0 %v2372
      %v2397 = vpop.f32.mrf.mxu0
      %v2398 = vadd.f32 0.0, %v2397
      %2399 = vmatmul.f32.gmra.mxu0 %v2374
      %v2400 = vpop.f32.mrf.mxu0
      %v2401 = vadd.f32 0.0, %v2400
      %2402 = vdwg.mxu0
      %v2403 = vsel %vm1197, %v2293, -inf
      %2404 = vmax.xlane.f32.xlu0 %v2403
      %v2405 = vpop.xlane.xlu0 %2404
      %v2406 = vsel %vm1197, %v2296, -inf
      %2407 = vmax.xlane.f32.xlu0 %v2406
      %v2408 = vpop.xlane.xlu0 %2407
      %v2409 = vsel %vm1197, %v2328, -inf
      %2410 = vmax.xlane.f32.xlu0 %v2409
      %v2411 = vpop.xlane.xlu0 %2410
      %v2412 = vsel %vm1197, %v2331, -inf
      %2413 = vmax.xlane.f32.xlu0 %v2412
      %v2414 = vpop.xlane.xlu0 %2413
      %v2415 = vsel %vm1197, %v2363, -inf
      %2416 = vmax.xlane.f32.xlu0 %v2415
      %v2417 = vpop.xlane.xlu0 %2416
      %v2418 = vsel %vm1197, %v2366, -inf
      %2419 = vmax.xlane.f32.xlu0 %v2418
      %v2420 = vpop.xlane.xlu0 %2419
      %v2421 = vsel %vm1197, %v2398, -inf
      %2422 = vmax.xlane.f32.xlu0 %v2421
      %v2423 = vpop.xlane.xlu0 %2422
      %v2424 = vsel %vm1197, %v2401, -inf
      %2425 = vmax.xlane.f32.xlu0 %v2424
      %v2426 = vpop.xlane.xlu0 %2425
      %v2427 = vsub.f32 %v2293, %v2405
      %v2428 = vsub.f32 %v2296, %v2408
      %v2429 = vsub.f32 %v2328, %v2411
      %v2430 = vsub.f32 %v2331, %v2414
      %v2431 = vsub.f32 %v2363, %v2417
      %v2432 = vsub.f32 %v2366, %v2420
      %v2433 = vsub.f32 %v2398, %v2423
      %v2434 = vsub.f32 %v2401, %v2426
      %v2435 = vmul.f32 %v2427, 1.442695
      %v2436 = vpow.pop %v2435
      %v2437 = vmul.f32 %v2428, 1.442695
      %v2438 = vpow.pop %v2437
      %v2439 = vmul.f32 %v2429, 1.442695
      %v2440 = vpow.pop %v2439
      %v2441 = vmul.f32 %v2430, 1.442695
      %v2442 = vpow.pop %v2441
      %v2443 = vmul.f32 %v2431, 1.442695
      %v2444 = vpow.pop %v2443
      %v2445 = vmul.f32 %v2432, 1.442695
      %v2446 = vpow.pop %v2445
      %v2447 = vmul.f32 %v2433, 1.442695
      %v2448 = vpow.pop %v2447
      %v2449 = vmul.f32 %v2434, 1.442695
      %v2450 = vpow.pop %v2449
      %v2451 = vsel %vm1197, %v2436, 0.0
      %2452 = vadd.xlane.f32.xlu0 %v2451
      %v2453 = vpop.xlane.xlu0 %2452
      %v2454 = vsel %vm1197, %v2438, 0.0
      %2455 = vadd.xlane.f32.xlu0 %v2454
      %v2456 = vpop.xlane.xlu0 %2455
      %v2457 = vsel %vm1197, %v2440, 0.0
      %2458 = vadd.xlane.f32.xlu0 %v2457
      %v2459 = vpop.xlane.xlu0 %2458
      %v2460 = vsel %vm1197, %v2442, 0.0
      %2461 = vadd.xlane.f32.xlu0 %v2460
      %v2462 = vpop.xlane.xlu0 %2461
      %v2463 = vsel %vm1197, %v2444, 0.0
      %2464 = vadd.xlane.f32.xlu0 %v2463
      %v2465 = vpop.xlane.xlu0 %2464
      %v2466 = vsel %vm1197, %v2446, 0.0
      %2467 = vadd.xlane.f32.xlu0 %v2466
      %v2468 = vpop.xlane.xlu0 %2467
      %v2469 = vsel %vm1197, %v2448, 0.0
      %2470 = vadd.xlane.f32.xlu0 %v2469
      %v2471 = vpop.xlane.xlu0 %2470
      %v2472 = vsel %vm1197, %v2450, 0.0
      %2473 = vadd.xlane.f32.xlu0 %v2472
      %v2474 = vpop.xlane.xlu0 %2473
      %v2475 = vrcp.pop %v2453
      %v2476 = vrcp.pop %v2456
      %v2477 = vrcp.pop %v2459
      %v2478 = vrcp.pop %v2462
      %v2479 = vrcp.pop %v2465
      %v2480 = vrcp.pop %v2468
      %v2481 = vrcp.pop %v2471
      %v2482 = vrcp.pop %v2474
      %v2483 = vmul.f32 %v2436, %v2475
      %v2484 = vmul.f32 %v2438, %v2476
      %v2485 = vmul.f32 %v2440, %v2477
      %v2486 = vmul.f32 %v2442, %v2478
      %v2487 = vmul.f32 %v2444, %v2479
      %v2488 = vmul.f32 %v2446, %v2480
      %v2489 = vmul.f32 %v2448, %v2481
      %v2490 = vmul.f32 %v2450, %v2482
      %2491 = vrot.lane.b32.xlu0 %v2228, 64
      %v2492 = vpop.permute.xlu0 %2491
      %2493 = vrot.lane.b32.xlu0 %v2231, 64
      %v2494 = vpop.permute.xlu0 %2493
      %v2498 = vsel %vm1197, %v2483, 0
      %v2501 = vsel %vm1197, %v2484, 0
      %2503 = vmatpush.msra.mxu0 0.0
      %2504 = vmatpush.msra.mxu0 0.0
      %2505 = vmatpush.msra.mxu0 0.0
      %2506 = vmatpush.msra.mxu0 0.0
      %2507 = vmatpush.msra.mxu0 0.0
      %2508 = vmatpush.msra.mxu0 0.0
      %2509 = vmatpush.msra.mxu0 0.0
      %2510 = vmatpush.msra.mxu0 0.0
      %2511 = vmatpush.msra.mxu0 0.0
      %2512 = vmatpush.msra.mxu0 0.0
      %2513 = vmatpush.msra.mxu0 0.0
      %2514 = vmatpush.msra.mxu0 0.0
      %2515 = vmatpush.msra.mxu0 0.0
      %2516 = vmatpush.msra.mxu0 0.0
      %2517 = vmatpush.msra.mxu0 %v2494
      %2518 = vmatpush.msra.mxu0 %v2492
      %2519 = vmatmul.f32.gmra.mxu0 %v2498
      %v2520 = vpop.f32.mrf.mxu0
      %v2521 = vadd.f32 0.0, %v2520
      %2522 = vmatmul.f32.gmra.mxu0 %v2501
      %v2523 = vpop.f32.mrf.mxu0
      %v2524 = vadd.f32 0.0, %v2523
      %2525 = vdwg.mxu0
      %2526 = vrot.lane.b32.xlu0 %v2252, 64
      %v2527 = vpop.permute.xlu0 %2526
      %2528 = vrot.lane.b32.xlu0 %v2254, 64
      %v2529 = vpop.permute.xlu0 %2528
      %v2533 = vsel %vm1197, %v2485, 0
      %v2536 = vsel %vm1197, %v2486, 0
      %2538 = vmatpush.msra.mxu0 0.0
      %2539 = vmatpush.msra.mxu0 0.0
      %2540 = vmatpush.msra.mxu0 0.0
      %2541 = vmatpush.msra.mxu0 0.0
      %2542 = vmatpush.msra.mxu0 0.0
      %2543 = vmatpush.msra.mxu0 0.0
      %2544 = vmatpush.msra.mxu0 0.0
      %2545 = vmatpush.msra.mxu0 0.0
      %2546 = vmatpush.msra.mxu0 0.0
      %2547 = vmatpush.msra.mxu0 0.0
      %2548 = vmatpush.msra.mxu0 0.0
      %2549 = vmatpush.msra.mxu0 0.0
      %2550 = vmatpush.msra.mxu0 0.0
      %2551 = vmatpush.msra.mxu0 0.0
      %2552 = vmatpush.msra.mxu0 %v2529
      %2553 = vmatpush.msra.mxu0 %v2527
      %2554 = vmatmul.f32.gmra.mxu0 %v2533
      %v2555 = vpop.f32.mrf.mxu0
      %v2556 = vadd.f32 0.0, %v2555
      %2557 = vmatmul.f32.gmra.mxu0 %v2536
      %v2558 = vpop.f32.mrf.mxu0
      %v2559 = vadd.f32 0.0, %v2558
      %2560 = vdwg.mxu0
      %2561 = vrot.lane.b32.xlu0 %v2256, 64
      %v2562 = vpop.permute.xlu0 %2561
      %2563 = vrot.lane.b32.xlu0 %v2258, 64
      %v2564 = vpop.permute.xlu0 %2563
      %v2568 = vsel %vm1197, %v2487, 0
      %v2571 = vsel %vm1197, %v2488, 0
      %2573 = vmatpush.msra.mxu0 0.0
      %2574 = vmatpush.msra.mxu0 0.0
      %2575 = vmatpush.msra.mxu0 0.0
      %2576 = vmatpush.msra.mxu0 0.0
      %2577 = vmatpush.msra.mxu0 0.0
      %2578 = vmatpush.msra.mxu0 0.0
      %2579 = vmatpush.msra.mxu0 0.0
      %2580 = vmatpush.msra.mxu0 0.0
      %2581 = vmatpush.msra.mxu0 0.0
      %2582 = vmatpush.msra.mxu0 0.0
      %2583 = vmatpush.msra.mxu0 0.0
      %2584 = vmatpush.msra.mxu0 0.0
      %2585 = vmatpush.msra.mxu0 0.0
      %2586 = vmatpush.msra.mxu0 0.0
      %2587 = vmatpush.msra.mxu0 %v2564
      %2588 = vmatpush.msra.mxu0 %v2562
      %2589 = vmatmul.f32.gmra.mxu0 %v2568
      %v2590 = vpop.f32.mrf.mxu0
      %v2591 = vadd.f32 0.0, %v2590
      %2592 = vmatmul.f32.gmra.mxu0 %v2571
      %v2593 = vpop.f32.mrf.mxu0
      %v2594 = vadd.f32 0.0, %v2593
      %2595 = vdwg.mxu0
      %2596 = vrot.lane.b32.xlu0 %v2260, 64
      %v2597 = vpop.permute.xlu0 %2596
      %2598 = vrot.lane.b32.xlu0 %v2262, 64
      %v2599 = vpop.permute.xlu0 %2598
      %v2603 = vsel %vm1197, %v2489, 0
      %v2606 = vsel %vm1197, %v2490, 0
      %2608 = vmatpush.msra.mxu0 0.0
      %2609 = vmatpush.msra.mxu0 0.0
      %2610 = vmatpush.msra.mxu0 0.0
      %2611 = vmatpush.msra.mxu0 0.0
      %2612 = vmatpush.msra.mxu0 0.0
      %2613 = vmatpush.msra.mxu0 0.0
      %2614 = vmatpush.msra.mxu0 0.0
      %2615 = vmatpush.msra.mxu0 0.0
      %2616 = vmatpush.msra.mxu0 0.0
      %2617 = vmatpush.msra.mxu0 0.0
      %2618 = vmatpush.msra.mxu0 0.0
      %2619 = vmatpush.msra.mxu0 0.0
      %2620 = vmatpush.msra.mxu0 0.0
      %2621 = vmatpush.msra.mxu0 0.0
      %2622 = vmatpush.msra.mxu0 %v2599
      %2623 = vmatpush.msra.mxu0 %v2597
      %2624 = vmatmul.f32.gmra.mxu0 %v2603
      %v2625 = vpop.f32.mrf.mxu0
      %v2626 = vadd.f32 0.0, %v2625
      %2627 = vmatmul.f32.gmra.mxu0 %v2606
      %v2628 = vpop.f32.mrf.mxu0
      %v2629 = vadd.f32 0.0, %v2628
      %2630 = vdwg.mxu0
      %2633 = vrot.lane.b32.xlu0 %v2556, 8
      %v2634 = vpop.permute.xlu0 %2633
      %2635 = vrot.lane.b32.xlu0 %v2559, 8
      %v2636 = vpop.permute.xlu0 %2635
      %2641 = vrot.lane.b32.xlu0 %v2591, 16
      %v2642 = vpop.permute.xlu0 %2641
      %2643 = vrot.lane.b32.xlu0 %v2594, 16
      %v2644 = vpop.permute.xlu0 %2643
      %2649 = vrot.lane.b32.xlu0 %v2626, 24
      %v2650 = vpop.permute.xlu0 %2649
      %2651 = vrot.lane.b32.xlu0 %v2629, 24
      %v2652 = vpop.permute.xlu0 %2651
      %v2655 = vsel %vm1500, %v2521, %v2634
      %v2656 = vsel %vm1500, %v2524, %v2636
      %v2657 = vsel %vm1197, %v2655, %v2642
      %v2658 = vsel %vm1197, %v2656, %v2644
      %v2659 = vsel %vm1893, %v2657, %v2650
      %v2660 = vsel %vm1893, %v2658, %v2652
      %v2662 = vsel %vm1370, %v2659, 0
      %v2665 = vsel %vm1370, %v2660, 0
      %2667 = vmatpush.msra.mxu0 0.0
      %2668 = vmatpush.msra.mxu0 0.0
      %2669 = vmatpush.msra.mxu0 0.0
      %2670 = vmatpush.msra.mxu0 0.0
      %2671 = vmatpush.msra.mxu0 0.0
      %2672 = vmatpush.msra.mxu0 0.0
      %2673 = vmatpush.msra.mxu0 0.0
      %2674 = vmatpush.msra.mxu0 0.0
      %2675 = vmatpush.msra.mxu0 0.0
      %2676 = vmatpush.msra.mxu0 0.0
      %2677 = vmatpush.msra.mxu0 0.0
      %2678 = vmatpush.msra.mxu0 0.0
      %2679 = vmatpush.msra.mxu0 %v2124
      %2680 = vmatpush.msra.mxu0 %v2123
      %2681 = vmatpush.msra.mxu0 %v2122
      %2682 = vmatpush.msra.mxu0 %v2121
      %2683 = vmatmul.f32.gmra.mxu0 %v2662
      %v2684 = vpop.f32.mrf.mxu0
      %v2685 = vadd.f32 0.0, %v2684
      %2686 = vmatmul.f32.gmra.mxu0 %v2665
      %v2687 = vpop.f32.mrf.mxu0
      %v2688 = vadd.f32 0.0, %v2687
      %2689 = vdwg.mxu0
      %v2690 = vadd.f32 %v2107, %v2685
      %v2691 = vadd.f32 %v2108, %v2688
      %v2693 = vperm.slane %v2126, 0
      %v2695 = vadd.f32 %v2690, %v2693
      %v2696 = vadd.f32 %v2691, %v2693
      %v2697 = vsel %vm1370, %v2695, 0.0
      %2698 = vadd.xlane.f32.xlu0 %v2697
      %v2699 = vpop.xlane.xlu0 %2698
      %v2700 = vsel %vm1370, %v2696, 0.0
      %2701 = vadd.xlane.f32.xlu0 %v2700
      %v2702 = vpop.xlane.xlu0 %2701
      %v2703 = vmul.f32 %v2699, %v1383
      %v2704 = vmul.f32 %v2702, %v1383
      %v2705 = vsub.f32 %v2695, %v2703
      %v2706 = vsub.f32 %v2696, %v2704
      %v2707 = vmul.f32 %v2705, %v2705
      %v2708 = vmul.f32 %v2706, %v2706
      %v2709 = vsel %vm1370, %v2707, 0.0
      %2710 = vadd.xlane.f32.xlu0 %v2709
      %v2711 = vpop.xlane.xlu0 %2710
      %v2712 = vsel %vm1370, %v2708, 0.0
      %2713 = vadd.xlane.f32.xlu0 %v2712
      %v2714 = vpop.xlane.xlu0 %2713
      %v2715 = vmul.f32 %v2711, 0.032258064
      %v2716 = vmul.f32 %v2714, 0.032258064
      %v2717 = vrsqrt.pop %v2715
      %v2718 = vmul.f32 %v2717, %v2715
      %v2719 = vmul.f32 %v2718, %v2717
      %v2720 = vmul.f32 0.5, %v2719
      %v2721 = vsub.f32 1.5, %v2720
      %v2722 = vmul.f32 %v2717, %v2721
      %v2723 = vmul.f32 %v2715, %v2722
      %vm2724 = vcmp.eq.f32.partialorder %v2715, inf
      %v2725 = vsel %vm2724, %v2715, %v2723
      %vm2726 = vcmp.eq.f32.partialorder %v2715, 0.0
      %v2727 = vand.u32 %v2715, 2147483648
      %v2728 = vsel %vm2726, %v2727, %v2725
      %v2729 = vrsqrt.pop %v2716
      %v2730 = vmul.f32 %v2729, %v2716
      %v2731 = vmul.f32 %v2730, %v2729
      %v2732 = vmul.f32 0.5, %v2731
      %v2733 = vsub.f32 1.5, %v2732
      %v2734 = vmul.f32 %v2729, %v2733
      %v2735 = vmul.f32 %v2716, %v2734
      %vm2736 = vcmp.eq.f32.partialorder %v2716, inf
      %v2737 = vsel %vm2736, %v2716, %v2735
      %vm2738 = vcmp.eq.f32.partialorder %v2716, 0.0
      %v2739 = vand.u32 %v2716, 2147483648
      %v2740 = vsel %vm2738, %v2739, %v2737
      %v2741 = vadd.f32 %v2728, 1e-06
      %v2742 = vadd.f32 %v2740, 1e-06
      %v2743 = vrcp.pop %v2741
      %v2744 = vrcp.pop %v2742
      %v2745 = vperm.slane %v2110, 1
      %v2746 = vmul.f32 %v2745, %v2705
      %v2747 = vmul.f32 %v2745, %v2706
      %v2748 = vmul.f32 %v2746, %v2743
      %v2749 = vmul.f32 %v2747, %v2744
      %v2750 = vperm.slane %v2112, 1
      %v2751 = vadd.f32 %v2748, %v2750
      %v2752 = vadd.f32 %v2749, %v2750
      %2753 = vmatpush.msra.mxu0 0.0
      %2754 = vmatpush.msra.mxu0 0.0
      %2755 = vmatpush.msra.mxu0 0.0
      %2756 = vmatpush.msra.mxu0 0.0
      %2757 = vmatpush.msra.mxu0 0.0
      %2758 = vmatpush.msra.mxu0 0.0
      %2759 = vmatpush.msra.mxu0 0.0
      %2760 = vmatpush.msra.mxu0 0.0
      %2761 = vmatpush.msra.mxu0 0.0
      %2762 = vmatpush.msra.mxu0 0.0
      %2763 = vmatpush.msra.mxu0 0.0
      %2764 = vmatpush.msra.mxu0 0.0
      %2765 = vmatpush.msra.mxu0 0.0
      %2766 = vmatpush.msra.mxu0 0.0
      %2767 = vmatpush.msra.mxu0 %v2752
      %2768 = vmatpush.msra.mxu0 %v2751
      %2769 = vmatmul.f32.gmra.mxu0 %v1989
      %v2770 = vpop.f32.mrf.mxu0
      %v2771 = vadd.f32 0.0, %v2770
      %2772 = vmatmul.f32.gmra.mxu0 %v1992
      %v2773 = vpop.f32.mrf.mxu0
      %v2774 = vadd.f32 0.0, %v2773
      %2775 = vdwg.mxu0
      %v2777 = vperm.slane %v2133, 0
      %v2780 = vsel %vm1370, %v2771, 0
      %v2783 = vsel %vm1370, %v2774, 0
      %2785 = vmatpush.msra.mxu0 0.0
      %2786 = vmatpush.msra.mxu0 0.0
      %2787 = vmatpush.msra.mxu0 0.0
      %2788 = vmatpush.msra.mxu0 0.0
      %2789 = vmatpush.msra.mxu0 0.0
      %2790 = vmatpush.msra.mxu0 0.0
      %2791 = vmatpush.msra.mxu0 0.0
      %2792 = vmatpush.msra.mxu0 0.0
      %2793 = vmatpush.msra.mxu0 0.0
      %2794 = vmatpush.msra.mxu0 0.0
      %2795 = vmatpush.msra.mxu0 0.0
      %2796 = vmatpush.msra.mxu0 0.0
      %2797 = vmatpush.msra.mxu0 %v2131
      %2798 = vmatpush.msra.mxu0 %v2130
      %2799 = vmatpush.msra.mxu0 %v2129
      %2800 = vmatpush.msra.mxu0 %v2128
      %2801 = vmatmul.f32.gmra.mxu0 %v2780
      %v2802 = vpop.f32.mrf.mxu0
      %v2803 = vadd.f32 %v2777, %v2802
      %2804 = vmatmul.f32.gmra.mxu0 %v2783
      %v2805 = vpop.f32.mrf.mxu0
      %v2806 = vadd.f32 %v2777, %v2805
      %2807 = vdwg.mxu0
      %v2808 = vmax.f32 %v2803, 0.0
      %v2809 = vmax.f32 %v2806, 0.0
      %2810 = vmatpush.msra.mxu0 0.0
      %2811 = vmatpush.msra.mxu0 0.0
      %2812 = vmatpush.msra.mxu0 0.0
      %2813 = vmatpush.msra.mxu0 0.0
      %2814 = vmatpush.msra.mxu0 0.0
      %2815 = vmatpush.msra.mxu0 0.0
      %2816 = vmatpush.msra.mxu0 0.0
      %2817 = vmatpush.msra.mxu0 0.0
      %2818 = vmatpush.msra.mxu0 0.0
      %2819 = vmatpush.msra.mxu0 0.0
      %2820 = vmatpush.msra.mxu0 0.0
      %2821 = vmatpush.msra.mxu0 0.0
      %2822 = vmatpush.msra.mxu0 0.0
      %2823 = vmatpush.msra.mxu0 0.0
      %2824 = vmatpush.msra.mxu0 %v2809
      %2825 = vmatpush.msra.mxu0 %v2808
      %2826 = vmatmul.f32.gmra.mxu0 %v1989
      %v2827 = vpop.f32.mrf.mxu0
      %v2828 = vadd.f32 0.0, %v2827
      %2829 = vmatmul.f32.gmra.mxu0 %v1992
      %v2830 = vpop.f32.mrf.mxu0
      %v2831 = vadd.f32 0.0, %v2830
      %2832 = vdwg.mxu0
      %v2834 = vperm.slane %v2144, 0
      %v2837 = vsel %vm2077, %v2828, 0
      %v2840 = vsel %vm2077, %v2831, 0
      %2842 = vmatpush.msra.mxu0 0.0
      %2843 = vmatpush.msra.mxu0 0.0
      %2844 = vmatpush.msra.mxu0 0.0
      %2845 = vmatpush.msra.mxu0 0.0
      %2846 = vmatpush.msra.mxu0 0.0
      %2847 = vmatpush.msra.mxu0 0.0
      %2848 = vmatpush.msra.mxu0 0.0
      %2849 = vmatpush.msra.mxu0 0.0
      %2850 = vmatpush.msra.mxu0 %v2142
      %2851 = vmatpush.msra.mxu0 %v2141
      %2852 = vmatpush.msra.mxu0 %v2140
      %2853 = vmatpush.msra.mxu0 %v2139
      %2854 = vmatpush.msra.mxu0 %v2138
      %2855 = vmatpush.msra.mxu0 %v2137
      %2856 = vmatpush.msra.mxu0 %v2136
      %2857 = vmatpush.msra.mxu0 %v2135
      %2858 = vmatmul.f32.gmra.mxu0 %v2837
      %v2859 = vpop.f32.mrf.mxu0
      %v2860 = vadd.f32 %v2834, %v2859
      %2861 = vmatmul.f32.gmra.mxu0 %v2840
      %v2862 = vpop.f32.mrf.mxu0
      %v2863 = vadd.f32 %v2834, %v2862
      %2864 = vdwg.mxu0
      %v2865 = vadd.f32 %v2695, %v2860
      %v2866 = vadd.f32 %v2696, %v2863
      %s2867 = scalar_lea.vmem %s13, 4
      %v2868 = vld [vmem:[%s2867] sm:$0x3]
      %s2869 = scalar_lea.vmem %s15, 4
      %v2870 = vld [vmem:[%s2869] sm:$0x3]
      %s2871 = scalar_lea.vmem %s17, 64
      %v2872 = vld [vmem:[%s2871] sm:$0xff]
      %v2873 = vld [vmem:[%s2871 + $0x8] sm:$0xff]
      %v2874 = vld [vmem:[%s2871 + $0x10] sm:$0xff]
      %v2875 = vld [vmem:[%s2871 + $0x18] sm:$0xff]
      %s2876 = scalar_lea.vmem %s19, 2
      %v2877 = vld [vmem:[%s2876] sm:$0x1]
      %s2878 = scalar_lea.vmem %s21, 64
      %v2879 = vld [vmem:[%s2878] sm:$0xff]
      %v2880 = vld [vmem:[%s2878 + $0x8] sm:$0xff]
      %v2881 = vld [vmem:[%s2878 + $0x10] sm:$0xff]
      %v2882 = vld [vmem:[%s2878 + $0x18] sm:$0xff]
      %s2883 = scalar_lea.vmem %s23, 2
      %v2884 = vld [vmem:[%s2883] sm:$0x1]
      %s2885 = scalar_lea.vmem %s25, 64
      %v2886 = vld [vmem:[%s2885] sm:$0xff]
      %v2887 = vld [vmem:[%s2885 + $0x8] sm:$0xff]
      %v2888 = vld [vmem:[%s2885 + $0x10] sm:$0xff]
      %v2889 = vld [vmem:[%s2885 + $0x18] sm:$0xff]
      %s2890 = scalar_lea.vmem %s27, 2
      %v2891 = vld [vmem:[%s2890] sm:$0x1]
      %s2892 = scalar_lea.vmem %s29, 128
      %v2893 = vld [vmem:[%s2892] sm:$0xff]
      %v2894 = vld [vmem:[%s2892 + $0x8] sm:$0xff]
      %v2895 = vld [vmem:[%s2892 + $0x10] sm:$0xff]
      %v2896 = vld [vmem:[%s2892 + $0x18] sm:$0xff]
      %v2897 = vld [vmem:[%s2892 + $0x20] sm:$0xff]
      %v2898 = vld [vmem:[%s2892 + $0x28] sm:$0xff]
      %v2899 = vld [vmem:[%s2892 + $0x30] sm:$0xff]
      %v2900 = vld [vmem:[%s2892 + $0x38] sm:$0xff]
      %s2901 = scalar_lea.vmem %s31, 2
      %v2902 = vld [vmem:[%s2901] sm:$0x1]
      %v2903 = vsel %vm1370, %v2865, 0.0
      %2904 = vadd.xlane.f32.xlu0 %v2903
      %v2905 = vpop.xlane.xlu0 %2904
      %v2906 = vsel %vm1370, %v2866, 0.0
      %2907 = vadd.xlane.f32.xlu0 %v2906
      %v2908 = vpop.xlane.xlu0 %2907
      %v2909 = vmul.f32 %v2905, %v1383
      %v2910 = vmul.f32 %v2908, %v1383
      %v2911 = vsub.f32 %v2865, %v2909
      %v2912 = vsub.f32 %v2866, %v2910
      %v2913 = vmul.f32 %v2911, %v2911
      %v2914 = vmul.f32 %v2912, %v2912
      %v2915 = vsel %vm1370, %v2913, 0.0
      %2916 = vadd.xlane.f32.xlu0 %v2915
      %v2917 = vpop.xlane.xlu0 %2916
      %v2918 = vsel %vm1370, %v2914, 0.0
      %2919 = vadd.xlane.f32.xlu0 %v2918
      %v2920 = vpop.xlane.xlu0 %2919
      %v2921 = vmul.f32 %v2917, 0.032258064
      %v2922 = vmul.f32 %v2920, 0.032258064
      %v2923 = vrsqrt.pop %v2921
      %v2924 = vmul.f32 %v2923, %v2921
      %v2925 = vmul.f32 %v2924, %v2923
      %v2926 = vmul.f32 0.5, %v2925
      %v2927 = vsub.f32 1.5, %v2926
      %v2928 = vmul.f32 %v2923, %v2927
      %v2929 = vmul.f32 %v2921, %v2928
      %vm2930 = vcmp.eq.f32.partialorder %v2921, inf
      %v2931 = vsel %vm2930, %v2921, %v2929
      %vm2932 = vcmp.eq.f32.partialorder %v2921, 0.0
      %v2933 = vand.u32 %v2921, 2147483648
      %v2934 = vsel %vm2932, %v2933, %v2931
      %v2935 = vrsqrt.pop %v2922
      %v2936 = vmul.f32 %v2935, %v2922
      %v2937 = vmul.f32 %v2936, %v2935
      %v2938 = vmul.f32 0.5, %v2937
      %v2939 = vsub.f32 1.5, %v2938
      %v2940 = vmul.f32 %v2935, %v2939
      %v2941 = vmul.f32 %v2922, %v2940
      %vm2942 = vcmp.eq.f32.partialorder %v2922, inf
      %v2943 = vsel %vm2942, %v2922, %v2941
      %vm2944 = vcmp.eq.f32.partialorder %v2922, 0.0
      %v2945 = vand.u32 %v2922, 2147483648
      %v2946 = vsel %vm2944, %v2945, %v2943
      %v2947 = vadd.f32 %v2934, 1e-06
      %v2948 = vadd.f32 %v2946, 1e-06
      %v2949 = vrcp.pop %v2947
      %v2950 = vrcp.pop %v2948
      %v2951 = vperm.slane %v2868, 0
      %v2952 = vmul.f32 %v2951, %v2911
      %v2953 = vmul.f32 %v2951, %v2912
      %v2954 = vmul.f32 %v2952, %v2949
      %v2955 = vmul.f32 %v2953, %v2950
      %v2956 = vperm.slane %v2870, 0
      %v2957 = vadd.f32 %v2954, %v2956
      %v2958 = vadd.f32 %v2955, %v2956
      %v2960 = vperm.slane %v2877, 0
      %v2963 = vsel %vm1370, %v2957, 0
      %v2966 = vsel %vm1370, %v2958, 0
      %2968 = vmatpush.msra.mxu0 0.0
      %2969 = vmatpush.msra.mxu0 0.0
      %2970 = vmatpush.msra.mxu0 0.0
      %2971 = vmatpush.msra.mxu0 0.0
      %2972 = vmatpush.msra.mxu0 0.0
      %2973 = vmatpush.msra.mxu0 0.0
      %2974 = vmatpush.msra.mxu0 0.0
      %2975 = vmatpush.msra.mxu0 0.0
      %2976 = vmatpush.msra.mxu0 0.0
      %2977 = vmatpush.msra.mxu0 0.0
      %2978 = vmatpush.msra.mxu0 0.0
      %2979 = vmatpush.msra.mxu0 0.0
      %2980 = vmatpush.msra.mxu0 %v2875
      %2981 = vmatpush.msra.mxu0 %v2874
      %2982 = vmatpush.msra.mxu0 %v2873
      %2983 = vmatpush.msra.mxu0 %v2872
      %2984 = vmatmul.f32.gmra.mxu0 %v2963
      %v2985 = vpop.f32.mrf.mxu0
      %v2986 = vadd.f32 %v2960, %v2985
      %2987 = vmatmul.f32.gmra.mxu0 %v2966
      %v2988 = vpop.f32.mrf.mxu0
      %v2989 = vadd.f32 %v2960, %v2988
      %2990 = vdwg.mxu0
      %v2991 = vmul.f32 %v2986, 0.35355338
      %v2992 = vmul.f32 %v2989, 0.35355338
      %2995 = vrot.lane.b32.xlu0 %v2991, 120
      %v2996 = vpop.permute.xlu0 %2995
      %2997 = vrot.lane.b32.xlu0 %v2992, 120
      %v2998 = vpop.permute.xlu0 %2997
      %2999 = vrot.lane.b32.xlu0 %v2991, 112
      %v3000 = vpop.permute.xlu0 %2999
      %3001 = vrot.lane.b32.xlu0 %v2992, 112
      %v3002 = vpop.permute.xlu0 %3001
      %3003 = vrot.lane.b32.xlu0 %v2991, 104
      %v3004 = vpop.permute.xlu0 %3003
      %3005 = vrot.lane.b32.xlu0 %v2992, 104
      %v3006 = vpop.permute.xlu0 %3005
      %3009 = vrot.lane.b32.xlu0 %v2986, 120
      %v3010 = vpop.permute.xlu0 %3009
      %3011 = vrot.lane.b32.xlu0 %v2989, 120
      %v3012 = vpop.permute.xlu0 %3011
      %3013 = vrot.lane.b32.xlu0 %v2986, 112
      %v3014 = vpop.permute.xlu0 %3013
      %3015 = vrot.lane.b32.xlu0 %v2989, 112
      %v3016 = vpop.permute.xlu0 %3015
      %3017 = vrot.lane.b32.xlu0 %v2986, 104
      %v3018 = vpop.permute.xlu0 %3017
      %3019 = vrot.lane.b32.xlu0 %v2989, 104
      %v3020 = vpop.permute.xlu0 %3019
      %3021 = vrot.lane.b32.xlu0 %v2986, 96
      %v3022 = vpop.permute.xlu0 %3021
      %3023 = vrot.lane.b32.xlu0 %v2989, 96
      %v3024 = vpop.permute.xlu0 %3023
      %v3025 = vsel %vm1500, %v2991, 0
      %v3027 = vsel %vm1500, %v2992, 0
      %v3029 = vsel %vm1500, %v3022, 0
      %v3031 = vsel %vm1500, %v3024, 0
      %3033 = vmatpush.xpose.msra.mxu0 0.0
      %3034 = vmatpush.xpose.msra.mxu0 0.0
      %3035 = vmatpush.xpose.msra.mxu0 0.0
      %3036 = vmatpush.xpose.msra.mxu0 0.0
      %3037 = vmatpush.xpose.msra.mxu0 0.0
      %3038 = vmatpush.xpose.msra.mxu0 0.0
      %3039 = vmatpush.xpose.msra.mxu0 0.0
      %3040 = vmatpush.xpose.msra.mxu0 0.0
      %3041 = vmatpush.xpose.msra.mxu0 0.0
      %3042 = vmatpush.xpose.msra.mxu0 0.0
      %3043 = vmatpush.xpose.msra.mxu0 0.0
      %3044 = vmatpush.xpose.msra.mxu0 0.0
      %3045 = vmatpush.xpose.msra.mxu0 0.0
      %3046 = vmatpush.xpose.msra.mxu0 0.0
      %3047 = vmatpush.xpose.msra.mxu0 %v3031
      %3048 = vmatpush.xpose.msra.mxu0 %v3029
      %3049 = vmatmul.f32.gmra.mxu0 %v3025
      %v3050 = vpop.f32.mrf.mxu0
      %v3051 = vadd.f32 0.0, %v3050
      %3052 = vmatmul.f32.gmra.mxu0 %v3027
      %v3053 = vpop.f32.mrf.mxu0
      %v3054 = vadd.f32 0.0, %v3053
      %3055 = vdwg.mxu0
      %3056 = vrot.lane.b32.xlu0 %v3010, 96
      %v3057 = vpop.permute.xlu0 %3056
      %3058 = vrot.lane.b32.xlu0 %v3012, 96
      %v3059 = vpop.permute.xlu0 %3058
      %v3060 = vsel %vm1500, %v2996, 0
      %v3062 = vsel %vm1500, %v2998, 0
      %v3064 = vsel %vm1500, %v3057, 0
      %v3066 = vsel %vm1500, %v3059, 0
      %3068 = vmatpush.xpose.msra.mxu0 0.0
      %3069 = vmatpush.xpose.msra.mxu0 0.0
      %3070 = vmatpush.xpose.msra.mxu0 0.0
      %3071 = vmatpush.xpose.msra.mxu0 0.0
      %3072 = vmatpush.xpose.msra.mxu0 0.0
      %3073 = vmatpush.xpose.msra.mxu0 0.0
      %3074 = vmatpush.xpose.msra.mxu0 0.0
      %3075 = vmatpush.xpose.msra.mxu0 0.0
      %3076 = vmatpush.xpose.msra.mxu0 0.0
      %3077 = vmatpush.xpose.msra.mxu0 0.0
      %3078 = vmatpush.xpose.msra.mxu0 0.0
      %3079 = vmatpush.xpose.msra.mxu0 0.0
      %3080 = vmatpush.xpose.msra.mxu0 0.0
      %3081 = vmatpush.xpose.msra.mxu0 0.0
      %3082 = vmatpush.xpose.msra.mxu0 %v3066
      %3083 = vmatpush.xpose.msra.mxu0 %v3064
      %3084 = vmatmul.f32.gmra.mxu0 %v3060
      %v3085 = vpop.f32.mrf.mxu0
      %v3086 = vadd.f32 0.0, %v3085
      %3087 = vmatmul.f32.gmra.mxu0 %v3062
      %v3088 = vpop.f32.mrf.mxu0
      %v3089 = vadd.f32 0.0, %v3088
      %3090 = vdwg.mxu0
      %3091 = vrot.lane.b32.xlu0 %v3014, 96
      %v3092 = vpop.permute.xlu0 %3091
      %3093 = vrot.lane.b32.xlu0 %v3016, 96
      %v3094 = vpop.permute.xlu0 %3093
      %v3095 = vsel %vm1500, %v3000, 0
      %v3097 = vsel %vm1500, %v3002, 0
      %v3099 = vsel %vm1500, %v3092, 0
      %v3101 = vsel %vm1500, %v3094, 0
      %3103 = vmatpush.xpose.msra.mxu0 0.0
      %3104 = vmatpush.xpose.msra.mxu0 0.0
      %3105 = vmatpush.xpose.msra.mxu0 0.0
      %3106 = vmatpush.xpose.msra.mxu0 0.0
      %3107 = vmatpush.xpose.msra.mxu0 0.0
      %3108 = vmatpush.xpose.msra.mxu0 0.0
      %3109 = vmatpush.xpose.msra.mxu0 0.0
      %3110 = vmatpush.xpose.msra.mxu0 0.0
      %3111 = vmatpush.xpose.msra.mxu0 0.0
      %3112 = vmatpush.xpose.msra.mxu0 0.0
      %3113 = vmatpush.xpose.msra.mxu0 0.0
      %3114 = vmatpush.xpose.msra.mxu0 0.0
      %3115 = vmatpush.xpose.msra.mxu0 0.0
      %3116 = vmatpush.xpose.msra.mxu0 0.0
      %3117 = vmatpush.xpose.msra.mxu0 %v3101
      %3118 = vmatpush.xpose.msra.mxu0 %v3099
      %3119 = vmatmul.f32.gmra.mxu0 %v3095
      %v3120 = vpop.f32.mrf.mxu0
      %v3121 = vadd.f32 0.0, %v3120
      %3122 = vmatmul.f32.gmra.mxu0 %v3097
      %v3123 = vpop.f32.mrf.mxu0
      %v3124 = vadd.f32 0.0, %v3123
      %3125 = vdwg.mxu0
      %3126 = vrot.lane.b32.xlu0 %v3018, 96
      %v3127 = vpop.permute.xlu0 %3126
      %3128 = vrot.lane.b32.xlu0 %v3020, 96
      %v3129 = vpop.permute.xlu0 %3128
      %v3130 = vsel %vm1500, %v3004, 0
      %v3132 = vsel %vm1500, %v3006, 0
      %v3134 = vsel %vm1500, %v3127, 0
      %v3136 = vsel %vm1500, %v3129, 0
      %3138 = vmatpush.xpose.msra.mxu0 0.0
      %3139 = vmatpush.xpose.msra.mxu0 0.0
      %3140 = vmatpush.xpose.msra.mxu0 0.0
      %3141 = vmatpush.xpose.msra.mxu0 0.0
      %3142 = vmatpush.xpose.msra.mxu0 0.0
      %3143 = vmatpush.xpose.msra.mxu0 0.0
      %3144 = vmatpush.xpose.msra.mxu0 0.0
      %3145 = vmatpush.xpose.msra.mxu0 0.0
      %3146 = vmatpush.xpose.msra.mxu0 0.0
      %3147 = vmatpush.xpose.msra.mxu0 0.0
      %3148 = vmatpush.xpose.msra.mxu0 0.0
      %3149 = vmatpush.xpose.msra.mxu0 0.0
      %3150 = vmatpush.xpose.msra.mxu0 0.0
      %3151 = vmatpush.xpose.msra.mxu0 0.0
      %3152 = vmatpush.xpose.msra.mxu0 %v3136
      %3153 = vmatpush.xpose.msra.mxu0 %v3134
      %3154 = vmatmul.f32.gmra.mxu0 %v3130
      %v3155 = vpop.f32.mrf.mxu0
      %v3156 = vadd.f32 0.0, %v3155
      %3157 = vmatmul.f32.gmra.mxu0 %v3132
      %v3158 = vpop.f32.mrf.mxu0
      %v3159 = vadd.f32 0.0, %v3158
      %3160 = vdwg.mxu0
      %v3161 = vsel %vm1197, %v3051, -inf
      %3162 = vmax.xlane.f32.xlu0 %v3161
      %v3163 = vpop.xlane.xlu0 %3162
      %v3164 = vsel %vm1197, %v3054, -inf
      %3165 = vmax.xlane.f32.xlu0 %v3164
      %v3166 = vpop.xlane.xlu0 %3165
      %v3167 = vsel %vm1197, %v3086, -inf
      %3168 = vmax.xlane.f32.xlu0 %v3167
      %v3169 = vpop.xlane.xlu0 %3168
      %v3170 = vsel %vm1197, %v3089, -inf
      %3171 = vmax.xlane.f32.xlu0 %v3170
      %v3172 = vpop.xlane.xlu0 %3171
      %v3173 = vsel %vm1197, %v3121, -inf
      %3174 = vmax.xlane.f32.xlu0 %v3173
      %v3175 = vpop.xlane.xlu0 %3174
      %v3176 = vsel %vm1197, %v3124, -inf
      %3177 = vmax.xlane.f32.xlu0 %v3176
      %v3178 = vpop.xlane.xlu0 %3177
      %v3179 = vsel %vm1197, %v3156, -inf
      %3180 = vmax.xlane.f32.xlu0 %v3179
      %v3181 = vpop.xlane.xlu0 %3180
      %v3182 = vsel %vm1197, %v3159, -inf
      %3183 = vmax.xlane.f32.xlu0 %v3182
      %v3184 = vpop.xlane.xlu0 %3183
      %v3185 = vsub.f32 %v3051, %v3163
      %v3186 = vsub.f32 %v3054, %v3166
      %v3187 = vsub.f32 %v3086, %v3169
      %v3188 = vsub.f32 %v3089, %v3172
      %v3189 = vsub.f32 %v3121, %v3175
      %v3190 = vsub.f32 %v3124, %v3178
      %v3191 = vsub.f32 %v3156, %v3181
      %v3192 = vsub.f32 %v3159, %v3184
      %v3193 = vmul.f32 %v3185, 1.442695
      %v3194 = vpow.pop %v3193
      %v3195 = vmul.f32 %v3186, 1.442695
      %v3196 = vpow.pop %v3195
      %v3197 = vmul.f32 %v3187, 1.442695
      %v3198 = vpow.pop %v3197
      %v3199 = vmul.f32 %v3188, 1.442695
      %v3200 = vpow.pop %v3199
      %v3201 = vmul.f32 %v3189, 1.442695
      %v3202 = vpow.pop %v3201
      %v3203 = vmul.f32 %v3190, 1.442695
      %v3204 = vpow.pop %v3203
      %v3205 = vmul.f32 %v3191, 1.442695
      %v3206 = vpow.pop %v3205
      %v3207 = vmul.f32 %v3192, 1.442695
      %v3208 = vpow.pop %v3207
      %v3209 = vsel %vm1197, %v3194, 0.0
      %3210 = vadd.xlane.f32.xlu0 %v3209
      %v3211 = vpop.xlane.xlu0 %3210
      %v3212 = vsel %vm1197, %v3196, 0.0
      %3213 = vadd.xlane.f32.xlu0 %v3212
      %v3214 = vpop.xlane.xlu0 %3213
      %v3215 = vsel %vm1197, %v3198, 0.0
      %3216 = vadd.xlane.f32.xlu0 %v3215
      %v3217 = vpop.xlane.xlu0 %3216
      %v3218 = vsel %vm1197, %v3200, 0.0
      %3219 = vadd.xlane.f32.xlu0 %v3218
      %v3220 = vpop.xlane.xlu0 %3219
      %v3221 = vsel %vm1197, %v3202, 0.0
      %3222 = vadd.xlane.f32.xlu0 %v3221
      %v3223 = vpop.xlane.xlu0 %3222
      %v3224 = vsel %vm1197, %v3204, 0.0
      %3225 = vadd.xlane.f32.xlu0 %v3224
      %v3226 = vpop.xlane.xlu0 %3225
      %v3227 = vsel %vm1197, %v3206, 0.0
      %3228 = vadd.xlane.f32.xlu0 %v3227
      %v3229 = vpop.xlane.xlu0 %3228
      %v3230 = vsel %vm1197, %v3208, 0.0
      %3231 = vadd.xlane.f32.xlu0 %v3230
      %v3232 = vpop.xlane.xlu0 %3231
      %v3233 = vrcp.pop %v3211
      %v3234 = vrcp.pop %v3214
      %v3235 = vrcp.pop %v3217
      %v3236 = vrcp.pop %v3220
      %v3237 = vrcp.pop %v3223
      %v3238 = vrcp.pop %v3226
      %v3239 = vrcp.pop %v3229
      %v3240 = vrcp.pop %v3232
      %v3241 = vmul.f32 %v3194, %v3233
      %v3242 = vmul.f32 %v3196, %v3234
      %v3243 = vmul.f32 %v3198, %v3235
      %v3244 = vmul.f32 %v3200, %v3236
      %v3245 = vmul.f32 %v3202, %v3237
      %v3246 = vmul.f32 %v3204, %v3238
      %v3247 = vmul.f32 %v3206, %v3239
      %v3248 = vmul.f32 %v3208, %v3240
      %3249 = vrot.lane.b32.xlu0 %v2986, 64
      %v3250 = vpop.permute.xlu0 %3249
      %3251 = vrot.lane.b32.xlu0 %v2989, 64
      %v3252 = vpop.permute.xlu0 %3251
      %v3256 = vsel %vm1197, %v3241, 0
      %v3259 = vsel %vm1197, %v3242, 0
      %3261 = vmatpush.msra.mxu0 0.0
      %3262 = vmatpush.msra.mxu0 0.0
      %3263 = vmatpush.msra.mxu0 0.0
      %3264 = vmatpush.msra.mxu0 0.0
      %3265 = vmatpush.msra.mxu0 0.0
      %3266 = vmatpush.msra.mxu0 0.0
      %3267 = vmatpush.msra.mxu0 0.0
      %3268 = vmatpush.msra.mxu0 0.0
      %3269 = vmatpush.msra.mxu0 0.0
      %3270 = vmatpush.msra.mxu0 0.0
      %3271 = vmatpush.msra.mxu0 0.0
      %3272 = vmatpush.msra.mxu0 0.0
      %3273 = vmatpush.msra.mxu0 0.0
      %3274 = vmatpush.msra.mxu0 0.0
      %3275 = vmatpush.msra.mxu0 %v3252
      %3276 = vmatpush.msra.mxu0 %v3250
      %3277 = vmatmul.f32.gmra.mxu0 %v3256
      %v3278 = vpop.f32.mrf.mxu0
      %v3279 = vadd.f32 0.0, %v3278
      %3280 = vmatmul.f32.gmra.mxu0 %v3259
      %v3281 = vpop.f32.mrf.mxu0
      %v3282 = vadd.f32 0.0, %v3281
      %3283 = vdwg.mxu0
      %3284 = vrot.lane.b32.xlu0 %v3010, 64
      %v3285 = vpop.permute.xlu0 %3284
      %3286 = vrot.lane.b32.xlu0 %v3012, 64
      %v3287 = vpop.permute.xlu0 %3286
      %v3291 = vsel %vm1197, %v3243, 0
      %v3294 = vsel %vm1197, %v3244, 0
      %3296 = vmatpush.msra.mxu0 0.0
      %3297 = vmatpush.msra.mxu0 0.0
      %3298 = vmatpush.msra.mxu0 0.0
      %3299 = vmatpush.msra.mxu0 0.0
      %3300 = vmatpush.msra.mxu0 0.0
      %3301 = vmatpush.msra.mxu0 0.0
      %3302 = vmatpush.msra.mxu0 0.0
      %3303 = vmatpush.msra.mxu0 0.0
      %3304 = vmatpush.msra.mxu0 0.0
      %3305 = vmatpush.msra.mxu0 0.0
      %3306 = vmatpush.msra.mxu0 0.0
      %3307 = vmatpush.msra.mxu0 0.0
      %3308 = vmatpush.msra.mxu0 0.0
      %3309 = vmatpush.msra.mxu0 0.0
      %3310 = vmatpush.msra.mxu0 %v3287
      %3311 = vmatpush.msra.mxu0 %v3285
      %3312 = vmatmul.f32.gmra.mxu0 %v3291
      %v3313 = vpop.f32.mrf.mxu0
      %v3314 = vadd.f32 0.0, %v3313
      %3315 = vmatmul.f32.gmra.mxu0 %v3294
      %v3316 = vpop.f32.mrf.mxu0
      %v3317 = vadd.f32 0.0, %v3316
      %3318 = vdwg.mxu0
      %3319 = vrot.lane.b32.xlu0 %v3014, 64
      %v3320 = vpop.permute.xlu0 %3319
      %3321 = vrot.lane.b32.xlu0 %v3016, 64
      %v3322 = vpop.permute.xlu0 %3321
      %v3326 = vsel %vm1197, %v3245, 0
      %v3329 = vsel %vm1197, %v3246, 0
      %3331 = vmatpush.msra.mxu0 0.0
      %3332 = vmatpush.msra.mxu0 0.0
      %3333 = vmatpush.msra.mxu0 0.0
      %3334 = vmatpush.msra.mxu0 0.0
      %3335 = vmatpush.msra.mxu0 0.0
      %3336 = vmatpush.msra.mxu0 0.0
      %3337 = vmatpush.msra.mxu0 0.0
      %3338 = vmatpush.msra.mxu0 0.0
      %3339 = vmatpush.msra.mxu0 0.0
      %3340 = vmatpush.msra.mxu0 0.0
      %3341 = vmatpush.msra.mxu0 0.0
      %3342 = vmatpush.msra.mxu0 0.0
      %3343 = vmatpush.msra.mxu0 0.0
      %3344 = vmatpush.msra.mxu0 0.0
      %3345 = vmatpush.msra.mxu0 %v3322
      %3346 = vmatpush.msra.mxu0 %v3320
      %3347 = vmatmul.f32.gmra.mxu0 %v3326
      %v3348 = vpop.f32.mrf.mxu0
      %v3349 = vadd.f32 0.0, %v3348
      %3350 = vmatmul.f32.gmra.mxu0 %v3329
      %v3351 = vpop.f32.mrf.mxu0
      %v3352 = vadd.f32 0.0, %v3351
      %3353 = vdwg.mxu0
      %3354 = vrot.lane.b32.xlu0 %v3018, 64
      %v3355 = vpop.permute.xlu0 %3354
      %3356 = vrot.lane.b32.xlu0 %v3020, 64
      %v3357 = vpop.permute.xlu0 %3356
      %v3361 = vsel %vm1197, %v3247, 0
      %v3364 = vsel %vm1197, %v3248, 0
      %3366 = vmatpush.msra.mxu0 0.0
      %3367 = vmatpush.msra.mxu0 0.0
      %3368 = vmatpush.msra.mxu0 0.0
      %3369 = vmatpush.msra.mxu0 0.0
      %3370 = vmatpush.msra.mxu0 0.0
      %3371 = vmatpush.msra.mxu0 0.0
      %3372 = vmatpush.msra.mxu0 0.0
      %3373 = vmatpush.msra.mxu0 0.0
      %3374 = vmatpush.msra.mxu0 0.0
      %3375 = vmatpush.msra.mxu0 0.0
      %3376 = vmatpush.msra.mxu0 0.0
      %3377 = vmatpush.msra.mxu0 0.0
      %3378 = vmatpush.msra.mxu0 0.0
      %3379 = vmatpush.msra.mxu0 0.0
      %3380 = vmatpush.msra.mxu0 %v3357
      %3381 = vmatpush.msra.mxu0 %v3355
      %3382 = vmatmul.f32.gmra.mxu0 %v3361
      %v3383 = vpop.f32.mrf.mxu0
      %v3384 = vadd.f32 0.0, %v3383
      %3385 = vmatmul.f32.gmra.mxu0 %v3364
      %v3386 = vpop.f32.mrf.mxu0
      %v3387 = vadd.f32 0.0, %v3386
      %3388 = vdwg.mxu0
      %3391 = vrot.lane.b32.xlu0 %v3314, 8
      %v3392 = vpop.permute.xlu0 %3391
      %3393 = vrot.lane.b32.xlu0 %v3317, 8
      %v3394 = vpop.permute.xlu0 %3393
      %3399 = vrot.lane.b32.xlu0 %v3349, 16
      %v3400 = vpop.permute.xlu0 %3399
      %3401 = vrot.lane.b32.xlu0 %v3352, 16
      %v3402 = vpop.permute.xlu0 %3401
      %3407 = vrot.lane.b32.xlu0 %v3384, 24
      %v3408 = vpop.permute.xlu0 %3407
      %3409 = vrot.lane.b32.xlu0 %v3387, 24
      %v3410 = vpop.permute.xlu0 %3409
      %v3413 = vsel %vm1500, %v3279, %v3392
      %v3414 = vsel %vm1500, %v3282, %v3394
      %v3415 = vsel %vm1197, %v3413, %v3400
      %v3416 = vsel %vm1197, %v3414, %v3402
      %v3417 = vsel %vm1893, %v3415, %v3408
      %v3418 = vsel %vm1893, %v3416, %v3410
      %v3420 = vsel %vm1370, %v3417, 0
      %v3423 = vsel %vm1370, %v3418, 0
      %3425 = vmatpush.msra.mxu0 0.0
      %3426 = vmatpush.msra.mxu0 0.0
      %3427 = vmatpush.msra.mxu0 0.0
      %3428 = vmatpush.msra.mxu0 0.0
      %3429 = vmatpush.msra.mxu0 0.0
      %3430 = vmatpush.msra.mxu0 0.0
      %3431 = vmatpush.msra.mxu0 0.0
      %3432 = vmatpush.msra.mxu0 0.0
      %3433 = vmatpush.msra.mxu0 0.0
      %3434 = vmatpush.msra.mxu0 0.0
      %3435 = vmatpush.msra.mxu0 0.0
      %3436 = vmatpush.msra.mxu0 0.0
      %3437 = vmatpush.msra.mxu0 %v2882
      %3438 = vmatpush.msra.mxu0 %v2881
      %3439 = vmatpush.msra.mxu0 %v2880
      %3440 = vmatpush.msra.mxu0 %v2879
      %3441 = vmatmul.f32.gmra.mxu0 %v3420
      %v3442 = vpop.f32.mrf.mxu0
      %v3443 = vadd.f32 0.0, %v3442
      %3444 = vmatmul.f32.gmra.mxu0 %v3423
      %v3445 = vpop.f32.mrf.mxu0
      %v3446 = vadd.f32 0.0, %v3445
      %3447 = vdwg.mxu0
      %v3448 = vadd.f32 %v2865, %v3443
      %v3449 = vadd.f32 %v2866, %v3446
      %v3451 = vperm.slane %v2884, 0
      %v3453 = vadd.f32 %v3448, %v3451
      %v3454 = vadd.f32 %v3449, %v3451
      %v3455 = vsel %vm1370, %v3453, 0.0
      %3456 = vadd.xlane.f32.xlu0 %v3455
      %v3457 = vpop.xlane.xlu0 %3456
      %v3458 = vsel %vm1370, %v3454, 0.0
      %3459 = vadd.xlane.f32.xlu0 %v3458
      %v3460 = vpop.xlane.xlu0 %3459
      %v3461 = vmul.f32 %v3457, %v1383
      %v3462 = vmul.f32 %v3460, %v1383
      %v3463 = vsub.f32 %v3453, %v3461
      %v3464 = vsub.f32 %v3454, %v3462
      %v3465 = vmul.f32 %v3463, %v3463
      %v3466 = vmul.f32 %v3464, %v3464
      %v3467 = vsel %vm1370, %v3465, 0.0
      %3468 = vadd.xlane.f32.xlu0 %v3467
      %v3469 = vpop.xlane.xlu0 %3468
      %v3470 = vsel %vm1370, %v3466, 0.0
      %3471 = vadd.xlane.f32.xlu0 %v3470
      %v3472 = vpop.xlane.xlu0 %3471
      %v3473 = vmul.f32 %v3469, 0.032258064
      %v3474 = vmul.f32 %v3472, 0.032258064
      %v3475 = vrsqrt.pop %v3473
      %v3476 = vmul.f32 %v3475, %v3473
      %v3477 = vmul.f32 %v3476, %v3475
      %v3478 = vmul.f32 0.5, %v3477
      %v3479 = vsub.f32 1.5, %v3478
      %v3480 = vmul.f32 %v3475, %v3479
      %v3481 = vmul.f32 %v3473, %v3480
      %vm3482 = vcmp.eq.f32.partialorder %v3473, inf
      %v3483 = vsel %vm3482, %v3473, %v3481
      %vm3484 = vcmp.eq.f32.partialorder %v3473, 0.0
      %v3485 = vand.u32 %v3473, 2147483648
      %v3486 = vsel %vm3484, %v3485, %v3483
      %v3487 = vrsqrt.pop %v3474
      %v3488 = vmul.f32 %v3487, %v3474
      %v3489 = vmul.f32 %v3488, %v3487
      %v3490 = vmul.f32 0.5, %v3489
      %v3491 = vsub.f32 1.5, %v3490
      %v3492 = vmul.f32 %v3487, %v3491
      %v3493 = vmul.f32 %v3474, %v3492
      %vm3494 = vcmp.eq.f32.partialorder %v3474, inf
      %v3495 = vsel %vm3494, %v3474, %v3493
      %vm3496 = vcmp.eq.f32.partialorder %v3474, 0.0
      %v3497 = vand.u32 %v3474, 2147483648
      %v3498 = vsel %vm3496, %v3497, %v3495
      %v3499 = vadd.f32 %v3486, 1e-06
      %v3500 = vadd.f32 %v3498, 1e-06
      %v3501 = vrcp.pop %v3499
      %v3502 = vrcp.pop %v3500
      %v3503 = vperm.slane %v2868, 1
      %v3504 = vmul.f32 %v3503, %v3463
      %v3505 = vmul.f32 %v3503, %v3464
      %v3506 = vmul.f32 %v3504, %v3501
      %v3507 = vmul.f32 %v3505, %v3502
      %v3508 = vperm.slane %v2870, 1
      %v3509 = vadd.f32 %v3506, %v3508
      %v3510 = vadd.f32 %v3507, %v3508
      %3511 = vmatpush.msra.mxu0 0.0
      %3512 = vmatpush.msra.mxu0 0.0
      %3513 = vmatpush.msra.mxu0 0.0
      %3514 = vmatpush.msra.mxu0 0.0
      %3515 = vmatpush.msra.mxu0 0.0
      %3516 = vmatpush.msra.mxu0 0.0
      %3517 = vmatpush.msra.mxu0 0.0
      %3518 = vmatpush.msra.mxu0 0.0
      %3519 = vmatpush.msra.mxu0 0.0
      %3520 = vmatpush.msra.mxu0 0.0
      %3521 = vmatpush.msra.mxu0 0.0
      %3522 = vmatpush.msra.mxu0 0.0
      %3523 = vmatpush.msra.mxu0 0.0
      %3524 = vmatpush.msra.mxu0 0.0
      %3525 = vmatpush.msra.mxu0 %v3510
      %3526 = vmatpush.msra.mxu0 %v3509
      %3527 = vmatmul.f32.gmra.mxu0 %v1989
      %v3528 = vpop.f32.mrf.mxu0
      %v3529 = vadd.f32 0.0, %v3528
      %3530 = vmatmul.f32.gmra.mxu0 %v1992
      %v3531 = vpop.f32.mrf.mxu0
      %v3532 = vadd.f32 0.0, %v3531
      %3533 = vdwg.mxu0
      %v3535 = vperm.slane %v2891, 0
      %v3538 = vsel %vm1370, %v3529, 0
      %v3541 = vsel %vm1370, %v3532, 0
      %3543 = vmatpush.msra.mxu0 0.0
      %3544 = vmatpush.msra.mxu0 0.0
      %3545 = vmatpush.msra.mxu0 0.0
      %3546 = vmatpush.msra.mxu0 0.0
      %3547 = vmatpush.msra.mxu0 0.0
      %3548 = vmatpush.msra.mxu0 0.0
      %3549 = vmatpush.msra.mxu0 0.0
      %3550 = vmatpush.msra.mxu0 0.0
      %3551 = vmatpush.msra.mxu0 0.0
      %3552 = vmatpush.msra.mxu0 0.0
      %3553 = vmatpush.msra.mxu0 0.0
      %3554 = vmatpush.msra.mxu0 0.0
      %3555 = vmatpush.msra.mxu0 %v2889
      %3556 = vmatpush.msra.mxu0 %v2888
      %3557 = vmatpush.msra.mxu0 %v2887
      %3558 = vmatpush.msra.mxu0 %v2886
      %3559 = vmatmul.f32.gmra.mxu0 %v3538
      %v3560 = vpop.f32.mrf.mxu0
      %v3561 = vadd.f32 %v3535, %v3560
      %3562 = vmatmul.f32.gmra.mxu0 %v3541
      %v3563 = vpop.f32.mrf.mxu0
      %v3564 = vadd.f32 %v3535, %v3563
      %3565 = vdwg.mxu0
      %v3566 = vmax.f32 %v3561, 0.0
      %v3567 = vmax.f32 %v3564, 0.0
      %3568 = vmatpush.msra.mxu0 0.0
      %3569 = vmatpush.msra.mxu0 0.0
      %3570 = vmatpush.msra.mxu0 0.0
      %3571 = vmatpush.msra.mxu0 0.0
      %3572 = vmatpush.msra.mxu0 0.0
      %3573 = vmatpush.msra.mxu0 0.0
      %3574 = vmatpush.msra.mxu0 0.0
      %3575 = vmatpush.msra.mxu0 0.0
      %3576 = vmatpush.msra.mxu0 0.0
      %3577 = vmatpush.msra.mxu0 0.0
      %3578 = vmatpush.msra.mxu0 0.0
      %3579 = vmatpush.msra.mxu0 0.0
      %3580 = vmatpush.msra.mxu0 0.0
      %3581 = vmatpush.msra.mxu0 0.0
      %3582 = vmatpush.msra.mxu0 %v3567
      %3583 = vmatpush.msra.mxu0 %v3566
      %3584 = vmatmul.f32.gmra.mxu0 %v1989
      %v3585 = vpop.f32.mrf.mxu0
      %v3586 = vadd.f32 0.0, %v3585
      %3587 = vmatmul.f32.gmra.mxu0 %v1992
      %v3588 = vpop.f32.mrf.mxu0
      %v3589 = vadd.f32 0.0, %v3588
      %3590 = vdwg.mxu0
      %v3592 = vperm.slane %v2902, 0
      %v3595 = vsel %vm2077, %v3586, 0
      %v3598 = vsel %vm2077, %v3589, 0
      %3600 = vmatpush.msra.mxu0 0.0
      %3601 = vmatpush.msra.mxu0 0.0
      %3602 = vmatpush.msra.mxu0 0.0
      %3603 = vmatpush.msra.mxu0 0.0
      %3604 = vmatpush.msra.mxu0 0.0
      %3605 = vmatpush.msra.mxu0 0.0
      %3606 = vmatpush.msra.mxu0 0.0
      %3607 = vmatpush.msra.mxu0 0.0
      %3608 = vmatpush.msra.mxu0 %v2900
      %3609 = vmatpush.msra.mxu0 %v2899
      %3610 = vmatpush.msra.mxu0 %v2898
      %3611 = vmatpush.msra.mxu0 %v2897
      %3612 = vmatpush.msra.mxu0 %v2896
      %3613 = vmatpush.msra.mxu0 %v2895
      %3614 = vmatpush.msra.mxu0 %v2894
      %3615 = vmatpush.msra.mxu0 %v2893
      %3616 = vmatmul.f32.gmra.mxu0 %v3595
      %v3617 = vpop.f32.mrf.mxu0
      %v3618 = vadd.f32 %v3592, %v3617
      %3619 = vmatmul.f32.gmra.mxu0 %v3598
      %v3620 = vpop.f32.mrf.mxu0
      %v3621 = vadd.f32 %v3592, %v3620
      %3622 = vdwg.mxu0
      %v3623 = vadd.f32 %v3453, %v3618
      %v3624 = vadd.f32 %v3454, %v3621
      %s3625 = scalar_lea.vmem %s13, 6
      %v3626 = vld [vmem:[%s3625] sm:$0x3]
      %s3627 = scalar_lea.vmem %s15, 6
      %v3628 = vld [vmem:[%s3627] sm:$0x3]
      %s3629 = scalar_lea.vmem %s17, 96
      %v3630 = vld [vmem:[%s3629] sm:$0xff]
      %v3631 = vld [vmem:[%s3629 + $0x8] sm:$0xff]
      %v3632 = vld [vmem:[%s3629 + $0x10] sm:$0xff]
      %v3633 = vld [vmem:[%s3629 + $0x18] sm:$0xff]
      %s3634 = scalar_lea.vmem %s19, 3
      %v3635 = vld [vmem:[%s3634] sm:$0x1]
      %s3636 = scalar_lea.vmem %s21, 96
      %v3637 = vld [vmem:[%s3636] sm:$0xff]
      %v3638 = vld [vmem:[%s3636 + $0x8] sm:$0xff]
      %v3639 = vld [vmem:[%s3636 + $0x10] sm:$0xff]
      %v3640 = vld [vmem:[%s3636 + $0x18] sm:$0xff]
      %s3641 = scalar_lea.vmem %s23, 3
      %v3642 = vld [vmem:[%s3641] sm:$0x1]
      %s3643 = scalar_lea.vmem %s25, 96
      %v3644 = vld [vmem:[%s3643] sm:$0xff]
      %v3645 = vld [vmem:[%s3643 + $0x8] sm:$0xff]
      %v3646 = vld [vmem:[%s3643 + $0x10] sm:$0xff]
      %v3647 = vld [vmem:[%s3643 + $0x18] sm:$0xff]
      %s3648 = scalar_lea.vmem %s27, 3
      %v3649 = vld [vmem:[%s3648] sm:$0x1]
      %s3650 = scalar_lea.vmem %s29, 192
      %v3651 = vld [vmem:[%s3650] sm:$0xff]
      %v3652 = vld [vmem:[%s3650 + $0x8] sm:$0xff]
      %v3653 = vld [vmem:[%s3650 + $0x10] sm:$0xff]
      %v3654 = vld [vmem:[%s3650 + $0x18] sm:$0xff]
      %v3655 = vld [vmem:[%s3650 + $0x20] sm:$0xff]
      %v3656 = vld [vmem:[%s3650 + $0x28] sm:$0xff]
      %v3657 = vld [vmem:[%s3650 + $0x30] sm:$0xff]
      %v3658 = vld [vmem:[%s3650 + $0x38] sm:$0xff]
      %s3659 = scalar_lea.vmem %s31, 3
      %v3660 = vld [vmem:[%s3659] sm:$0x1]
      %v3661 = vsel %vm1370, %v3623, 0.0
      %3662 = vadd.xlane.f32.xlu0 %v3661
      %v3663 = vpop.xlane.xlu0 %3662
      %v3664 = vsel %vm1370, %v3624, 0.0
      %3665 = vadd.xlane.f32.xlu0 %v3664
      %v3666 = vpop.xlane.xlu0 %3665
      %v3667 = vmul.f32 %v3663, %v1383
      %v3668 = vmul.f32 %v3666, %v1383
      %v3669 = vsub.f32 %v3623, %v3667
      %v3670 = vsub.f32 %v3624, %v3668
      %v3671 = vmul.f32 %v3669, %v3669
      %v3672 = vmul.f32 %v3670, %v3670
      %v3673 = vsel %vm1370, %v3671, 0.0
      %3674 = vadd.xlane.f32.xlu0 %v3673
      %v3675 = vpop.xlane.xlu0 %3674
      %v3676 = vsel %vm1370, %v3672, 0.0
      %3677 = vadd.xlane.f32.xlu0 %v3676
      %v3678 = vpop.xlane.xlu0 %3677
      %v3679 = vmul.f32 %v3675, 0.032258064
      %v3680 = vmul.f32 %v3678, 0.032258064
      %v3681 = vrsqrt.pop %v3679
      %v3682 = vmul.f32 %v3681, %v3679
      %v3683 = vmul.f32 %v3682, %v3681
      %v3684 = vmul.f32 0.5, %v3683
      %v3685 = vsub.f32 1.5, %v3684
      %v3686 = vmul.f32 %v3681, %v3685
      %v3687 = vmul.f32 %v3679, %v3686
      %vm3688 = vcmp.eq.f32.partialorder %v3679, inf
      %v3689 = vsel %vm3688, %v3679, %v3687
      %vm3690 = vcmp.eq.f32.partialorder %v3679, 0.0
      %v3691 = vand.u32 %v3679, 2147483648
      %v3692 = vsel %vm3690, %v3691, %v3689
      %v3693 = vrsqrt.pop %v3680
      %v3694 = vmul.f32 %v3693, %v3680
      %v3695 = vmul.f32 %v3694, %v3693
      %v3696 = vmul.f32 0.5, %v3695
      %v3697 = vsub.f32 1.5, %v3696
      %v3698 = vmul.f32 %v3693, %v3697
      %v3699 = vmul.f32 %v3680, %v3698
      %vm3700 = vcmp.eq.f32.partialorder %v3680, inf
      %v3701 = vsel %vm3700, %v3680, %v3699
      %vm3702 = vcmp.eq.f32.partialorder %v3680, 0.0
      %v3703 = vand.u32 %v3680, 2147483648
      %v3704 = vsel %vm3702, %v3703, %v3701
      %v3705 = vadd.f32 %v3692, 1e-06
      %v3706 = vadd.f32 %v3704, 1e-06
      %v3707 = vrcp.pop %v3705
      %v3708 = vrcp.pop %v3706
      %v3709 = vperm.slane %v3626, 0
      %v3710 = vmul.f32 %v3709, %v3669
      %v3711 = vmul.f32 %v3709, %v3670
      %v3712 = vmul.f32 %v3710, %v3707
      %v3713 = vmul.f32 %v3711, %v3708
      %v3714 = vperm.slane %v3628, 0
      %v3715 = vadd.f32 %v3712, %v3714
      %v3716 = vadd.f32 %v3713, %v3714
      %v3718 = vperm.slane %v3635, 0
      %v3721 = vsel %vm1370, %v3715, 0
      %v3724 = vsel %vm1370, %v3716, 0
      %3726 = vmatpush.msra.mxu0 0.0
      %3727 = vmatpush.msra.mxu0 0.0
      %3728 = vmatpush.msra.mxu0 0.0
      %3729 = vmatpush.msra.mxu0 0.0
      %3730 = vmatpush.msra.mxu0 0.0
      %3731 = vmatpush.msra.mxu0 0.0
      %3732 = vmatpush.msra.mxu0 0.0
      %3733 = vmatpush.msra.mxu0 0.0
      %3734 = vmatpush.msra.mxu0 0.0
      %3735 = vmatpush.msra.mxu0 0.0
      %3736 = vmatpush.msra.mxu0 0.0
      %3737 = vmatpush.msra.mxu0 0.0
      %3738 = vmatpush.msra.mxu0 %v3633
      %3739 = vmatpush.msra.mxu0 %v3632
      %3740 = vmatpush.msra.mxu0 %v3631
      %3741 = vmatpush.msra.mxu0 %v3630
      %3742 = vmatmul.f32.gmra.mxu0 %v3721
      %v3743 = vpop.f32.mrf.mxu0
      %v3744 = vadd.f32 %v3718, %v3743
      %3745 = vmatmul.f32.gmra.mxu0 %v3724
      %v3746 = vpop.f32.mrf.mxu0
      %v3747 = vadd.f32 %v3718, %v3746
      %3748 = vdwg.mxu0
      %v3749 = vmul.f32 %v3744, 0.35355338
      %v3750 = vmul.f32 %v3747, 0.35355338
      %3753 = vrot.lane.b32.xlu0 %v3749, 120
      %v3754 = vpop.permute.xlu0 %3753
      %3755 = vrot.lane.b32.xlu0 %v3750, 120
      %v3756 = vpop.permute.xlu0 %3755
      %3757 = vrot.lane.b32.xlu0 %v3749, 112
      %v3758 = vpop.permute.xlu0 %3757
      %3759 = vrot.lane.b32.xlu0 %v3750, 112
      %v3760 = vpop.permute.xlu0 %3759
      %3761 = vrot.lane.b32.xlu0 %v3749, 104
      %v3762 = vpop.permute.xlu0 %3761
      %3763 = vrot.lane.b32.xlu0 %v3750, 104
      %v3764 = vpop.permute.xlu0 %3763
      %3767 = vrot.lane.b32.xlu0 %v3744, 120
      %v3768 = vpop.permute.xlu0 %3767
      %3769 = vrot.lane.b32.xlu0 %v3747, 120
      %v3770 = vpop.permute.xlu0 %3769
      %3771 = vrot.lane.b32.xlu0 %v3744, 112
      %v3772 = vpop.permute.xlu0 %3771
      %3773 = vrot.lane.b32.xlu0 %v3747, 112
      %v3774 = vpop.permute.xlu0 %3773
      %3775 = vrot.lane.b32.xlu0 %v3744, 104
      %v3776 = vpop.permute.xlu0 %3775
      %3777 = vrot.lane.b32.xlu0 %v3747, 104
      %v3778 = vpop.permute.xlu0 %3777
      %3779 = vrot.lane.b32.xlu0 %v3744, 96
      %v3780 = vpop.permute.xlu0 %3779
      %3781 = vrot.lane.b32.xlu0 %v3747, 96
      %v3782 = vpop.permute.xlu0 %3781
      %v3783 = vsel %vm1500, %v3749, 0
      %v3785 = vsel %vm1500, %v3750, 0
      %v3787 = vsel %vm1500, %v3780, 0
      %v3789 = vsel %vm1500, %v3782, 0
      %3791 = vmatpush.xpose.msra.mxu0 0.0
      %3792 = vmatpush.xpose.msra.mxu0 0.0
      %3793 = vmatpush.xpose.msra.mxu0 0.0
      %3794 = vmatpush.xpose.msra.mxu0 0.0
      %3795 = vmatpush.xpose.msra.mxu0 0.0
      %3796 = vmatpush.xpose.msra.mxu0 0.0
      %3797 = vmatpush.xpose.msra.mxu0 0.0
      %3798 = vmatpush.xpose.msra.mxu0 0.0
      %3799 = vmatpush.xpose.msra.mxu0 0.0
      %3800 = vmatpush.xpose.msra.mxu0 0.0
      %3801 = vmatpush.xpose.msra.mxu0 0.0
      %3802 = vmatpush.xpose.msra.mxu0 0.0
      %3803 = vmatpush.xpose.msra.mxu0 0.0
      %3804 = vmatpush.xpose.msra.mxu0 0.0
      %3805 = vmatpush.xpose.msra.mxu0 %v3789
      %3806 = vmatpush.xpose.msra.mxu0 %v3787
      %3807 = vmatmul.f32.gmra.mxu0 %v3783
      %v3808 = vpop.f32.mrf.mxu0
      %v3809 = vadd.f32 0.0, %v3808
      %3810 = vmatmul.f32.gmra.mxu0 %v3785
      %v3811 = vpop.f32.mrf.mxu0
      %v3812 = vadd.f32 0.0, %v3811
      %3813 = vdwg.mxu0
      %3814 = vrot.lane.b32.xlu0 %v3768, 96
      %v3815 = vpop.permute.xlu0 %3814
      %3816 = vrot.lane.b32.xlu0 %v3770, 96
      %v3817 = vpop.permute.xlu0 %3816
      %v3818 = vsel %vm1500, %v3754, 0
      %v3820 = vsel %vm1500, %v3756, 0
      %v3822 = vsel %vm1500, %v3815, 0
      %v3824 = vsel %vm1500, %v3817, 0
      %3826 = vmatpush.xpose.msra.mxu0 0.0
      %3827 = vmatpush.xpose.msra.mxu0 0.0
      %3828 = vmatpush.xpose.msra.mxu0 0.0
      %3829 = vmatpush.xpose.msra.mxu0 0.0
      %3830 = vmatpush.xpose.msra.mxu0 0.0
      %3831 = vmatpush.xpose.msra.mxu0 0.0
      %3832 = vmatpush.xpose.msra.mxu0 0.0
      %3833 = vmatpush.xpose.msra.mxu0 0.0
      %3834 = vmatpush.xpose.msra.mxu0 0.0
      %3835 = vmatpush.xpose.msra.mxu0 0.0
      %3836 = vmatpush.xpose.msra.mxu0 0.0
      %3837 = vmatpush.xpose.msra.mxu0 0.0
      %3838 = vmatpush.xpose.msra.mxu0 0.0
      %3839 = vmatpush.xpose.msra.mxu0 0.0
      %3840 = vmatpush.xpose.msra.mxu0 %v3824
      %3841 = vmatpush.xpose.msra.mxu0 %v3822
      %3842 = vmatmul.f32.gmra.mxu0 %v3818
      %v3843 = vpop.f32.mrf.mxu0
      %v3844 = vadd.f32 0.0, %v3843
      %3845 = vmatmul.f32.gmra.mxu0 %v3820
      %v3846 = vpop.f32.mrf.mxu0
      %v3847 = vadd.f32 0.0, %v3846
      %3848 = vdwg.mxu0
      %3849 = vrot.lane.b32.xlu0 %v3772, 96
      %v3850 = vpop.permute.xlu0 %3849
      %3851 = vrot.lane.b32.xlu0 %v3774, 96
      %v3852 = vpop.permute.xlu0 %3851
      %v3853 = vsel %vm1500, %v3758, 0
      %v3855 = vsel %vm1500, %v3760, 0
      %v3857 = vsel %vm1500, %v3850, 0
      %v3859 = vsel %vm1500, %v3852, 0
      %3861 = vmatpush.xpose.msra.mxu0 0.0
      %3862 = vmatpush.xpose.msra.mxu0 0.0
      %3863 = vmatpush.xpose.msra.mxu0 0.0
      %3864 = vmatpush.xpose.msra.mxu0 0.0
      %3865 = vmatpush.xpose.msra.mxu0 0.0
      %3866 = vmatpush.xpose.msra.mxu0 0.0
      %3867 = vmatpush.xpose.msra.mxu0 0.0
      %3868 = vmatpush.xpose.msra.mxu0 0.0
      %3869 = vmatpush.xpose.msra.mxu0 0.0
      %3870 = vmatpush.xpose.msra.mxu0 0.0
      %3871 = vmatpush.xpose.msra.mxu0 0.0
      %3872 = vmatpush.xpose.msra.mxu0 0.0
      %3873 = vmatpush.xpose.msra.mxu0 0.0
      %3874 = vmatpush.xpose.msra.mxu0 0.0
      %3875 = vmatpush.xpose.msra.mxu0 %v3859
      %3876 = vmatpush.xpose.msra.mxu0 %v3857
      %3877 = vmatmul.f32.gmra.mxu0 %v3853
      %v3878 = vpop.f32.mrf.mxu0
      %v3879 = vadd.f32 0.0, %v3878
      %3880 = vmatmul.f32.gmra.mxu0 %v3855
      %v3881 = vpop.f32.mrf.mxu0
      %v3882 = vadd.f32 0.0, %v3881
      %3883 = vdwg.mxu0
      %3884 = vrot.lane.b32.xlu0 %v3776, 96
      %v3885 = vpop.permute.xlu0 %3884
      %3886 = vrot.lane.b32.xlu0 %v3778, 96
      %v3887 = vpop.permute.xlu0 %3886
      %v3888 = vsel %vm1500, %v3762, 0
      %v3890 = vsel %vm1500, %v3764, 0
      %v3892 = vsel %vm1500, %v3885, 0
      %v3894 = vsel %vm1500, %v3887, 0
      %3896 = vmatpush.xpose.msra.mxu0 0.0
      %3897 = vmatpush.xpose.msra.mxu0 0.0
      %3898 = vmatpush.xpose.msra.mxu0 0.0
      %3899 = vmatpush.xpose.msra.mxu0 0.0
      %3900 = vmatpush.xpose.msra.mxu0 0.0
      %3901 = vmatpush.xpose.msra.mxu0 0.0
      %3902 = vmatpush.xpose.msra.mxu0 0.0
      %3903 = vmatpush.xpose.msra.mxu0 0.0
      %3904 = vmatpush.xpose.msra.mxu0 0.0
      %3905 = vmatpush.xpose.msra.mxu0 0.0
      %3906 = vmatpush.xpose.msra.mxu0 0.0
      %3907 = vmatpush.xpose.msra.mxu0 0.0
      %3908 = vmatpush.xpose.msra.mxu0 0.0
      %3909 = vmatpush.xpose.msra.mxu0 0.0
      %3910 = vmatpush.xpose.msra.mxu0 %v3894
      %3911 = vmatpush.xpose.msra.mxu0 %v3892
      %3912 = vmatmul.f32.gmra.mxu0 %v3888
      %v3913 = vpop.f32.mrf.mxu0
      %v3914 = vadd.f32 0.0, %v3913
      %3915 = vmatmul.f32.gmra.mxu0 %v3890
      %v3916 = vpop.f32.mrf.mxu0
      %v3917 = vadd.f32 0.0, %v3916
      %3918 = vdwg.mxu0
      %v3919 = vsel %vm1197, %v3809, -inf
      %3920 = vmax.xlane.f32.xlu0 %v3919
      %v3921 = vpop.xlane.xlu0 %3920
      %v3922 = vsel %vm1197, %v3812, -inf
      %3923 = vmax.xlane.f32.xlu0 %v3922
      %v3924 = vpop.xlane.xlu0 %3923
      %v3925 = vsel %vm1197, %v3844, -inf
      %3926 = vmax.xlane.f32.xlu0 %v3925
      %v3927 = vpop.xlane.xlu0 %3926
      %v3928 = vsel %vm1197, %v3847, -inf
      %3929 = vmax.xlane.f32.xlu0 %v3928
      %v3930 = vpop.xlane.xlu0 %3929
      %v3931 = vsel %vm1197, %v3879, -inf
      %3932 = vmax.xlane.f32.xlu0 %v3931
      %v3933 = vpop.xlane.xlu0 %3932
      %v3934 = vsel %vm1197, %v3882, -inf
      %3935 = vmax.xlane.f32.xlu0 %v3934
      %v3936 = vpop.xlane.xlu0 %3935
      %v3937 = vsel %vm1197, %v3914, -inf
      %3938 = vmax.xlane.f32.xlu0 %v3937
      %v3939 = vpop.xlane.xlu0 %3938
      %v3940 = vsel %vm1197, %v3917, -inf
      %3941 = vmax.xlane.f32.xlu0 %v3940
      %v3942 = vpop.xlane.xlu0 %3941
      %v3943 = vsub.f32 %v3809, %v3921
      %v3944 = vsub.f32 %v3812, %v3924
      %v3945 = vsub.f32 %v3844, %v3927
      %v3946 = vsub.f32 %v3847, %v3930
      %v3947 = vsub.f32 %v3879, %v3933
      %v3948 = vsub.f32 %v3882, %v3936
      %v3949 = vsub.f32 %v3914, %v3939
      %v3950 = vsub.f32 %v3917, %v3942
      %v3951 = vmul.f32 %v3943, 1.442695
      %v3952 = vpow.pop %v3951
      %v3953 = vmul.f32 %v3944, 1.442695
      %v3954 = vpow.pop %v3953
      %v3955 = vmul.f32 %v3945, 1.442695
      %v3956 = vpow.pop %v3955
      %v3957 = vmul.f32 %v3946, 1.442695
      %v3958 = vpow.pop %v3957
      %v3959 = vmul.f32 %v3947, 1.442695
      %v3960 = vpow.pop %v3959
      %v3961 = vmul.f32 %v3948, 1.442695
      %v3962 = vpow.pop %v3961
      %v3963 = vmul.f32 %v3949, 1.442695
      %v3964 = vpow.pop %v3963
      %v3965 = vmul.f32 %v3950, 1.442695
      %v3966 = vpow.pop %v3965
      %v3967 = vsel %vm1197, %v3952, 0.0
      %3968 = vadd.xlane.f32.xlu0 %v3967
      %v3969 = vpop.xlane.xlu0 %3968
      %v3970 = vsel %vm1197, %v3954, 0.0
      %3971 = vadd.xlane.f32.xlu0 %v3970
      %v3972 = vpop.xlane.xlu0 %3971
      %v3973 = vsel %vm1197, %v3956, 0.0
      %3974 = vadd.xlane.f32.xlu0 %v3973
      %v3975 = vpop.xlane.xlu0 %3974
      %v3976 = vsel %vm1197, %v3958, 0.0
      %3977 = vadd.xlane.f32.xlu0 %v3976
      %v3978 = vpop.xlane.xlu0 %3977
      %v3979 = vsel %vm1197, %v3960, 0.0
      %3980 = vadd.xlane.f32.xlu0 %v3979
      %v3981 = vpop.xlane.xlu0 %3980
      %v3982 = vsel %vm1197, %v3962, 0.0
      %3983 = vadd.xlane.f32.xlu0 %v3982
      %v3984 = vpop.xlane.xlu0 %3983
      %v3985 = vsel %vm1197, %v3964, 0.0
      %3986 = vadd.xlane.f32.xlu0 %v3985
      %v3987 = vpop.xlane.xlu0 %3986
      %v3988 = vsel %vm1197, %v3966, 0.0
      %3989 = vadd.xlane.f32.xlu0 %v3988
      %v3990 = vpop.xlane.xlu0 %3989
      %v3991 = vrcp.pop %v3969
      %v3992 = vrcp.pop %v3972
      %v3993 = vrcp.pop %v3975
      %v3994 = vrcp.pop %v3978
      %v3995 = vrcp.pop %v3981
      %v3996 = vrcp.pop %v3984
      %v3997 = vrcp.pop %v3987
      %v3998 = vrcp.pop %v3990
      %v3999 = vmul.f32 %v3952, %v3991
      %v4000 = vmul.f32 %v3954, %v3992
      %v4001 = vmul.f32 %v3956, %v3993
      %v4002 = vmul.f32 %v3958, %v3994
      %v4003 = vmul.f32 %v3960, %v3995
      %v4004 = vmul.f32 %v3962, %v3996
      %v4005 = vmul.f32 %v3964, %v3997
      %v4006 = vmul.f32 %v3966, %v3998
      %4007 = vrot.lane.b32.xlu0 %v3744, 64
      %v4008 = vpop.permute.xlu0 %4007
      %4009 = vrot.lane.b32.xlu0 %v3747, 64
      %v4010 = vpop.permute.xlu0 %4009
      %v4014 = vsel %vm1197, %v3999, 0
      %v4017 = vsel %vm1197, %v4000, 0
      %4019 = vmatpush.msra.mxu0 0.0
      %4020 = vmatpush.msra.mxu0 0.0
      %4021 = vmatpush.msra.mxu0 0.0
      %4022 = vmatpush.msra.mxu0 0.0
      %4023 = vmatpush.msra.mxu0 0.0
      %4024 = vmatpush.msra.mxu0 0.0
      %4025 = vmatpush.msra.mxu0 0.0
      %4026 = vmatpush.msra.mxu0 0.0
      %4027 = vmatpush.msra.mxu0 0.0
      %4028 = vmatpush.msra.mxu0 0.0
      %4029 = vmatpush.msra.mxu0 0.0
      %4030 = vmatpush.msra.mxu0 0.0
      %4031 = vmatpush.msra.mxu0 0.0
      %4032 = vmatpush.msra.mxu0 0.0
      %4033 = vmatpush.msra.mxu0 %v4010
      %4034 = vmatpush.msra.mxu0 %v4008
      %4035 = vmatmul.f32.gmra.mxu0 %v4014
      %v4036 = vpop.f32.mrf.mxu0
      %v4037 = vadd.f32 0.0, %v4036
      %4038 = vmatmul.f32.gmra.mxu0 %v4017
      %v4039 = vpop.f32.mrf.mxu0
      %v4040 = vadd.f32 0.0, %v4039
      %4041 = vdwg.mxu0
      %4042 = vrot.lane.b32.xlu0 %v3768, 64
      %v4043 = vpop.permute.xlu0 %4042
      %4044 = vrot.lane.b32.xlu0 %v3770, 64
      %v4045 = vpop.permute.xlu0 %4044
      %v4049 = vsel %vm1197, %v4001, 0
      %v4052 = vsel %vm1197, %v4002, 0
      %4054 = vmatpush.msra.mxu0 0.0
      %4055 = vmatpush.msra.mxu0 0.0
      %4056 = vmatpush.msra.mxu0 0.0
      %4057 = vmatpush.msra.mxu0 0.0
      %4058 = vmatpush.msra.mxu0 0.0
      %4059 = vmatpush.msra.mxu0 0.0
      %4060 = vmatpush.msra.mxu0 0.0
      %4061 = vmatpush.msra.mxu0 0.0
      %4062 = vmatpush.msra.mxu0 0.0
      %4063 = vmatpush.msra.mxu0 0.0
      %4064 = vmatpush.msra.mxu0 0.0
      %4065 = vmatpush.msra.mxu0 0.0
      %4066 = vmatpush.msra.mxu0 0.0
      %4067 = vmatpush.msra.mxu0 0.0
      %4068 = vmatpush.msra.mxu0 %v4045
      %4069 = vmatpush.msra.mxu0 %v4043
      %4070 = vmatmul.f32.gmra.mxu0 %v4049
      %v4071 = vpop.f32.mrf.mxu0
      %v4072 = vadd.f32 0.0, %v4071
      %4073 = vmatmul.f32.gmra.mxu0 %v4052
      %v4074 = vpop.f32.mrf.mxu0
      %v4075 = vadd.f32 0.0, %v4074
      %4076 = vdwg.mxu0
      %4077 = vrot.lane.b32.xlu0 %v3772, 64
      %v4078 = vpop.permute.xlu0 %4077
      %4079 = vrot.lane.b32.xlu0 %v3774, 64
      %v4080 = vpop.permute.xlu0 %4079
      %v4084 = vsel %vm1197, %v4003, 0
      %v4087 = vsel %vm1197, %v4004, 0
      %4089 = vmatpush.msra.mxu0 0.0
      %4090 = vmatpush.msra.mxu0 0.0
      %4091 = vmatpush.msra.mxu0 0.0
      %4092 = vmatpush.msra.mxu0 0.0
      %4093 = vmatpush.msra.mxu0 0.0
      %4094 = vmatpush.msra.mxu0 0.0
      %4095 = vmatpush.msra.mxu0 0.0
      %4096 = vmatpush.msra.mxu0 0.0
      %4097 = vmatpush.msra.mxu0 0.0
      %4098 = vmatpush.msra.mxu0 0.0
      %4099 = vmatpush.msra.mxu0 0.0
      %4100 = vmatpush.msra.mxu0 0.0
      %4101 = vmatpush.msra.mxu0 0.0
      %4102 = vmatpush.msra.mxu0 0.0
      %4103 = vmatpush.msra.mxu0 %v4080
      %4104 = vmatpush.msra.mxu0 %v4078
      %4105 = vmatmul.f32.gmra.mxu0 %v4084
      %v4106 = vpop.f32.mrf.mxu0
      %v4107 = vadd.f32 0.0, %v4106
      %4108 = vmatmul.f32.gmra.mxu0 %v4087
      %v4109 = vpop.f32.mrf.mxu0
      %v4110 = vadd.f32 0.0, %v4109
      %4111 = vdwg.mxu0
      %4112 = vrot.lane.b32.xlu0 %v3776, 64
      %v4113 = vpop.permute.xlu0 %4112
      %4114 = vrot.lane.b32.xlu0 %v3778, 64
      %v4115 = vpop.permute.xlu0 %4114
      %v4119 = vsel %vm1197, %v4005, 0
      %v4122 = vsel %vm1197, %v4006, 0
      %4124 = vmatpush.msra.mxu0 0.0
      %4125 = vmatpush.msra.mxu0 0.0
      %4126 = vmatpush.msra.mxu0 0.0
      %4127 = vmatpush.msra.mxu0 0.0
      %4128 = vmatpush.msra.mxu0 0.0
      %4129 = vmatpush.msra.mxu0 0.0
      %4130 = vmatpush.msra.mxu0 0.0
      %4131 = vmatpush.msra.mxu0 0.0
      %4132 = vmatpush.msra.mxu0 0.0
      %4133 = vmatpush.msra.mxu0 0.0
      %4134 = vmatpush.msra.mxu0 0.0
      %4135 = vmatpush.msra.mxu0 0.0
      %4136 = vmatpush.msra.mxu0 0.0
      %4137 = vmatpush.msra.mxu0 0.0
      %4138 = vmatpush.msra.mxu0 %v4115
      %4139 = vmatpush.msra.mxu0 %v4113
      %4140 = vmatmul.f32.gmra.mxu0 %v4119
      %v4141 = vpop.f32.mrf.mxu0
      %v4142 = vadd.f32 0.0, %v4141
      %4143 = vmatmul.f32.gmra.mxu0 %v4122
      %v4144 = vpop.f32.mrf.mxu0
      %v4145 = vadd.f32 0.0, %v4144
      %4146 = vdwg.mxu0
      %4149 = vrot.lane.b32.xlu0 %v4072, 8
      %v4150 = vpop.permute.xlu0 %4149
      %4151 = vrot.lane.b32.xlu0 %v4075, 8
      %v4152 = vpop.permute.xlu0 %4151
      %4157 = vrot.lane.b32.xlu0 %v4107, 16
      %v4158 = vpop.permute.xlu0 %4157
      %4159 = vrot.lane.b32.xlu0 %v4110, 16
      %v4160 = vpop.permute.xlu0 %4159
      %4165 = vrot.lane.b32.xlu0 %v4142, 24
      %v4166 = vpop.permute.xlu0 %4165
      %4167 = vrot.lane.b32.xlu0 %v4145, 24
      %v4168 = vpop.permute.xlu0 %4167
      %v4171 = vsel %vm1500, %v4037, %v4150
      %v4172 = vsel %vm1500, %v4040, %v4152
      %v4173 = vsel %vm1197, %v4171, %v4158
      %v4174 = vsel %vm1197, %v4172, %v4160
      %v4175 = vsel %vm1893, %v4173, %v4166
      %v4176 = vsel %vm1893, %v4174, %v4168
      %v4178 = vsel %vm1370, %v4175, 0
      %v4181 = vsel %vm1370, %v4176, 0
      %4183 = vmatpush.msra.mxu0 0.0
      %4184 = vmatpush.msra.mxu0 0.0
      %4185 = vmatpush.msra.mxu0 0.0
      %4186 = vmatpush.msra.mxu0 0.0
      %4187 = vmatpush.msra.mxu0 0.0
      %4188 = vmatpush.msra.mxu0 0.0
      %4189 = vmatpush.msra.mxu0 0.0
      %4190 = vmatpush.msra.mxu0 0.0
      %4191 = vmatpush.msra.mxu0 0.0
      %4192 = vmatpush.msra.mxu0 0.0
      %4193 = vmatpush.msra.mxu0 0.0
      %4194 = vmatpush.msra.mxu0 0.0
      %4195 = vmatpush.msra.mxu0 %v3640
      %4196 = vmatpush.msra.mxu0 %v3639
      %4197 = vmatpush.msra.mxu0 %v3638
      %4198 = vmatpush.msra.mxu0 %v3637
      %4199 = vmatmul.f32.gmra.mxu0 %v4178
      %v4200 = vpop.f32.mrf.mxu0
      %v4201 = vadd.f32 0.0, %v4200
      %4202 = vmatmul.f32.gmra.mxu0 %v4181
      %v4203 = vpop.f32.mrf.mxu0
      %v4204 = vadd.f32 0.0, %v4203
      %4205 = vdwg.mxu0
      %v4206 = vadd.f32 %v3623, %v4201
      %v4207 = vadd.f32 %v3624, %v4204
      %v4209 = vperm.slane %v3642, 0
      %v4211 = vadd.f32 %v4206, %v4209
      %v4212 = vadd.f32 %v4207, %v4209
      %v4213 = vsel %vm1370, %v4211, 0.0
      %4214 = vadd.xlane.f32.xlu0 %v4213
      %v4215 = vpop.xlane.xlu0 %4214
      %v4216 = vsel %vm1370, %v4212, 0.0
      %4217 = vadd.xlane.f32.xlu0 %v4216
      %v4218 = vpop.xlane.xlu0 %4217
      %v4219 = vmul.f32 %v4215, %v1383
      %v4220 = vmul.f32 %v4218, %v1383
      %v4221 = vsub.f32 %v4211, %v4219
      %v4222 = vsub.f32 %v4212, %v4220
      %v4223 = vmul.f32 %v4221, %v4221
      %v4224 = vmul.f32 %v4222, %v4222
      %v4225 = vsel %vm1370, %v4223, 0.0
      %4226 = vadd.xlane.f32.xlu0 %v4225
      %v4227 = vpop.xlane.xlu0 %4226
      %v4228 = vsel %vm1370, %v4224, 0.0
      %4229 = vadd.xlane.f32.xlu0 %v4228
      %v4230 = vpop.xlane.xlu0 %4229
      %v4231 = vmul.f32 %v4227, 0.032258064
      %v4232 = vmul.f32 %v4230, 0.032258064
      %v4233 = vrsqrt.pop %v4231
      %v4234 = vmul.f32 %v4233, %v4231
      %v4235 = vmul.f32 %v4234, %v4233
      %v4236 = vmul.f32 0.5, %v4235
      %v4237 = vsub.f32 1.5, %v4236
      %v4238 = vmul.f32 %v4233, %v4237
      %v4239 = vmul.f32 %v4231, %v4238
      %vm4240 = vcmp.eq.f32.partialorder %v4231, inf
      %v4241 = vsel %vm4240, %v4231, %v4239
      %vm4242 = vcmp.eq.f32.partialorder %v4231, 0.0
      %v4243 = vand.u32 %v4231, 2147483648
      %v4244 = vsel %vm4242, %v4243, %v4241
      %v4245 = vrsqrt.pop %v4232
      %v4246 = vmul.f32 %v4245, %v4232
      %v4247 = vmul.f32 %v4246, %v4245
      %v4248 = vmul.f32 0.5, %v4247
      %v4249 = vsub.f32 1.5, %v4248
      %v4250 = vmul.f32 %v4245, %v4249
      %v4251 = vmul.f32 %v4232, %v4250
      %vm4252 = vcmp.eq.f32.partialorder %v4232, inf
      %v4253 = vsel %vm4252, %v4232, %v4251
      %vm4254 = vcmp.eq.f32.partialorder %v4232, 0.0
      %v4255 = vand.u32 %v4232, 2147483648
      %v4256 = vsel %vm4254, %v4255, %v4253
      %v4257 = vadd.f32 %v4244, 1e-06
      %v4258 = vadd.f32 %v4256, 1e-06
      %v4259 = vrcp.pop %v4257
      %v4260 = vrcp.pop %v4258
      %v4261 = vperm.slane %v3626, 1
      %v4262 = vmul.f32 %v4261, %v4221
      %v4263 = vmul.f32 %v4261, %v4222
      %v4264 = vmul.f32 %v4262, %v4259
      %v4265 = vmul.f32 %v4263, %v4260
      %v4266 = vperm.slane %v3628, 1
      %v4267 = vadd.f32 %v4264, %v4266
      %v4268 = vadd.f32 %v4265, %v4266
      %4269 = vmatpush.msra.mxu0 0.0
      %4270 = vmatpush.msra.mxu0 0.0
      %4271 = vmatpush.msra.mxu0 0.0
      %4272 = vmatpush.msra.mxu0 0.0
      %4273 = vmatpush.msra.mxu0 0.0
      %4274 = vmatpush.msra.mxu0 0.0
      %4275 = vmatpush.msra.mxu0 0.0
      %4276 = vmatpush.msra.mxu0 0.0
      %4277 = vmatpush.msra.mxu0 0.0
      %4278 = vmatpush.msra.mxu0 0.0
      %4279 = vmatpush.msra.mxu0 0.0
      %4280 = vmatpush.msra.mxu0 0.0
      %4281 = vmatpush.msra.mxu0 0.0
      %4282 = vmatpush.msra.mxu0 0.0
      %4283 = vmatpush.msra.mxu0 %v4268
      %4284 = vmatpush.msra.mxu0 %v4267
      %4285 = vmatmul.f32.gmra.mxu0 %v1989
      %v4286 = vpop.f32.mrf.mxu0
      %v4287 = vadd.f32 0.0, %v4286
      %4288 = vmatmul.f32.gmra.mxu0 %v1992
      %v4289 = vpop.f32.mrf.mxu0
      %v4290 = vadd.f32 0.0, %v4289
      %4291 = vdwg.mxu0
      %v4293 = vperm.slane %v3649, 0
      %v4296 = vsel %vm1370, %v4287, 0
      %v4299 = vsel %vm1370, %v4290, 0
      %4301 = vmatpush.msra.mxu0 0.0
      %4302 = vmatpush.msra.mxu0 0.0
      %4303 = vmatpush.msra.mxu0 0.0
      %4304 = vmatpush.msra.mxu0 0.0
      %4305 = vmatpush.msra.mxu0 0.0
      %4306 = vmatpush.msra.mxu0 0.0
      %4307 = vmatpush.msra.mxu0 0.0
      %4308 = vmatpush.msra.mxu0 0.0
      %4309 = vmatpush.msra.mxu0 0.0
      %4310 = vmatpush.msra.mxu0 0.0
      %4311 = vmatpush.msra.mxu0 0.0
      %4312 = vmatpush.msra.mxu0 0.0
      %4313 = vmatpush.msra.mxu0 %v3647
      %4314 = vmatpush.msra.mxu0 %v3646
      %4315 = vmatpush.msra.mxu0 %v3645
      %4316 = vmatpush.msra.mxu0 %v3644
      %4317 = vmatmul.f32.gmra.mxu0 %v4296
      %v4318 = vpop.f32.mrf.mxu0
      %v4319 = vadd.f32 %v4293, %v4318
      %4320 = vmatmul.f32.gmra.mxu0 %v4299
      %v4321 = vpop.f32.mrf.mxu0
      %v4322 = vadd.f32 %v4293, %v4321
      %4323 = vdwg.mxu0
      %v4324 = vmax.f32 %v4319, 0.0
      %v4325 = vmax.f32 %v4322, 0.0
      %4326 = vmatpush.msra.mxu0 0.0
      %4327 = vmatpush.msra.mxu0 0.0
      %4328 = vmatpush.msra.mxu0 0.0
      %4329 = vmatpush.msra.mxu0 0.0
      %4330 = vmatpush.msra.mxu0 0.0
      %4331 = vmatpush.msra.mxu0 0.0
      %4332 = vmatpush.msra.mxu0 0.0
      %4333 = vmatpush.msra.mxu0 0.0
      %4334 = vmatpush.msra.mxu0 0.0
      %4335 = vmatpush.msra.mxu0 0.0
      %4336 = vmatpush.msra.mxu0 0.0
      %4337 = vmatpush.msra.mxu0 0.0
      %4338 = vmatpush.msra.mxu0 0.0
      %4339 = vmatpush.msra.mxu0 0.0
      %4340 = vmatpush.msra.mxu0 %v4325
      %4341 = vmatpush.msra.mxu0 %v4324
      %4342 = vmatmul.f32.gmra.mxu0 %v1989
      %v4343 = vpop.f32.mrf.mxu0
      %v4344 = vadd.f32 0.0, %v4343
      %4345 = vmatmul.f32.gmra.mxu0 %v1992
      %v4346 = vpop.f32.mrf.mxu0
      %v4347 = vadd.f32 0.0, %v4346
      %4348 = vdwg.mxu0
      %v4350 = vperm.slane %v3660, 0
      %v4353 = vsel %vm2077, %v4344, 0
      %v4356 = vsel %vm2077, %v4347, 0
      %4358 = vmatpush.msra.mxu0 0.0
      %4359 = vmatpush.msra.mxu0 0.0
      %4360 = vmatpush.msra.mxu0 0.0
      %4361 = vmatpush.msra.mxu0 0.0
      %4362 = vmatpush.msra.mxu0 0.0
      %4363 = vmatpush.msra.mxu0 0.0
      %4364 = vmatpush.msra.mxu0 0.0
      %4365 = vmatpush.msra.mxu0 0.0
      %4366 = vmatpush.msra.mxu0 %v3658
      %4367 = vmatpush.msra.mxu0 %v3657
      %4368 = vmatpush.msra.mxu0 %v3656
      %4369 = vmatpush.msra.mxu0 %v3655
      %4370 = vmatpush.msra.mxu0 %v3654
      %4371 = vmatpush.msra.mxu0 %v3653
      %4372 = vmatpush.msra.mxu0 %v3652
      %4373 = vmatpush.msra.mxu0 %v3651
      %4374 = vmatmul.f32.gmra.mxu0 %v4353
      %v4375 = vpop.f32.mrf.mxu0
      %v4376 = vadd.f32 %v4350, %v4375
      %4377 = vmatmul.f32.gmra.mxu0 %v4356
      %v4378 = vpop.f32.mrf.mxu0
      %v4379 = vadd.f32 %v4350, %v4378
      %4380 = vdwg.mxu0
      %v4381 = vadd.f32 %v4211, %v4376
      %v4382 = vadd.f32 %v4212, %v4379
      %s4383 = scalar_lea.vmem %s13, 8
      %v4384 = vld [vmem:[%s4383] sm:$0x3]
      %s4385 = scalar_lea.vmem %s15, 8
      %v4386 = vld [vmem:[%s4385] sm:$0x3]
      %s4387 = scalar_lea.vmem %s17, 128
      %v4388 = vld [vmem:[%s4387] sm:$0xff]
      %v4389 = vld [vmem:[%s4387 + $0x8] sm:$0xff]
      %v4390 = vld [vmem:[%s4387 + $0x10] sm:$0xff]
      %v4391 = vld [vmem:[%s4387 + $0x18] sm:$0xff]
      %s4392 = scalar_lea.vmem %s19, 4
      %v4393 = vld [vmem:[%s4392] sm:$0x1]
      %s4394 = scalar_lea.vmem %s21, 128
      %v4395 = vld [vmem:[%s4394] sm:$0xff]
      %v4396 = vld [vmem:[%s4394 + $0x8] sm:$0xff]
      %v4397 = vld [vmem:[%s4394 + $0x10] sm:$0xff]
      %v4398 = vld [vmem:[%s4394 + $0x18] sm:$0xff]
      %s4399 = scalar_lea.vmem %s23, 4
      %v4400 = vld [vmem:[%s4399] sm:$0x1]
      %s4401 = scalar_lea.vmem %s25, 128
      %v4402 = vld [vmem:[%s4401] sm:$0xff]
      %v4403 = vld [vmem:[%s4401 + $0x8] sm:$0xff]
      %v4404 = vld [vmem:[%s4401 + $0x10] sm:$0xff]
      %v4405 = vld [vmem:[%s4401 + $0x18] sm:$0xff]
      %s4406 = scalar_lea.vmem %s27, 4
      %v4407 = vld [vmem:[%s4406] sm:$0x1]
      %s4408 = scalar_lea.vmem %s29, 256
      %v4409 = vld [vmem:[%s4408] sm:$0xff]
      %v4410 = vld [vmem:[%s4408 + $0x8] sm:$0xff]
      %v4411 = vld [vmem:[%s4408 + $0x10] sm:$0xff]
      %v4412 = vld [vmem:[%s4408 + $0x18] sm:$0xff]
      %v4413 = vld [vmem:[%s4408 + $0x20] sm:$0xff]
      %v4414 = vld [vmem:[%s4408 + $0x28] sm:$0xff]
      %v4415 = vld [vmem:[%s4408 + $0x30] sm:$0xff]
      %v4416 = vld [vmem:[%s4408 + $0x38] sm:$0xff]
      %s4417 = scalar_lea.vmem %s31, 4
      %v4418 = vld [vmem:[%s4417] sm:$0x1]
      %v4419 = vsel %vm1370, %v4381, 0.0
      %4420 = vadd.xlane.f32.xlu0 %v4419
      %v4421 = vpop.xlane.xlu0 %4420
      %v4422 = vsel %vm1370, %v4382, 0.0
      %4423 = vadd.xlane.f32.xlu0 %v4422
      %v4424 = vpop.xlane.xlu0 %4423
      %v4425 = vmul.f32 %v4421, %v1383
      %v4426 = vmul.f32 %v4424, %v1383
      %v4427 = vsub.f32 %v4381, %v4425
      %v4428 = vsub.f32 %v4382, %v4426
      %v4429 = vmul.f32 %v4427, %v4427
      %v4430 = vmul.f32 %v4428, %v4428
      %v4431 = vsel %vm1370, %v4429, 0.0
      %4432 = vadd.xlane.f32.xlu0 %v4431
      %v4433 = vpop.xlane.xlu0 %4432
      %v4434 = vsel %vm1370, %v4430, 0.0
      %4435 = vadd.xlane.f32.xlu0 %v4434
      %v4436 = vpop.xlane.xlu0 %4435
      %v4437 = vmul.f32 %v4433, 0.032258064
      %v4438 = vmul.f32 %v4436, 0.032258064
      %v4439 = vrsqrt.pop %v4437
      %v4440 = vmul.f32 %v4439, %v4437
      %v4441 = vmul.f32 %v4440, %v4439
      %v4442 = vmul.f32 0.5, %v4441
      %v4443 = vsub.f32 1.5, %v4442
      %v4444 = vmul.f32 %v4439, %v4443
      %v4445 = vmul.f32 %v4437, %v4444
      %vm4446 = vcmp.eq.f32.partialorder %v4437, inf
      %v4447 = vsel %vm4446, %v4437, %v4445
      %vm4448 = vcmp.eq.f32.partialorder %v4437, 0.0
      %v4449 = vand.u32 %v4437, 2147483648
      %v4450 = vsel %vm4448, %v4449, %v4447
      %v4451 = vrsqrt.pop %v4438
      %v4452 = vmul.f32 %v4451, %v4438
      %v4453 = vmul.f32 %v4452, %v4451
      %v4454 = vmul.f32 0.5, %v4453
      %v4455 = vsub.f32 1.5, %v4454
      %v4456 = vmul.f32 %v4451, %v4455
      %v4457 = vmul.f32 %v4438, %v4456
      %vm4458 = vcmp.eq.f32.partialorder %v4438, inf
      %v4459 = vsel %vm4458, %v4438, %v4457
      %vm4460 = vcmp.eq.f32.partialorder %v4438, 0.0
      %v4461 = vand.u32 %v4438, 2147483648
      %v4462 = vsel %vm4460, %v4461, %v4459
      %v4463 = vadd.f32 %v4450, 1e-06
      %v4464 = vadd.f32 %v4462, 1e-06
      %v4465 = vrcp.pop %v4463
      %v4466 = vrcp.pop %v4464
      %v4467 = vperm.slane %v4384, 0
      %v4468 = vmul.f32 %v4467, %v4427
      %v4469 = vmul.f32 %v4467, %v4428
      %v4470 = vmul.f32 %v4468, %v4465
      %v4471 = vmul.f32 %v4469, %v4466
      %v4472 = vperm.slane %v4386, 0
      %v4473 = vadd.f32 %v4470, %v4472
      %v4474 = vadd.f32 %v4471, %v4472
      %v4476 = vperm.slane %v4393, 0
      %v4479 = vsel %vm1370, %v4473, 0
      %v4482 = vsel %vm1370, %v4474, 0
      %4484 = vmatpush.msra.mxu0 0.0
      %4485 = vmatpush.msra.mxu0 0.0
      %4486 = vmatpush.msra.mxu0 0.0
      %4487 = vmatpush.msra.mxu0 0.0
      %4488 = vmatpush.msra.mxu0 0.0
      %4489 = vmatpush.msra.mxu0 0.0
      %4490 = vmatpush.msra.mxu0 0.0
      %4491 = vmatpush.msra.mxu0 0.0
      %4492 = vmatpush.msra.mxu0 0.0
      %4493 = vmatpush.msra.mxu0 0.0
      %4494 = vmatpush.msra.mxu0 0.0
      %4495 = vmatpush.msra.mxu0 0.0
      %4496 = vmatpush.msra.mxu0 %v4391
      %4497 = vmatpush.msra.mxu0 %v4390
      %4498 = vmatpush.msra.mxu0 %v4389
      %4499 = vmatpush.msra.mxu0 %v4388
      %4500 = vmatmul.f32.gmra.mxu0 %v4479
      %v4501 = vpop.f32.mrf.mxu0
      %v4502 = vadd.f32 %v4476, %v4501
      %4503 = vmatmul.f32.gmra.mxu0 %v4482
      %v4504 = vpop.f32.mrf.mxu0
      %v4505 = vadd.f32 %v4476, %v4504
      %4506 = vdwg.mxu0
      %v4507 = vmul.f32 %v4502, 0.35355338
      %v4508 = vmul.f32 %v4505, 0.35355338
      %4511 = vrot.lane.b32.xlu0 %v4507, 120
      %v4512 = vpop.permute.xlu0 %4511
      %4513 = vrot.lane.b32.xlu0 %v4508, 120
      %v4514 = vpop.permute.xlu0 %4513
      %4515 = vrot.lane.b32.xlu0 %v4507, 112
      %v4516 = vpop.permute.xlu0 %4515
      %4517 = vrot.lane.b32.xlu0 %v4508, 112
      %v4518 = vpop.permute.xlu0 %4517
      %4519 = vrot.lane.b32.xlu0 %v4507, 104
      %v4520 = vpop.permute.xlu0 %4519
      %4521 = vrot.lane.b32.xlu0 %v4508, 104
      %v4522 = vpop.permute.xlu0 %4521
      %4525 = vrot.lane.b32.xlu0 %v4502, 120
      %v4526 = vpop.permute.xlu0 %4525
      %4527 = vrot.lane.b32.xlu0 %v4505, 120
      %v4528 = vpop.permute.xlu0 %4527
      %4529 = vrot.lane.b32.xlu0 %v4502, 112
      %v4530 = vpop.permute.xlu0 %4529
      %4531 = vrot.lane.b32.xlu0 %v4505, 112
      %v4532 = vpop.permute.xlu0 %4531
      %4533 = vrot.lane.b32.xlu0 %v4502, 104
      %v4534 = vpop.permute.xlu0 %4533
      %4535 = vrot.lane.b32.xlu0 %v4505, 104
      %v4536 = vpop.permute.xlu0 %4535
      %4537 = vrot.lane.b32.xlu0 %v4502, 96
      %v4538 = vpop.permute.xlu0 %4537
      %4539 = vrot.lane.b32.xlu0 %v4505, 96
      %v4540 = vpop.permute.xlu0 %4539
      %v4541 = vsel %vm1500, %v4507, 0
      %v4543 = vsel %vm1500, %v4508, 0
      %v4545 = vsel %vm1500, %v4538, 0
      %v4547 = vsel %vm1500, %v4540, 0
      %4549 = vmatpush.xpose.msra.mxu0 0.0
      %4550 = vmatpush.xpose.msra.mxu0 0.0
      %4551 = vmatpush.xpose.msra.mxu0 0.0
      %4552 = vmatpush.xpose.msra.mxu0 0.0
      %4553 = vmatpush.xpose.msra.mxu0 0.0
      %4554 = vmatpush.xpose.msra.mxu0 0.0
      %4555 = vmatpush.xpose.msra.mxu0 0.0
      %4556 = vmatpush.xpose.msra.mxu0 0.0
      %4557 = vmatpush.xpose.msra.mxu0 0.0
      %4558 = vmatpush.xpose.msra.mxu0 0.0
      %4559 = vmatpush.xpose.msra.mxu0 0.0
      %4560 = vmatpush.xpose.msra.mxu0 0.0
      %4561 = vmatpush.xpose.msra.mxu0 0.0
      %4562 = vmatpush.xpose.msra.mxu0 0.0
      %4563 = vmatpush.xpose.msra.mxu0 %v4547
      %4564 = vmatpush.xpose.msra.mxu0 %v4545
      %4565 = vmatmul.f32.gmra.mxu0 %v4541
      %v4566 = vpop.f32.mrf.mxu0
      %v4567 = vadd.f32 0.0, %v4566
      %4568 = vmatmul.f32.gmra.mxu0 %v4543
      %v4569 = vpop.f32.mrf.mxu0
      %v4570 = vadd.f32 0.0, %v4569
      %4571 = vdwg.mxu0
      %4572 = vrot.lane.b32.xlu0 %v4526, 96
      %v4573 = vpop.permute.xlu0 %4572
      %4574 = vrot.lane.b32.xlu0 %v4528, 96
      %v4575 = vpop.permute.xlu0 %4574
      %v4576 = vsel %vm1500, %v4512, 0
      %v4578 = vsel %vm1500, %v4514, 0
      %v4580 = vsel %vm1500, %v4573, 0
      %v4582 = vsel %vm1500, %v4575, 0
      %4584 = vmatpush.xpose.msra.mxu0 0.0
      %4585 = vmatpush.xpose.msra.mxu0 0.0
      %4586 = vmatpush.xpose.msra.mxu0 0.0
      %4587 = vmatpush.xpose.msra.mxu0 0.0
      %4588 = vmatpush.xpose.msra.mxu0 0.0
      %4589 = vmatpush.xpose.msra.mxu0 0.0
      %4590 = vmatpush.xpose.msra.mxu0 0.0
      %4591 = vmatpush.xpose.msra.mxu0 0.0
      %4592 = vmatpush.xpose.msra.mxu0 0.0
      %4593 = vmatpush.xpose.msra.mxu0 0.0
      %4594 = vmatpush.xpose.msra.mxu0 0.0
      %4595 = vmatpush.xpose.msra.mxu0 0.0
      %4596 = vmatpush.xpose.msra.mxu0 0.0
      %4597 = vmatpush.xpose.msra.mxu0 0.0
      %4598 = vmatpush.xpose.msra.mxu0 %v4582
      %4599 = vmatpush.xpose.msra.mxu0 %v4580
      %4600 = vmatmul.f32.gmra.mxu0 %v4576
      %v4601 = vpop.f32.mrf.mxu0
      %v4602 = vadd.f32 0.0, %v4601
      %4603 = vmatmul.f32.gmra.mxu0 %v4578
      %v4604 = vpop.f32.mrf.mxu0
      %v4605 = vadd.f32 0.0, %v4604
      %4606 = vdwg.mxu0
      %4607 = vrot.lane.b32.xlu0 %v4530, 96
      %v4608 = vpop.permute.xlu0 %4607
      %4609 = vrot.lane.b32.xlu0 %v4532, 96
      %v4610 = vpop.permute.xlu0 %4609
      %v4611 = vsel %vm1500, %v4516, 0
      %v4613 = vsel %vm1500, %v4518, 0
      %v4615 = vsel %vm1500, %v4608, 0
      %v4617 = vsel %vm1500, %v4610, 0
      %4619 = vmatpush.xpose.msra.mxu0 0.0
      %4620 = vmatpush.xpose.msra.mxu0 0.0
      %4621 = vmatpush.xpose.msra.mxu0 0.0
      %4622 = vmatpush.xpose.msra.mxu0 0.0
      %4623 = vmatpush.xpose.msra.mxu0 0.0
      %4624 = vmatpush.xpose.msra.mxu0 0.0
      %4625 = vmatpush.xpose.msra.mxu0 0.0
      %4626 = vmatpush.xpose.msra.mxu0 0.0
      %4627 = vmatpush.xpose.msra.mxu0 0.0
      %4628 = vmatpush.xpose.msra.mxu0 0.0
      %4629 = vmatpush.xpose.msra.mxu0 0.0
      %4630 = vmatpush.xpose.msra.mxu0 0.0
      %4631 = vmatpush.xpose.msra.mxu0 0.0
      %4632 = vmatpush.xpose.msra.mxu0 0.0
      %4633 = vmatpush.xpose.msra.mxu0 %v4617
      %4634 = vmatpush.xpose.msra.mxu0 %v4615
      %4635 = vmatmul.f32.gmra.mxu0 %v4611
      %v4636 = vpop.f32.mrf.mxu0
      %v4637 = vadd.f32 0.0, %v4636
      %4638 = vmatmul.f32.gmra.mxu0 %v4613
      %v4639 = vpop.f32.mrf.mxu0
      %v4640 = vadd.f32 0.0, %v4639
      %4641 = vdwg.mxu0
      %4642 = vrot.lane.b32.xlu0 %v4534, 96
      %v4643 = vpop.permute.xlu0 %4642
      %4644 = vrot.lane.b32.xlu0 %v4536, 96
      %v4645 = vpop.permute.xlu0 %4644
      %v4646 = vsel %vm1500, %v4520, 0
      %v4648 = vsel %vm1500, %v4522, 0
      %v4650 = vsel %vm1500, %v4643, 0
      %v4652 = vsel %vm1500, %v4645, 0
      %4654 = vmatpush.xpose.msra.mxu0 0.0
      %4655 = vmatpush.xpose.msra.mxu0 0.0
      %4656 = vmatpush.xpose.msra.mxu0 0.0
      %4657 = vmatpush.xpose.msra.mxu0 0.0
      %4658 = vmatpush.xpose.msra.mxu0 0.0
      %4659 = vmatpush.xpose.msra.mxu0 0.0
      %4660 = vmatpush.xpose.msra.mxu0 0.0
      %4661 = vmatpush.xpose.msra.mxu0 0.0
      %4662 = vmatpush.xpose.msra.mxu0 0.0
      %4663 = vmatpush.xpose.msra.mxu0 0.0
      %4664 = vmatpush.xpose.msra.mxu0 0.0
      %4665 = vmatpush.xpose.msra.mxu0 0.0
      %4666 = vmatpush.xpose.msra.mxu0 0.0
      %4667 = vmatpush.xpose.msra.mxu0 0.0
      %4668 = vmatpush.xpose.msra.mxu0 %v4652
      %4669 = vmatpush.xpose.msra.mxu0 %v4650
      %4670 = vmatmul.f32.gmra.mxu0 %v4646
      %v4671 = vpop.f32.mrf.mxu0
      %v4672 = vadd.f32 0.0, %v4671
      %4673 = vmatmul.f32.gmra.mxu0 %v4648
      %v4674 = vpop.f32.mrf.mxu0
      %v4675 = vadd.f32 0.0, %v4674
      %4676 = vdwg.mxu0
      %v4677 = vsel %vm1197, %v4567, -inf
      %4678 = vmax.xlane.f32.xlu0 %v4677
      %v4679 = vpop.xlane.xlu0 %4678
      %v4680 = vsel %vm1197, %v4570, -inf
      %4681 = vmax.xlane.f32.xlu0 %v4680
      %v4682 = vpop.xlane.xlu0 %4681
      %v4683 = vsel %vm1197, %v4602, -inf
      %4684 = vmax.xlane.f32.xlu0 %v4683
      %v4685 = vpop.xlane.xlu0 %4684
      %v4686 = vsel %vm1197, %v4605, -inf
      %4687 = vmax.xlane.f32.xlu0 %v4686
      %v4688 = vpop.xlane.xlu0 %4687
      %v4689 = vsel %vm1197, %v4637, -inf
      %4690 = vmax.xlane.f32.xlu0 %v4689
      %v4691 = vpop.xlane.xlu0 %4690
      %v4692 = vsel %vm1197, %v4640, -inf
      %4693 = vmax.xlane.f32.xlu0 %v4692
      %v4694 = vpop.xlane.xlu0 %4693
      %v4695 = vsel %vm1197, %v4672, -inf
      %4696 = vmax.xlane.f32.xlu0 %v4695
      %v4697 = vpop.xlane.xlu0 %4696
      %v4698 = vsel %vm1197, %v4675, -inf
      %4699 = vmax.xlane.f32.xlu0 %v4698
      %v4700 = vpop.xlane.xlu0 %4699
      %v4701 = vsub.f32 %v4567, %v4679
      %v4702 = vsub.f32 %v4570, %v4682
      %v4703 = vsub.f32 %v4602, %v4685
      %v4704 = vsub.f32 %v4605, %v4688
      %v4705 = vsub.f32 %v4637, %v4691
      %v4706 = vsub.f32 %v4640, %v4694
      %v4707 = vsub.f32 %v4672, %v4697
      %v4708 = vsub.f32 %v4675, %v4700
      %v4709 = vmul.f32 %v4701, 1.442695
      %v4710 = vpow.pop %v4709
      %v4711 = vmul.f32 %v4702, 1.442695
      %v4712 = vpow.pop %v4711
      %v4713 = vmul.f32 %v4703, 1.442695
      %v4714 = vpow.pop %v4713
      %v4715 = vmul.f32 %v4704, 1.442695
      %v4716 = vpow.pop %v4715
      %v4717 = vmul.f32 %v4705, 1.442695
      %v4718 = vpow.pop %v4717
      %v4719 = vmul.f32 %v4706, 1.442695
      %v4720 = vpow.pop %v4719
      %v4721 = vmul.f32 %v4707, 1.442695
      %v4722 = vpow.pop %v4721
      %v4723 = vmul.f32 %v4708, 1.442695
      %v4724 = vpow.pop %v4723
      %v4725 = vsel %vm1197, %v4710, 0.0
      %4726 = vadd.xlane.f32.xlu0 %v4725
      %v4727 = vpop.xlane.xlu0 %4726
      %v4728 = vsel %vm1197, %v4712, 0.0
      %4729 = vadd.xlane.f32.xlu0 %v4728
      %v4730 = vpop.xlane.xlu0 %4729
      %v4731 = vsel %vm1197, %v4714, 0.0
      %4732 = vadd.xlane.f32.xlu0 %v4731
      %v4733 = vpop.xlane.xlu0 %4732
      %v4734 = vsel %vm1197, %v4716, 0.0
      %4735 = vadd.xlane.f32.xlu0 %v4734
      %v4736 = vpop.xlane.xlu0 %4735
      %v4737 = vsel %vm1197, %v4718, 0.0
      %4738 = vadd.xlane.f32.xlu0 %v4737
      %v4739 = vpop.xlane.xlu0 %4738
      %v4740 = vsel %vm1197, %v4720, 0.0
      %4741 = vadd.xlane.f32.xlu0 %v4740
      %v4742 = vpop.xlane.xlu0 %4741
      %v4743 = vsel %vm1197, %v4722, 0.0
      %4744 = vadd.xlane.f32.xlu0 %v4743
      %v4745 = vpop.xlane.xlu0 %4744
      %v4746 = vsel %vm1197, %v4724, 0.0
      %4747 = vadd.xlane.f32.xlu0 %v4746
      %v4748 = vpop.xlane.xlu0 %4747
      %v4749 = vrcp.pop %v4727
      %v4750 = vrcp.pop %v4730
      %v4751 = vrcp.pop %v4733
      %v4752 = vrcp.pop %v4736
      %v4753 = vrcp.pop %v4739
      %v4754 = vrcp.pop %v4742
      %v4755 = vrcp.pop %v4745
      %v4756 = vrcp.pop %v4748
      %v4757 = vmul.f32 %v4710, %v4749
      %v4758 = vmul.f32 %v4712, %v4750
      %v4759 = vmul.f32 %v4714, %v4751
      %v4760 = vmul.f32 %v4716, %v4752
      %v4761 = vmul.f32 %v4718, %v4753
      %v4762 = vmul.f32 %v4720, %v4754
      %v4763 = vmul.f32 %v4722, %v4755
      %v4764 = vmul.f32 %v4724, %v4756
      %4765 = vrot.lane.b32.xlu0 %v4502, 64
      %v4766 = vpop.permute.xlu0 %4765
      %4767 = vrot.lane.b32.xlu0 %v4505, 64
      %v4768 = vpop.permute.xlu0 %4767
      %v4772 = vsel %vm1197, %v4757, 0
      %v4775 = vsel %vm1197, %v4758, 0
      %4777 = vmatpush.msra.mxu0 0.0
      %4778 = vmatpush.msra.mxu0 0.0
      %4779 = vmatpush.msra.mxu0 0.0
      %4780 = vmatpush.msra.mxu0 0.0
      %4781 = vmatpush.msra.mxu0 0.0
      %4782 = vmatpush.msra.mxu0 0.0
      %4783 = vmatpush.msra.mxu0 0.0
      %4784 = vmatpush.msra.mxu0 0.0
      %4785 = vmatpush.msra.mxu0 0.0
      %4786 = vmatpush.msra.mxu0 0.0
      %4787 = vmatpush.msra.mxu0 0.0
      %4788 = vmatpush.msra.mxu0 0.0
      %4789 = vmatpush.msra.mxu0 0.0
      %4790 = vmatpush.msra.mxu0 0.0
      %4791 = vmatpush.msra.mxu0 %v4768
      %4792 = vmatpush.msra.mxu0 %v4766
      %4793 = vmatmul.f32.gmra.mxu0 %v4772
      %v4794 = vpop.f32.mrf.mxu0
      %v4795 = vadd.f32 0.0, %v4794
      %4796 = vmatmul.f32.gmra.mxu0 %v4775
      %v4797 = vpop.f32.mrf.mxu0
      %v4798 = vadd.f32 0.0, %v4797
      %4799 = vdwg.mxu0
      %4800 = vrot.lane.b32.xlu0 %v4526, 64
      %v4801 = vpop.permute.xlu0 %4800
      %4802 = vrot.lane.b32.xlu0 %v4528, 64
      %v4803 = vpop.permute.xlu0 %4802
      %v4807 = vsel %vm1197, %v4759, 0
      %v4810 = vsel %vm1197, %v4760, 0
      %4812 = vmatpush.msra.mxu0 0.0
      %4813 = vmatpush.msra.mxu0 0.0
      %4814 = vmatpush.msra.mxu0 0.0
      %4815 = vmatpush.msra.mxu0 0.0
      %4816 = vmatpush.msra.mxu0 0.0
      %4817 = vmatpush.msra.mxu0 0.0
      %4818 = vmatpush.msra.mxu0 0.0
      %4819 = vmatpush.msra.mxu0 0.0
      %4820 = vmatpush.msra.mxu0 0.0
      %4821 = vmatpush.msra.mxu0 0.0
      %4822 = vmatpush.msra.mxu0 0.0
      %4823 = vmatpush.msra.mxu0 0.0
      %4824 = vmatpush.msra.mxu0 0.0
      %4825 = vmatpush.msra.mxu0 0.0
      %4826 = vmatpush.msra.mxu0 %v4803
      %4827 = vmatpush.msra.mxu0 %v4801
      %4828 = vmatmul.f32.gmra.mxu0 %v4807
      %v4829 = vpop.f32.mrf.mxu0
      %v4830 = vadd.f32 0.0, %v4829
      %4831 = vmatmul.f32.gmra.mxu0 %v4810
      %v4832 = vpop.f32.mrf.mxu0
      %v4833 = vadd.f32 0.0, %v4832
      %4834 = vdwg.mxu0
      %4835 = vrot.lane.b32.xlu0 %v4530, 64
      %v4836 = vpop.permute.xlu0 %4835
      %4837 = vrot.lane.b32.xlu0 %v4532, 64
      %v4838 = vpop.permute.xlu0 %4837
      %v4842 = vsel %vm1197, %v4761, 0
      %v4845 = vsel %vm1197, %v4762, 0
      %4847 = vmatpush.msra.mxu0 0.0
      %4848 = vmatpush.msra.mxu0 0.0
      %4849 = vmatpush.msra.mxu0 0.0
      %4850 = vmatpush.msra.mxu0 0.0
      %4851 = vmatpush.msra.mxu0 0.0
      %4852 = vmatpush.msra.mxu0 0.0
      %4853 = vmatpush.msra.mxu0 0.0
      %4854 = vmatpush.msra.mxu0 0.0
      %4855 = vmatpush.msra.mxu0 0.0
      %4856 = vmatpush.msra.mxu0 0.0
      %4857 = vmatpush.msra.mxu0 0.0
      %4858 = vmatpush.msra.mxu0 0.0
      %4859 = vmatpush.msra.mxu0 0.0
      %4860 = vmatpush.msra.mxu0 0.0
      %4861 = vmatpush.msra.mxu0 %v4838
      %4862 = vmatpush.msra.mxu0 %v4836
      %4863 = vmatmul.f32.gmra.mxu0 %v4842
      %v4864 = vpop.f32.mrf.mxu0
      %v4865 = vadd.f32 0.0, %v4864
      %4866 = vmatmul.f32.gmra.mxu0 %v4845
      %v4867 = vpop.f32.mrf.mxu0
      %v4868 = vadd.f32 0.0, %v4867
      %4869 = vdwg.mxu0
      %4870 = vrot.lane.b32.xlu0 %v4534, 64
      %v4871 = vpop.permute.xlu0 %4870
      %4872 = vrot.lane.b32.xlu0 %v4536, 64
      %v4873 = vpop.permute.xlu0 %4872
      %v4877 = vsel %vm1197, %v4763, 0
      %v4880 = vsel %vm1197, %v4764, 0
      %4882 = vmatpush.msra.mxu0 0.0
      %4883 = vmatpush.msra.mxu0 0.0
      %4884 = vmatpush.msra.mxu0 0.0
      %4885 = vmatpush.msra.mxu0 0.0
      %4886 = vmatpush.msra.mxu0 0.0
      %4887 = vmatpush.msra.mxu0 0.0
      %4888 = vmatpush.msra.mxu0 0.0
      %4889 = vmatpush.msra.mxu0 0.0
      %4890 = vmatpush.msra.mxu0 0.0
      %4891 = vmatpush.msra.mxu0 0.0
      %4892 = vmatpush.msra.mxu0 0.0
      %4893 = vmatpush.msra.mxu0 0.0
      %4894 = vmatpush.msra.mxu0 0.0
      %4895 = vmatpush.msra.mxu0 0.0
      %4896 = vmatpush.msra.mxu0 %v4873
      %4897 = vmatpush.msra.mxu0 %v4871
      %4898 = vmatmul.f32.gmra.mxu0 %v4877
      %v4899 = vpop.f32.mrf.mxu0
      %v4900 = vadd.f32 0.0, %v4899
      %4901 = vmatmul.f32.gmra.mxu0 %v4880
      %v4902 = vpop.f32.mrf.mxu0
      %v4903 = vadd.f32 0.0, %v4902
      %4904 = vdwg.mxu0
      %4907 = vrot.lane.b32.xlu0 %v4830, 8
      %v4908 = vpop.permute.xlu0 %4907
      %4909 = vrot.lane.b32.xlu0 %v4833, 8
      %v4910 = vpop.permute.xlu0 %4909
      %4915 = vrot.lane.b32.xlu0 %v4865, 16
      %v4916 = vpop.permute.xlu0 %4915
      %4917 = vrot.lane.b32.xlu0 %v4868, 16
      %v4918 = vpop.permute.xlu0 %4917
      %4923 = vrot.lane.b32.xlu0 %v4900, 24
      %v4924 = vpop.permute.xlu0 %4923
      %4925 = vrot.lane.b32.xlu0 %v4903, 24
      %v4926 = vpop.permute.xlu0 %4925
      %v4929 = vsel %vm1500, %v4795, %v4908
      %v4930 = vsel %vm1500, %v4798, %v4910
      %v4931 = vsel %vm1197, %v4929, %v4916
      %v4932 = vsel %vm1197, %v4930, %v4918
      %v4933 = vsel %vm1893, %v4931, %v4924
      %v4934 = vsel %vm1893, %v4932, %v4926
      %v4936 = vsel %vm1370, %v4933, 0
      %v4939 = vsel %vm1370, %v4934, 0
      %4941 = vmatpush.msra.mxu0 0.0
      %4942 = vmatpush.msra.mxu0 0.0
      %4943 = vmatpush.msra.mxu0 0.0
      %4944 = vmatpush.msra.mxu0 0.0
      %4945 = vmatpush.msra.mxu0 0.0
      %4946 = vmatpush.msra.mxu0 0.0
      %4947 = vmatpush.msra.mxu0 0.0
      %4948 = vmatpush.msra.mxu0 0.0
      %4949 = vmatpush.msra.mxu0 0.0
      %4950 = vmatpush.msra.mxu0 0.0
      %4951 = vmatpush.msra.mxu0 0.0
      %4952 = vmatpush.msra.mxu0 0.0
      %4953 = vmatpush.msra.mxu0 %v4398
      %4954 = vmatpush.msra.mxu0 %v4397
      %4955 = vmatpush.msra.mxu0 %v4396
      %4956 = vmatpush.msra.mxu0 %v4395
      %4957 = vmatmul.f32.gmra.mxu0 %v4936
      %v4958 = vpop.f32.mrf.mxu0
      %v4959 = vadd.f32 0.0, %v4958
      %4960 = vmatmul.f32.gmra.mxu0 %v4939
      %v4961 = vpop.f32.mrf.mxu0
      %v4962 = vadd.f32 0.0, %v4961
      %4963 = vdwg.mxu0
      %v4964 = vadd.f32 %v4381, %v4959
      %v4965 = vadd.f32 %v4382, %v4962
      %v4967 = vperm.slane %v4400, 0
      %v4969 = vadd.f32 %v4964, %v4967
      %v4970 = vadd.f32 %v4965, %v4967
      %v4971 = vsel %vm1370, %v4969, 0.0
      %4972 = vadd.xlane.f32.xlu0 %v4971
      %v4973 = vpop.xlane.xlu0 %4972
      %v4974 = vsel %vm1370, %v4970, 0.0
      %4975 = vadd.xlane.f32.xlu0 %v4974
      %v4976 = vpop.xlane.xlu0 %4975
      %v4977 = vmul.f32 %v4973, %v1383
      %v4978 = vmul.f32 %v4976, %v1383
      %v4979 = vsub.f32 %v4969, %v4977
      %v4980 = vsub.f32 %v4970, %v4978
      %v4981 = vmul.f32 %v4979, %v4979
      %v4982 = vmul.f32 %v4980, %v4980
      %v4983 = vsel %vm1370, %v4981, 0.0
      %4984 = vadd.xlane.f32.xlu0 %v4983
      %v4985 = vpop.xlane.xlu0 %4984
      %v4986 = vsel %vm1370, %v4982, 0.0
      %4987 = vadd.xlane.f32.xlu0 %v4986
      %v4988 = vpop.xlane.xlu0 %4987
      %v4989 = vmul.f32 %v4985, 0.032258064
      %v4990 = vmul.f32 %v4988, 0.032258064
      %v4991 = vrsqrt.pop %v4989
      %v4992 = vmul.f32 %v4991, %v4989
      %v4993 = vmul.f32 %v4992, %v4991
      %v4994 = vmul.f32 0.5, %v4993
      %v4995 = vsub.f32 1.5, %v4994
      %v4996 = vmul.f32 %v4991, %v4995
      %v4997 = vmul.f32 %v4989, %v4996
      %vm4998 = vcmp.eq.f32.partialorder %v4989, inf
      %v4999 = vsel %vm4998, %v4989, %v4997
      %vm5000 = vcmp.eq.f32.partialorder %v4989, 0.0
      %v5001 = vand.u32 %v4989, 2147483648
      %v5002 = vsel %vm5000, %v5001, %v4999
      %v5003 = vrsqrt.pop %v4990
      %v5004 = vmul.f32 %v5003, %v4990
      %v5005 = vmul.f32 %v5004, %v5003
      %v5006 = vmul.f32 0.5, %v5005
      %v5007 = vsub.f32 1.5, %v5006
      %v5008 = vmul.f32 %v5003, %v5007
      %v5009 = vmul.f32 %v4990, %v5008
      %vm5010 = vcmp.eq.f32.partialorder %v4990, inf
      %v5011 = vsel %vm5010, %v4990, %v5009
      %vm5012 = vcmp.eq.f32.partialorder %v4990, 0.0
      %v5013 = vand.u32 %v4990, 2147483648
      %v5014 = vsel %vm5012, %v5013, %v5011
      %v5015 = vadd.f32 %v5002, 1e-06
      %v5016 = vadd.f32 %v5014, 1e-06
      %v5017 = vrcp.pop %v5015
      %v5018 = vrcp.pop %v5016
      %v5019 = vperm.slane %v4384, 1
      %v5020 = vmul.f32 %v5019, %v4979
      %v5021 = vmul.f32 %v5019, %v4980
      %v5022 = vmul.f32 %v5020, %v5017
      %v5023 = vmul.f32 %v5021, %v5018
      %v5024 = vperm.slane %v4386, 1
      %v5025 = vadd.f32 %v5022, %v5024
      %v5026 = vadd.f32 %v5023, %v5024
      %5027 = vmatpush.msra.mxu0 0.0
      %5028 = vmatpush.msra.mxu0 0.0
      %5029 = vmatpush.msra.mxu0 0.0
      %5030 = vmatpush.msra.mxu0 0.0
      %5031 = vmatpush.msra.mxu0 0.0
      %5032 = vmatpush.msra.mxu0 0.0
      %5033 = vmatpush.msra.mxu0 0.0
      %5034 = vmatpush.msra.mxu0 0.0
      %5035 = vmatpush.msra.mxu0 0.0
      %5036 = vmatpush.msra.mxu0 0.0
      %5037 = vmatpush.msra.mxu0 0.0
      %5038 = vmatpush.msra.mxu0 0.0
      %5039 = vmatpush.msra.mxu0 0.0
      %5040 = vmatpush.msra.mxu0 0.0
      %5041 = vmatpush.msra.mxu0 %v5026
      %5042 = vmatpush.msra.mxu0 %v5025
      %5043 = vmatmul.f32.gmra.mxu0 %v1989
      %v5044 = vpop.f32.mrf.mxu0
      %v5045 = vadd.f32 0.0, %v5044
      %5046 = vmatmul.f32.gmra.mxu0 %v1992
      %v5047 = vpop.f32.mrf.mxu0
      %v5048 = vadd.f32 0.0, %v5047
      %5049 = vdwg.mxu0
      %v5051 = vperm.slane %v4407, 0
      %v5054 = vsel %vm1370, %v5045, 0
      %v5057 = vsel %vm1370, %v5048, 0
      %5059 = vmatpush.msra.mxu0 0.0
      %5060 = vmatpush.msra.mxu0 0.0
      %5061 = vmatpush.msra.mxu0 0.0
      %5062 = vmatpush.msra.mxu0 0.0
      %5063 = vmatpush.msra.mxu0 0.0
      %5064 = vmatpush.msra.mxu0 0.0
      %5065 = vmatpush.msra.mxu0 0.0
      %5066 = vmatpush.msra.mxu0 0.0
      %5067 = vmatpush.msra.mxu0 0.0
      %5068 = vmatpush.msra.mxu0 0.0
      %5069 = vmatpush.msra.mxu0 0.0
      %5070 = vmatpush.msra.mxu0 0.0
      %5071 = vmatpush.msra.mxu0 %v4405
      %5072 = vmatpush.msra.mxu0 %v4404
      %5073 = vmatpush.msra.mxu0 %v4403
      %5074 = vmatpush.msra.mxu0 %v4402
      %5075 = vmatmul.f32.gmra.mxu0 %v5054
      %v5076 = vpop.f32.mrf.mxu0
      %v5077 = vadd.f32 %v5051, %v5076
      %5078 = vmatmul.f32.gmra.mxu0 %v5057
      %v5079 = vpop.f32.mrf.mxu0
      %v5080 = vadd.f32 %v5051, %v5079
      %5081 = vdwg.mxu0
      %v5082 = vmax.f32 %v5077, 0.0
      %v5083 = vmax.f32 %v5080, 0.0
      %5084 = vmatpush.msra.mxu0 0.0
      %5085 = vmatpush.msra.mxu0 0.0
      %5086 = vmatpush.msra.mxu0 0.0
      %5087 = vmatpush.msra.mxu0 0.0
      %5088 = vmatpush.msra.mxu0 0.0
      %5089 = vmatpush.msra.mxu0 0.0
      %5090 = vmatpush.msra.mxu0 0.0
      %5091 = vmatpush.msra.mxu0 0.0
      %5092 = vmatpush.msra.mxu0 0.0
      %5093 = vmatpush.msra.mxu0 0.0
      %5094 = vmatpush.msra.mxu0 0.0
      %5095 = vmatpush.msra.mxu0 0.0
      %5096 = vmatpush.msra.mxu0 0.0
      %5097 = vmatpush.msra.mxu0 0.0
      %5098 = vmatpush.msra.mxu0 %v5083
      %5099 = vmatpush.msra.mxu0 %v5082
      %5100 = vmatmul.f32.gmra.mxu0 %v1989
      %v5101 = vpop.f32.mrf.mxu0
      %v5102 = vadd.f32 0.0, %v5101
      %5103 = vmatmul.f32.gmra.mxu0 %v1992
      %v5104 = vpop.f32.mrf.mxu0
      %v5105 = vadd.f32 0.0, %v5104
      %5106 = vdwg.mxu0
      %v5108 = vperm.slane %v4418, 0
      %v5111 = vsel %vm2077, %v5102, 0
      %v5114 = vsel %vm2077, %v5105, 0
      %5116 = vmatpush.msra.mxu0 0.0
      %5117 = vmatpush.msra.mxu0 0.0
      %5118 = vmatpush.msra.mxu0 0.0
      %5119 = vmatpush.msra.mxu0 0.0
      %5120 = vmatpush.msra.mxu0 0.0
      %5121 = vmatpush.msra.mxu0 0.0
      %5122 = vmatpush.msra.mxu0 0.0
      %5123 = vmatpush.msra.mxu0 0.0
      %5124 = vmatpush.msra.mxu0 %v4416
      %5125 = vmatpush.msra.mxu0 %v4415
      %5126 = vmatpush.msra.mxu0 %v4414
      %5127 = vmatpush.msra.mxu0 %v4413
      %5128 = vmatpush.msra.mxu0 %v4412
      %5129 = vmatpush.msra.mxu0 %v4411
      %5130 = vmatpush.msra.mxu0 %v4410
      %5131 = vmatpush.msra.mxu0 %v4409
      %5132 = vmatmul.f32.gmra.mxu0 %v5111
      %v5133 = vpop.f32.mrf.mxu0
      %v5134 = vadd.f32 %v5108, %v5133
      %5135 = vmatmul.f32.gmra.mxu0 %v5114
      %v5136 = vpop.f32.mrf.mxu0
      %v5137 = vadd.f32 %v5108, %v5136
      %5138 = vdwg.mxu0
      %v5139 = vadd.f32 %v4969, %v5134
      %v5140 = vadd.f32 %v4970, %v5137
      %v5141 = vld [vmem:[%s33] sm:$0xff]
      %v5142 = vld [vmem:[%s33 + $0x8] sm:$0xff]
      %v5143 = vld [vmem:[%s33 + $0x10] sm:$0xff]
      %v5144 = vld [vmem:[%s33 + $0x18] sm:$0xff]
      %v5145 = vld [vmem:[%s33 + $0x20] sm:$0xff]
      %v5146 = vld [vmem:[%s33 + $0x28] sm:$0xff]
      %v5147 = vld [vmem:[%s33 + $0x30] sm:$0xff]
      %v5148 = vld [vmem:[%s33 + $0x38] sm:$0xff]
      %v5149 = vld [vmem:[%s33 + $0x40] sm:$0xff]
      %v5150 = vld [vmem:[%s33 + $0x48] sm:$0xff]
      %v5151 = vld [vmem:[%s33 + $0x50] sm:$0xff]
      %v5152 = vld [vmem:[%s33 + $0x58] sm:$0xff]
      %v5153 = vld [vmem:[%s35] sm:$0x1]
      %5154 = vmatpush.msra.mxu0 0.0
      %5155 = vmatpush.msra.mxu0 0.0
      %5156 = vmatpush.msra.mxu0 0.0
      %5157 = vmatpush.msra.mxu0 0.0
      %5158 = vmatpush.msra.mxu0 0.0
      %5159 = vmatpush.msra.mxu0 0.0
      %5160 = vmatpush.msra.mxu0 0.0
      %5161 = vmatpush.msra.mxu0 0.0
      %5162 = vmatpush.msra.mxu0 0.0
      %5163 = vmatpush.msra.mxu0 0.0
      %5164 = vmatpush.msra.mxu0 0.0
      %5165 = vmatpush.msra.mxu0 0.0
      %5166 = vmatpush.msra.mxu0 0.0
      %5167 = vmatpush.msra.mxu0 0.0
      %5168 = vmatpush.msra.mxu0 %v5140
      %5169 = vmatpush.msra.mxu0 %v5139
      %5170 = vmatmul.f32.gmra.mxu0 %v1199
      %v5171 = vpop.f32.mrf.mxu0
      %v5172 = vadd.f32 0.0, %v5171
      %5173 = vmatmul.f32.gmra.mxu0 %v1202
      %v5174 = vpop.f32.mrf.mxu0
      %v5175 = vadd.f32 0.0, %v5174
      %5176 = vdwg.mxu0
      %5177 = vmatpush.msra.mxu0 0.0
      %5178 = vmatpush.msra.mxu0 0.0
      %5179 = vmatpush.msra.mxu0 0.0
      %5180 = vmatpush.msra.mxu0 0.0
      %5181 = vmatpush.msra.mxu0 0.0
      %5182 = vmatpush.msra.mxu0 0.0
      %5183 = vmatpush.msra.mxu0 0.0
      %5184 = vmatpush.msra.mxu0 0.0
      %5185 = vmatpush.msra.mxu0 0.0
      %5186 = vmatpush.msra.mxu0 0.0
      %5187 = vmatpush.msra.mxu0 0.0
      %5188 = vmatpush.msra.mxu0 0.0
      %5189 = vmatpush.msra.mxu0 0.0
      %5190 = vmatpush.msra.mxu0 0.0
      %5191 = vmatpush.msra.mxu0 %v5140
      %5192 = vmatpush.msra.mxu0 %v5139
      %5193 = vmatmul.f32.gmra.mxu0 %v1228
      %v5194 = vpop.f32.mrf.mxu0
      %v5195 = vadd.f32 0.0, %v5194
      %5196 = vmatmul.f32.gmra.mxu0 %v1231
      %v5197 = vpop.f32.mrf.mxu0
      %v5198 = vadd.f32 0.0, %v5197
      %5199 = vdwg.mxu0
      %5200 = vmatpush.msra.mxu0 0.0
      %5201 = vmatpush.msra.mxu0 0.0
      %5202 = vmatpush.msra.mxu0 0.0
      %5203 = vmatpush.msra.mxu0 0.0
      %5204 = vmatpush.msra.mxu0 0.0
      %5205 = vmatpush.msra.mxu0 0.0
      %5206 = vmatpush.msra.mxu0 0.0
      %5207 = vmatpush.msra.mxu0 0.0
      %5208 = vmatpush.msra.mxu0 0.0
      %5209 = vmatpush.msra.mxu0 0.0
      %5210 = vmatpush.msra.mxu0 0.0
      %5211 = vmatpush.msra.mxu0 0.0
      %5212 = vmatpush.msra.mxu0 0.0
      %5213 = vmatpush.msra.mxu0 0.0
      %5214 = vmatpush.msra.mxu0 %v5140
      %5215 = vmatpush.msra.mxu0 %v5139
      %5216 = vmatmul.f32.gmra.mxu0 %v1257
      %v5217 = vpop.f32.mrf.mxu0
      %v5218 = vadd.f32 0.0, %v5217
      %5219 = vmatmul.f32.gmra.mxu0 %v1260
      %v5220 = vpop.f32.mrf.mxu0
      %v5221 = vadd.f32 0.0, %v5220
      %5222 = vdwg.mxu0
      %5225 = vrot.lane.b32.xlu0 %v5195, 32
      %v5226 = vpop.permute.xlu0 %5225
      %5227 = vrot.lane.b32.xlu0 %v5198, 32
      %v5228 = vpop.permute.xlu0 %5227
      %5233 = vrot.lane.b32.xlu0 %v5218, 64
      %v5234 = vpop.permute.xlu0 %5233
      %5235 = vrot.lane.b32.xlu0 %v5221, 64
      %v5236 = vpop.permute.xlu0 %5235
      %v5239 = vsel %vm1370, %v5172, %v5226
      %v5240 = vsel %vm1370, %v5175, %v5228
      %v5241 = vsel %vm2077, %v5239, %v5234
      %v5242 = vsel %vm2077, %v5240, %v5236
      %v5244 = vperm.slane %v5153, 0
      %vm5246 = vcmask 785408
      %v5248 = vsel %vm5246, %v5241, 0
      %v5251 = vsel %vm5246, %v5242, 0
      %5253 = vmatpush.msra.mxu0 0.0
      %5254 = vmatpush.msra.mxu0 0.0
      %5255 = vmatpush.msra.mxu0 0.0
      %5256 = vmatpush.msra.mxu0 0.0
      %5257 = vmatpush.msra.mxu0 %v5152
      %5258 = vmatpush.msra.mxu0 %v5151
      %5259 = vmatpush.msra.mxu0 %v5150
      %5260 = vmatpush.msra.mxu0 %v5149
      %5261 = vmatpush.msra.mxu0 %v5148
      %5262 = vmatpush.msra.mxu0 %v5147
      %5263 = vmatpush.msra.mxu0 %v5146
      %5264 = vmatpush.msra.mxu0 %v5145
      %5265 = vmatpush.msra.mxu0 %v5144
      %5266 = vmatpush.msra.mxu0 %v5143
      %5267 = vmatpush.msra.mxu0 %v5142
      %5268 = vmatpush.msra.mxu0 %v5141
      %5269 = vmatmul.f32.gmra.mxu0 %v5248
      %v5270 = vpop.f32.mrf.mxu0
      %v5271 = vadd.f32 %v5244, %v5270
      %5272 = vmatmul.f32.gmra.mxu0 %v5251
      %v5273 = vpop.f32.mrf.mxu0
      %v5274 = vadd.f32 %v5244, %v5273
      %5275 = vdwg.mxu0
      %vm5276 = vcmask 23552
      %5277 = vst.msk [vmem:[%s1179] sm:$0xff] %vm5276, %v5271
      %5278 = vst.msk [vmem:[%s1179 + $0x8] sm:$0xff] %vm5276, %v5274
      %v5279 = vld [vmem:[%s1174] sm:$0x3]
      %v5280 = vld [vmem:[%s37] sm:$0xff]
      %v5281 = vld [vmem:[%s37 + $0x8] sm:$0xff]
      %v5282 = vld [vmem:[%s37 + $0x10] sm:$0xff]
      %v5283 = vld [vmem:[%s37 + $0x18] sm:$0xff]
      %v5284 = vld [vmem:[%s37 + $0x20] sm:$0xff]
      %v5285 = vld [vmem:[%s37 + $0x28] sm:$0xff]
      %v5286 = vld [vmem:[%s37 + $0x30] sm:$0xff]
      %v5287 = vld [vmem:[%s37 + $0x38] sm:$0xff]
      %v5288 = vld [vmem:[%s37 + $0x40] sm:$0xff]
      %v5289 = vld [vmem:[%s37 + $0x48] sm:$0xff]
      %v5290 = vld [vmem:[%s37 + $0x50] sm:$0xff]
      %v5291 = vld [vmem:[%s37 + $0x58] sm:$0xff]
      %v5292 = vld [vmem:[%s37 + $0x60] sm:$0xff]
      %v5293 = vld [vmem:[%s37 + $0x68] sm:$0xff]
      %v5294 = vld [vmem:[%s37 + $0x70] sm:$0xff]
      %v5295 = vld [vmem:[%s37 + $0x78] sm:$0xff]
      %v5296 = vld [vmem:[%s37 + $0x80] sm:$0xff]
      %v5297 = vld [vmem:[%s37 + $0x88] sm:$0xff]
      %v5298 = vld [vmem:[%s37 + $0x90] sm:$0xff]
      %v5299 = vld [vmem:[%s37 + $0x98] sm:$0xff]
      %v5300 = vld [vmem:[%s37 + $0xa0] sm:$0xff]
      %v5301 = vld [vmem:[%s37 + $0xa8] sm:$0xff]
      %v5302 = vld [vmem:[%s37 + $0xb0] sm:$0xff]
      %v5303 = vld [vmem:[%s37 + $0xb8] sm:$0xff]
      %v5304 = vld [vmem:[%s37 + $0xc0] sm:$0xff]
      %v5305 = vld [vmem:[%s39] sm:$0x1]
      %v5307 = vperm.slane %v5279, 0
      %v5308 = vperm.slane %v5279, 1
      %vm5310 = vcmask 588800
      %v5311 = vsel %vm5310, %v5308, 0
      %5313 = vmatpush.msra.mxu0 %v5295
      %5314 = vmatpush.msra.mxu0 %v5294
      %5315 = vmatpush.msra.mxu0 %v5293
      %5316 = vmatpush.msra.mxu0 %v5292
      %5317 = vmatpush.msra.mxu0 %v5291
      %5318 = vmatpush.msra.mxu0 %v5290
      %5319 = vmatpush.msra.mxu0 %v5289
      %5320 = vmatpush.msra.mxu0 %v5288
      %5321 = vmatpush.msra.mxu0 %v5287
      %5322 = vmatpush.msra.mxu0 %v5286
      %5323 = vmatpush.msra.mxu0 %v5285
      %5324 = vmatpush.msra.mxu0 %v5284
      %5325 = vmatpush.msra.mxu0 %v5283
      %5326 = vmatpush.msra.mxu0 %v5282
      %5327 = vmatpush.msra.mxu0 %v5281
      %5328 = vmatpush.msra.mxu0 %v5280
      %5329 = vmatmul.f32.gmra.mxu0 %v5307
      %v5330 = vpop.f32.mrf.mxu0
      %v5331 = vadd.f32 %v5305, %v5330
      %5332 = vdwg.mxu0
      %5333 = vmatpush.msra.mxu0 0.0
      %5334 = vmatpush.msra.mxu0 0.0
      %5335 = vmatpush.msra.mxu0 0.0
      %5336 = vmatpush.msra.mxu0 0.0
      %5337 = vmatpush.msra.mxu0 0.0
      %5338 = vmatpush.msra.mxu0 0.0
      %5339 = vmatpush.msra.mxu0 0.0
      %5340 = vmatpush.msra.mxu0 %v5304
      %5341 = vmatpush.msra.mxu0 %v5303
      %5342 = vmatpush.msra.mxu0 %v5302
      %5343 = vmatpush.msra.mxu0 %v5301
      %5344 = vmatpush.msra.mxu0 %v5300
      %5345 = vmatpush.msra.mxu0 %v5299
      %5346 = vmatpush.msra.mxu0 %v5298
      %5347 = vmatpush.msra.mxu0 %v5297
      %5348 = vmatpush.msra.mxu0 %v5296
      %5349 = vmatmul.f32.gmra.mxu0 %v5311
      %v5350 = vpop.f32.mrf.mxu0
      %v5351 = vadd.f32 %v5331, %v5350
      %5352 = vdwg.mxu0
      %v5353 = vmax.f32 %v5351, 0.0
      %v5354 = vld [vmem:[%s41] sm:$0xff]
      %v5355 = vld [vmem:[%s41 + $0x8] sm:$0xff]
      %v5356 = vld [vmem:[%s41 + $0x10] sm:$0xff]
      %v5357 = vld [vmem:[%s41 + $0x18] sm:$0xff]
      %v5358 = vld [vmem:[%s41 + $0x20] sm:$0xff]
      %v5359 = vld [vmem:[%s41 + $0x28] sm:$0xff]
      %v5360 = vld [vmem:[%s41 + $0x30] sm:$0xff]
      %v5361 = vld [vmem:[%s41 + $0x38] sm:$0xff]
      %v5362 = vld [vmem:[%s43] sm:$0x1]
      %v5364 = vsel %vm2077, %v5353, 0
      %5366 = vmatpush.msra.mxu0 0.0
      %5367 = vmatpush.msra.mxu0 0.0
      %5368 = vmatpush.msra.mxu0 0.0
      %5369 = vmatpush.msra.mxu0 0.0
      %5370 = vmatpush.msra.mxu0 0.0
      %5371 = vmatpush.msra.mxu0 0.0
      %5372 = vmatpush.msra.mxu0 0.0
      %5373 = vmatpush.msra.mxu0 0.0
      %5374 = vmatpush.msra.mxu0 %v5361
      %5375 = vmatpush.msra.mxu0 %v5360
      %5376 = vmatpush.msra.mxu0 %v5359
      %5377 = vmatpush.msra.mxu0 %v5358
      %5378 = vmatpush.msra.mxu0 %v5357
      %5379 = vmatpush.msra.mxu0 %v5356
      %5380 = vmatpush.msra.mxu0 %v5355
      %5381 = vmatpush.msra.mxu0 %v5354
      %5382 = vmatmul.f32.gmra.mxu0 %v5364
      %v5383 = vpop.f32.mrf.mxu0
      %v5384 = vadd.f32 %v5362, %v5383
      %5385 = vdwg.mxu0
      %v5386 = vmax.f32 %v5384, 0.0
      %v5387 = vperm.slane %v5386, 0
      %5389 = vrot.lane.b32.xlu0 %v5387, 2
      %v5390 = vpop.permute.xlu0 %5389
      %v5392 = vsel %vm1301, %v1193, %v5390
      %v5393 = vsel %vm1301, %v1194, %v5390
      %v5394 = vld [vmem:[%s45] sm:$0xff]
      %v5395 = vld [vmem:[%s45 + $0x8] sm:$0xff]
      %v5396 = vld [vmem:[%s45 + $0x10] sm:$0xff]
      %v5397 = vld [vmem:[%s45 + $0x18] sm:$0xff]
      %v5398 = vld [vmem:[%s45 + $0x20] sm:$0xff]
      %v5399 = vld [vmem:[%s45 + $0x28] sm:$0xff]
      %v5400 = vld [vmem:[%s45 + $0x30] sm:$0xff]
      %v5401 = vld [vmem:[%s45 + $0x38] sm:$0xff]
      %v5402 = vld [vmem:[%s45 + $0x40] sm:$0xff]
      %v5403 = vld [vmem:[%s45 + $0x48] sm:$0xff]
      %v5404 = vld [vmem:[%s45 + $0x50] sm:$0xff]
      %v5405 = vld [vmem:[%s45 + $0x58] sm:$0xff]
      %v5406 = vld [vmem:[%s45 + $0x60] sm:$0xff]
      %v5407 = vld [vmem:[%s45 + $0x68] sm:$0xff]
      %v5408 = vld [vmem:[%s45 + $0x70] sm:$0xff]
      %v5409 = vld [vmem:[%s45 + $0x78] sm:$0xff]
      %v5410 = vld [vmem:[%s45 + $0x80] sm:$0xff]
      %v5411 = vld [vmem:[%s45 + $0x88] sm:$0xff]
      %v5412 = vld [vmem:[%s45 + $0x90] sm:$0xff]
      %v5413 = vld [vmem:[%s45 + $0x98] sm:$0xff]
      %v5414 = vld [vmem:[%s45 + $0xa0] sm:$0xff]
      %v5415 = vld [vmem:[%s45 + $0xa8] sm:$0xff]
      %v5416 = vld [vmem:[%s45 + $0xb0] sm:$0xff]
      %v5417 = vld [vmem:[%s45 + $0xb8] sm:$0xff]
      %v5418 = vld [vmem:[%s45 + $0xc0] sm:$0x3f]
      %v5419 = vld [vmem:[%s47] sm:$0x1]
      %5420 = vmatpush.msra.mxu0 0.0
      %5421 = vmatpush.msra.mxu0 0.0
      %5422 = vmatpush.msra.mxu0 0.0
      %5423 = vmatpush.msra.mxu0 0.0
      %5424 = vmatpush.msra.mxu0 0.0
      %5425 = vmatpush.msra.mxu0 0.0
      %5426 = vmatpush.msra.mxu0 0.0
      %5427 = vmatpush.msra.mxu0 0.0
      %5428 = vmatpush.msra.mxu0 0.0
      %5429 = vmatpush.msra.mxu0 0.0
      %5430 = vmatpush.msra.mxu0 0.0
      %5431 = vmatpush.msra.mxu0 0.0
      %5432 = vmatpush.msra.mxu0 0.0
      %5433 = vmatpush.msra.mxu0 0.0
      %5434 = vmatpush.msra.mxu0 %v5393
      %5435 = vmatpush.msra.mxu0 %v5392
      %5436 = vmatmul.f32.gmra.mxu0 %v1199
      %v5437 = vpop.f32.mrf.mxu0
      %v5438 = vadd.f32 0.0, %v5437
      %5439 = vmatmul.f32.gmra.mxu0 %v1202
      %v5440 = vpop.f32.mrf.mxu0
      %v5441 = vadd.f32 0.0, %v5440
      %5442 = vdwg.mxu0
      %5443 = vmatpush.msra.mxu0 0.0
      %5444 = vmatpush.msra.mxu0 0.0
      %5445 = vmatpush.msra.mxu0 0.0
      %5446 = vmatpush.msra.mxu0 0.0
      %5447 = vmatpush.msra.mxu0 0.0
      %5448 = vmatpush.msra.mxu0 0.0
      %5449 = vmatpush.msra.mxu0 0.0
      %5450 = vmatpush.msra.mxu0 0.0
      %5451 = vmatpush.msra.mxu0 0.0
      %5452 = vmatpush.msra.mxu0 0.0
      %5453 = vmatpush.msra.mxu0 0.0
      %5454 = vmatpush.msra.mxu0 0.0
      %5455 = vmatpush.msra.mxu0 0.0
      %5456 = vmatpush.msra.mxu0 0.0
      %5457 = vmatpush.msra.mxu0 %v5393
      %5458 = vmatpush.msra.mxu0 %v5392
      %5459 = vmatmul.f32.gmra.mxu0 %v1228
      %v5460 = vpop.f32.mrf.mxu0
      %v5461 = vadd.f32 0.0, %v5460
      %5462 = vmatmul.f32.gmra.mxu0 %v1231
      %v5463 = vpop.f32.mrf.mxu0
      %v5464 = vadd.f32 0.0, %v5463
      %5465 = vdwg.mxu0
      %5466 = vmatpush.msra.mxu0 0.0
      %5467 = vmatpush.msra.mxu0 0.0
      %5468 = vmatpush.msra.mxu0 0.0
      %5469 = vmatpush.msra.mxu0 0.0
      %5470 = vmatpush.msra.mxu0 0.0
      %5471 = vmatpush.msra.mxu0 0.0
      %5472 = vmatpush.msra.mxu0 0.0
      %5473 = vmatpush.msra.mxu0 0.0
      %5474 = vmatpush.msra.mxu0 0.0
      %5475 = vmatpush.msra.mxu0 0.0
      %5476 = vmatpush.msra.mxu0 0.0
      %5477 = vmatpush.msra.mxu0 0.0
      %5478 = vmatpush.msra.mxu0 0.0
      %5479 = vmatpush.msra.mxu0 0.0
      %5480 = vmatpush.msra.mxu0 %v5393
      %5481 = vmatpush.msra.mxu0 %v5392
      %5482 = vmatmul.f32.gmra.mxu0 %v1257
      %v5483 = vpop.f32.mrf.mxu0
      %v5484 = vadd.f32 0.0, %v5483
      %5485 = vmatmul.f32.gmra.mxu0 %v1260
      %v5486 = vpop.f32.mrf.mxu0
      %v5487 = vadd.f32 0.0, %v5486
      %5488 = vdwg.mxu0
      %5491 = vrot.lane.b32.xlu0 %v5461, 66
      %v5492 = vpop.permute.xlu0 %5491
      %5493 = vrot.lane.b32.xlu0 %v5464, 66
      %v5494 = vpop.permute.xlu0 %5493
      %5499 = vrot.lane.b32.xlu0 %v5484, 4
      %v5500 = vpop.permute.xlu0 %5499
      %5501 = vrot.lane.b32.xlu0 %v5487, 4
      %v5502 = vpop.permute.xlu0 %5501
      %vm5505 = vcmask 539648
      %v5506 = vsel %vm5505, %v5438, %v5492
      %v5507 = vsel %vm5505, %v5441, %v5494
      %v5508 = vsel %vm1304, %v5492, %v5500
      %v5509 = vsel %vm1304, %v5494, %v5502
      %v5511 = vperm.slane %v5419, 0
      %vm5513 = vcmask 572416
      %v5515 = vsel %vm5513, %v5508, 0
      %v5518 = vsel %vm5513, %v5509, 0
      %v5521 = vsel %vm1317, %v5418, 0
      %5523 = vmatpush.msra.mxu0 %v5409
      %5524 = vmatpush.msra.mxu0 %v5408
      %5525 = vmatpush.msra.mxu0 %v5407
      %5526 = vmatpush.msra.mxu0 %v5406
      %5527 = vmatpush.msra.mxu0 %v5405
      %5528 = vmatpush.msra.mxu0 %v5404
      %5529 = vmatpush.msra.mxu0 %v5403
      %5530 = vmatpush.msra.mxu0 %v5402
      %5531 = vmatpush.msra.mxu0 %v5401
      %5532 = vmatpush.msra.mxu0 %v5400
      %5533 = vmatpush.msra.mxu0 %v5399
      %5534 = vmatpush.msra.mxu0 %v5398
      %5535 = vmatpush.msra.mxu0 %v5397
      %5536 = vmatpush.msra.mxu0 %v5396
      %5537 = vmatpush.msra.mxu0 %v5395
      %5538 = vmatpush.msra.mxu0 %v5394
      %5539 = vmatmul.f32.gmra.mxu0 %v5506
      %v5540 = vpop.f32.mrf.mxu0
      %v5541 = vadd.f32 %v5511, %v5540
      %5542 = vmatmul.f32.gmra.mxu0 %v5507
      %v5543 = vpop.f32.mrf.mxu0
      %v5544 = vadd.f32 %v5511, %v5543
      %5545 = vdwg.mxu0
      %5546 = vmatpush.msra.mxu0 0.0
      %5547 = vmatpush.msra.mxu0 0.0
      %5548 = vmatpush.msra.mxu0 0.0
      %5549 = vmatpush.msra.mxu0 0.0
      %5550 = vmatpush.msra.mxu0 0.0
      %5551 = vmatpush.msra.mxu0 0.0
      %5552 = vmatpush.msra.mxu0 0.0
      %5553 = vmatpush.msra.mxu0 %v5521
      %5554 = vmatpush.msra.mxu0 %v5417
      %5555 = vmatpush.msra.mxu0 %v5416
      %5556 = vmatpush.msra.mxu0 %v5415
      %5557 = vmatpush.msra.mxu0 %v5414
      %5558 = vmatpush.msra.mxu0 %v5413
      %5559 = vmatpush.msra.mxu0 %v5412
      %5560 = vmatpush.msra.mxu0 %v5411
      %5561 = vmatpush.msra.mxu0 %v5410
      %5562 = vmatmul.f32.gmra.mxu0 %v5515
      %v5563 = vpop.f32.mrf.mxu0
      %v5564 = vadd.f32 %v5541, %v5563
      %5565 = vmatmul.f32.gmra.mxu0 %v5518
      %v5566 = vpop.f32.mrf.mxu0
      %v5567 = vadd.f32 %v5544, %v5566
      %5568 = vdwg.mxu0
      %v5569 = vld [vmem:[%s49] sm:$0x3]
      %v5570 = vld [vmem:[%s51] sm:$0x3]
      %v5571 = vld [vmem:[%s53] sm:$0xff]
      %v5572 = vld [vmem:[%s53 + $0x8] sm:$0xff]
      %v5573 = vld [vmem:[%s55] sm:$0x1]
      %v5574 = vld [vmem:[%s57] sm:$0xff]
      %v5575 = vld [vmem:[%s57 + $0x8] sm:$0xff]
      %v5576 = vld [vmem:[%s59] sm:$0x1]
      %v5577 = vld [vmem:[%s61] sm:$0xff]
      %v5578 = vld [vmem:[%s61 + $0x8] sm:$0xff]
      %v5579 = vld [vmem:[%s63] sm:$0x1]
      %v5580 = vld [vmem:[%s65] sm:$0xff]
      %v5581 = vld [vmem:[%s65 + $0x8] sm:$0xff]
      %v5582 = vld [vmem:[%s65 + $0x10] sm:$0xff]
      %v5583 = vld [vmem:[%s65 + $0x18] sm:$0xff]
      %v5584 = vld [vmem:[%s67] sm:$0x1]
      %v5585 = vsel %vm1197, %v5564, 0.0
      %5586 = vadd.xlane.f32.xlu0 %v5585
      %v5587 = vpop.xlane.xlu0 %5586
      %v5588 = vsel %vm1197, %v5567, 0.0
      %5589 = vadd.xlane.f32.xlu0 %v5588
      %v5590 = vpop.xlane.xlu0 %5589
      %v5591 = vrcp.pop 16.0
      %v5592 = vmul.f32 16.0, %v5591
      %v5593 = vsub.f32 1.0, %v5592
      %v5594 = vmul.f32 %v5591, %v5593
      %v5595 = vadd.f32 %v5591, %v5594
      %vm5596 = vweird.f32 %v5591
      %v5597 = vsel %vm5596, %v5591, %v5595
      %v5598 = vmul.f32 %v5587, %v5597
      %v5599 = vmul.f32 %v5590, %v5597
      %v5600 = vsub.f32 %v5564, %v5598
      %v5601 = vsub.f32 %v5567, %v5599
      %v5602 = vmul.f32 %v5600, %v5600
      %v5603 = vmul.f32 %v5601, %v5601
      %v5604 = vsel %vm1197, %v5602, 0.0
      %5605 = vadd.xlane.f32.xlu0 %v5604
      %v5606 = vpop.xlane.xlu0 %5605
      %v5607 = vsel %vm1197, %v5603, 0.0
      %5608 = vadd.xlane.f32.xlu0 %v5607
      %v5609 = vpop.xlane.xlu0 %5608
      %v5610 = vmul.f32 %v5606, 0.06666667
      %v5611 = vmul.f32 %v5609, 0.06666667
      %v5612 = vrsqrt.pop %v5610
      %v5613 = vmul.f32 %v5612, %v5610
      %v5614 = vmul.f32 %v5613, %v5612
      %v5615 = vmul.f32 0.5, %v5614
      %v5616 = vsub.f32 1.5, %v5615
      %v5617 = vmul.f32 %v5612, %v5616
      %v5618 = vmul.f32 %v5610, %v5617
      %vm5619 = vcmp.eq.f32.partialorder %v5610, inf
      %v5620 = vsel %vm5619, %v5610, %v5618
      %vm5621 = vcmp.eq.f32.partialorder %v5610, 0.0
      %v5622 = vand.u32 %v5610, 2147483648
      %v5623 = vsel %vm5621, %v5622, %v5620
      %v5624 = vrsqrt.pop %v5611
      %v5625 = vmul.f32 %v5624, %v5611
      %v5626 = vmul.f32 %v5625, %v5624
      %v5627 = vmul.f32 0.5, %v5626
      %v5628 = vsub.f32 1.5, %v5627
      %v5629 = vmul.f32 %v5624, %v5628
      %v5630 = vmul.f32 %v5611, %v5629
      %vm5631 = vcmp.eq.f32.partialorder %v5611, inf
      %v5632 = vsel %vm5631, %v5611, %v5630
      %vm5633 = vcmp.eq.f32.partialorder %v5611, 0.0
      %v5634 = vand.u32 %v5611, 2147483648
      %v5635 = vsel %vm5633, %v5634, %v5632
      %v5636 = vadd.f32 %v5623, 1e-06
      %v5637 = vadd.f32 %v5635, 1e-06
      %v5638 = vrcp.pop %v5636
      %v5639 = vrcp.pop %v5637
      %v5640 = vperm.slane %v5569, 0
      %v5641 = vmul.f32 %v5640, %v5600
      %v5642 = vmul.f32 %v5640, %v5601
      %v5643 = vmul.f32 %v5641, %v5638
      %v5644 = vmul.f32 %v5642, %v5639
      %v5645 = vperm.slane %v5570, 0
      %v5646 = vadd.f32 %v5643, %v5645
      %v5647 = vadd.f32 %v5644, %v5645
      %v5649 = vperm.slane %v5573, 0
      %v5652 = vsel %vm1197, %v5646, 0
      %v5655 = vsel %vm1197, %v5647, 0
      %5657 = vmatpush.msra.mxu0 0.0
      %5658 = vmatpush.msra.mxu0 0.0
      %5659 = vmatpush.msra.mxu0 0.0
      %5660 = vmatpush.msra.mxu0 0.0
      %5661 = vmatpush.msra.mxu0 0.0
      %5662 = vmatpush.msra.mxu0 0.0
      %5663 = vmatpush.msra.mxu0 0.0
      %5664 = vmatpush.msra.mxu0 0.0
      %5665 = vmatpush.msra.mxu0 0.0
      %5666 = vmatpush.msra.mxu0 0.0
      %5667 = vmatpush.msra.mxu0 0.0
      %5668 = vmatpush.msra.mxu0 0.0
      %5669 = vmatpush.msra.mxu0 0.0
      %5670 = vmatpush.msra.mxu0 0.0
      %5671 = vmatpush.msra.mxu0 %v5572
      %5672 = vmatpush.msra.mxu0 %v5571
      %5673 = vmatmul.f32.gmra.mxu0 %v5652
      %v5674 = vpop.f32.mrf.mxu0
      %v5675 = vadd.f32 %v5649, %v5674
      %5676 = vmatmul.f32.gmra.mxu0 %v5655
      %v5677 = vpop.f32.mrf.mxu0
      %v5678 = vadd.f32 %v5649, %v5677
      %5679 = vdwg.mxu0
      %v5680 = vmul.f32 %v5675, 0.5
      %v5681 = vmul.f32 %v5678, 0.5
      %5684 = vrot.lane.b32.xlu0 %v5680, 124
      %v5685 = vpop.permute.xlu0 %5684
      %5686 = vrot.lane.b32.xlu0 %v5681, 124
      %v5687 = vpop.permute.xlu0 %5686
      %5688 = vrot.lane.b32.xlu0 %v5680, 120
      %v5689 = vpop.permute.xlu0 %5688
      %5690 = vrot.lane.b32.xlu0 %v5681, 120
      %v5691 = vpop.permute.xlu0 %5690
      %5692 = vrot.lane.b32.xlu0 %v5680, 116
      %v5693 = vpop.permute.xlu0 %5692
      %5694 = vrot.lane.b32.xlu0 %v5681, 116
      %v5695 = vpop.permute.xlu0 %5694
      %5698 = vrot.lane.b32.xlu0 %v5675, 124
      %v5699 = vpop.permute.xlu0 %5698
      %5700 = vrot.lane.b32.xlu0 %v5678, 124
      %v5701 = vpop.permute.xlu0 %5700
      %5702 = vrot.lane.b32.xlu0 %v5675, 120
      %v5703 = vpop.permute.xlu0 %5702
      %5704 = vrot.lane.b32.xlu0 %v5678, 120
      %v5705 = vpop.permute.xlu0 %5704
      %5706 = vrot.lane.b32.xlu0 %v5675, 116
      %v5707 = vpop.permute.xlu0 %5706
      %5708 = vrot.lane.b32.xlu0 %v5678, 116
      %v5709 = vpop.permute.xlu0 %5708
      %5710 = vrot.lane.b32.xlu0 %v5675, 112
      %v5711 = vpop.permute.xlu0 %5710
      %5712 = vrot.lane.b32.xlu0 %v5678, 112
      %v5713 = vpop.permute.xlu0 %5712
      %v5714 = vsel %vm1304, %v5680, 0
      %v5716 = vsel %vm1304, %v5681, 0
      %v5718 = vsel %vm1304, %v5711, 0
      %v5720 = vsel %vm1304, %v5713, 0
      %5722 = vmatpush.xpose.msra.mxu0 0.0
      %5723 = vmatpush.xpose.msra.mxu0 0.0
      %5724 = vmatpush.xpose.msra.mxu0 0.0
      %5725 = vmatpush.xpose.msra.mxu0 0.0
      %5726 = vmatpush.xpose.msra.mxu0 0.0
      %5727 = vmatpush.xpose.msra.mxu0 0.0
      %5728 = vmatpush.xpose.msra.mxu0 0.0
      %5729 = vmatpush.xpose.msra.mxu0 0.0
      %5730 = vmatpush.xpose.msra.mxu0 0.0
      %5731 = vmatpush.xpose.msra.mxu0 0.0
      %5732 = vmatpush.xpose.msra.mxu0 0.0
      %5733 = vmatpush.xpose.msra.mxu0 0.0
      %5734 = vmatpush.xpose.msra.mxu0 0.0
      %5735 = vmatpush.xpose.msra.mxu0 0.0
      %5736 = vmatpush.xpose.msra.mxu0 %v5720
      %5737 = vmatpush.xpose.msra.mxu0 %v5718
      %5738 = vmatmul.f32.gmra.mxu0 %v5714
      %v5739 = vpop.f32.mrf.mxu0
      %v5740 = vadd.f32 0.0, %v5739
      %5741 = vmatmul.f32.gmra.mxu0 %v5716
      %v5742 = vpop.f32.mrf.mxu0
      %v5743 = vadd.f32 0.0, %v5742
      %5744 = vdwg.mxu0
      %5745 = vrot.lane.b32.xlu0 %v5699, 112
      %v5746 = vpop.permute.xlu0 %5745
      %5747 = vrot.lane.b32.xlu0 %v5701, 112
      %v5748 = vpop.permute.xlu0 %5747
      %v5749 = vsel %vm1304, %v5685, 0
      %v5751 = vsel %vm1304, %v5687, 0
      %v5753 = vsel %vm1304, %v5746, 0
      %v5755 = vsel %vm1304, %v5748, 0
      %5757 = vmatpush.xpose.msra.mxu0 0.0
      %5758 = vmatpush.xpose.msra.mxu0 0.0
      %5759 = vmatpush.xpose.msra.mxu0 0.0
      %5760 = vmatpush.xpose.msra.mxu0 0.0
      %5761 = vmatpush.xpose.msra.mxu0 0.0
      %5762 = vmatpush.xpose.msra.mxu0 0.0
      %5763 = vmatpush.xpose.msra.mxu0 0.0
      %5764 = vmatpush.xpose.msra.mxu0 0.0
      %5765 = vmatpush.xpose.msra.mxu0 0.0
      %5766 = vmatpush.xpose.msra.mxu0 0.0
      %5767 = vmatpush.xpose.msra.mxu0 0.0
      %5768 = vmatpush.xpose.msra.mxu0 0.0
      %5769 = vmatpush.xpose.msra.mxu0 0.0
      %5770 = vmatpush.xpose.msra.mxu0 0.0
      %5771 = vmatpush.xpose.msra.mxu0 %v5755
      %5772 = vmatpush.xpose.msra.mxu0 %v5753
      %5773 = vmatmul.f32.gmra.mxu0 %v5749
      %v5774 = vpop.f32.mrf.mxu0
      %v5775 = vadd.f32 0.0, %v5774
      %5776 = vmatmul.f32.gmra.mxu0 %v5751
      %v5777 = vpop.f32.mrf.mxu0
      %v5778 = vadd.f32 0.0, %v5777
      %5779 = vdwg.mxu0
      %5780 = vrot.lane.b32.xlu0 %v5703, 112
      %v5781 = vpop.permute.xlu0 %5780
      %5782 = vrot.lane.b32.xlu0 %v5705, 112
      %v5783 = vpop.permute.xlu0 %5782
      %v5784 = vsel %vm1304, %v5689, 0
      %v5786 = vsel %vm1304, %v5691, 0
      %v5788 = vsel %vm1304, %v5781, 0
      %v5790 = vsel %vm1304, %v5783, 0
      %5792 = vmatpush.xpose.msra.mxu0 0.0
      %5793 = vmatpush.xpose.msra.mxu0 0.0
      %5794 = vmatpush.xpose.msra.mxu0 0.0
      %5795 = vmatpush.xpose.msra.mxu0 0.0
      %5796 = vmatpush.xpose.msra.mxu0 0.0
      %5797 = vmatpush.xpose.msra.mxu0 0.0
      %5798 = vmatpush.xpose.msra.mxu0 0.0
      %5799 = vmatpush.xpose.msra.mxu0 0.0
      %5800 = vmatpush.xpose.msra.mxu0 0.0
      %5801 = vmatpush.xpose.msra.mxu0 0.0
      %5802 = vmatpush.xpose.msra.mxu0 0.0
      %5803 = vmatpush.xpose.msra.mxu0 0.0
      %5804 = vmatpush.xpose.msra.mxu0 0.0
      %5805 = vmatpush.xpose.msra.mxu0 0.0
      %5806 = vmatpush.xpose.msra.mxu0 %v5790
      %5807 = vmatpush.xpose.msra.mxu0 %v5788
      %5808 = vmatmul.f32.gmra.mxu0 %v5784
      %v5809 = vpop.f32.mrf.mxu0
      %v5810 = vadd.f32 0.0, %v5809
      %5811 = vmatmul.f32.gmra.mxu0 %v5786
      %v5812 = vpop.f32.mrf.mxu0
      %v5813 = vadd.f32 0.0, %v5812
      %5814 = vdwg.mxu0
      %5815 = vrot.lane.b32.xlu0 %v5707, 112
      %v5816 = vpop.permute.xlu0 %5815
      %5817 = vrot.lane.b32.xlu0 %v5709, 112
      %v5818 = vpop.permute.xlu0 %5817
      %v5819 = vsel %vm1304, %v5693, 0
      %v5821 = vsel %vm1304, %v5695, 0
      %v5823 = vsel %vm1304, %v5816, 0
      %v5825 = vsel %vm1304, %v5818, 0
      %5827 = vmatpush.xpose.msra.mxu0 0.0
      %5828 = vmatpush.xpose.msra.mxu0 0.0
      %5829 = vmatpush.xpose.msra.mxu0 0.0
      %5830 = vmatpush.xpose.msra.mxu0 0.0
      %5831 = vmatpush.xpose.msra.mxu0 0.0
      %5832 = vmatpush.xpose.msra.mxu0 0.0
      %5833 = vmatpush.xpose.msra.mxu0 0.0
      %5834 = vmatpush.xpose.msra.mxu0 0.0
      %5835 = vmatpush.xpose.msra.mxu0 0.0
      %5836 = vmatpush.xpose.msra.mxu0 0.0
      %5837 = vmatpush.xpose.msra.mxu0 0.0
      %5838 = vmatpush.xpose.msra.mxu0 0.0
      %5839 = vmatpush.xpose.msra.mxu0 0.0
      %5840 = vmatpush.xpose.msra.mxu0 0.0
      %5841 = vmatpush.xpose.msra.mxu0 %v5825
      %5842 = vmatpush.xpose.msra.mxu0 %v5823
      %5843 = vmatmul.f32.gmra.mxu0 %v5819
      %v5844 = vpop.f32.mrf.mxu0
      %v5845 = vadd.f32 0.0, %v5844
      %5846 = vmatmul.f32.gmra.mxu0 %v5821
      %v5847 = vpop.f32.mrf.mxu0
      %v5848 = vadd.f32 0.0, %v5847
      %5849 = vdwg.mxu0
      %v5850 = vsel %vm1197, %v5740, -inf
      %5851 = vmax.xlane.f32.xlu0 %v5850
      %v5852 = vpop.xlane.xlu0 %5851
      %v5853 = vsel %vm1197, %v5743, -inf
      %5854 = vmax.xlane.f32.xlu0 %v5853
      %v5855 = vpop.xlane.xlu0 %5854
      %v5856 = vsel %vm1197, %v5775, -inf
      %5857 = vmax.xlane.f32.xlu0 %v5856
      %v5858 = vpop.xlane.xlu0 %5857
      %v5859 = vsel %vm1197, %v5778, -inf
      %5860 = vmax.xlane.f32.xlu0 %v5859
      %v5861 = vpop.xlane.xlu0 %5860
      %v5862 = vsel %vm1197, %v5810, -inf
      %5863 = vmax.xlane.f32.xlu0 %v5862
      %v5864 = vpop.xlane.xlu0 %5863
      %v5865 = vsel %vm1197, %v5813, -inf
      %5866 = vmax.xlane.f32.xlu0 %v5865
      %v5867 = vpop.xlane.xlu0 %5866
      %v5868 = vsel %vm1197, %v5845, -inf
      %5869 = vmax.xlane.f32.xlu0 %v5868
      %v5870 = vpop.xlane.xlu0 %5869
      %v5871 = vsel %vm1197, %v5848, -inf
      %5872 = vmax.xlane.f32.xlu0 %v5871
      %v5873 = vpop.xlane.xlu0 %5872
      %v5874 = vsub.f32 %v5740, %v5852
      %v5875 = vsub.f32 %v5743, %v5855
      %v5876 = vsub.f32 %v5775, %v5858
      %v5877 = vsub.f32 %v5778, %v5861
      %v5878 = vsub.f32 %v5810, %v5864
      %v5879 = vsub.f32 %v5813, %v5867
      %v5880 = vsub.f32 %v5845, %v5870
      %v5881 = vsub.f32 %v5848, %v5873
      %v5882 = vmul.f32 %v5874, 1.442695
      %v5883 = vpow.pop %v5882
      %v5884 = vmul.f32 %v5875, 1.442695
      %v5885 = vpow.pop %v5884
      %v5886 = vmul.f32 %v5876, 1.442695
      %v5887 = vpow.pop %v5886
      %v5888 = vmul.f32 %v5877, 1.442695
      %v5889 = vpow.pop %v5888
      %v5890 = vmul.f32 %v5878, 1.442695
      %v5891 = vpow.pop %v5890
      %v5892 = vmul.f32 %v5879, 1.442695
      %v5893 = vpow.pop %v5892
      %v5894 = vmul.f32 %v5880, 1.442695
      %v5895 = vpow.pop %v5894
      %v5896 = vmul.f32 %v5881, 1.442695
      %v5897 = vpow.pop %v5896
      %v5898 = vsel %vm1197, %v5883, 0.0
      %5899 = vadd.xlane.f32.xlu0 %v5898
      %v5900 = vpop.xlane.xlu0 %5899
      %v5901 = vsel %vm1197, %v5885, 0.0
      %5902 = vadd.xlane.f32.xlu0 %v5901
      %v5903 = vpop.xlane.xlu0 %5902
      %v5904 = vsel %vm1197, %v5887, 0.0
      %5905 = vadd.xlane.f32.xlu0 %v5904
      %v5906 = vpop.xlane.xlu0 %5905
      %v5907 = vsel %vm1197, %v5889, 0.0
      %5908 = vadd.xlane.f32.xlu0 %v5907
      %v5909 = vpop.xlane.xlu0 %5908
      %v5910 = vsel %vm1197, %v5891, 0.0
      %5911 = vadd.xlane.f32.xlu0 %v5910
      %v5912 = vpop.xlane.xlu0 %5911
      %v5913 = vsel %vm1197, %v5893, 0.0
      %5914 = vadd.xlane.f32.xlu0 %v5913
      %v5915 = vpop.xlane.xlu0 %5914
      %v5916 = vsel %vm1197, %v5895, 0.0
      %5917 = vadd.xlane.f32.xlu0 %v5916
      %v5918 = vpop.xlane.xlu0 %5917
      %v5919 = vsel %vm1197, %v5897, 0.0
      %5920 = vadd.xlane.f32.xlu0 %v5919
      %v5921 = vpop.xlane.xlu0 %5920
      %v5922 = vrcp.pop %v5900
      %v5923 = vrcp.pop %v5903
      %v5924 = vrcp.pop %v5906
      %v5925 = vrcp.pop %v5909
      %v5926 = vrcp.pop %v5912
      %v5927 = vrcp.pop %v5915
      %v5928 = vrcp.pop %v5918
      %v5929 = vrcp.pop %v5921
      %v5930 = vmul.f32 %v5883, %v5922
      %v5931 = vmul.f32 %v5885, %v5923
      %v5932 = vmul.f32 %v5887, %v5924
      %v5933 = vmul.f32 %v5889, %v5925
      %v5934 = vmul.f32 %v5891, %v5926
      %v5935 = vmul.f32 %v5893, %v5927
      %v5936 = vmul.f32 %v5895, %v5928
      %v5937 = vmul.f32 %v5897, %v5929
      %5938 = vrot.lane.b32.xlu0 %v5675, 96
      %v5939 = vpop.permute.xlu0 %5938
      %5940 = vrot.lane.b32.xlu0 %v5678, 96
      %v5941 = vpop.permute.xlu0 %5940
      %v5945 = vsel %vm1197, %v5930, 0
      %v5948 = vsel %vm1197, %v5931, 0
      %5950 = vmatpush.msra.mxu0 0.0
      %5951 = vmatpush.msra.mxu0 0.0
      %5952 = vmatpush.msra.mxu0 0.0
      %5953 = vmatpush.msra.mxu0 0.0
      %5954 = vmatpush.msra.mxu0 0.0
      %5955 = vmatpush.msra.mxu0 0.0
      %5956 = vmatpush.msra.mxu0 0.0
      %5957 = vmatpush.msra.mxu0 0.0
      %5958 = vmatpush.msra.mxu0 0.0
      %5959 = vmatpush.msra.mxu0 0.0
      %5960 = vmatpush.msra.mxu0 0.0
      %5961 = vmatpush.msra.mxu0 0.0
      %5962 = vmatpush.msra.mxu0 0.0
      %5963 = vmatpush.msra.mxu0 0.0
      %5964 = vmatpush.msra.mxu0 %v5941
      %5965 = vmatpush.msra.mxu0 %v5939
      %5966 = vmatmul.f32.gmra.mxu0 %v5945
      %v5967 = vpop.f32.mrf.mxu0
      %v5968 = vadd.f32 0.0, %v5967
      %5969 = vmatmul.f32.gmra.mxu0 %v5948
      %v5970 = vpop.f32.mrf.mxu0
      %v5971 = vadd.f32 0.0, %v5970
      %5972 = vdwg.mxu0
      %5973 = vrot.lane.b32.xlu0 %v5699, 96
      %v5974 = vpop.permute.xlu0 %5973
      %5975 = vrot.lane.b32.xlu0 %v5701, 96
      %v5976 = vpop.permute.xlu0 %5975
      %v5980 = vsel %vm1197, %v5932, 0
      %v5983 = vsel %vm1197, %v5933, 0
      %5985 = vmatpush.msra.mxu0 0.0
      %5986 = vmatpush.msra.mxu0 0.0
      %5987 = vmatpush.msra.mxu0 0.0
      %5988 = vmatpush.msra.mxu0 0.0
      %5989 = vmatpush.msra.mxu0 0.0
      %5990 = vmatpush.msra.mxu0 0.0
      %5991 = vmatpush.msra.mxu0 0.0
      %5992 = vmatpush.msra.mxu0 0.0
      %5993 = vmatpush.msra.mxu0 0.0
      %5994 = vmatpush.msra.mxu0 0.0
      %5995 = vmatpush.msra.mxu0 0.0
      %5996 = vmatpush.msra.mxu0 0.0
      %5997 = vmatpush.msra.mxu0 0.0
      %5998 = vmatpush.msra.mxu0 0.0
      %5999 = vmatpush.msra.mxu0 %v5976
      %6000 = vmatpush.msra.mxu0 %v5974
      %6001 = vmatmul.f32.gmra.mxu0 %v5980
      %v6002 = vpop.f32.mrf.mxu0
      %v6003 = vadd.f32 0.0, %v6002
      %6004 = vmatmul.f32.gmra.mxu0 %v5983
      %v6005 = vpop.f32.mrf.mxu0
      %v6006 = vadd.f32 0.0, %v6005
      %6007 = vdwg.mxu0
      %6008 = vrot.lane.b32.xlu0 %v5703, 96
      %v6009 = vpop.permute.xlu0 %6008
      %6010 = vrot.lane.b32.xlu0 %v5705, 96
      %v6011 = vpop.permute.xlu0 %6010
      %v6015 = vsel %vm1197, %v5934, 0
      %v6018 = vsel %vm1197, %v5935, 0
      %6020 = vmatpush.msra.mxu0 0.0
      %6021 = vmatpush.msra.mxu0 0.0
      %6022 = vmatpush.msra.mxu0 0.0
      %6023 = vmatpush.msra.mxu0 0.0
      %6024 = vmatpush.msra.mxu0 0.0
      %6025 = vmatpush.msra.mxu0 0.0
      %6026 = vmatpush.msra.mxu0 0.0
      %6027 = vmatpush.msra.mxu0 0.0
      %6028 = vmatpush.msra.mxu0 0.0
      %6029 = vmatpush.msra.mxu0 0.0
      %6030 = vmatpush.msra.mxu0 0.0
      %6031 = vmatpush.msra.mxu0 0.0
      %6032 = vmatpush.msra.mxu0 0.0
      %6033 = vmatpush.msra.mxu0 0.0
      %6034 = vmatpush.msra.mxu0 %v6011
      %6035 = vmatpush.msra.mxu0 %v6009
      %6036 = vmatmul.f32.gmra.mxu0 %v6015
      %v6037 = vpop.f32.mrf.mxu0
      %v6038 = vadd.f32 0.0, %v6037
      %6039 = vmatmul.f32.gmra.mxu0 %v6018
      %v6040 = vpop.f32.mrf.mxu0
      %v6041 = vadd.f32 0.0, %v6040
      %6042 = vdwg.mxu0
      %6043 = vrot.lane.b32.xlu0 %v5707, 96
      %v6044 = vpop.permute.xlu0 %6043
      %6045 = vrot.lane.b32.xlu0 %v5709, 96
      %v6046 = vpop.permute.xlu0 %6045
      %v6050 = vsel %vm1197, %v5936, 0
      %v6053 = vsel %vm1197, %v5937, 0
      %6055 = vmatpush.msra.mxu0 0.0
      %6056 = vmatpush.msra.mxu0 0.0
      %6057 = vmatpush.msra.mxu0 0.0
      %6058 = vmatpush.msra.mxu0 0.0
      %6059 = vmatpush.msra.mxu0 0.0
      %6060 = vmatpush.msra.mxu0 0.0
      %6061 = vmatpush.msra.mxu0 0.0
      %6062 = vmatpush.msra.mxu0 0.0
      %6063 = vmatpush.msra.mxu0 0.0
      %6064 = vmatpush.msra.mxu0 0.0
      %6065 = vmatpush.msra.mxu0 0.0
      %6066 = vmatpush.msra.mxu0 0.0
      %6067 = vmatpush.msra.mxu0 0.0
      %6068 = vmatpush.msra.mxu0 0.0
      %6069 = vmatpush.msra.mxu0 %v6046
      %6070 = vmatpush.msra.mxu0 %v6044
      %6071 = vmatmul.f32.gmra.mxu0 %v6050
      %v6072 = vpop.f32.mrf.mxu0
      %v6073 = vadd.f32 0.0, %v6072
      %6074 = vmatmul.f32.gmra.mxu0 %v6053
      %v6075 = vpop.f32.mrf.mxu0
      %v6076 = vadd.f32 0.0, %v6075
      %6077 = vdwg.mxu0
      %6080 = vrot.lane.b32.xlu0 %v6003, 4
      %v6081 = vpop.permute.xlu0 %6080
      %6082 = vrot.lane.b32.xlu0 %v6006, 4
      %v6083 = vpop.permute.xlu0 %6082
      %6088 = vrot.lane.b32.xlu0 %v6038, 8
      %v6089 = vpop.permute.xlu0 %6088
      %6090 = vrot.lane.b32.xlu0 %v6041, 8
      %v6091 = vpop.permute.xlu0 %6090
      %6096 = vrot.lane.b32.xlu0 %v6073, 12
      %v6097 = vpop.permute.xlu0 %6096
      %6098 = vrot.lane.b32.xlu0 %v6076, 12
      %v6099 = vpop.permute.xlu0 %6098
      %v6102 = vsel %vm1304, %v5968, %v6081
      %v6103 = vsel %vm1304, %v5971, %v6083
      %v6104 = vsel %vm1500, %v6102, %v6089
      %v6105 = vsel %vm1500, %v6103, %v6091
      %vm6106 = vcmask 97280
      %v6107 = vsel %vm6106, %v6104, %v6097
      %v6108 = vsel %vm6106, %v6105, %v6099
      %v6110 = vsel %vm1197, %v6107, 0
      %v6113 = vsel %vm1197, %v6108, 0
      %6115 = vmatpush.msra.mxu0 0.0
      %6116 = vmatpush.msra.mxu0 0.0
      %6117 = vmatpush.msra.mxu0 0.0
      %6118 = vmatpush.msra.mxu0 0.0
      %6119 = vmatpush.msra.mxu0 0.0
      %6120 = vmatpush.msra.mxu0 0.0
      %6121 = vmatpush.msra.mxu0 0.0
      %6122 = vmatpush.msra.mxu0 0.0
      %6123 = vmatpush.msra.mxu0 0.0
      %6124 = vmatpush.msra.mxu0 0.0
      %6125 = vmatpush.msra.mxu0 0.0
      %6126 = vmatpush.msra.mxu0 0.0
      %6127 = vmatpush.msra.mxu0 0.0
      %6128 = vmatpush.msra.mxu0 0.0
      %6129 = vmatpush.msra.mxu0 %v5575
      %6130 = vmatpush.msra.mxu0 %v5574
      %6131 = vmatmul.f32.gmra.mxu0 %v6110
      %v6132 = vpop.f32.mrf.mxu0
      %v6133 = vadd.f32 0.0, %v6132
      %6134 = vmatmul.f32.gmra.mxu0 %v6113
      %v6135 = vpop.f32.mrf.mxu0
      %v6136 = vadd.f32 0.0, %v6135
      %6137 = vdwg.mxu0
      %v6138 = vadd.f32 %v5564, %v6133
      %v6139 = vadd.f32 %v5567, %v6136
      %v6141 = vperm.slane %v5576, 0
      %v6143 = vadd.f32 %v6138, %v6141
      %v6144 = vadd.f32 %v6139, %v6141
      %v6145 = vsel %vm1197, %v6143, 0.0
      %6146 = vadd.xlane.f32.xlu0 %v6145
      %v6147 = vpop.xlane.xlu0 %6146
      %v6148 = vsel %vm1197, %v6144, 0.0
      %6149 = vadd.xlane.f32.xlu0 %v6148
      %v6150 = vpop.xlane.xlu0 %6149
      %v6151 = vmul.f32 %v6147, %v5597
      %v6152 = vmul.f32 %v6150, %v5597
      %v6153 = vsub.f32 %v6143, %v6151
      %v6154 = vsub.f32 %v6144, %v6152
      %v6155 = vmul.f32 %v6153, %v6153
      %v6156 = vmul.f32 %v6154, %v6154
      %v6157 = vsel %vm1197, %v6155, 0.0
      %6158 = vadd.xlane.f32.xlu0 %v6157
      %v6159 = vpop.xlane.xlu0 %6158
      %v6160 = vsel %vm1197, %v6156, 0.0
      %6161 = vadd.xlane.f32.xlu0 %v6160
      %v6162 = vpop.xlane.xlu0 %6161
      %v6163 = vmul.f32 %v6159, 0.06666667
      %v6164 = vmul.f32 %v6162, 0.06666667
      %v6165 = vrsqrt.pop %v6163
      %v6166 = vmul.f32 %v6165, %v6163
      %v6167 = vmul.f32 %v6166, %v6165
      %v6168 = vmul.f32 0.5, %v6167
      %v6169 = vsub.f32 1.5, %v6168
      %v6170 = vmul.f32 %v6165, %v6169
      %v6171 = vmul.f32 %v6163, %v6170
      %vm6172 = vcmp.eq.f32.partialorder %v6163, inf
      %v6173 = vsel %vm6172, %v6163, %v6171
      %vm6174 = vcmp.eq.f32.partialorder %v6163, 0.0
      %v6175 = vand.u32 %v6163, 2147483648
      %v6176 = vsel %vm6174, %v6175, %v6173
      %v6177 = vrsqrt.pop %v6164
      %v6178 = vmul.f32 %v6177, %v6164
      %v6179 = vmul.f32 %v6178, %v6177
      %v6180 = vmul.f32 0.5, %v6179
      %v6181 = vsub.f32 1.5, %v6180
      %v6182 = vmul.f32 %v6177, %v6181
      %v6183 = vmul.f32 %v6164, %v6182
      %vm6184 = vcmp.eq.f32.partialorder %v6164, inf
      %v6185 = vsel %vm6184, %v6164, %v6183
      %vm6186 = vcmp.eq.f32.partialorder %v6164, 0.0
      %v6187 = vand.u32 %v6164, 2147483648
      %v6188 = vsel %vm6186, %v6187, %v6185
      %v6189 = vadd.f32 %v6176, 1e-06
      %v6190 = vadd.f32 %v6188, 1e-06
      %v6191 = vrcp.pop %v6189
      %v6192 = vrcp.pop %v6190
      %v6193 = vperm.slane %v5569, 1
      %v6194 = vmul.f32 %v6193, %v6153
      %v6195 = vmul.f32 %v6193, %v6154
      %v6196 = vmul.f32 %v6194, %v6191
      %v6197 = vmul.f32 %v6195, %v6192
      %v6198 = vperm.slane %v5570, 1
      %v6199 = vadd.f32 %v6196, %v6198
      %v6200 = vadd.f32 %v6197, %v6198
      %6201 = vmatpush.msra.mxu0 0.0
      %6202 = vmatpush.msra.mxu0 0.0
      %6203 = vmatpush.msra.mxu0 0.0
      %6204 = vmatpush.msra.mxu0 0.0
      %6205 = vmatpush.msra.mxu0 0.0
      %6206 = vmatpush.msra.mxu0 0.0
      %6207 = vmatpush.msra.mxu0 0.0
      %6208 = vmatpush.msra.mxu0 0.0
      %6209 = vmatpush.msra.mxu0 0.0
      %6210 = vmatpush.msra.mxu0 0.0
      %6211 = vmatpush.msra.mxu0 0.0
      %6212 = vmatpush.msra.mxu0 0.0
      %6213 = vmatpush.msra.mxu0 0.0
      %6214 = vmatpush.msra.mxu0 0.0
      %6215 = vmatpush.msra.mxu0 %v6200
      %6216 = vmatpush.msra.mxu0 %v6199
      %6217 = vmatmul.f32.gmra.mxu0 %v1989
      %v6218 = vpop.f32.mrf.mxu0
      %v6219 = vadd.f32 0.0, %v6218
      %6220 = vmatmul.f32.gmra.mxu0 %v1992
      %v6221 = vpop.f32.mrf.mxu0
      %v6222 = vadd.f32 0.0, %v6221
      %6223 = vdwg.mxu0
      %v6225 = vperm.slane %v5579, 0
      %v6228 = vsel %vm1197, %v6219, 0
      %v6231 = vsel %vm1197, %v6222, 0
      %6233 = vmatpush.msra.mxu0 0.0
      %6234 = vmatpush.msra.mxu0 0.0
      %6235 = vmatpush.msra.mxu0 0.0
      %6236 = vmatpush.msra.mxu0 0.0
      %6237 = vmatpush.msra.mxu0 0.0
      %6238 = vmatpush.msra.mxu0 0.0
      %6239 = vmatpush.msra.mxu0 0.0
      %6240 = vmatpush.msra.mxu0 0.0
      %6241 = vmatpush.msra.mxu0 0.0
      %6242 = vmatpush.msra.mxu0 0.0
      %6243 = vmatpush.msra.mxu0 0.0
      %6244 = vmatpush.msra.mxu0 0.0
      %6245 = vmatpush.msra.mxu0 0.0
      %6246 = vmatpush.msra.mxu0 0.0
      %6247 = vmatpush.msra.mxu0 %v5578
      %6248 = vmatpush.msra.mxu0 %v5577
      %6249 = vmatmul.f32.gmra.mxu0 %v6228
      %v6250 = vpop.f32.mrf.mxu0
      %v6251 = vadd.f32 %v6225, %v6250
      %6252 = vmatmul.f32.gmra.mxu0 %v6231
      %v6253 = vpop.f32.mrf.mxu0
      %v6254 = vadd.f32 %v6225, %v6253
      %6255 = vdwg.mxu0
      %v6256 = vmax.f32 %v6251, 0.0
      %v6257 = vmax.f32 %v6254, 0.0
      %6258 = vmatpush.msra.mxu0 0.0
      %6259 = vmatpush.msra.mxu0 0.0
      %6260 = vmatpush.msra.mxu0 0.0
      %6261 = vmatpush.msra.mxu0 0.0
      %6262 = vmatpush.msra.mxu0 0.0
      %6263 = vmatpush.msra.mxu0 0.0
      %6264 = vmatpush.msra.mxu0 0.0
      %6265 = vmatpush.msra.mxu0 0.0
      %6266 = vmatpush.msra.mxu0 0.0
      %6267 = vmatpush.msra.mxu0 0.0
      %6268 = vmatpush.msra.mxu0 0.0
      %6269 = vmatpush.msra.mxu0 0.0
      %6270 = vmatpush.msra.mxu0 0.0
      %6271 = vmatpush.msra.mxu0 0.0
      %6272 = vmatpush.msra.mxu0 %v6257
      %6273 = vmatpush.msra.mxu0 %v6256
      %6274 = vmatmul.f32.gmra.mxu0 %v1989
      %v6275 = vpop.f32.mrf.mxu0
      %v6276 = vadd.f32 0.0, %v6275
      %6277 = vmatmul.f32.gmra.mxu0 %v1992
      %v6278 = vpop.f32.mrf.mxu0
      %v6279 = vadd.f32 0.0, %v6278
      %6280 = vdwg.mxu0
      %v6282 = vperm.slane %v5584, 0
      %v6285 = vsel %vm1370, %v6276, 0
      %v6288 = vsel %vm1370, %v6279, 0
      %6290 = vmatpush.msra.mxu0 0.0
      %6291 = vmatpush.msra.mxu0 0.0
      %6292 = vmatpush.msra.mxu0 0.0
      %6293 = vmatpush.msra.mxu0 0.0
      %6294 = vmatpush.msra.mxu0 0.0
      %6295 = vmatpush.msra.mxu0 0.0
      %6296 = vmatpush.msra.mxu0 0.0
      %6297 = vmatpush.msra.mxu0 0.0
      %6298 = vmatpush.msra.mxu0 0.0
      %6299 = vmatpush.msra.mxu0 0.0
      %6300 = vmatpush.msra.mxu0 0.0
      %6301 = vmatpush.msra.mxu0 0.0
      %6302 = vmatpush.msra.mxu0 %v5583
      %6303 = vmatpush.msra.mxu0 %v5582
      %6304 = vmatpush.msra.mxu0 %v5581
      %6305 = vmatpush.msra.mxu0 %v5580
      %6306 = vmatmul.f32.gmra.mxu0 %v6285
      %v6307 = vpop.f32.mrf.mxu0
      %v6308 = vadd.f32 %v6282, %v6307
      %6309 = vmatmul.f32.gmra.mxu0 %v6288
      %v6310 = vpop.f32.mrf.mxu0
      %v6311 = vadd.f32 %v6282, %v6310
      %6312 = vdwg.mxu0
      %v6313 = vadd.f32 %v6143, %v6308
      %v6314 = vadd.f32 %v6144, %v6311
      %s6315 = scalar_lea.vmem %s49, 2
      %v6316 = vld [vmem:[%s6315] sm:$0x3]
      %s6317 = scalar_lea.vmem %s51, 2
      %v6318 = vld [vmem:[%s6317] sm:$0x3]
      %s6319 = scalar_lea.vmem %s53, 16
      %v6320 = vld [vmem:[%s6319] sm:$0xff]
      %v6321 = vld [vmem:[%s6319 + $0x8] sm:$0xff]
      %s6322 = scalar_lea.vmem %s55, 1
      %v6323 = vld [vmem:[%s6322] sm:$0x1]
      %s6324 = scalar_lea.vmem %s57, 16
      %v6325 = vld [vmem:[%s6324] sm:$0xff]
      %v6326 = vld [vmem:[%s6324 + $0x8] sm:$0xff]
      %s6327 = scalar_lea.vmem %s59, 1
      %v6328 = vld [vmem:[%s6327] sm:$0x1]
      %s6329 = scalar_lea.vmem %s61, 16
      %v6330 = vld [vmem:[%s6329] sm:$0xff]
      %v6331 = vld [vmem:[%s6329 + $0x8] sm:$0xff]
      %s6332 = scalar_lea.vmem %s63, 1
      %v6333 = vld [vmem:[%s6332] sm:$0x1]
      %s6334 = scalar_lea.vmem %s65, 32
      %v6335 = vld [vmem:[%s6334] sm:$0xff]
      %v6336 = vld [vmem:[%s6334 + $0x8] sm:$0xff]
      %v6337 = vld [vmem:[%s6334 + $0x10] sm:$0xff]
      %v6338 = vld [vmem:[%s6334 + $0x18] sm:$0xff]
      %s6339 = scalar_lea.vmem %s67, 1
      %v6340 = vld [vmem:[%s6339] sm:$0x1]
      %v6341 = vsel %vm1197, %v6313, 0.0
      %6342 = vadd.xlane.f32.xlu0 %v6341
      %v6343 = vpop.xlane.xlu0 %6342
      %v6344 = vsel %vm1197, %v6314, 0.0
      %6345 = vadd.xlane.f32.xlu0 %v6344
      %v6346 = vpop.xlane.xlu0 %6345
      %v6347 = vmul.f32 %v6343, %v5597
      %v6348 = vmul.f32 %v6346, %v5597
      %v6349 = vsub.f32 %v6313, %v6347
      %v6350 = vsub.f32 %v6314, %v6348
      %v6351 = vmul.f32 %v6349, %v6349
      %v6352 = vmul.f32 %v6350, %v6350
      %v6353 = vsel %vm1197, %v6351, 0.0
      %6354 = vadd.xlane.f32.xlu0 %v6353
      %v6355 = vpop.xlane.xlu0 %6354
      %v6356 = vsel %vm1197, %v6352, 0.0
      %6357 = vadd.xlane.f32.xlu0 %v6356
      %v6358 = vpop.xlane.xlu0 %6357
      %v6359 = vmul.f32 %v6355, 0.06666667
      %v6360 = vmul.f32 %v6358, 0.06666667
      %v6361 = vrsqrt.pop %v6359
      %v6362 = vmul.f32 %v6361, %v6359
      %v6363 = vmul.f32 %v6362, %v6361
      %v6364 = vmul.f32 0.5, %v6363
      %v6365 = vsub.f32 1.5, %v6364
      %v6366 = vmul.f32 %v6361, %v6365
      %v6367 = vmul.f32 %v6359, %v6366
      %vm6368 = vcmp.eq.f32.partialorder %v6359, inf
      %v6369 = vsel %vm6368, %v6359, %v6367
      %vm6370 = vcmp.eq.f32.partialorder %v6359, 0.0
      %v6371 = vand.u32 %v6359, 2147483648
      %v6372 = vsel %vm6370, %v6371, %v6369
      %v6373 = vrsqrt.pop %v6360
      %v6374 = vmul.f32 %v6373, %v6360
      %v6375 = vmul.f32 %v6374, %v6373
      %v6376 = vmul.f32 0.5, %v6375
      %v6377 = vsub.f32 1.5, %v6376
      %v6378 = vmul.f32 %v6373, %v6377
      %v6379 = vmul.f32 %v6360, %v6378
      %vm6380 = vcmp.eq.f32.partialorder %v6360, inf
      %v6381 = vsel %vm6380, %v6360, %v6379
      %vm6382 = vcmp.eq.f32.partialorder %v6360, 0.0
      %v6383 = vand.u32 %v6360, 2147483648
      %v6384 = vsel %vm6382, %v6383, %v6381
      %v6385 = vadd.f32 %v6372, 1e-06
      %v6386 = vadd.f32 %v6384, 1e-06
      %v6387 = vrcp.pop %v6385
      %v6388 = vrcp.pop %v6386
      %v6389 = vperm.slane %v6316, 0
      %v6390 = vmul.f32 %v6389, %v6349
      %v6391 = vmul.f32 %v6389, %v6350
      %v6392 = vmul.f32 %v6390, %v6387
      %v6393 = vmul.f32 %v6391, %v6388
      %v6394 = vperm.slane %v6318, 0
      %v6395 = vadd.f32 %v6392, %v6394
      %v6396 = vadd.f32 %v6393, %v6394
      %v6398 = vperm.slane %v6323, 0
      %v6401 = vsel %vm1197, %v6395, 0
      %v6404 = vsel %vm1197, %v6396, 0
      %6406 = vmatpush.msra.mxu0 0.0
      %6407 = vmatpush.msra.mxu0 0.0
      %6408 = vmatpush.msra.mxu0 0.0
      %6409 = vmatpush.msra.mxu0 0.0
      %6410 = vmatpush.msra.mxu0 0.0
      %6411 = vmatpush.msra.mxu0 0.0
      %6412 = vmatpush.msra.mxu0 0.0
      %6413 = vmatpush.msra.mxu0 0.0
      %6414 = vmatpush.msra.mxu0 0.0
      %6415 = vmatpush.msra.mxu0 0.0
      %6416 = vmatpush.msra.mxu0 0.0
      %6417 = vmatpush.msra.mxu0 0.0
      %6418 = vmatpush.msra.mxu0 0.0
      %6419 = vmatpush.msra.mxu0 0.0
      %6420 = vmatpush.msra.mxu0 %v6321
      %6421 = vmatpush.msra.mxu0 %v6320
      %6422 = vmatmul.f32.gmra.mxu0 %v6401
      %v6423 = vpop.f32.mrf.mxu0
      %v6424 = vadd.f32 %v6398, %v6423
      %6425 = vmatmul.f32.gmra.mxu0 %v6404
      %v6426 = vpop.f32.mrf.mxu0
      %v6427 = vadd.f32 %v6398, %v6426
      %6428 = vdwg.mxu0
      %v6429 = vmul.f32 %v6424, 0.5
      %v6430 = vmul.f32 %v6427, 0.5
      %6433 = vrot.lane.b32.xlu0 %v6429, 124
      %v6434 = vpop.permute.xlu0 %6433
      %6435 = vrot.lane.b32.xlu0 %v6430, 124
      %v6436 = vpop.permute.xlu0 %6435
      %6437 = vrot.lane.b32.xlu0 %v6429, 120
      %v6438 = vpop.permute.xlu0 %6437
      %6439 = vrot.lane.b32.xlu0 %v6430, 120
      %v6440 = vpop.permute.xlu0 %6439
      %6441 = vrot.lane.b32.xlu0 %v6429, 116
      %v6442 = vpop.permute.xlu0 %6441
      %6443 = vrot.lane.b32.xlu0 %v6430, 116
      %v6444 = vpop.permute.xlu0 %6443
      %6447 = vrot.lane.b32.xlu0 %v6424, 124
      %v6448 = vpop.permute.xlu0 %6447
      %6449 = vrot.lane.b32.xlu0 %v6427, 124
      %v6450 = vpop.permute.xlu0 %6449
      %6451 = vrot.lane.b32.xlu0 %v6424, 120
      %v6452 = vpop.permute.xlu0 %6451
      %6453 = vrot.lane.b32.xlu0 %v6427, 120
      %v6454 = vpop.permute.xlu0 %6453
      %6455 = vrot.lane.b32.xlu0 %v6424, 116
      %v6456 = vpop.permute.xlu0 %6455
      %6457 = vrot.lane.b32.xlu0 %v6427, 116
      %v6458 = vpop.permute.xlu0 %6457
      %6459 = vrot.lane.b32.xlu0 %v6424, 112
      %v6460 = vpop.permute.xlu0 %6459
      %6461 = vrot.lane.b32.xlu0 %v6427, 112
      %v6462 = vpop.permute.xlu0 %6461
      %v6463 = vsel %vm1304, %v6429, 0
      %v6465 = vsel %vm1304, %v6430, 0
      %v6467 = vsel %vm1304, %v6460, 0
      %v6469 = vsel %vm1304, %v6462, 0
      %6471 = vmatpush.xpose.msra.mxu0 0.0
      %6472 = vmatpush.xpose.msra.mxu0 0.0
      %6473 = vmatpush.xpose.msra.mxu0 0.0
      %6474 = vmatpush.xpose.msra.mxu0 0.0
      %6475 = vmatpush.xpose.msra.mxu0 0.0
      %6476 = vmatpush.xpose.msra.mxu0 0.0
      %6477 = vmatpush.xpose.msra.mxu0 0.0
      %6478 = vmatpush.xpose.msra.mxu0 0.0
      %6479 = vmatpush.xpose.msra.mxu0 0.0
      %6480 = vmatpush.xpose.msra.mxu0 0.0
      %6481 = vmatpush.xpose.msra.mxu0 0.0
      %6482 = vmatpush.xpose.msra.mxu0 0.0
      %6483 = vmatpush.xpose.msra.mxu0 0.0
      %6484 = vmatpush.xpose.msra.mxu0 0.0
      %6485 = vmatpush.xpose.msra.mxu0 %v6469
      %6486 = vmatpush.xpose.msra.mxu0 %v6467
      %6487 = vmatmul.f32.gmra.mxu0 %v6463
      %v6488 = vpop.f32.mrf.mxu0
      %v6489 = vadd.f32 0.0, %v6488
      %6490 = vmatmul.f32.gmra.mxu0 %v6465
      %v6491 = vpop.f32.mrf.mxu0
      %v6492 = vadd.f32 0.0, %v6491
      %6493 = vdwg.mxu0
      %6494 = vrot.lane.b32.xlu0 %v6448, 112
      %v6495 = vpop.permute.xlu0 %6494
      %6496 = vrot.lane.b32.xlu0 %v6450, 112
      %v6497 = vpop.permute.xlu0 %6496
      %v6498 = vsel %vm1304, %v6434, 0
      %v6500 = vsel %vm1304, %v6436, 0
      %v6502 = vsel %vm1304, %v6495, 0
      %v6504 = vsel %vm1304, %v6497, 0
      %6506 = vmatpush.xpose.msra.mxu0 0.0
      %6507 = vmatpush.xpose.msra.mxu0 0.0
      %6508 = vmatpush.xpose.msra.mxu0 0.0
      %6509 = vmatpush.xpose.msra.mxu0 0.0
      %6510 = vmatpush.xpose.msra.mxu0 0.0
      %6511 = vmatpush.xpose.msra.mxu0 0.0
      %6512 = vmatpush.xpose.msra.mxu0 0.0
      %6513 = vmatpush.xpose.msra.mxu0 0.0
      %6514 = vmatpush.xpose.msra.mxu0 0.0
      %6515 = vmatpush.xpose.msra.mxu0 0.0
      %6516 = vmatpush.xpose.msra.mxu0 0.0
      %6517 = vmatpush.xpose.msra.mxu0 0.0
      %6518 = vmatpush.xpose.msra.mxu0 0.0
      %6519 = vmatpush.xpose.msra.mxu0 0.0
      %6520 = vmatpush.xpose.msra.mxu0 %v6504
      %6521 = vmatpush.xpose.msra.mxu0 %v6502
      %6522 = vmatmul.f32.gmra.mxu0 %v6498
      %v6523 = vpop.f32.mrf.mxu0
      %v6524 = vadd.f32 0.0, %v6523
      %6525 = vmatmul.f32.gmra.mxu0 %v6500
      %v6526 = vpop.f32.mrf.mxu0
      %v6527 = vadd.f32 0.0, %v6526
      %6528 = vdwg.mxu0
      %6529 = vrot.lane.b32.xlu0 %v6452, 112
      %v6530 = vpop.permute.xlu0 %6529
      %6531 = vrot.lane.b32.xlu0 %v6454, 112
      %v6532 = vpop.permute.xlu0 %6531
      %v6533 = vsel %vm1304, %v6438, 0
      %v6535 = vsel %vm1304, %v6440, 0
      %v6537 = vsel %vm1304, %v6530, 0
      %v6539 = vsel %vm1304, %v6532, 0
      %6541 = vmatpush.xpose.msra.mxu0 0.0
      %6542 = vmatpush.xpose.msra.mxu0 0.0
      %6543 = vmatpush.xpose.msra.mxu0 0.0
      %6544 = vmatpush.xpose.msra.mxu0 0.0
      %6545 = vmatpush.xpose.msra.mxu0 0.0
      %6546 = vmatpush.xpose.msra.mxu0 0.0
      %6547 = vmatpush.xpose.msra.mxu0 0.0
      %6548 = vmatpush.xpose.msra.mxu0 0.0
      %6549 = vmatpush.xpose.msra.mxu0 0.0
      %6550 = vmatpush.xpose.msra.mxu0 0.0
      %6551 = vmatpush.xpose.msra.mxu0 0.0
      %6552 = vmatpush.xpose.msra.mxu0 0.0
      %6553 = vmatpush.xpose.msra.mxu0 0.0
      %6554 = vmatpush.xpose.msra.mxu0 0.0
      %6555 = vmatpush.xpose.msra.mxu0 %v6539
      %6556 = vmatpush.xpose.msra.mxu0 %v6537
      %6557 = vmatmul.f32.gmra.mxu0 %v6533
      %v6558 = vpop.f32.mrf.mxu0
      %v6559 = vadd.f32 0.0, %v6558
      %6560 = vmatmul.f32.gmra.mxu0 %v6535
      %v6561 = vpop.f32.mrf.mxu0
      %v6562 = vadd.f32 0.0, %v6561
      %6563 = vdwg.mxu0
      %6564 = vrot.lane.b32.xlu0 %v6456, 112
      %v6565 = vpop.permute.xlu0 %6564
      %6566 = vrot.lane.b32.xlu0 %v6458, 112
      %v6567 = vpop.permute.xlu0 %6566
      %v6568 = vsel %vm1304, %v6442, 0
      %v6570 = vsel %vm1304, %v6444, 0
      %v6572 = vsel %vm1304, %v6565, 0
      %v6574 = vsel %vm1304, %v6567, 0
      %6576 = vmatpush.xpose.msra.mxu0 0.0
      %6577 = vmatpush.xpose.msra.mxu0 0.0
      %6578 = vmatpush.xpose.msra.mxu0 0.0
      %6579 = vmatpush.xpose.msra.mxu0 0.0
      %6580 = vmatpush.xpose.msra.mxu0 0.0
      %6581 = vmatpush.xpose.msra.mxu0 0.0
      %6582 = vmatpush.xpose.msra.mxu0 0.0
      %6583 = vmatpush.xpose.msra.mxu0 0.0
      %6584 = vmatpush.xpose.msra.mxu0 0.0
      %6585 = vmatpush.xpose.msra.mxu0 0.0
      %6586 = vmatpush.xpose.msra.mxu0 0.0
      %6587 = vmatpush.xpose.msra.mxu0 0.0
      %6588 = vmatpush.xpose.msra.mxu0 0.0
      %6589 = vmatpush.xpose.msra.mxu0 0.0
      %6590 = vmatpush.xpose.msra.mxu0 %v6574
      %6591 = vmatpush.xpose.msra.mxu0 %v6572
      %6592 = vmatmul.f32.gmra.mxu0 %v6568
      %v6593 = vpop.f32.mrf.mxu0
      %v6594 = vadd.f32 0.0, %v6593
      %6595 = vmatmul.f32.gmra.mxu0 %v6570
      %v6596 = vpop.f32.mrf.mxu0
      %v6597 = vadd.f32 0.0, %v6596
      %6598 = vdwg.mxu0
      %v6599 = vsel %vm1197, %v6489, -inf
      %6600 = vmax.xlane.f32.xlu0 %v6599
      %v6601 = vpop.xlane.xlu0 %6600
      %v6602 = vsel %vm1197, %v6492, -inf
      %6603 = vmax.xlane.f32.xlu0 %v6602
      %v6604 = vpop.xlane.xlu0 %6603
      %v6605 = vsel %vm1197, %v6524, -inf
      %6606 = vmax.xlane.f32.xlu0 %v6605
      %v6607 = vpop.xlane.xlu0 %6606
      %v6608 = vsel %vm1197, %v6527, -inf
      %6609 = vmax.xlane.f32.xlu0 %v6608
      %v6610 = vpop.xlane.xlu0 %6609
      %v6611 = vsel %vm1197, %v6559, -inf
      %6612 = vmax.xlane.f32.xlu0 %v6611
      %v6613 = vpop.xlane.xlu0 %6612
      %v6614 = vsel %vm1197, %v6562, -inf
      %6615 = vmax.xlane.f32.xlu0 %v6614
      %v6616 = vpop.xlane.xlu0 %6615
      %v6617 = vsel %vm1197, %v6594, -inf
      %6618 = vmax.xlane.f32.xlu0 %v6617
      %v6619 = vpop.xlane.xlu0 %6618
      %v6620 = vsel %vm1197, %v6597, -inf
      %6621 = vmax.xlane.f32.xlu0 %v6620
      %v6622 = vpop.xlane.xlu0 %6621
      %v6623 = vsub.f32 %v6489, %v6601
      %v6624 = vsub.f32 %v6492, %v6604
      %v6625 = vsub.f32 %v6524, %v6607
      %v6626 = vsub.f32 %v6527, %v6610
      %v6627 = vsub.f32 %v6559, %v6613
      %v6628 = vsub.f32 %v6562, %v6616
      %v6629 = vsub.f32 %v6594, %v6619
      %v6630 = vsub.f32 %v6597, %v6622
      %v6631 = vmul.f32 %v6623, 1.442695
      %v6632 = vpow.pop %v6631
      %v6633 = vmul.f32 %v6624, 1.442695
      %v6634 = vpow.pop %v6633
      %v6635 = vmul.f32 %v6625, 1.442695
      %v6636 = vpow.pop %v6635
      %v6637 = vmul.f32 %v6626, 1.442695
      %v6638 = vpow.pop %v6637
      %v6639 = vmul.f32 %v6627, 1.442695
      %v6640 = vpow.pop %v6639
      %v6641 = vmul.f32 %v6628, 1.442695
      %v6642 = vpow.pop %v6641
      %v6643 = vmul.f32 %v6629, 1.442695
      %v6644 = vpow.pop %v6643
      %v6645 = vmul.f32 %v6630, 1.442695
      %v6646 = vpow.pop %v6645
      %v6647 = vsel %vm1197, %v6632, 0.0
      %6648 = vadd.xlane.f32.xlu0 %v6647
      %v6649 = vpop.xlane.xlu0 %6648
      %v6650 = vsel %vm1197, %v6634, 0.0
      %6651 = vadd.xlane.f32.xlu0 %v6650
      %v6652 = vpop.xlane.xlu0 %6651
      %v6653 = vsel %vm1197, %v6636, 0.0
      %6654 = vadd.xlane.f32.xlu0 %v6653
      %v6655 = vpop.xlane.xlu0 %6654
      %v6656 = vsel %vm1197, %v6638, 0.0
      %6657 = vadd.xlane.f32.xlu0 %v6656
      %v6658 = vpop.xlane.xlu0 %6657
      %v6659 = vsel %vm1197, %v6640, 0.0
      %6660 = vadd.xlane.f32.xlu0 %v6659
      %v6661 = vpop.xlane.xlu0 %6660
      %v6662 = vsel %vm1197, %v6642, 0.0
      %6663 = vadd.xlane.f32.xlu0 %v6662
      %v6664 = vpop.xlane.xlu0 %6663
      %v6665 = vsel %vm1197, %v6644, 0.0
      %6666 = vadd.xlane.f32.xlu0 %v6665
      %v6667 = vpop.xlane.xlu0 %6666
      %v6668 = vsel %vm1197, %v6646, 0.0
      %6669 = vadd.xlane.f32.xlu0 %v6668
      %v6670 = vpop.xlane.xlu0 %6669
      %v6671 = vrcp.pop %v6649
      %v6672 = vrcp.pop %v6652
      %v6673 = vrcp.pop %v6655
      %v6674 = vrcp.pop %v6658
      %v6675 = vrcp.pop %v6661
      %v6676 = vrcp.pop %v6664
      %v6677 = vrcp.pop %v6667
      %v6678 = vrcp.pop %v6670
      %v6679 = vmul.f32 %v6632, %v6671
      %v6680 = vmul.f32 %v6634, %v6672
      %v6681 = vmul.f32 %v6636, %v6673
      %v6682 = vmul.f32 %v6638, %v6674
      %v6683 = vmul.f32 %v6640, %v6675
      %v6684 = vmul.f32 %v6642, %v6676
      %v6685 = vmul.f32 %v6644, %v6677
      %v6686 = vmul.f32 %v6646, %v6678
      %6687 = vrot.lane.b32.xlu0 %v6424, 96
      %v6688 = vpop.permute.xlu0 %6687
      %6689 = vrot.lane.b32.xlu0 %v6427, 96
      %v6690 = vpop.permute.xlu0 %6689
      %v6694 = vsel %vm1197, %v6679, 0
      %v6697 = vsel %vm1197, %v6680, 0
      %6699 = vmatpush.msra.mxu0 0.0
      %6700 = vmatpush.msra.mxu0 0.0
      %6701 = vmatpush.msra.mxu0 0.0
      %6702 = vmatpush.msra.mxu0 0.0
      %6703 = vmatpush.msra.mxu0 0.0
      %6704 = vmatpush.msra.mxu0 0.0
      %6705 = vmatpush.msra.mxu0 0.0
      %6706 = vmatpush.msra.mxu0 0.0
      %6707 = vmatpush.msra.mxu0 0.0
      %6708 = vmatpush.msra.mxu0 0.0
      %6709 = vmatpush.msra.mxu0 0.0
      %6710 = vmatpush.msra.mxu0 0.0
      %6711 = vmatpush.msra.mxu0 0.0
      %6712 = vmatpush.msra.mxu0 0.0
      %6713 = vmatpush.msra.mxu0 %v6690
      %6714 = vmatpush.msra.mxu0 %v6688
      %6715 = vmatmul.f32.gmra.mxu0 %v6694
      %v6716 = vpop.f32.mrf.mxu0
      %v6717 = vadd.f32 0.0, %v6716
      %6718 = vmatmul.f32.gmra.mxu0 %v6697
      %v6719 = vpop.f32.mrf.mxu0
      %v6720 = vadd.f32 0.0, %v6719
      %6721 = vdwg.mxu0
      %6722 = vrot.lane.b32.xlu0 %v6448, 96
      %v6723 = vpop.permute.xlu0 %6722
      %6724 = vrot.lane.b32.xlu0 %v6450, 96
      %v6725 = vpop.permute.xlu0 %6724
      %v6729 = vsel %vm1197, %v6681, 0
      %v6732 = vsel %vm1197, %v6682, 0
      %6734 = vmatpush.msra.mxu0 0.0
      %6735 = vmatpush.msra.mxu0 0.0
      %6736 = vmatpush.msra.mxu0 0.0
      %6737 = vmatpush.msra.mxu0 0.0
      %6738 = vmatpush.msra.mxu0 0.0
      %6739 = vmatpush.msra.mxu0 0.0
      %6740 = vmatpush.msra.mxu0 0.0
      %6741 = vmatpush.msra.mxu0 0.0
      %6742 = vmatpush.msra.mxu0 0.0
      %6743 = vmatpush.msra.mxu0 0.0
      %6744 = vmatpush.msra.mxu0 0.0
      %6745 = vmatpush.msra.mxu0 0.0
      %6746 = vmatpush.msra.mxu0 0.0
      %6747 = vmatpush.msra.mxu0 0.0
      %6748 = vmatpush.msra.mxu0 %v6725
      %6749 = vmatpush.msra.mxu0 %v6723
      %6750 = vmatmul.f32.gmra.mxu0 %v6729
      %v6751 = vpop.f32.mrf.mxu0
      %v6752 = vadd.f32 0.0, %v6751
      %6753 = vmatmul.f32.gmra.mxu0 %v6732
      %v6754 = vpop.f32.mrf.mxu0
      %v6755 = vadd.f32 0.0, %v6754
      %6756 = vdwg.mxu0
      %6757 = vrot.lane.b32.xlu0 %v6452, 96
      %v6758 = vpop.permute.xlu0 %6757
      %6759 = vrot.lane.b32.xlu0 %v6454, 96
      %v6760 = vpop.permute.xlu0 %6759
      %v6764 = vsel %vm1197, %v6683, 0
      %v6767 = vsel %vm1197, %v6684, 0
      %6769 = vmatpush.msra.mxu0 0.0
      %6770 = vmatpush.msra.mxu0 0.0
      %6771 = vmatpush.msra.mxu0 0.0
      %6772 = vmatpush.msra.mxu0 0.0
      %6773 = vmatpush.msra.mxu0 0.0
      %6774 = vmatpush.msra.mxu0 0.0
      %6775 = vmatpush.msra.mxu0 0.0
      %6776 = vmatpush.msra.mxu0 0.0
      %6777 = vmatpush.msra.mxu0 0.0
      %6778 = vmatpush.msra.mxu0 0.0
      %6779 = vmatpush.msra.mxu0 0.0
      %6780 = vmatpush.msra.mxu0 0.0
      %6781 = vmatpush.msra.mxu0 0.0
      %6782 = vmatpush.msra.mxu0 0.0
      %6783 = vmatpush.msra.mxu0 %v6760
      %6784 = vmatpush.msra.mxu0 %v6758
      %6785 = vmatmul.f32.gmra.mxu0 %v6764
      %v6786 = vpop.f32.mrf.mxu0
      %v6787 = vadd.f32 0.0, %v6786
      %6788 = vmatmul.f32.gmra.mxu0 %v6767
      %v6789 = vpop.f32.mrf.mxu0
      %v6790 = vadd.f32 0.0, %v6789
      %6791 = vdwg.mxu0
      %6792 = vrot.lane.b32.xlu0 %v6456, 96
      %v6793 = vpop.permute.xlu0 %6792
      %6794 = vrot.lane.b32.xlu0 %v6458, 96
      %v6795 = vpop.permute.xlu0 %6794
      %v6799 = vsel %vm1197, %v6685, 0
      %v6802 = vsel %vm1197, %v6686, 0
      %6804 = vmatpush.msra.mxu0 0.0
      %6805 = vmatpush.msra.mxu0 0.0
      %6806 = vmatpush.msra.mxu0 0.0
      %6807 = vmatpush.msra.mxu0 0.0
      %6808 = vmatpush.msra.mxu0 0.0
      %6809 = vmatpush.msra.mxu0 0.0
      %6810 = vmatpush.msra.mxu0 0.0
      %6811 = vmatpush.msra.mxu0 0.0
      %6812 = vmatpush.msra.mxu0 0.0
      %6813 = vmatpush.msra.mxu0 0.0
      %6814 = vmatpush.msra.mxu0 0.0
      %6815 = vmatpush.msra.mxu0 0.0
      %6816 = vmatpush.msra.mxu0 0.0
      %6817 = vmatpush.msra.mxu0 0.0
      %6818 = vmatpush.msra.mxu0 %v6795
      %6819 = vmatpush.msra.mxu0 %v6793
      %6820 = vmatmul.f32.gmra.mxu0 %v6799
      %v6821 = vpop.f32.mrf.mxu0
      %v6822 = vadd.f32 0.0, %v6821
      %6823 = vmatmul.f32.gmra.mxu0 %v6802
      %v6824 = vpop.f32.mrf.mxu0
      %v6825 = vadd.f32 0.0, %v6824
      %6826 = vdwg.mxu0
      %6829 = vrot.lane.b32.xlu0 %v6752, 4
      %v6830 = vpop.permute.xlu0 %6829
      %6831 = vrot.lane.b32.xlu0 %v6755, 4
      %v6832 = vpop.permute.xlu0 %6831
      %6837 = vrot.lane.b32.xlu0 %v6787, 8
      %v6838 = vpop.permute.xlu0 %6837
      %6839 = vrot.lane.b32.xlu0 %v6790, 8
      %v6840 = vpop.permute.xlu0 %6839
      %6845 = vrot.lane.b32.xlu0 %v6822, 12
      %v6846 = vpop.permute.xlu0 %6845
      %6847 = vrot.lane.b32.xlu0 %v6825, 12
      %v6848 = vpop.permute.xlu0 %6847
      %v6851 = vsel %vm1304, %v6717, %v6830
      %v6852 = vsel %vm1304, %v6720, %v6832
      %v6853 = vsel %vm1500, %v6851, %v6838
      %v6854 = vsel %vm1500, %v6852, %v6840
      %v6855 = vsel %vm6106, %v6853, %v6846
      %v6856 = vsel %vm6106, %v6854, %v6848
      %v6858 = vsel %vm1197, %v6855, 0
      %v6861 = vsel %vm1197, %v6856, 0
      %6863 = vmatpush.msra.mxu0 0.0
      %6864 = vmatpush.msra.mxu0 0.0
      %6865 = vmatpush.msra.mxu0 0.0
      %6866 = vmatpush.msra.mxu0 0.0
      %6867 = vmatpush.msra.mxu0 0.0
      %6868 = vmatpush.msra.mxu0 0.0
      %6869 = vmatpush.msra.mxu0 0.0
      %6870 = vmatpush.msra.mxu0 0.0
      %6871 = vmatpush.msra.mxu0 0.0
      %6872 = vmatpush.msra.mxu0 0.0
      %6873 = vmatpush.msra.mxu0 0.0
      %6874 = vmatpush.msra.mxu0 0.0
      %6875 = vmatpush.msra.mxu0 0.0
      %6876 = vmatpush.msra.mxu0 0.0
      %6877 = vmatpush.msra.mxu0 %v6326
      %6878 = vmatpush.msra.mxu0 %v6325
      %6879 = vmatmul.f32.gmra.mxu0 %v6858
      %v6880 = vpop.f32.mrf.mxu0
      %v6881 = vadd.f32 0.0, %v6880
      %6882 = vmatmul.f32.gmra.mxu0 %v6861
      %v6883 = vpop.f32.mrf.mxu0
      %v6884 = vadd.f32 0.0, %v6883
      %6885 = vdwg.mxu0
      %v6886 = vadd.f32 %v6313, %v6881
      %v6887 = vadd.f32 %v6314, %v6884
      %v6889 = vperm.slane %v6328, 0
      %v6891 = vadd.f32 %v6886, %v6889
      %v6892 = vadd.f32 %v6887, %v6889
      %v6893 = vsel %vm1197, %v6891, 0.0
      %6894 = vadd.xlane.f32.xlu0 %v6893
      %v6895 = vpop.xlane.xlu0 %6894
      %v6896 = vsel %vm1197, %v6892, 0.0
      %6897 = vadd.xlane.f32.xlu0 %v6896
      %v6898 = vpop.xlane.xlu0 %6897
      %v6899 = vmul.f32 %v6895, %v5597
      %v6900 = vmul.f32 %v6898, %v5597
      %v6901 = vsub.f32 %v6891, %v6899
      %v6902 = vsub.f32 %v6892, %v6900
      %v6903 = vmul.f32 %v6901, %v6901
      %v6904 = vmul.f32 %v6902, %v6902
      %v6905 = vsel %vm1197, %v6903, 0.0
      %6906 = vadd.xlane.f32.xlu0 %v6905
      %v6907 = vpop.xlane.xlu0 %6906
      %v6908 = vsel %vm1197, %v6904, 0.0
      %6909 = vadd.xlane.f32.xlu0 %v6908
      %v6910 = vpop.xlane.xlu0 %6909
      %v6911 = vmul.f32 %v6907, 0.06666667
      %v6912 = vmul.f32 %v6910, 0.06666667
      %v6913 = vrsqrt.pop %v6911
      %v6914 = vmul.f32 %v6913, %v6911
      %v6915 = vmul.f32 %v6914, %v6913
      %v6916 = vmul.f32 0.5, %v6915
      %v6917 = vsub.f32 1.5, %v6916
      %v6918 = vmul.f32 %v6913, %v6917
      %v6919 = vmul.f32 %v6911, %v6918
      %vm6920 = vcmp.eq.f32.partialorder %v6911, inf
      %v6921 = vsel %vm6920, %v6911, %v6919
      %vm6922 = vcmp.eq.f32.partialorder %v6911, 0.0
      %v6923 = vand.u32 %v6911, 2147483648
      %v6924 = vsel %vm6922, %v6923, %v6921
      %v6925 = vrsqrt.pop %v6912
      %v6926 = vmul.f32 %v6925, %v6912
      %v6927 = vmul.f32 %v6926, %v6925
      %v6928 = vmul.f32 0.5, %v6927
      %v6929 = vsub.f32 1.5, %v6928
      %v6930 = vmul.f32 %v6925, %v6929
      %v6931 = vmul.f32 %v6912, %v6930
      %vm6932 = vcmp.eq.f32.partialorder %v6912, inf
      %v6933 = vsel %vm6932, %v6912, %v6931
      %vm6934 = vcmp.eq.f32.partialorder %v6912, 0.0
      %v6935 = vand.u32 %v6912, 2147483648
      %v6936 = vsel %vm6934, %v6935, %v6933
      %v6937 = vadd.f32 %v6924, 1e-06
      %v6938 = vadd.f32 %v6936, 1e-06
      %v6939 = vrcp.pop %v6937
      %v6940 = vrcp.pop %v6938
      %v6941 = vperm.slane %v6316, 1
      %v6942 = vmul.f32 %v6941, %v6901
      %v6943 = vmul.f32 %v6941, %v6902
      %v6944 = vmul.f32 %v6942, %v6939
      %v6945 = vmul.f32 %v6943, %v6940
      %v6946 = vperm.slane %v6318, 1
      %v6947 = vadd.f32 %v6944, %v6946
      %v6948 = vadd.f32 %v6945, %v6946
      %6949 = vmatpush.msra.mxu0 0.0
      %6950 = vmatpush.msra.mxu0 0.0
      %6951 = vmatpush.msra.mxu0 0.0
      %6952 = vmatpush.msra.mxu0 0.0
      %6953 = vmatpush.msra.mxu0 0.0
      %6954 = vmatpush.msra.mxu0 0.0
      %6955 = vmatpush.msra.mxu0 0.0
      %6956 = vmatpush.msra.mxu0 0.0
      %6957 = vmatpush.msra.mxu0 0.0
      %6958 = vmatpush.msra.mxu0 0.0
      %6959 = vmatpush.msra.mxu0 0.0
      %6960 = vmatpush.msra.mxu0 0.0
      %6961 = vmatpush.msra.mxu0 0.0
      %6962 = vmatpush.msra.mxu0 0.0
      %6963 = vmatpush.msra.mxu0 %v6948
      %6964 = vmatpush.msra.mxu0 %v6947
      %6965 = vmatmul.f32.gmra.mxu0 %v1989
      %v6966 = vpop.f32.mrf.mxu0
      %v6967 = vadd.f32 0.0, %v6966
      %6968 = vmatmul.f32.gmra.mxu0 %v1992
      %v6969 = vpop.f32.mrf.mxu0
      %v6970 = vadd.f32 0.0, %v6969
      %6971 = vdwg.mxu0
      %v6973 = vperm.slane %v6333, 0
      %v6976 = vsel %vm1197, %v6967, 0
      %v6979 = vsel %vm1197, %v6970, 0
      %6981 = vmatpush.msra.mxu0 0.0
      %6982 = vmatpush.msra.mxu0 0.0
      %6983 = vmatpush.msra.mxu0 0.0
      %6984 = vmatpush.msra.mxu0 0.0
      %6985 = vmatpush.msra.mxu0 0.0
      %6986 = vmatpush.msra.mxu0 0.0
      %6987 = vmatpush.msra.mxu0 0.0
      %6988 = vmatpush.msra.mxu0 0.0
      %6989 = vmatpush.msra.mxu0 0.0
      %6990 = vmatpush.msra.mxu0 0.0
      %6991 = vmatpush.msra.mxu0 0.0
      %6992 = vmatpush.msra.mxu0 0.0
      %6993 = vmatpush.msra.mxu0 0.0
      %6994 = vmatpush.msra.mxu0 0.0
      %6995 = vmatpush.msra.mxu0 %v6331
      %6996 = vmatpush.msra.mxu0 %v6330
      %6997 = vmatmul.f32.gmra.mxu0 %v6976
      %v6998 = vpop.f32.mrf.mxu0
      %v6999 = vadd.f32 %v6973, %v6998
      %7000 = vmatmul.f32.gmra.mxu0 %v6979
      %v7001 = vpop.f32.mrf.mxu0
      %v7002 = vadd.f32 %v6973, %v7001
      %7003 = vdwg.mxu0
      %v7004 = vmax.f32 %v6999, 0.0
      %v7005 = vmax.f32 %v7002, 0.0
      %7006 = vmatpush.msra.mxu0 0.0
      %7007 = vmatpush.msra.mxu0 0.0
      %7008 = vmatpush.msra.mxu0 0.0
      %7009 = vmatpush.msra.mxu0 0.0
      %7010 = vmatpush.msra.mxu0 0.0
      %7011 = vmatpush.msra.mxu0 0.0
      %7012 = vmatpush.msra.mxu0 0.0
      %7013 = vmatpush.msra.mxu0 0.0
      %7014 = vmatpush.msra.mxu0 0.0
      %7015 = vmatpush.msra.mxu0 0.0
      %7016 = vmatpush.msra.mxu0 0.0
      %7017 = vmatpush.msra.mxu0 0.0
      %7018 = vmatpush.msra.mxu0 0.0
      %7019 = vmatpush.msra.mxu0 0.0
      %7020 = vmatpush.msra.mxu0 %v7005
      %7021 = vmatpush.msra.mxu0 %v7004
      %7022 = vmatmul.f32.gmra.mxu0 %v1989
      %v7023 = vpop.f32.mrf.mxu0
      %v7024 = vadd.f32 0.0, %v7023
      %7025 = vmatmul.f32.gmra.mxu0 %v1992
      %v7026 = vpop.f32.mrf.mxu0
      %v7027 = vadd.f32 0.0, %v7026
      %7028 = vdwg.mxu0
      %v7030 = vperm.slane %v6340, 0
      %v7033 = vsel %vm1370, %v7024, 0
      %v7036 = vsel %vm1370, %v7027, 0
      %7038 = vmatpush.msra.mxu0 0.0
      %7039 = vmatpush.msra.mxu0 0.0
      %7040 = vmatpush.msra.mxu0 0.0
      %7041 = vmatpush.msra.mxu0 0.0
      %7042 = vmatpush.msra.mxu0 0.0
      %7043 = vmatpush.msra.mxu0 0.0
      %7044 = vmatpush.msra.mxu0 0.0
      %7045 = vmatpush.msra.mxu0 0.0
      %7046 = vmatpush.msra.mxu0 0.0
      %7047 = vmatpush.msra.mxu0 0.0
      %7048 = vmatpush.msra.mxu0 0.0
      %7049 = vmatpush.msra.mxu0 0.0
      %7050 = vmatpush.msra.mxu0 %v6338
      %7051 = vmatpush.msra.mxu0 %v6337
      %7052 = vmatpush.msra.mxu0 %v6336
      %7053 = vmatpush.msra.mxu0 %v6335
      %7054 = vmatmul.f32.gmra.mxu0 %v7033
      %v7055 = vpop.f32.mrf.mxu0
      %v7056 = vadd.f32 %v7030, %v7055
      %7057 = vmatmul.f32.gmra.mxu0 %v7036
      %v7058 = vpop.f32.mrf.mxu0
      %v7059 = vadd.f32 %v7030, %v7058
      %7060 = vdwg.mxu0
      %v7061 = vadd.f32 %v6891, %v7056
      %v7062 = vadd.f32 %v6892, %v7059
      %v7063 = vld [vmem:[%s69] sm:$0xff]
      %v7064 = vld [vmem:[%s69 + $0x8] sm:$0xff]
      %v7065 = vld [vmem:[%s69 + $0x10] sm:$0xff]
      %v7066 = vld [vmem:[%s69 + $0x18] sm:$0xff]
      %v7067 = vld [vmem:[%s69 + $0x20] sm:$0xff]
      %v7068 = vld [vmem:[%s69 + $0x28] sm:$0xff]
      %v7069 = vld [vmem:[%s69 + $0x30] sm:$0xff]
      %v7070 = vld [vmem:[%s69 + $0x38] sm:$0xff]
      %v7072 = vsel %vm1197, %v7063, 0
      %v7075 = vsel %vm1197, %v7064, 0
      %v7078 = vsel %vm1197, %v7065, 0
      %v7081 = vsel %vm1197, %v7066, 0
      %v7084 = vsel %vm1197, %v7067, 0
      %v7087 = vsel %vm1197, %v7068, 0
      %v7090 = vsel %vm1197, %v7069, 0
      %v7093 = vsel %vm1197, %v7070, 0
      %7095 = vmatpush.msra.mxu0 0.0
      %7096 = vmatpush.msra.mxu0 0.0
      %7097 = vmatpush.msra.mxu0 0.0
      %7098 = vmatpush.msra.mxu0 0.0
      %7099 = vmatpush.msra.mxu0 0.0
      %7100 = vmatpush.msra.mxu0 0.0
      %7101 = vmatpush.msra.mxu0 0.0
      %7102 = vmatpush.msra.mxu0 0.0
      %7103 = vmatpush.msra.mxu0 0.0
      %7104 = vmatpush.msra.mxu0 0.0
      %7105 = vmatpush.msra.mxu0 0.0
      %7106 = vmatpush.msra.mxu0 0.0
      %7107 = vmatpush.msra.mxu0 0.0
      %7108 = vmatpush.msra.mxu0 0.0
      %7109 = vmatpush.msra.mxu0 %v7062
      %7110 = vmatpush.msra.mxu0 %v7061
      %7111 = vmatmul.f32.gmra.mxu0 %v7072
      %v7112 = vpop.f32.mrf.mxu0
      %v7113 = vadd.f32 0.0, %v7112
      %7114 = vmatmul.f32.gmra.mxu0 %v7075
      %v7115 = vpop.f32.mrf.mxu0
      %v7116 = vadd.f32 0.0, %v7115
      %7117 = vmatmul.f32.gmra.mxu0 %v7078
      %v7118 = vpop.f32.mrf.mxu0
      %v7119 = vadd.f32 0.0, %v7118
      %7120 = vmatmul.f32.gmra.mxu0 %v7081
      %v7121 = vpop.f32.mrf.mxu0
      %v7122 = vadd.f32 0.0, %v7121
      %7123 = vmatmul.f32.gmra.mxu0 %v7084
      %v7124 = vpop.f32.mrf.mxu0
      %v7125 = vadd.f32 0.0, %v7124
      %7126 = vmatmul.f32.gmra.mxu0 %v7087
      %v7127 = vpop.f32.mrf.mxu0
      %v7128 = vadd.f32 0.0, %v7127
      %7129 = vmatmul.f32.gmra.mxu0 %v7090
      %v7130 = vpop.f32.mrf.mxu0
      %v7131 = vadd.f32 0.0, %v7130
      %7132 = vmatmul.f32.gmra.mxu0 %v7093
      %v7133 = vpop.f32.mrf.mxu0
      %v7134 = vadd.f32 0.0, %v7133
      %7135 = vdwg.mxu0
      %v7136 = vld [vmem:[%s71] sm:$0xff]
      %v7137 = vld [vmem:[%s71 + $0x8] sm:$0xff]
      %v7138 = vld [vmem:[%s73] sm:$0x1]
      %v7140 = vperm.slane %v7138, 0
      %v7143 = vsel %vm1197, %v7113, 0
      %v7146 = vsel %vm1197, %v7116, 0
      %v7149 = vsel %vm1197, %v7119, 0
      %v7152 = vsel %vm1197, %v7122, 0
      %v7155 = vsel %vm1197, %v7125, 0
      %v7158 = vsel %vm1197, %v7128, 0
      %v7161 = vsel %vm1197, %v7131, 0
      %v7164 = vsel %vm1197, %v7134, 0
      %7166 = vmatpush.msra.mxu0 0.0
      %7167 = vmatpush.msra.mxu0 0.0
      %7168 = vmatpush.msra.mxu0 0.0
      %7169 = vmatpush.msra.mxu0 0.0
      %7170 = vmatpush.msra.mxu0 0.0
      %7171 = vmatpush.msra.mxu0 0.0
      %7172 = vmatpush.msra.mxu0 0.0
      %7173 = vmatpush.msra.mxu0 0.0
      %7174 = vmatpush.msra.mxu0 0.0
      %7175 = vmatpush.msra.mxu0 0.0
      %7176 = vmatpush.msra.mxu0 0.0
      %7177 = vmatpush.msra.mxu0 0.0
      %7178 = vmatpush.msra.mxu0 0.0
      %7179 = vmatpush.msra.mxu0 0.0
      %7180 = vmatpush.msra.mxu0 %v7137
      %7181 = vmatpush.msra.mxu0 %v7136
      %7182 = vmatmul.f32.gmra.mxu0 %v7143
      %v7183 = vpop.f32.mrf.mxu0
      %v7184 = vadd.f32 %v7140, %v7183
      %7185 = vmatmul.f32.gmra.mxu0 %v7146
      %v7186 = vpop.f32.mrf.mxu0
      %v7187 = vadd.f32 %v7140, %v7186
      %7188 = vmatmul.f32.gmra.mxu0 %v7149
      %v7189 = vpop.f32.mrf.mxu0
      %v7190 = vadd.f32 %v7140, %v7189
      %7191 = vmatmul.f32.gmra.mxu0 %v7152
      %v7192 = vpop.f32.mrf.mxu0
      %v7193 = vadd.f32 %v7140, %v7192
      %7194 = vmatmul.f32.gmra.mxu0 %v7155
      %v7195 = vpop.f32.mrf.mxu0
      %v7196 = vadd.f32 %v7140, %v7195
      %7197 = vmatmul.f32.gmra.mxu0 %v7158
      %v7198 = vpop.f32.mrf.mxu0
      %v7199 = vadd.f32 %v7140, %v7198
      %7200 = vmatmul.f32.gmra.mxu0 %v7161
      %v7201 = vpop.f32.mrf.mxu0
      %v7202 = vadd.f32 %v7140, %v7201
      %7203 = vmatmul.f32.gmra.mxu0 %v7164
      %v7204 = vpop.f32.mrf.mxu0
      %v7205 = vadd.f32 %v7140, %v7204
      %7206 = vdwg.mxu0
      %7207 = vst.msk [vmem:[%s1184] sm:$0xff] %vm5276, %v7184
      %7208 = vst.msk [vmem:[%s1184 + $0x8] sm:$0xff] %vm5276, %v7187
      %7209 = vst.msk [vmem:[%s1184 + $0x10] sm:$0xff] %vm5276, %v7190
      %7210 = vst.msk [vmem:[%s1184 + $0x18] sm:$0xff] %vm5276, %v7193
      %7211 = vst.msk [vmem:[%s1184 + $0x20] sm:$0xff] %vm5276, %v7196
      %7212 = vst.msk [vmem:[%s1184 + $0x28] sm:$0xff] %vm5276, %v7199
      %7213 = vst.msk [vmem:[%s1184 + $0x30] sm:$0xff] %vm5276, %v7202
      %7214 = vst.msk [vmem:[%s1184 + $0x38] sm:$0xff] %vm5276, %v7205
      %p7215 = scmp.lt.s32.totalorder %s89, 1
      %s7216 = scalar_select %p7215, %s89, 1
      %s7217 = smul.addr %s7216, 2
      %s7218 = smul.addr %s7217, 8
      %s7219 = scalar_lea.vmem %s75, %s7218
      %p7220 = scmp.lt.s32.totalorder %s89, 1
      %s7221 = scalar_select %p7220, %s89, 1
      %s7222 = smul.addr %s7221, 8
      %s7223 = smul.addr %s7222, 8
      %s7224 = scalar_lea.vmem %s77, %s7223
      // Predicated region
      $region169: #{tpu_custom_call.1} parent=167 // pred_check
        %p7225 = pneg %p894
      $region170: #{tpu_custom_call.1} parent=167 // pred_check_branch
        %7227 = sbr.rel (%p7225) target = $region172
      $region171: #{tpu_custom_call.1} parent=167 // pred_region
        _
      $region172: #{tpu_custom_call.1} parent=167 // pred_fallthru
        _
      // Predicated region
      $region173: #{tpu_custom_call.1} parent=167 // pred_check
        %p7228 = pneg %p920
      $region174: #{tpu_custom_call.1} parent=167 // pred_check_branch
        %7230 = sbr.rel (%p7228) target = $region176
      $region175: #{tpu_custom_call.1} parent=167 // pred_region
        _
      $region176: #{tpu_custom_call.1} parent=167 // pred_fallthru
        _
    $region168: #{tpu_custom_call.1} parent=5 // pred_fallthru
      _
    %p7231 = scmp.le.s32.totalorder 2, %s84
    // Predicated region
    $region177: #{tpu_custom_call.1} parent=5 // pred_check
      %p7232 = pneg %p7231
    $region178: #{tpu_custom_call.1} parent=5 // pred_check_branch
      %7234 = sbr.rel (%p7232) target = $region180
    $region179: #{tpu_custom_call.1} parent=5 // pred_region
      %s7235 = ssub.s32 %s84, 2
      // Predicated region
      $region181: #{tpu_custom_call.1} parent=179 // pred_check
        %p7236 = pneg %p900
      $region182: #{tpu_custom_call.1} parent=179 // pred_check_branch
        %7238 = sbr.rel (%p7236) target = $region184
      $region183: #{tpu_custom_call.1} parent=179 // pred_region
        %p7239 = scmp.lt.s32.totalorder %s90, 1
        %s7240 = scalar_select %p7239, %s90, 1
        %s7241 = smul.addr %s7240, 2
        %s7242 = smul.addr %s7241, 8
        %s7243 = scalar_lea.vmem %s75, %s7242
      $region184: #{tpu_custom_call.1} parent=179 // pred_fallthru
        _
      // Predicated region
      $region185: #{tpu_custom_call.1} parent=179 // pred_check
        %p7244 = pneg %p926
      $region186: #{tpu_custom_call.1} parent=179 // pred_check_branch
        %7246 = sbr.rel (%p7244) target = $region188
      $region187: #{tpu_custom_call.1} parent=179 // pred_region
        %p7247 = scmp.lt.s32.totalorder %s90, 1
        %s7248 = scalar_select %p7247, %s90, 1
        %s7249 = smul.addr %s7248, 8
        %s7250 = smul.addr %s7249, 8
        %s7251 = scalar_lea.vmem %s77, %s7250
      $region188: #{tpu_custom_call.1} parent=179 // pred_fallthru
        _
    $region180: #{tpu_custom_call.1} parent=5 // pred_fallthru
      _
  $region6: #{tpu_custom_call.1} parent=0 // loop_footer
    %s88 = sadd.s32 1, %s84
  $region7: #{tpu_custom_call.1} parent=0 // loop_footer_branch
    %83 = sbr.rel target = $region3
  $region8: #{tpu_custom_call.1} parent=0 // loop_exit
    _

</llo_original>
